<compile_context>
chip_gen: v7x
topology: tpu7x:2x2x1
jax: 0.10.0
libtpu: 0.0.40
codegen_flags: <defaults>
</compile_context>

<pallas_src>
import jax
import jax.numpy as jnp
from jax.experimental import pallas as pl
from jax.experimental.pallas import tpu as pltpu


# ---------------------------------------------------------------------------
# Fused bidirectional LSTM layer: whole sequence in one grid step.
# ---------------------------------------------------------------------------
def _bilstm_layer_kernel(x_ref, wih_ref, whh_ref, b_ref, o_ref, gx_scr):
    # x_ref   : (T*B, D)     time-major rows (row = t*B + b)
    # wih_ref : (D, 8H)      [W_ih_fwd | W_ih_bwd]^T
    # whh_ref : (2, H, 4H)   per-direction W_hh^T
    # b_ref   : (1, 8H)      [b_fwd | b_bwd]   (b_ih + b_hh)
    # o_ref   : (T, B, 2H)   [h_fwd | h_bwd], already time-aligned
    # gx_scr  : (T*B, 8H)    hoisted input projection for both directions
    T, B, twoH = o_ref.shape
    H = twoH // 2
    G = 4 * H

    # (1) Input projection for the whole sequence & both directions: 1 matmul.
    gx_scr[...] = (
        jnp.dot(x_ref[...], wih_ref[...], preferred_element_type=jnp.float32)
        + b_ref[...])

    whh_f = whh_ref[0]                       # (H, 4H)
    whh_b = whh_ref[1]

    def cell(gates, c):
        i = jax.nn.sigmoid(gates[:, 0 * H:1 * H])
        f = jax.nn.sigmoid(gates[:, 1 * H:2 * H])
        g = jnp.tanh(gates[:, 2 * H:3 * H])
        o = jax.nn.sigmoid(gates[:, 3 * H:4 * H])
        c_new = f * c + i * g
        return o * jnp.tanh(c_new), c_new

    h_f = jnp.zeros((B, H), jnp.float32)
    c_f = jnp.zeros((B, H), jnp.float32)
    h_b = jnp.zeros((B, H), jnp.float32)
    c_b = jnp.zeros((B, H), jnp.float32)

    # (2) Time recurrence, statically unrolled (T is small), fwd + bwd fused.
    for t in range(T):
        tb = T - 1 - t
        gates_f = (gx_scr[t * B:(t + 1) * B, 0:G]
                   + jnp.dot(h_f, whh_f, preferred_element_type=jnp.float32))
        gates_b = (gx_scr[tb * B:(tb + 1) * B, G:2 * G]
                   + jnp.dot(h_b, whh_b, preferred_element_type=jnp.float32))
        h_f, c_f = cell(gates_f, c_f)
        h_b, c_b = cell(gates_b, c_b)
        o_ref[t, :, 0:H] = h_f               # forward half, lane-aligned
        o_ref[tb, :, H:twoH] = h_b           # backward half, lane-aligned


def _run_bilstm_layer(x_flat, wih, whh, b, T, B):
    TB, D = x_flat.shape
    H = whh.shape[1]
    return pl.pallas_call(
        _bilstm_layer_kernel,
        out_shape=jax.ShapeDtypeStruct((T, B, 2 * H), jnp.float32),
        grid_spec=pltpu.PrefetchScalarGridSpec(
            num_scalar_prefetch=0,
            grid=(1,),
            in_specs=[
                pl.BlockSpec((TB, D), lambda i: (0, 0)),           # x (flat)
                pl.BlockSpec((D, 8 * H), lambda i: (0, 0)),        # W_ih (both)
                pl.BlockSpec((2, H, 4 * H), lambda i: (0, 0, 0)),  # W_hh (stacked)
                pl.BlockSpec((1, 8 * H), lambda i: (0, 0)),        # bias (both)
            ],
            out_specs=pl.BlockSpec((T, B, 2 * H), lambda i: (0, 0, 0)),
            scratch_shapes=[pltpu.VMEM((TB, 8 * H), jnp.float32)],
        ),
        compiler_params=pltpu.CompilerParams(
            dimension_semantics=("arbitrary",)),
    )(x_flat, wih, whh, b)


# ---------------------------------------------------------------------------
# fc + softmax(dim=1): single launch, one matmul, softmax over time.
# ---------------------------------------------------------------------------
def _fc_softmax_kernel(y_ref, w_ref, b_ref, o_ref):
    # y_ref : (T*B, 2H) time-major rows;  w_ref : (2H, C);  b_ref : (1, C)
    # o_ref : (T, B, C)  softmax over the time axis (== nn.Softmax(dim=1))
    T, B, C = o_ref.shape
    logits = (jnp.dot(y_ref[...], w_ref[...], preferred_element_type=jnp.float32)
              + b_ref[...])                                    # (T*B, C)
    rows = [logits[t * B:(t + 1) * B, :] for t in range(T)]    # T x (B, C)
    m = rows[0]
    for r in rows[1:]:
        m = jnp.maximum(m, r)
    es = [jnp.exp(r - m) for r in rows]
    s = es[0]
    for e in es[1:]:
        s = s + e
    inv = pl.reciprocal(s, approx=True)                        # EUP, ~free
    for t in range(T):
        o_ref[t] = es[t] * inv


def _run_fc_softmax(y_flat, w, b, T, B):
    TB, D = y_flat.shape
    C = w.shape[1]
    return pl.pallas_call(
        _fc_softmax_kernel,
        out_shape=jax.ShapeDtypeStruct((T, B, C), jnp.float32),
        grid_spec=pltpu.PrefetchScalarGridSpec(
            num_scalar_prefetch=0,
            grid=(1,),
            in_specs=[
                pl.BlockSpec((TB, D), lambda i: (0, 0)),
                pl.BlockSpec((D, C), lambda i: (0, 0)),
                pl.BlockSpec((1, C), lambda i: (0, 0)),
            ],
            out_specs=pl.BlockSpec((T, B, C), lambda i: (0, 0, 0)),
        ),
        compiler_params=pltpu.CompilerParams(
            dimension_semantics=("arbitrary",)),
    )(y_flat, w, b)


# ---------------------------------------------------------------------------
# Full forward pass (glue in plain JAX; reshapes are contiguous / free).
# ---------------------------------------------------------------------------
def lstm_forward(x, params, num_layers):
    """x: (B, T, input_size) -> (B, T, num_classes), matching the module."""
    B, T, _ = x.shape
    cur = jnp.transpose(x, (1, 0, 2)).reshape(T * B, -1)       # time-major rows
    for layer in range(num_layers):
        wih, whh, b = params["lstm"][layer]
        out_tb = _run_bilstm_layer(cur, wih, whh, b, T=T, B=B)  # (T, B, 2H)
        cur = out_tb.reshape(T * B, -1)
    probs_tbc = _run_fc_softmax(cur, params["fc_w"], params["fc_b"], T=T, B=B)
    return jnp.transpose(probs_tbc, (1, 0, 2))                 # (B, T, C)


def init_params(key, input_size, hidden, num_layers, num_classes):
    params = {"lstm": []}
    bound = 1.0 / (hidden ** 0.5)
    for layer in range(num_layers):
        d_in = input_size if layer == 0 else 2 * hidden
        wihs, whhs, bs = [], [], []
        for _direction in range(2):
            key, k1, k2, k3, k4 = jax.random.split(key, 5)
            wih = jax.random.uniform(k1, (d_in, 4 * hidden), jnp.float32, -bound, bound)
            whh = jax.random.uniform(k2, (hidden, 4 * hidden), jnp.float32, -bound, bound)
            b_ih = jax.random.uniform(k3, (4 * hidden,), jnp.float32, -bound, bound)
            b_hh = jax.random.uniform(k4, (4 * hidden,), jnp.float32, -bound, bound)
            wihs.append(wih); whhs.append(whh); bs.append(b_ih + b_hh)
        params["lstm"].append((
            jnp.concatenate(wihs, axis=1),                      # (d_in, 8H)
            jnp.stack(whhs, axis=0),                            # (2, H, 4H)
            jnp.concatenate(bs, axis=0).reshape(1, 8 * hidden), # (1, 8H)
        ))
    key, kw, kb = jax.random.split(key, 3)
    fb = 1.0 / ((2 * hidden) ** 0.5)
    params["fc_w"] = jax.random.uniform(kw, (2 * hidden, num_classes),
                                        jnp.float32, -fb, fb)
    params["fc_b"] = jax.random.uniform(kb, (1, num_classes),
                                        jnp.float32, -fb, fb)
    return params


# ---------------------------------------------------------------------------
# Pure-JAX reference for validation.
# ---------------------------------------------------------------------------
def _reference_forward(x, params, num_layers, hidden):
    H = hidden
    inp = jnp.transpose(x, (1, 0, 2))                           # (T, B, D)
    for layer in range(num_layers):
        wih_cat, whh_st, b_cat = params["lstm"][layer]
        outs = []
        for direction in range(2):
            wih = wih_cat[:, direction * 4 * H:(direction + 1) * 4 * H]
            whh = whh_st[direction]
            b = b_cat[0, direction * 4 * H:(direction + 1) * 4 * H]
            xs = inp[::-1] if direction == 1 else inp
            B = xs.shape[1]

            def step(carry, xt, wih=wih, whh=whh, b=b):
                h, c = carry
                gates = xt @ wih + h @ whh + b
                i = jax.nn.sigmoid(gates[:, :H])
                f = jax.nn.sigmoid(gates[:, H:2 * H])
                g = jnp.tanh(gates[:, 2 * H:3 * H])
                o = jax.nn.sigmoid(gates[:, 3 * H:])
                c = f * c + i * g
                h = o * jnp.tanh(c)
                return (h, c), h

            init = (jnp.zeros((B, H), jnp.float32), jnp.zeros((B, H), jnp.float32))
            _, hs = jax.lax.scan(step, init, xs)
            outs.append(hs[::-1] if direction == 1 else hs)
        inp = jnp.concatenate(outs, axis=-1)
    y = jnp.transpose(inp, (1, 0, 2))                           # (B, T, 2H)
    logits = y @ params["fc_w"] + params["fc_b"][0]
    return jax.nn.softmax(logits, axis=1)                       # softmax over time


if __name__ == "__main__":
    B, T, INPUT_SIZE = 2, 8, 16
    HIDDEN = 128          # nn.LSTM hidden_size = `dimension` default
    NUM_LAYERS = 2        # cfg['num_layers']
    NUM_CLASSES = 4

    key = jax.random.PRNGKey(0)
    key, kx = jax.random.split(key)
    x = jax.random.normal(kx, (B, T, INPUT_SIZE), jnp.float32)
    params = init_params(key, INPUT_SIZE, HIDDEN, NUM_LAYERS, NUM_CLASSES)

    fwd = jax.jit(lambda xx, pp: lstm_forward(xx, pp, NUM_LAYERS))
    out = jax.block_until_ready(fwd(x, params))

    ref = _reference_forward(x, params, NUM_LAYERS, HIDDEN)
    assert out.shape == (B, T, NUM_CLASSES)
    assert bool(jnp.all(jnp.isfinite(out)))
    assert bool(jnp.allclose(out, ref, atol=3e-2, rtol=3e-2))
    print("KERNEL_OK")
</pallas_src>

<mosaic_0001>
module attributes {stable_mosaic.version = 11 : i64} {
  func.func @_bilstm_layer_kernel(%arg0: i32, %arg1: memref<16x256xf32, #tpu.memory_space<vmem>>, %arg2: memref<256x1024xf32, #tpu.memory_space<vmem>>, %arg3: memref<2x128x512xf32, #tpu.memory_space<vmem>>, %arg4: memref<1x1024xf32, #tpu.memory_space<vmem>>, %arg5: memref<8x2x256xf32, #tpu.memory_space<vmem>>, %arg6: memref<16x1024xf32, #tpu.memory_space<vmem>>) attributes {dimension_semantics = [#tpu.dimension_semantics<arbitrary>], iteration_bounds = array<i64: 1>, scalar_prefetch = 0 : i64, scratch_operands = 1 : i64, tpu.core_type = #tpu.core_type<tc>, window_params = [{pipeline_mode = #tpu.pipeline_mode<synchronous>, transform_indices = @transform_0, window_bounds = array<i64: 16, 256>}, {pipeline_mode = #tpu.pipeline_mode<synchronous>, transform_indices = @transform_1, window_bounds = array<i64: 256, 1024>}, {pipeline_mode = #tpu.pipeline_mode<synchronous>, transform_indices = @transform_2, window_bounds = array<i64: 2, 128, 512>}, {pipeline_mode = #tpu.pipeline_mode<synchronous>, transform_indices = @transform_3, window_bounds = array<i64: 1, 1024>}, {pipeline_mode = #tpu.pipeline_mode<synchronous>, transform_indices = @transform_4, window_bounds = array<i64: 8, 2, 256>}]} {
    %c0 = arith.constant 0 : index
    %c0_0 = arith.constant 0 : index
    %0 = vector.load %arg1[%c0, %c0_0] : memref<16x256xf32, #tpu.memory_space<vmem>>, vector<16x256xf32>
    %c0_1 = arith.constant 0 : index
    %c0_2 = arith.constant 0 : index
    %1 = vector.load %arg2[%c0_1, %c0_2] : memref<256x1024xf32, #tpu.memory_space<vmem>>, vector<256x1024xf32>
    %cst = arith.constant dense<0.000000e+00> : vector<16x1024xf32>
    %2 = tpu.matmul %0, %1, %cst {dimension_numbers = #tpu.dot_dimension_numbers<[1], [0], [0], [1], [0, 0, 1, 1], [], []>} : vector<16x256xf32>, vector<256x1024xf32>, vector<16x1024xf32> -> vector<16x1024xf32>
    %c0_3 = arith.constant 0 : index
    %c0_4 = arith.constant 0 : index
    %3 = vector.load %arg4[%c0_3, %c0_4] : memref<1x1024xf32, #tpu.memory_space<vmem>>, vector<1x1024xf32>
    %4 = vector.broadcast %3 : vector<1x1024xf32> to vector<16x1024xf32>
    %5 = arith.addf %2, %4 : vector<16x1024xf32>
    %c0_5 = arith.constant 0 : index
    %c0_6 = arith.constant 0 : index
    %6 = vector.load %arg6[%c0_5, %c0_6] : memref<16x1024xf32, #tpu.memory_space<vmem>>, vector<16x1024xf32>
    tpu.vector_store %arg6[%c0_5, %c0_6], %5 {strides = array<i32>} : memref<16x1024xf32, #tpu.memory_space<vmem>>, vector<16x1024xf32>,
    %c0_7 = arith.constant 0 : index
    %c0_8 = arith.constant 0 : index
    %c0_9 = arith.constant 0 : index
    %7 = vector.load %arg3[%c0_7, %c0_8, %c0_9] : memref<2x128x512xf32, #tpu.memory_space<vmem>>, vector<1x128x512xf32>
    %8 = vector.shape_cast %7 : vector<1x128x512xf32> to vector<128x512xf32>
    %c1 = arith.constant 1 : index
    %c0_10 = arith.constant 0 : index
    %c0_11 = arith.constant 0 : index
    %9 = vector.load %arg3[%c1, %c0_10, %c0_11] : memref<2x128x512xf32, #tpu.memory_space<vmem>>, vector<1x128x512xf32>
    %10 = vector.shape_cast %9 : vector<1x128x512xf32> to vector<128x512xf32>
    %cst_12 = arith.constant 0.000000e+00 : f32
    %11 = vector.broadcast %cst_12 : f32 to vector<2x128xf32>
    %cst_13 = arith.constant 0.000000e+00 : f32
    %12 = vector.broadcast %cst_13 : f32 to vector<2x128xf32>
    %cst_14 = arith.constant 0.000000e+00 : f32
    %13 = vector.broadcast %cst_14 : f32 to vector<2x128xf32>
    %cst_15 = arith.constant 0.000000e+00 : f32
    %14 = vector.broadcast %cst_15 : f32 to vector<2x128xf32>
    %c0_16 = arith.constant 0 : index
    %c0_17 = arith.constant 0 : index
    %15 = vector.load %arg6[%c0_16, %c0_17] : memref<16x1024xf32, #tpu.memory_space<vmem>>, vector<2x512xf32>
    %cst_18 = arith.constant dense<0.000000e+00> : vector<2x512xf32>
    %16 = tpu.matmul %11, %8, %cst_18 {dimension_numbers = #tpu.dot_dimension_numbers<[1], [0], [0], [1], [0, 0, 1, 1], [], []>} : vector<2x128xf32>, vector<128x512xf32>, vector<2x512xf32> -> vector<2x512xf32>
    %17 = arith.addf %15, %16 : vector<2x512xf32>
    %c14 = arith.constant 14 : index
    %c512 = arith.constant 512 : index
    %18 = vector.load %arg6[%c14, %c512] : memref<16x1024xf32, #tpu.memory_space<vmem>>, vector<2x512xf32>
    %cst_19 = arith.constant dense<0.000000e+00> : vector<2x512xf32>
    %19 = tpu.matmul %13, %10, %cst_19 {dimension_numbers = #tpu.dot_dimension_numbers<[1], [0], [0], [1], [0, 0, 1, 1], [], []>} : vector<2x128xf32>, vector<128x512xf32>, vector<2x512xf32> -> vector<2x512xf32>
    %20 = arith.addf %18, %19 : vector<2x512xf32>
    %21 = vector.extract_strided_slice %17 {offsets = [0, 0], sizes = [2, 128], strides = [1, 1]} : vector<2x512xf32> to vector<2x128xf32>
    %22 = arith.negf %21 : vector<2x128xf32>
    %23 = math.exp %22 : vector<2x128xf32>
    %cst_20 = arith.constant 1.000000e+00 : f32
    %24 = vector.broadcast %cst_20 : f32 to vector<2x128xf32>
    %25 = arith.addf %24, %23 : vector<2x128xf32>
    %26 = arith.divf %24, %25 : vector<2x128xf32>
    %27 = vector.extract_strided_slice %17 {offsets = [0, 128], sizes = [2, 128], strides = [1, 1]} : vector<2x512xf32> to vector<2x128xf32>
    %28 = arith.negf %27 : vector<2x128xf32>
    %29 = math.exp %28 : vector<2x128xf32>
    %cst_21 = arith.constant 1.000000e+00 : f32
    %30 = vector.broadcast %cst_21 : f32 to vector<2x128xf32>
    %31 = arith.addf %30, %29 : vector<2x128xf32>
    %32 = arith.divf %30, %31 : vector<2x128xf32>
    %33 = vector.extract_strided_slice %17 {offsets = [0, 256], sizes = [2, 128], strides = [1, 1]} : vector<2x512xf32> to vector<2x128xf32>
    %34 = math.tanh %33 : vector<2x128xf32>
    %35 = vector.extract_strided_slice %17 {offsets = [0, 384], sizes = [2, 128], strides = [1, 1]} : vector<2x512xf32> to vector<2x128xf32>
    %36 = arith.negf %35 : vector<2x128xf32>
    %37 = math.exp %36 : vector<2x128xf32>
    %cst_22 = arith.constant 1.000000e+00 : f32
    %38 = vector.broadcast %cst_22 : f32 to vector<2x128xf32>
    %39 = arith.addf %38, %37 : vector<2x128xf32>
    %40 = arith.divf %38, %39 : vector<2x128xf32>
    %41 = arith.mulf %32, %12 : vector<2x128xf32>
    %42 = arith.mulf %26, %34 : vector<2x128xf32>
    %43 = arith.addf %41, %42 : vector<2x128xf32>
    %44 = math.tanh %43 : vector<2x128xf32>
    %45 = arith.mulf %40, %44 : vector<2x128xf32>
    %46 = vector.extract_strided_slice %20 {offsets = [0, 0], sizes = [2, 128], strides = [1, 1]} : vector<2x512xf32> to vector<2x128xf32>
    %47 = arith.negf %46 : vector<2x128xf32>
    %48 = math.exp %47 : vector<2x128xf32>
    %cst_23 = arith.constant 1.000000e+00 : f32
    %49 = vector.broadcast %cst_23 : f32 to vector<2x128xf32>
    %50 = arith.addf %49, %48 : vector<2x128xf32>
    %51 = arith.divf %49, %50 : vector<2x128xf32>
    %52 = vector.extract_strided_slice %20 {offsets = [0, 128], sizes = [2, 128], strides = [1, 1]} : vector<2x512xf32> to vector<2x128xf32>
    %53 = arith.negf %52 : vector<2x128xf32>
    %54 = math.exp %53 : vector<2x128xf32>
    %cst_24 = arith.constant 1.000000e+00 : f32
    %55 = vector.broadcast %cst_24 : f32 to vector<2x128xf32>
    %56 = arith.addf %55, %54 : vector<2x128xf32>
    %57 = arith.divf %55, %56 : vector<2x128xf32>
    %58 = vector.extract_strided_slice %20 {offsets = [0, 256], sizes = [2, 128], strides = [1, 1]} : vector<2x512xf32> to vector<2x128xf32>
    %59 = math.tanh %58 : vector<2x128xf32>
    %60 = vector.extract_strided_slice %20 {offsets = [0, 384], sizes = [2, 128], strides = [1, 1]} : vector<2x512xf32> to vector<2x128xf32>
    %61 = arith.negf %60 : vector<2x128xf32>
    %62 = math.exp %61 : vector<2x128xf32>
    %cst_25 = arith.constant 1.000000e+00 : f32
    %63 = vector.broadcast %cst_25 : f32 to vector<2x128xf32>
    %64 = arith.addf %63, %62 : vector<2x128xf32>
    %65 = arith.divf %63, %64 : vector<2x128xf32>
    %66 = arith.mulf %57, %14 : vector<2x128xf32>
    %67 = arith.mulf %51, %59 : vector<2x128xf32>
    %68 = arith.addf %66, %67 : vector<2x128xf32>
    %69 = math.tanh %68 : vector<2x128xf32>
    %70 = arith.mulf %65, %69 : vector<2x128xf32>
    %c0_26 = arith.constant 0 : index
    %c0_27 = arith.constant 0 : index
    %c0_28 = arith.constant 0 : index
    %71 = vector.load %arg5[%c0_26, %c0_27, %c0_28] : memref<8x2x256xf32, #tpu.memory_space<vmem>>, vector<1x2x128xf32>
    %72 = vector.shape_cast %71 : vector<1x2x128xf32> to vector<2x128xf32>
    %73 = vector.shape_cast %45 : vector<2x128xf32> to vector<1x2x128xf32>
    tpu.vector_store %arg5[%c0_26, %c0_27, %c0_28], %73 {strides = array<i32>} : memref<8x2x256xf32, #tpu.memory_space<vmem>>, vector<1x2x128xf32>,
    %c7 = arith.constant 7 : index
    %c0_29 = arith.constant 0 : index
    %c128 = arith.constant 128 : index
    %74 = vector.load %arg5[%c7, %c0_29, %c128] : memref<8x2x256xf32, #tpu.memory_space<vmem>>, vector<1x2x128xf32>
    %75 = vector.shape_cast %74 : vector<1x2x128xf32> to vector<2x128xf32>
    %76 = vector.shape_cast %70 : vector<2x128xf32> to vector<1x2x128xf32>
    tpu.vector_store %arg5[%c7, %c0_29, %c128], %76 {strides = array<i32>} : memref<8x2x256xf32, #tpu.memory_space<vmem>>, vector<1x2x128xf32>,
    %c2 = arith.constant 2 : index
    %c0_30 = arith.constant 0 : index
    %77 = vector.load %arg6[%c2, %c0_30] : memref<16x1024xf32, #tpu.memory_space<vmem>>, vector<2x512xf32>
    %cst_31 = arith.constant dense<0.000000e+00> : vector<2x512xf32>
    %78 = tpu.matmul %45, %8, %cst_31 {dimension_numbers = #tpu.dot_dimension_numbers<[1], [0], [0], [1], [0, 0, 1, 1], [], []>} : vector<2x128xf32>, vector<128x512xf32>, vector<2x512xf32> -> vector<2x512xf32>
    %79 = arith.addf %77, %78 : vector<2x512xf32>
    %c12 = arith.constant 12 : index
    %c512_32 = arith.constant 512 : index
    %80 = vector.load %arg6[%c12, %c512_32] : memref<16x1024xf32, #tpu.memory_space<vmem>>, vector<2x512xf32>
    %cst_33 = arith.constant dense<0.000000e+00> : vector<2x512xf32>
    %81 = tpu.matmul %70, %10, %cst_33 {dimension_numbers = #tpu.dot_dimension_numbers<[1], [0], [0], [1], [0, 0, 1, 1], [], []>} : vector<2x128xf32>, vector<128x512xf32>, vector<2x512xf32> -> vector<2x512xf32>
    %82 = arith.addf %80, %81 : vector<2x512xf32>
    %83 = vector.extract_strided_slice %79 {offsets = [0, 0], sizes = [2, 128], strides = [1, 1]} : vector<2x512xf32> to vector<2x128xf32>
    %84 = arith.negf %83 : vector<2x128xf32>
    %85 = math.exp %84 : vector<2x128xf32>
    %cst_34 = arith.constant 1.000000e+00 : f32
    %86 = vector.broadcast %cst_34 : f32 to vector<2x128xf32>
    %87 = arith.addf %86, %85 : vector<2x128xf32>
    %88 = arith.divf %86, %87 : vector<2x128xf32>
    %89 = vector.extract_strided_slice %79 {offsets = [0, 128], sizes = [2, 128], strides = [1, 1]} : vector<2x512xf32> to vector<2x128xf32>
    %90 = arith.negf %89 : vector<2x128xf32>
    %91 = math.exp %90 : vector<2x128xf32>
    %cst_35 = arith.constant 1.000000e+00 : f32
    %92 = vector.broadcast %cst_35 : f32 to vector<2x128xf32>
    %93 = arith.addf %92, %91 : vector<2x128xf32>
    %94 = arith.divf %92, %93 : vector<2x128xf32>
    %95 = vector.extract_strided_slice %79 {offsets = [0, 256], sizes = [2, 128], strides = [1, 1]} : vector<2x512xf32> to vector<2x128xf32>
    %96 = math.tanh %95 : vector<2x128xf32>
    %97 = vector.extract_strided_slice %79 {offsets = [0, 384], sizes = [2, 128], strides = [1, 1]} : vector<2x512xf32> to vector<2x128xf32>
    %98 = arith.negf %97 : vector<2x128xf32>
    %99 = math.exp %98 : vector<2x128xf32>
    %cst_36 = arith.constant 1.000000e+00 : f32
    %100 = vector.broadcast %cst_36 : f32 to vector<2x128xf32>
    %101 = arith.addf %100, %99 : vector<2x128xf32>
    %102 = arith.divf %100, %101 : vector<2x128xf32>
    %103 = arith.mulf %94, %43 : vector<2x128xf32>
    %104 = arith.mulf %88, %96 : vector<2x128xf32>
    %105 = arith.addf %103, %104 : vector<2x128xf32>
    %106 = math.tanh %105 : vector<2x128xf32>
    %107 = arith.mulf %102, %106 : vector<2x128xf32>
    %108 = vector.extract_strided_slice %82 {offsets = [0, 0], sizes = [2, 128], strides = [1, 1]} : vector<2x512xf32> to vector<2x128xf32>
    %109 = arith.negf %108 : vector<2x128xf32>
    %110 = math.exp %109 : vector<2x128xf32>
    %cst_37 = arith.constant 1.000000e+00 : f32
    %111 = vector.broadcast %cst_37 : f32 to vector<2x128xf32>
    %112 = arith.addf %111, %110 : vector<2x128xf32>
    %113 = arith.divf %111, %112 : vector<2x128xf32>
    %114 = vector.extract_strided_slice %82 {offsets = [0, 128], sizes = [2, 128], strides = [1, 1]} : vector<2x512xf32> to vector<2x128xf32>
    %115 = arith.negf %114 : vector<2x128xf32>
    %116 = math.exp %115 : vector<2x128xf32>
    %cst_38 = arith.constant 1.000000e+00 : f32
    %117 = vector.broadcast %cst_38 : f32 to vector<2x128xf32>
    %118 = arith.addf %117, %116 : vector<2x128xf32>
    %119 = arith.divf %117, %118 : vector<2x128xf32>
    %120 = vector.extract_strided_slice %82 {offsets = [0, 256], sizes = [2, 128], strides = [1, 1]} : vector<2x512xf32> to vector<2x128xf32>
    %121 = math.tanh %120 : vector<2x128xf32>
    %122 = vector.extract_strided_slice %82 {offsets = [0, 384], sizes = [2, 128], strides = [1, 1]} : vector<2x512xf32> to vector<2x128xf32>
    %123 = arith.negf %122 : vector<2x128xf32>
    %124 = math.exp %123 : vector<2x128xf32>
    %cst_39 = arith.constant 1.000000e+00 : f32
    %125 = vector.broadcast %cst_39 : f32 to vector<2x128xf32>
    %126 = arith.addf %125, %124 : vector<2x128xf32>
    %127 = arith.divf %125, %126 : vector<2x128xf32>
    %128 = arith.mulf %119, %68 : vector<2x128xf32>
    %129 = arith.mulf %113, %121 : vector<2x128xf32>
    %130 = arith.addf %128, %129 : vector<2x128xf32>
    %131 = math.tanh %130 : vector<2x128xf32>
    %132 = arith.mulf %127, %131 : vector<2x128xf32>
    %c1_40 = arith.constant 1 : index
    %c0_41 = arith.constant 0 : index
    %c0_42 = arith.constant 0 : index
    %133 = vector.load %arg5[%c1_40, %c0_41, %c0_42] : memref<8x2x256xf32, #tpu.memory_space<vmem>>, vector<1x2x128xf32>
    %134 = vector.shape_cast %133 : vector<1x2x128xf32> to vector<2x128xf32>
    %135 = vector.shape_cast %107 : vector<2x128xf32> to vector<1x2x128xf32>
    tpu.vector_store %arg5[%c1_40, %c0_41, %c0_42], %135 {strides = array<i32>} : memref<8x2x256xf32, #tpu.memory_space<vmem>>, vector<1x2x128xf32>,
    %c6 = arith.constant 6 : index
    %c0_43 = arith.constant 0 : index
    %c128_44 = arith.constant 128 : index
    %136 = vector.load %arg5[%c6, %c0_43, %c128_44] : memref<8x2x256xf32, #tpu.memory_space<vmem>>, vector<1x2x128xf32>
    %137 = vector.shape_cast %136 : vector<1x2x128xf32> to vector<2x128xf32>
    %138 = vector.shape_cast %132 : vector<2x128xf32> to vector<1x2x128xf32>
    tpu.vector_store %arg5[%c6, %c0_43, %c128_44], %138 {strides = array<i32>} : memref<8x2x256xf32, #tpu.memory_space<vmem>>, vector<1x2x128xf32>,
    %c4 = arith.constant 4 : index
    %c0_45 = arith.constant 0 : index
    %139 = vector.load %arg6[%c4, %c0_45] : memref<16x1024xf32, #tpu.memory_space<vmem>>, vector<2x512xf32>
    %cst_46 = arith.constant dense<0.000000e+00> : vector<2x512xf32>
    %140 = tpu.matmul %107, %8, %cst_46 {dimension_numbers = #tpu.dot_dimension_numbers<[1], [0], [0], [1], [0, 0, 1, 1], [], []>} : vector<2x128xf32>, vector<128x512xf32>, vector<2x512xf32> -> vector<2x512xf32>
    %141 = arith.addf %139, %140 : vector<2x512xf32>
    %c10 = arith.constant 10 : index
    %c512_47 = arith.constant 512 : index
    %142 = vector.load %arg6[%c10, %c512_47] : memref<16x1024xf32, #tpu.memory_space<vmem>>, vector<2x512xf32>
    %cst_48 = arith.constant dense<0.000000e+00> : vector<2x512xf32>
    %143 = tpu.matmul %132, %10, %cst_48 {dimension_numbers = #tpu.dot_dimension_numbers<[1], [0], [0], [1], [0, 0, 1, 1], [], []>} : vector<2x128xf32>, vector<128x512xf32>, vector<2x512xf32> -> vector<2x512xf32>
    %144 = arith.addf %142, %143 : vector<2x512xf32>
    %145 = vector.extract_strided_slice %141 {offsets = [0, 0], sizes = [2, 128], strides = [1, 1]} : vector<2x512xf32> to vector<2x128xf32>
    %146 = arith.negf %145 : vector<2x128xf32>
    %147 = math.exp %146 : vector<2x128xf32>
    %cst_49 = arith.constant 1.000000e+00 : f32
    %148 = vector.broadcast %cst_49 : f32 to vector<2x128xf32>
    %149 = arith.addf %148, %147 : vector<2x128xf32>
    %150 = arith.divf %148, %149 : vector<2x128xf32>
    %151 = vector.extract_strided_slice %141 {offsets = [0, 128], sizes = [2, 128], strides = [1, 1]} : vector<2x512xf32> to vector<2x128xf32>
    %152 = arith.negf %151 : vector<2x128xf32>
    %153 = math.exp %152 : vector<2x128xf32>
    %cst_50 = arith.constant 1.000000e+00 : f32
    %154 = vector.broadcast %cst_50 : f32 to vector<2x128xf32>
    %155 = arith.addf %154, %153 : vector<2x128xf32>
    %156 = arith.divf %154, %155 : vector<2x128xf32>
    %157 = vector.extract_strided_slice %141 {offsets = [0, 256], sizes = [2, 128], strides = [1, 1]} : vector<2x512xf32> to vector<2x128xf32>
    %158 = math.tanh %157 : vector<2x128xf32>
    %159 = vector.extract_strided_slice %141 {offsets = [0, 384], sizes = [2, 128], strides = [1, 1]} : vector<2x512xf32> to vector<2x128xf32>
    %160 = arith.negf %159 : vector<2x128xf32>
    %161 = math.exp %160 : vector<2x128xf32>
    %cst_51 = arith.constant 1.000000e+00 : f32
    %162 = vector.broadcast %cst_51 : f32 to vector<2x128xf32>
    %163 = arith.addf %162, %161 : vector<2x128xf32>
    %164 = arith.divf %162, %163 : vector<2x128xf32>
    %165 = arith.mulf %156, %105 : vector<2x128xf32>
    %166 = arith.mulf %150, %158 : vector<2x128xf32>
    %167 = arith.addf %165, %166 : vector<2x128xf32>
    %168 = math.tanh %167 : vector<2x128xf32>
    %169 = arith.mulf %164, %168 : vector<2x128xf32>
    %170 = vector.extract_strided_slice %144 {offsets = [0, 0], sizes = [2, 128], strides = [1, 1]} : vector<2x512xf32> to vector<2x128xf32>
    %171 = arith.negf %170 : vector<2x128xf32>
    %172 = math.exp %171 : vector<2x128xf32>
    %cst_52 = arith.constant 1.000000e+00 : f32
    %173 = vector.broadcast %cst_52 : f32 to vector<2x128xf32>
    %174 = arith.addf %173, %172 : vector<2x128xf32>
    %175 = arith.divf %173, %174 : vector<2x128xf32>
    %176 = vector.extract_strided_slice %144 {offsets = [0, 128], sizes = [2, 128], strides = [1, 1]} : vector<2x512xf32> to vector<2x128xf32>
    %177 = arith.negf %176 : vector<2x128xf32>
    %178 = math.exp %177 : vector<2x128xf32>
    %cst_53 = arith.constant 1.000000e+00 : f32
    %179 = vector.broadcast %cst_53 : f32 to vector<2x128xf32>
    %180 = arith.addf %179, %178 : vector<2x128xf32>
    %181 = arith.divf %179, %180 : vector<2x128xf32>
    %182 = vector.extract_strided_slice %144 {offsets = [0, 256], sizes = [2, 128], strides = [1, 1]} : vector<2x512xf32> to vector<2x128xf32>
    %183 = math.tanh %182 : vector<2x128xf32>
    %184 = vector.extract_strided_slice %144 {offsets = [0, 384], sizes = [2, 128], strides = [1, 1]} : vector<2x512xf32> to vector<2x128xf32>
    %185 = arith.negf %184 : vector<2x128xf32>
    %186 = math.exp %185 : vector<2x128xf32>
    %cst_54 = arith.constant 1.000000e+00 : f32
    %187 = vector.broadcast %cst_54 : f32 to vector<2x128xf32>
    %188 = arith.addf %187, %186 : vector<2x128xf32>
    %189 = arith.divf %187, %188 : vector<2x128xf32>
    %190 = arith.mulf %181, %130 : vector<2x128xf32>
    %191 = arith.mulf %175, %183 : vector<2x128xf32>
    %192 = arith.addf %190, %191 : vector<2x128xf32>
    %193 = math.tanh %192 : vector<2x128xf32>
    %194 = arith.mulf %189, %193 : vector<2x128xf32>
    %c2_55 = arith.constant 2 : index
    %c0_56 = arith.constant 0 : index
    %c0_57 = arith.constant 0 : index
    %195 = vector.load %arg5[%c2_55, %c0_56, %c0_57] : memref<8x2x256xf32, #tpu.memory_space<vmem>>, vector<1x2x128xf32>
    %196 = vector.shape_cast %195 : vector<1x2x128xf32> to vector<2x128xf32>
    %197 = vector.shape_cast %169 : vector<2x128xf32> to vector<1x2x128xf32>
    tpu.vector_store %arg5[%c2_55, %c0_56, %c0_57], %197 {strides = array<i32>} : memref<8x2x256xf32, #tpu.memory_space<vmem>>, vector<1x2x128xf32>,
    %c5 = arith.constant 5 : index
    %c0_58 = arith.constant 0 : index
    %c128_59 = arith.constant 128 : index
    %198 = vector.load %arg5[%c5, %c0_58, %c128_59] : memref<8x2x256xf32, #tpu.memory_space<vmem>>, vector<1x2x128xf32>
    %199 = vector.shape_cast %198 : vector<1x2x128xf32> to vector<2x128xf32>
    %200 = vector.shape_cast %194 : vector<2x128xf32> to vector<1x2x128xf32>
    tpu.vector_store %arg5[%c5, %c0_58, %c128_59], %200 {strides = array<i32>} : memref<8x2x256xf32, #tpu.memory_space<vmem>>, vector<1x2x128xf32>,
    %c6_60 = arith.constant 6 : index
    %c0_61 = arith.constant 0 : index
    %201 = vector.load %arg6[%c6_60, %c0_61] : memref<16x1024xf32, #tpu.memory_space<vmem>>, vector<2x512xf32>
    %cst_62 = arith.constant dense<0.000000e+00> : vector<2x512xf32>
    %202 = tpu.matmul %169, %8, %cst_62 {dimension_numbers = #tpu.dot_dimension_numbers<[1], [0], [0], [1], [0, 0, 1, 1], [], []>} : vector<2x128xf32>, vector<128x512xf32>, vector<2x512xf32> -> vector<2x512xf32>
    %203 = arith.addf %201, %202 : vector<2x512xf32>
    %c8 = arith.constant 8 : index
    %c512_63 = arith.constant 512 : index
    %204 = vector.load %arg6[%c8, %c512_63] : memref<16x1024xf32, #tpu.memory_space<vmem>>, vector<2x512xf32>
    %cst_64 = arith.constant dense<0.000000e+00> : vector<2x512xf32>
    %205 = tpu.matmul %194, %10, %cst_64 {dimension_numbers = #tpu.dot_dimension_numbers<[1], [0], [0], [1], [0, 0, 1, 1], [], []>} : vector<2x128xf32>, vector<128x512xf32>, vector<2x512xf32> -> vector<2x512xf32>
    %206 = arith.addf %204, %205 : vector<2x512xf32>
    %207 = vector.extract_strided_slice %203 {offsets = [0, 0], sizes = [2, 128], strides = [1, 1]} : vector<2x512xf32> to vector<2x128xf32>
    %208 = arith.negf %207 : vector<2x128xf32>
    %209 = math.exp %208 : vector<2x128xf32>
    %cst_65 = arith.constant 1.000000e+00 : f32
    %210 = vector.broadcast %cst_65 : f32 to vector<2x128xf32>
    %211 = arith.addf %210, %209 : vector<2x128xf32>
    %212 = arith.divf %210, %211 : vector<2x128xf32>
    %213 = vector.extract_strided_slice %203 {offsets = [0, 128], sizes = [2, 128], strides = [1, 1]} : vector<2x512xf32> to vector<2x128xf32>
    %214 = arith.negf %213 : vector<2x128xf32>
    %215 = math.exp %214 : vector<2x128xf32>
    %cst_66 = arith.constant 1.000000e+00 : f32
    %216 = vector.broadcast %cst_66 : f32 to vector<2x128xf32>
    %217 = arith.addf %216, %215 : vector<2x128xf32>
    %218 = arith.divf %216, %217 : vector<2x128xf32>
    %219 = vector.extract_strided_slice %203 {offsets = [0, 256], sizes = [2, 128], strides = [1, 1]} : vector<2x512xf32> to vector<2x128xf32>
    %220 = math.tanh %219 : vector<2x128xf32>
    %221 = vector.extract_strided_slice %203 {offsets = [0, 384], sizes = [2, 128], strides = [1, 1]} : vector<2x512xf32> to vector<2x128xf32>
    %222 = arith.negf %221 : vector<2x128xf32>
    %223 = math.exp %222 : vector<2x128xf32>
    %cst_67 = arith.constant 1.000000e+00 : f32
    %224 = vector.broadcast %cst_67 : f32 to vector<2x128xf32>
    %225 = arith.addf %224, %223 : vector<2x128xf32>
    %226 = arith.divf %224, %225 : vector<2x128xf32>
    %227 = arith.mulf %218, %167 : vector<2x128xf32>
    %228 = arith.mulf %212, %220 : vector<2x128xf32>
    %229 = arith.addf %227, %228 : vector<2x128xf32>
    %230 = math.tanh %229 : vector<2x128xf32>
    %231 = arith.mulf %226, %230 : vector<2x128xf32>
    %232 = vector.extract_strided_slice %206 {offsets = [0, 0], sizes = [2, 128], strides = [1, 1]} : vector<2x512xf32> to vector<2x128xf32>
    %233 = arith.negf %232 : vector<2x128xf32>
    %234 = math.exp %233 : vector<2x128xf32>
    %cst_68 = arith.constant 1.000000e+00 : f32
    %235 = vector.broadcast %cst_68 : f32 to vector<2x128xf32>
    %236 = arith.addf %235, %234 : vector<2x128xf32>
    %237 = arith.divf %235, %236 : vector<2x128xf32>
    %238 = vector.extract_strided_slice %206 {offsets = [0, 128], sizes = [2, 128], strides = [1, 1]} : vector<2x512xf32> to vector<2x128xf32>
    %239 = arith.negf %238 : vector<2x128xf32>
    %240 = math.exp %239 : vector<2x128xf32>
    %cst_69 = arith.constant 1.000000e+00 : f32
    %241 = vector.broadcast %cst_69 : f32 to vector<2x128xf32>
    %242 = arith.addf %241, %240 : vector<2x128xf32>
    %243 = arith.divf %241, %242 : vector<2x128xf32>
    %244 = vector.extract_strided_slice %206 {offsets = [0, 256], sizes = [2, 128], strides = [1, 1]} : vector<2x512xf32> to vector<2x128xf32>
    %245 = math.tanh %244 : vector<2x128xf32>
    %246 = vector.extract_strided_slice %206 {offsets = [0, 384], sizes = [2, 128], strides = [1, 1]} : vector<2x512xf32> to vector<2x128xf32>
    %247 = arith.negf %246 : vector<2x128xf32>
    %248 = math.exp %247 : vector<2x128xf32>
    %cst_70 = arith.constant 1.000000e+00 : f32
    %249 = vector.broadcast %cst_70 : f32 to vector<2x128xf32>
    %250 = arith.addf %249, %248 : vector<2x128xf32>
    %251 = arith.divf %249, %250 : vector<2x128xf32>
    %252 = arith.mulf %243, %192 : vector<2x128xf32>
    %253 = arith.mulf %237, %245 : vector<2x128xf32>
    %254 = arith.addf %252, %253 : vector<2x128xf32>
    %255 = math.tanh %254 : vector<2x128xf32>
    %256 = arith.mulf %251, %255 : vector<2x128xf32>
    %c3 = arith.constant 3 : index
    %c0_71 = arith.constant 0 : index
    %c0_72 = arith.constant 0 : index
    %257 = vector.load %arg5[%c3, %c0_71, %c0_72] : memref<8x2x256xf32, #tpu.memory_space<vmem>>, vector<1x2x128xf32>
    %258 = vector.shape_cast %257 : vector<1x2x128xf32> to vector<2x128xf32>
    %259 = vector.shape_cast %231 : vector<2x128xf32> to vector<1x2x128xf32>
    tpu.vector_store %arg5[%c3, %c0_71, %c0_72], %259 {strides = array<i32>} : memref<8x2x256xf32, #tpu.memory_space<vmem>>, vector<1x2x128xf32>,
    %c4_73 = arith.constant 4 : index
    %c0_74 = arith.constant 0 : index
    %c128_75 = arith.constant 128 : index
    %260 = vector.load %arg5[%c4_73, %c0_74, %c128_75] : memref<8x2x256xf32, #tpu.memory_space<vmem>>, vector<1x2x128xf32>
    %261 = vector.shape_cast %260 : vector<1x2x128xf32> to vector<2x128xf32>
    %262 = vector.shape_cast %256 : vector<2x128xf32> to vector<1x2x128xf32>
    tpu.vector_store %arg5[%c4_73, %c0_74, %c128_75], %262 {strides = array<i32>} : memref<8x2x256xf32, #tpu.memory_space<vmem>>, vector<1x2x128xf32>,
    %c8_76 = arith.constant 8 : index
    %c0_77 = arith.constant 0 : index
    %263 = vector.load %arg6[%c8_76, %c0_77] : memref<16x1024xf32, #tpu.memory_space<vmem>>, vector<2x512xf32>
    %cst_78 = arith.constant dense<0.000000e+00> : vector<2x512xf32>
    %264 = tpu.matmul %231, %8, %cst_78 {dimension_numbers = #tpu.dot_dimension_numbers<[1], [0], [0], [1], [0, 0, 1, 1], [], []>} : vector<2x128xf32>, vector<128x512xf32>, vector<2x512xf32> -> vector<2x512xf32>
    %265 = arith.addf %263, %264 : vector<2x512xf32>
    %c6_79 = arith.constant 6 : index
    %c512_80 = arith.constant 512 : index
    %266 = vector.load %arg6[%c6_79, %c512_80] : memref<16x1024xf32, #tpu.memory_space<vmem>>, vector<2x512xf32>
    %cst_81 = arith.constant dense<0.000000e+00> : vector<2x512xf32>
    %267 = tpu.matmul %256, %10, %cst_81 {dimension_numbers = #tpu.dot_dimension_numbers<[1], [0], [0], [1], [0, 0, 1, 1], [], []>} : vector<2x128xf32>, vector<128x512xf32>, vector<2x512xf32> -> vector<2x512xf32>
    %268 = arith.addf %266, %267 : vector<2x512xf32>
    %269 = vector.extract_strided_slice %265 {offsets = [0, 0], sizes = [2, 128], strides = [1, 1]} : vector<2x512xf32> to vector<2x128xf32>
    %270 = arith.negf %269 : vector<2x128xf32>
    %271 = math.exp %270 : vector<2x128xf32>
    %cst_82 = arith.constant 1.000000e+00 : f32
    %272 = vector.broadcast %cst_82 : f32 to vector<2x128xf32>
    %273 = arith.addf %272, %271 : vector<2x128xf32>
    %274 = arith.divf %272, %273 : vector<2x128xf32>
    %275 = vector.extract_strided_slice %265 {offsets = [0, 128], sizes = [2, 128], strides = [1, 1]} : vector<2x512xf32> to vector<2x128xf32>
    %276 = arith.negf %275 : vector<2x128xf32>
    %277 = math.exp %276 : vector<2x128xf32>
    %cst_83 = arith.constant 1.000000e+00 : f32
    %278 = vector.broadcast %cst_83 : f32 to vector<2x128xf32>
    %279 = arith.addf %278, %277 : vector<2x128xf32>
    %280 = arith.divf %278, %279 : vector<2x128xf32>
    %281 = vector.extract_strided_slice %265 {offsets = [0, 256], sizes = [2, 128], strides = [1, 1]} : vector<2x512xf32> to vector<2x128xf32>
    %282 = math.tanh %281 : vector<2x128xf32>
    %283 = vector.extract_strided_slice %265 {offsets = [0, 384], sizes = [2, 128], strides = [1, 1]} : vector<2x512xf32> to vector<2x128xf32>
    %284 = arith.negf %283 : vector<2x128xf32>
    %285 = math.exp %284 : vector<2x128xf32>
    %cst_84 = arith.constant 1.000000e+00 : f32
    %286 = vector.broadcast %cst_84 : f32 to vector<2x128xf32>
    %287 = arith.addf %286, %285 : vector<2x128xf32>
    %288 = arith.divf %286, %287 : vector<2x128xf32>
    %289 = arith.mulf %280, %229 : vector<2x128xf32>
    %290 = arith.mulf %274, %282 : vector<2x128xf32>
    %291 = arith.addf %289, %290 : vector<2x128xf32>
    %292 = math.tanh %291 : vector<2x128xf32>
    %293 = arith.mulf %288, %292 : vector<2x128xf32>
    %294 = vector.extract_strided_slice %268 {offsets = [0, 0], sizes = [2, 128], strides = [1, 1]} : vector<2x512xf32> to vector<2x128xf32>
    %295 = arith.negf %294 : vector<2x128xf32>
    %296 = math.exp %295 : vector<2x128xf32>
    %cst_85 = arith.constant 1.000000e+00 : f32
    %297 = vector.broadcast %cst_85 : f32 to vector<2x128xf32>
    %298 = arith.addf %297, %296 : vector<2x128xf32>
    %299 = arith.divf %297, %298 : vector<2x128xf32>
    %300 = vector.extract_strided_slice %268 {offsets = [0, 128], sizes = [2, 128], strides = [1, 1]} : vector<2x512xf32> to vector<2x128xf32>
    %301 = arith.negf %300 : vector<2x128xf32>
    %302 = math.exp %301 : vector<2x128xf32>
    %cst_86 = arith.constant 1.000000e+00 : f32
    %303 = vector.broadcast %cst_86 : f32 to vector<2x128xf32>
    %304 = arith.addf %303, %302 : vector<2x128xf32>
    %305 = arith.divf %303, %304 : vector<2x128xf32>
    %306 = vector.extract_strided_slice %268 {offsets = [0, 256], sizes = [2, 128], strides = [1, 1]} : vector<2x512xf32> to vector<2x128xf32>
    %307 = math.tanh %306 : vector<2x128xf32>
    %308 = vector.extract_strided_slice %268 {offsets = [0, 384], sizes = [2, 128], strides = [1, 1]} : vector<2x512xf32> to vector<2x128xf32>
    %309 = arith.negf %308 : vector<2x128xf32>
    %310 = math.exp %309 : vector<2x128xf32>
    %cst_87 = arith.constant 1.000000e+00 : f32
    %311 = vector.broadcast %cst_87 : f32 to vector<2x128xf32>
    %312 = arith.addf %311, %310 : vector<2x128xf32>
    %313 = arith.divf %311, %312 : vector<2x128xf32>
    %314 = arith.mulf %305, %254 : vector<2x128xf32>
    %315 = arith.mulf %299, %307 : vector<2x128xf32>
    %316 = arith.addf %314, %315 : vector<2x128xf32>
    %317 = math.tanh %316 : vector<2x128xf32>
    %318 = arith.mulf %313, %317 : vector<2x128xf32>
    %c4_88 = arith.constant 4 : index
    %c0_89 = arith.constant 0 : index
    %c0_90 = arith.constant 0 : index
    %319 = vector.load %arg5[%c4_88, %c0_89, %c0_90] : memref<8x2x256xf32, #tpu.memory_space<vmem>>, vector<1x2x128xf32>
    %320 = vector.shape_cast %319 : vector<1x2x128xf32> to vector<2x128xf32>
    %321 = vector.shape_cast %293 : vector<2x128xf32> to vector<1x2x128xf32>
    tpu.vector_store %arg5[%c4_88, %c0_89, %c0_90], %321 {strides = array<i32>} : memref<8x2x256xf32, #tpu.memory_space<vmem>>, vector<1x2x128xf32>,
    %c3_91 = arith.constant 3 : index
    %c0_92 = arith.constant 0 : index
    %c128_93 = arith.constant 128 : index
    %322 = vector.load %arg5[%c3_91, %c0_92, %c128_93] : memref<8x2x256xf32, #tpu.memory_space<vmem>>, vector<1x2x128xf32>
    %323 = vector.shape_cast %322 : vector<1x2x128xf32> to vector<2x128xf32>
    %324 = vector.shape_cast %318 : vector<2x128xf32> to vector<1x2x128xf32>
    tpu.vector_store %arg5[%c3_91, %c0_92, %c128_93], %324 {strides = array<i32>} : memref<8x2x256xf32, #tpu.memory_space<vmem>>, vector<1x2x128xf32>,
    %c10_94 = arith.constant 10 : index
    %c0_95 = arith.constant 0 : index
    %325 = vector.load %arg6[%c10_94, %c0_95] : memref<16x1024xf32, #tpu.memory_space<vmem>>, vector<2x512xf32>
    %cst_96 = arith.constant dense<0.000000e+00> : vector<2x512xf32>
    %326 = tpu.matmul %293, %8, %cst_96 {dimension_numbers = #tpu.dot_dimension_numbers<[1], [0], [0], [1], [0, 0, 1, 1], [], []>} : vector<2x128xf32>, vector<128x512xf32>, vector<2x512xf32> -> vector<2x512xf32>
    %327 = arith.addf %325, %326 : vector<2x512xf32>
    %c4_97 = arith.constant 4 : index
    %c512_98 = arith.constant 512 : index
    %328 = vector.load %arg6[%c4_97, %c512_98] : memref<16x1024xf32, #tpu.memory_space<vmem>>, vector<2x512xf32>
    %cst_99 = arith.constant dense<0.000000e+00> : vector<2x512xf32>
    %329 = tpu.matmul %318, %10, %cst_99 {dimension_numbers = #tpu.dot_dimension_numbers<[1], [0], [0], [1], [0, 0, 1, 1], [], []>} : vector<2x128xf32>, vector<128x512xf32>, vector<2x512xf32> -> vector<2x512xf32>
    %330 = arith.addf %328, %329 : vector<2x512xf32>
    %331 = vector.extract_strided_slice %327 {offsets = [0, 0], sizes = [2, 128], strides = [1, 1]} : vector<2x512xf32> to vector<2x128xf32>
    %332 = arith.negf %331 : vector<2x128xf32>
    %333 = math.exp %332 : vector<2x128xf32>
    %cst_100 = arith.constant 1.000000e+00 : f32
    %334 = vector.broadcast %cst_100 : f32 to vector<2x128xf32>
    %335 = arith.addf %334, %333 : vector<2x128xf32>
    %336 = arith.divf %334, %335 : vector<2x128xf32>
    %337 = vector.extract_strided_slice %327 {offsets = [0, 128], sizes = [2, 128], strides = [1, 1]} : vector<2x512xf32> to vector<2x128xf32>
    %338 = arith.negf %337 : vector<2x128xf32>
    %339 = math.exp %338 : vector<2x128xf32>
    %cst_101 = arith.constant 1.000000e+00 : f32
    %340 = vector.broadcast %cst_101 : f32 to vector<2x128xf32>
    %341 = arith.addf %340, %339 : vector<2x128xf32>
    %342 = arith.divf %340, %341 : vector<2x128xf32>
    %343 = vector.extract_strided_slice %327 {offsets = [0, 256], sizes = [2, 128], strides = [1, 1]} : vector<2x512xf32> to vector<2x128xf32>
    %344 = math.tanh %343 : vector<2x128xf32>
    %345 = vector.extract_strided_slice %327 {offsets = [0, 384], sizes = [2, 128], strides = [1, 1]} : vector<2x512xf32> to vector<2x128xf32>
    %346 = arith.negf %345 : vector<2x128xf32>
    %347 = math.exp %346 : vector<2x128xf32>
    %cst_102 = arith.constant 1.000000e+00 : f32
    %348 = vector.broadcast %cst_102 : f32 to vector<2x128xf32>
    %349 = arith.addf %348, %347 : vector<2x128xf32>
    %350 = arith.divf %348, %349 : vector<2x128xf32>
    %351 = arith.mulf %342, %291 : vector<2x128xf32>
    %352 = arith.mulf %336, %344 : vector<2x128xf32>
    %353 = arith.addf %351, %352 : vector<2x128xf32>
    %354 = math.tanh %353 : vector<2x128xf32>
    %355 = arith.mulf %350, %354 : vector<2x128xf32>
    %356 = vector.extract_strided_slice %330 {offsets = [0, 0], sizes = [2, 128], strides = [1, 1]} : vector<2x512xf32> to vector<2x128xf32>
    %357 = arith.negf %356 : vector<2x128xf32>
    %358 = math.exp %357 : vector<2x128xf32>
    %cst_103 = arith.constant 1.000000e+00 : f32
    %359 = vector.broadcast %cst_103 : f32 to vector<2x128xf32>
    %360 = arith.addf %359, %358 : vector<2x128xf32>
    %361 = arith.divf %359, %360 : vector<2x128xf32>
    %362 = vector.extract_strided_slice %330 {offsets = [0, 128], sizes = [2, 128], strides = [1, 1]} : vector<2x512xf32> to vector<2x128xf32>
    %363 = arith.negf %362 : vector<2x128xf32>
    %364 = math.exp %363 : vector<2x128xf32>
    %cst_104 = arith.constant 1.000000e+00 : f32
    %365 = vector.broadcast %cst_104 : f32 to vector<2x128xf32>
    %366 = arith.addf %365, %364 : vector<2x128xf32>
    %367 = arith.divf %365, %366 : vector<2x128xf32>
    %368 = vector.extract_strided_slice %330 {offsets = [0, 256], sizes = [2, 128], strides = [1, 1]} : vector<2x512xf32> to vector<2x128xf32>
    %369 = math.tanh %368 : vector<2x128xf32>
    %370 = vector.extract_strided_slice %330 {offsets = [0, 384], sizes = [2, 128], strides = [1, 1]} : vector<2x512xf32> to vector<2x128xf32>
    %371 = arith.negf %370 : vector<2x128xf32>
    %372 = math.exp %371 : vector<2x128xf32>
    %cst_105 = arith.constant 1.000000e+00 : f32
    %373 = vector.broadcast %cst_105 : f32 to vector<2x128xf32>
    %374 = arith.addf %373, %372 : vector<2x128xf32>
    %375 = arith.divf %373, %374 : vector<2x128xf32>
    %376 = arith.mulf %367, %316 : vector<2x128xf32>
    %377 = arith.mulf %361, %369 : vector<2x128xf32>
    %378 = arith.addf %376, %377 : vector<2x128xf32>
    %379 = math.tanh %378 : vector<2x128xf32>
    %380 = arith.mulf %375, %379 : vector<2x128xf32>
    %c5_106 = arith.constant 5 : index
    %c0_107 = arith.constant 0 : index
    %c0_108 = arith.constant 0 : index
    %381 = vector.load %arg5[%c5_106, %c0_107, %c0_108] : memref<8x2x256xf32, #tpu.memory_space<vmem>>, vector<1x2x128xf32>
    %382 = vector.shape_cast %381 : vector<1x2x128xf32> to vector<2x128xf32>
    %383 = vector.shape_cast %355 : vector<2x128xf32> to vector<1x2x128xf32>
    tpu.vector_store %arg5[%c5_106, %c0_107, %c0_108], %383 {strides = array<i32>} : memref<8x2x256xf32, #tpu.memory_space<vmem>>, vector<1x2x128xf32>,
    %c2_109 = arith.constant 2 : index
    %c0_110 = arith.constant 0 : index
    %c128_111 = arith.constant 128 : index
    %384 = vector.load %arg5[%c2_109, %c0_110, %c128_111] : memref<8x2x256xf32, #tpu.memory_space<vmem>>, vector<1x2x128xf32>
    %385 = vector.shape_cast %384 : vector<1x2x128xf32> to vector<2x128xf32>
    %386 = vector.shape_cast %380 : vector<2x128xf32> to vector<1x2x128xf32>
    tpu.vector_store %arg5[%c2_109, %c0_110, %c128_111], %386 {strides = array<i32>} : memref<8x2x256xf32, #tpu.memory_space<vmem>>, vector<1x2x128xf32>,
    %c12_112 = arith.constant 12 : index
    %c0_113 = arith.constant 0 : index
    %387 = vector.load %arg6[%c12_112, %c0_113] : memref<16x1024xf32, #tpu.memory_space<vmem>>, vector<2x512xf32>
    %cst_114 = arith.constant dense<0.000000e+00> : vector<2x512xf32>
    %388 = tpu.matmul %355, %8, %cst_114 {dimension_numbers = #tpu.dot_dimension_numbers<[1], [0], [0], [1], [0, 0, 1, 1], [], []>} : vector<2x128xf32>, vector<128x512xf32>, vector<2x512xf32> -> vector<2x512xf32>
    %389 = arith.addf %387, %388 : vector<2x512xf32>
    %c2_115 = arith.constant 2 : index
    %c512_116 = arith.constant 512 : index
    %390 = vector.load %arg6[%c2_115, %c512_116] : memref<16x1024xf32, #tpu.memory_space<vmem>>, vector<2x512xf32>
    %cst_117 = arith.constant dense<0.000000e+00> : vector<2x512xf32>
    %391 = tpu.matmul %380, %10, %cst_117 {dimension_numbers = #tpu.dot_dimension_numbers<[1], [0], [0], [1], [0, 0, 1, 1], [], []>} : vector<2x128xf32>, vector<128x512xf32>, vector<2x512xf32> -> vector<2x512xf32>
    %392 = arith.addf %390, %391 : vector<2x512xf32>
    %393 = vector.extract_strided_slice %389 {offsets = [0, 0], sizes = [2, 128], strides = [1, 1]} : vector<2x512xf32> to vector<2x128xf32>
    %394 = arith.negf %393 : vector<2x128xf32>
    %395 = math.exp %394 : vector<2x128xf32>
    %cst_118 = arith.constant 1.000000e+00 : f32
    %396 = vector.broadcast %cst_118 : f32 to vector<2x128xf32>
    %397 = arith.addf %396, %395 : vector<2x128xf32>
    %398 = arith.divf %396, %397 : vector<2x128xf32>
    %399 = vector.extract_strided_slice %389 {offsets = [0, 128], sizes = [2, 128], strides = [1, 1]} : vector<2x512xf32> to vector<2x128xf32>
    %400 = arith.negf %399 : vector<2x128xf32>
    %401 = math.exp %400 : vector<2x128xf32>
    %cst_119 = arith.constant 1.000000e+00 : f32
    %402 = vector.broadcast %cst_119 : f32 to vector<2x128xf32>
    %403 = arith.addf %402, %401 : vector<2x128xf32>
    %404 = arith.divf %402, %403 : vector<2x128xf32>
    %405 = vector.extract_strided_slice %389 {offsets = [0, 256], sizes = [2, 128], strides = [1, 1]} : vector<2x512xf32> to vector<2x128xf32>
    %406 = math.tanh %405 : vector<2x128xf32>
    %407 = vector.extract_strided_slice %389 {offsets = [0, 384], sizes = [2, 128], strides = [1, 1]} : vector<2x512xf32> to vector<2x128xf32>
    %408 = arith.negf %407 : vector<2x128xf32>
    %409 = math.exp %408 : vector<2x128xf32>
    %cst_120 = arith.constant 1.000000e+00 : f32
    %410 = vector.broadcast %cst_120 : f32 to vector<2x128xf32>
    %411 = arith.addf %410, %409 : vector<2x128xf32>
    %412 = arith.divf %410, %411 : vector<2x128xf32>
    %413 = arith.mulf %404, %353 : vector<2x128xf32>
    %414 = arith.mulf %398, %406 : vector<2x128xf32>
    %415 = arith.addf %413, %414 : vector<2x128xf32>
    %416 = math.tanh %415 : vector<2x128xf32>
    %417 = arith.mulf %412, %416 : vector<2x128xf32>
    %418 = vector.extract_strided_slice %392 {offsets = [0, 0], sizes = [2, 128], strides = [1, 1]} : vector<2x512xf32> to vector<2x128xf32>
    %419 = arith.negf %418 : vector<2x128xf32>
    %420 = math.exp %419 : vector<2x128xf32>
    %cst_121 = arith.constant 1.000000e+00 : f32
    %421 = vector.broadcast %cst_121 : f32 to vector<2x128xf32>
    %422 = arith.addf %421, %420 : vector<2x128xf32>
    %423 = arith.divf %421, %422 : vector<2x128xf32>
    %424 = vector.extract_strided_slice %392 {offsets = [0, 128], sizes = [2, 128], strides = [1, 1]} : vector<2x512xf32> to vector<2x128xf32>
    %425 = arith.negf %424 : vector<2x128xf32>
    %426 = math.exp %425 : vector<2x128xf32>
    %cst_122 = arith.constant 1.000000e+00 : f32
    %427 = vector.broadcast %cst_122 : f32 to vector<2x128xf32>
    %428 = arith.addf %427, %426 : vector<2x128xf32>
    %429 = arith.divf %427, %428 : vector<2x128xf32>
    %430 = vector.extract_strided_slice %392 {offsets = [0, 256], sizes = [2, 128], strides = [1, 1]} : vector<2x512xf32> to vector<2x128xf32>
    %431 = math.tanh %430 : vector<2x128xf32>
    %432 = vector.extract_strided_slice %392 {offsets = [0, 384], sizes = [2, 128], strides = [1, 1]} : vector<2x512xf32> to vector<2x128xf32>
    %433 = arith.negf %432 : vector<2x128xf32>
    %434 = math.exp %433 : vector<2x128xf32>
    %cst_123 = arith.constant 1.000000e+00 : f32
    %435 = vector.broadcast %cst_123 : f32 to vector<2x128xf32>
    %436 = arith.addf %435, %434 : vector<2x128xf32>
    %437 = arith.divf %435, %436 : vector<2x128xf32>
    %438 = arith.mulf %429, %378 : vector<2x128xf32>
    %439 = arith.mulf %423, %431 : vector<2x128xf32>
    %440 = arith.addf %438, %439 : vector<2x128xf32>
    %441 = math.tanh %440 : vector<2x128xf32>
    %442 = arith.mulf %437, %441 : vector<2x128xf32>
    %c6_124 = arith.constant 6 : index
    %c0_125 = arith.constant 0 : index
    %c0_126 = arith.constant 0 : index
    %443 = vector.load %arg5[%c6_124, %c0_125, %c0_126] : memref<8x2x256xf32, #tpu.memory_space<vmem>>, vector<1x2x128xf32>
    %444 = vector.shape_cast %443 : vector<1x2x128xf32> to vector<2x128xf32>
    %445 = vector.shape_cast %417 : vector<2x128xf32> to vector<1x2x128xf32>
    tpu.vector_store %arg5[%c6_124, %c0_125, %c0_126], %445 {strides = array<i32>} : memref<8x2x256xf32, #tpu.memory_space<vmem>>, vector<1x2x128xf32>,
    %c1_127 = arith.constant 1 : index
    %c0_128 = arith.constant 0 : index
    %c128_129 = arith.constant 128 : index
    %446 = vector.load %arg5[%c1_127, %c0_128, %c128_129] : memref<8x2x256xf32, #tpu.memory_space<vmem>>, vector<1x2x128xf32>
    %447 = vector.shape_cast %446 : vector<1x2x128xf32> to vector<2x128xf32>
    %448 = vector.shape_cast %442 : vector<2x128xf32> to vector<1x2x128xf32>
    tpu.vector_store %arg5[%c1_127, %c0_128, %c128_129], %448 {strides = array<i32>} : memref<8x2x256xf32, #tpu.memory_space<vmem>>, vector<1x2x128xf32>,
    %c14_130 = arith.constant 14 : index
    %c0_131 = arith.constant 0 : index
    %449 = vector.load %arg6[%c14_130, %c0_131] : memref<16x1024xf32, #tpu.memory_space<vmem>>, vector<2x512xf32>
    %cst_132 = arith.constant dense<0.000000e+00> : vector<2x512xf32>
    %450 = tpu.matmul %417, %8, %cst_132 {dimension_numbers = #tpu.dot_dimension_numbers<[1], [0], [0], [1], [0, 0, 1, 1], [], []>} : vector<2x128xf32>, vector<128x512xf32>, vector<2x512xf32> -> vector<2x512xf32>
    %451 = arith.addf %449, %450 : vector<2x512xf32>
    %c0_133 = arith.constant 0 : index
    %c512_134 = arith.constant 512 : index
    %452 = vector.load %arg6[%c0_133, %c512_134] : memref<16x1024xf32, #tpu.memory_space<vmem>>, vector<2x512xf32>
    %cst_135 = arith.constant dense<0.000000e+00> : vector<2x512xf32>
    %453 = tpu.matmul %442, %10, %cst_135 {dimension_numbers = #tpu.dot_dimension_numbers<[1], [0], [0], [1], [0, 0, 1, 1], [], []>} : vector<2x128xf32>, vector<128x512xf32>, vector<2x512xf32> -> vector<2x512xf32>
    %454 = arith.addf %452, %453 : vector<2x512xf32>
    %455 = vector.extract_strided_slice %451 {offsets = [0, 0], sizes = [2, 128], strides = [1, 1]} : vector<2x512xf32> to vector<2x128xf32>
    %456 = arith.negf %455 : vector<2x128xf32>
    %457 = math.exp %456 : vector<2x128xf32>
    %cst_136 = arith.constant 1.000000e+00 : f32
    %458 = vector.broadcast %cst_136 : f32 to vector<2x128xf32>
    %459 = arith.addf %458, %457 : vector<2x128xf32>
    %460 = arith.divf %458, %459 : vector<2x128xf32>
    %461 = vector.extract_strided_slice %451 {offsets = [0, 128], sizes = [2, 128], strides = [1, 1]} : vector<2x512xf32> to vector<2x128xf32>
    %462 = arith.negf %461 : vector<2x128xf32>
    %463 = math.exp %462 : vector<2x128xf32>
    %cst_137 = arith.constant 1.000000e+00 : f32
    %464 = vector.broadcast %cst_137 : f32 to vector<2x128xf32>
    %465 = arith.addf %464, %463 : vector<2x128xf32>
    %466 = arith.divf %464, %465 : vector<2x128xf32>
    %467 = vector.extract_strided_slice %451 {offsets = [0, 256], sizes = [2, 128], strides = [1, 1]} : vector<2x512xf32> to vector<2x128xf32>
    %468 = math.tanh %467 : vector<2x128xf32>
    %469 = vector.extract_strided_slice %451 {offsets = [0, 384], sizes = [2, 128], strides = [1, 1]} : vector<2x512xf32> to vector<2x128xf32>
    %470 = arith.negf %469 : vector<2x128xf32>
    %471 = math.exp %470 : vector<2x128xf32>
    %cst_138 = arith.constant 1.000000e+00 : f32
    %472 = vector.broadcast %cst_138 : f32 to vector<2x128xf32>
    %473 = arith.addf %472, %471 : vector<2x128xf32>
    %474 = arith.divf %472, %473 : vector<2x128xf32>
    %475 = arith.mulf %466, %415 : vector<2x128xf32>
    %476 = arith.mulf %460, %468 : vector<2x128xf32>
    %477 = arith.addf %475, %476 : vector<2x128xf32>
    %478 = math.tanh %477 : vector<2x128xf32>
    %479 = arith.mulf %474, %478 : vector<2x128xf32>
    %480 = vector.extract_strided_slice %454 {offsets = [0, 0], sizes = [2, 128], strides = [1, 1]} : vector<2x512xf32> to vector<2x128xf32>
    %481 = arith.negf %480 : vector<2x128xf32>
    %482 = math.exp %481 : vector<2x128xf32>
    %cst_139 = arith.constant 1.000000e+00 : f32
    %483 = vector.broadcast %cst_139 : f32 to vector<2x128xf32>
    %484 = arith.addf %483, %482 : vector<2x128xf32>
    %485 = arith.divf %483, %484 : vector<2x128xf32>
    %486 = vector.extract_strided_slice %454 {offsets = [0, 128], sizes = [2, 128], strides = [1, 1]} : vector<2x512xf32> to vector<2x128xf32>
    %487 = arith.negf %486 : vector<2x128xf32>
    %488 = math.exp %487 : vector<2x128xf32>
    %cst_140 = arith.constant 1.000000e+00 : f32
    %489 = vector.broadcast %cst_140 : f32 to vector<2x128xf32>
    %490 = arith.addf %489, %488 : vector<2x128xf32>
    %491 = arith.divf %489, %490 : vector<2x128xf32>
    %492 = vector.extract_strided_slice %454 {offsets = [0, 256], sizes = [2, 128], strides = [1, 1]} : vector<2x512xf32> to vector<2x128xf32>
    %493 = math.tanh %492 : vector<2x128xf32>
    %494 = vector.extract_strided_slice %454 {offsets = [0, 384], sizes = [2, 128], strides = [1, 1]} : vector<2x512xf32> to vector<2x128xf32>
    %495 = arith.negf %494 : vector<2x128xf32>
    %496 = math.exp %495 : vector<2x128xf32>
    %cst_141 = arith.constant 1.000000e+00 : f32
    %497 = vector.broadcast %cst_141 : f32 to vector<2x128xf32>
    %498 = arith.addf %497, %496 : vector<2x128xf32>
    %499 = arith.divf %497, %498 : vector<2x128xf32>
    %500 = arith.mulf %491, %440 : vector<2x128xf32>
    %501 = arith.mulf %485, %493 : vector<2x128xf32>
    %502 = arith.addf %500, %501 : vector<2x128xf32>
    %503 = math.tanh %502 : vector<2x128xf32>
    %504 = arith.mulf %499, %503 : vector<2x128xf32>
    %c7_142 = arith.constant 7 : index
    %c0_143 = arith.constant 0 : index
    %c0_144 = arith.constant 0 : index
    %505 = vector.load %arg5[%c7_142, %c0_143, %c0_144] : memref<8x2x256xf32, #tpu.memory_space<vmem>>, vector<1x2x128xf32>
    %506 = vector.shape_cast %505 : vector<1x2x128xf32> to vector<2x128xf32>
    %507 = vector.shape_cast %479 : vector<2x128xf32> to vector<1x2x128xf32>
    tpu.vector_store %arg5[%c7_142, %c0_143, %c0_144], %507 {strides = array<i32>} : memref<8x2x256xf32, #tpu.memory_space<vmem>>, vector<1x2x128xf32>,
    %c0_145 = arith.constant 0 : index
    %c0_146 = arith.constant 0 : index
    %c128_147 = arith.constant 128 : index
    %508 = vector.load %arg5[%c0_145, %c0_146, %c128_147] : memref<8x2x256xf32, #tpu.memory_space<vmem>>, vector<1x2x128xf32>
    %509 = vector.shape_cast %508 : vector<1x2x128xf32> to vector<2x128xf32>
    %510 = vector.shape_cast %504 : vector<2x128xf32> to vector<1x2x128xf32>
    tpu.vector_store %arg5[%c0_145, %c0_146, %c128_147], %510 {strides = array<i32>} : memref<8x2x256xf32, #tpu.memory_space<vmem>>, vector<1x2x128xf32>,
    return
  }
  func.func @transform_0(%arg0: i32) -> (i32, i32) {
    %c0_i32 = arith.constant 0 : i32
    %c0_i32_0 = arith.constant 0 : i32
    %c0_i32_1 = arith.constant 0 : i32
    return %c0_i32, %c0_i32_0 : i32, i32
  }
  func.func @transform_1(%arg0: i32) -> (i32, i32) {
    %c0_i32 = arith.constant 0 : i32
    %c0_i32_0 = arith.constant 0 : i32
    %c0_i32_1 = arith.constant 0 : i32
    return %c0_i32, %c0_i32_0 : i32, i32
  }
  func.func @transform_2(%arg0: i32) -> (i32, i32, i32) {
    %c0_i32 = arith.constant 0 : i32
    %c0_i32_0 = arith.constant 0 : i32
    %c0_i32_1 = arith.constant 0 : i32
    %c0_i32_2 = arith.constant 0 : i32
    return %c0_i32, %c0_i32_0, %c0_i32_1 : i32, i32, i32
  }
  func.func @transform_3(%arg0: i32) -> (i32, i32) {
    %c0_i32 = arith.constant 0 : i32
    %c0_i32_0 = arith.constant 0 : i32
    %c0_i32_1 = arith.constant 0 : i32
    return %c0_i32, %c0_i32_0 : i32, i32
  }
  func.func @transform_4(%arg0: i32) -> (i32, i32, i32) {
    %c0_i32 = arith.constant 0 : i32
    %c0_i32_0 = arith.constant 0 : i32
    %c0_i32_1 = arith.constant 0 : i32
    %c0_i32_2 = arith.constant 0 : i32
    return %c0_i32, %c0_i32_0, %c0_i32_1 : i32, i32, i32
  }
}

module attributes {stable_mosaic.version = 11 : i64} {
  func.func @_bilstm_layer_kernel(%arg0: i32, %arg1: memref<16x16xf32, #tpu.memory_space<vmem>>, %arg2: memref<16x1024xf32, #tpu.memory_space<vmem>>, %arg3: memref<2x128x512xf32, #tpu.memory_space<vmem>>, %arg4: memref<1x1024xf32, #tpu.memory_space<vmem>>, %arg5: memref<8x2x256xf32, #tpu.memory_space<vmem>>, %arg6: memref<16x1024xf32, #tpu.memory_space<vmem>>) attributes {dimension_semantics = [#tpu.dimension_semantics<arbitrary>], iteration_bounds = array<i64: 1>, scalar_prefetch = 0 : i64, scratch_operands = 1 : i64, tpu.core_type = #tpu.core_type<tc>, window_params = [{pipeline_mode = #tpu.pipeline_mode<synchronous>, transform_indices = @transform_0, window_bounds = array<i64: 16, 16>}, {pipeline_mode = #tpu.pipeline_mode<synchronous>, transform_indices = @transform_1, window_bounds = array<i64: 16, 1024>}, {pipeline_mode = #tpu.pipeline_mode<synchronous>, transform_indices = @transform_2, window_bounds = array<i64: 2, 128, 512>}, {pipeline_mode = #tpu.pipeline_mode<synchronous>, transform_indices = @transform_3, window_bounds = array<i64: 1, 1024>}, {pipeline_mode = #tpu.pipeline_mode<synchronous>, transform_indices = @transform_4, window_bounds = array<i64: 8, 2, 256>}]} {
    %c0 = arith.constant 0 : index
    %c0_0 = arith.constant 0 : index
    %0 = vector.load %arg1[%c0, %c0_0] : memref<16x16xf32, #tpu.memory_space<vmem>>, vector<16x16xf32>
    %c0_1 = arith.constant 0 : index
    %c0_2 = arith.constant 0 : index
    %1 = vector.load %arg2[%c0_1, %c0_2] : memref<16x1024xf32, #tpu.memory_space<vmem>>, vector<16x1024xf32>
    %cst = arith.constant dense<0.000000e+00> : vector<16x1024xf32>
    %2 = tpu.matmul %0, %1, %cst {dimension_numbers = #tpu.dot_dimension_numbers<[1], [0], [0], [1], [0, 0, 1, 1], [], []>} : vector<16x16xf32>, vector<16x1024xf32>, vector<16x1024xf32> -> vector<16x1024xf32>
    %c0_3 = arith.constant 0 : index
    %c0_4 = arith.constant 0 : index
    %3 = vector.load %arg4[%c0_3, %c0_4] : memref<1x1024xf32, #tpu.memory_space<vmem>>, vector<1x1024xf32>
    %4 = vector.broadcast %3 : vector<1x1024xf32> to vector<16x1024xf32>
    %5 = arith.addf %2, %4 : vector<16x1024xf32>
    %c0_5 = arith.constant 0 : index
    %c0_6 = arith.constant 0 : index
    %6 = vector.load %arg6[%c0_5, %c0_6] : memref<16x1024xf32, #tpu.memory_space<vmem>>, vector<16x1024xf32>
    tpu.vector_store %arg6[%c0_5, %c0_6], %5 {strides = array<i32>} : memref<16x1024xf32, #tpu.memory_space<vmem>>, vector<16x1024xf32>,
    %c0_7 = arith.constant 0 : index
    %c0_8 = arith.constant 0 : index
    %c0_9 = arith.constant 0 : index
    %7 = vector.load %arg3[%c0_7, %c0_8, %c0_9] : memref<2x128x512xf32, #tpu.memory_space<vmem>>, vector<1x128x512xf32>
    %8 = vector.shape_cast %7 : vector<1x128x512xf32> to vector<128x512xf32>
    %c1 = arith.constant 1 : index
    %c0_10 = arith.constant 0 : index
    %c0_11 = arith.constant 0 : index
    %9 = vector.load %arg3[%c1, %c0_10, %c0_11] : memref<2x128x512xf32, #tpu.memory_space<vmem>>, vector<1x128x512xf32>
    %10 = vector.shape_cast %9 : vector<1x128x512xf32> to vector<128x512xf32>
    %cst_12 = arith.constant 0.000000e+00 : f32
    %11 = vector.broadcast %cst_12 : f32 to vector<2x128xf32>
    %cst_13 = arith.constant 0.000000e+00 : f32
    %12 = vector.broadcast %cst_13 : f32 to vector<2x128xf32>
    %cst_14 = arith.constant 0.000000e+00 : f32
    %13 = vector.broadcast %cst_14 : f32 to vector<2x128xf32>
    %cst_15 = arith.constant 0.000000e+00 : f32
    %14 = vector.broadcast %cst_15 : f32 to vector<2x128xf32>
    %c0_16 = arith.constant 0 : index
    %c0_17 = arith.constant 0 : index
    %15 = vector.load %arg6[%c0_16, %c0_17] : memref<16x1024xf32, #tpu.memory_space<vmem>>, vector<2x512xf32>
    %cst_18 = arith.constant dense<0.000000e+00> : vector<2x512xf32>
    %16 = tpu.matmul %11, %8, %cst_18 {dimension_numbers = #tpu.dot_dimension_numbers<[1], [0], [0], [1], [0, 0, 1, 1], [], []>} : vector<2x128xf32>, vector<128x512xf32>, vector<2x512xf32> -> vector<2x512xf32>
    %17 = arith.addf %15, %16 : vector<2x512xf32>
    %c14 = arith.constant 14 : index
    %c512 = arith.constant 512 : index
    %18 = vector.load %arg6[%c14, %c512] : memref<16x1024xf32, #tpu.memory_space<vmem>>, vector<2x512xf32>
    %cst_19 = arith.constant dense<0.000000e+00> : vector<2x512xf32>
    %19 = tpu.matmul %13, %10, %cst_19 {dimension_numbers = #tpu.dot_dimension_numbers<[1], [0], [0], [1], [0, 0, 1, 1], [], []>} : vector<2x128xf32>, vector<128x512xf32>, vector<2x512xf32> -> vector<2x512xf32>
    %20 = arith.addf %18, %19 : vector<2x512xf32>
    %21 = vector.extract_strided_slice %17 {offsets = [0, 0], sizes = [2, 128], strides = [1, 1]} : vector<2x512xf32> to vector<2x128xf32>
    %22 = arith.negf %21 : vector<2x128xf32>
    %23 = math.exp %22 : vector<2x128xf32>
    %cst_20 = arith.constant 1.000000e+00 : f32
    %24 = vector.broadcast %cst_20 : f32 to vector<2x128xf32>
    %25 = arith.addf %24, %23 : vector<2x128xf32>
    %26 = arith.divf %24, %25 : vector<2x128xf32>
    %27 = vector.extract_strided_slice %17 {offsets = [0, 128], sizes = [2, 128], strides = [1, 1]} : vector<2x512xf32> to vector<2x128xf32>
    %28 = arith.negf %27 : vector<2x128xf32>
    %29 = math.exp %28 : vector<2x128xf32>
    %cst_21 = arith.constant 1.000000e+00 : f32
    %30 = vector.broadcast %cst_21 : f32 to vector<2x128xf32>
    %31 = arith.addf %30, %29 : vector<2x128xf32>
    %32 = arith.divf %30, %31 : vector<2x128xf32>
    %33 = vector.extract_strided_slice %17 {offsets = [0, 256], sizes = [2, 128], strides = [1, 1]} : vector<2x512xf32> to vector<2x128xf32>
    %34 = math.tanh %33 : vector<2x128xf32>
    %35 = vector.extract_strided_slice %17 {offsets = [0, 384], sizes = [2, 128], strides = [1, 1]} : vector<2x512xf32> to vector<2x128xf32>
    %36 = arith.negf %35 : vector<2x128xf32>
    %37 = math.exp %36 : vector<2x128xf32>
    %cst_22 = arith.constant 1.000000e+00 : f32
    %38 = vector.broadcast %cst_22 : f32 to vector<2x128xf32>
    %39 = arith.addf %38, %37 : vector<2x128xf32>
    %40 = arith.divf %38, %39 : vector<2x128xf32>
    %41 = arith.mulf %32, %12 : vector<2x128xf32>
    %42 = arith.mulf %26, %34 : vector<2x128xf32>
    %43 = arith.addf %41, %42 : vector<2x128xf32>
    %44 = math.tanh %43 : vector<2x128xf32>
    %45 = arith.mulf %40, %44 : vector<2x128xf32>
    %46 = vector.extract_strided_slice %20 {offsets = [0, 0], sizes = [2, 128], strides = [1, 1]} : vector<2x512xf32> to vector<2x128xf32>
    %47 = arith.negf %46 : vector<2x128xf32>
    %48 = math.exp %47 : vector<2x128xf32>
    %cst_23 = arith.constant 1.000000e+00 : f32
    %49 = vector.broadcast %cst_23 : f32 to vector<2x128xf32>
    %50 = arith.addf %49, %48 : vector<2x128xf32>
    %51 = arith.divf %49, %50 : vector<2x128xf32>
    %52 = vector.extract_strided_slice %20 {offsets = [0, 128], sizes = [2, 128], strides = [1, 1]} : vector<2x512xf32> to vector<2x128xf32>
    %53 = arith.negf %52 : vector<2x128xf32>
    %54 = math.exp %53 : vector<2x128xf32>
    %cst_24 = arith.constant 1.000000e+00 : f32
    %55 = vector.broadcast %cst_24 : f32 to vector<2x128xf32>
    %56 = arith.addf %55, %54 : vector<2x128xf32>
    %57 = arith.divf %55, %56 : vector<2x128xf32>
    %58 = vector.extract_strided_slice %20 {offsets = [0, 256], sizes = [2, 128], strides = [1, 1]} : vector<2x512xf32> to vector<2x128xf32>
    %59 = math.tanh %58 : vector<2x128xf32>
    %60 = vector.extract_strided_slice %20 {offsets = [0, 384], sizes = [2, 128], strides = [1, 1]} : vector<2x512xf32> to vector<2x128xf32>
    %61 = arith.negf %60 : vector<2x128xf32>
    %62 = math.exp %61 : vector<2x128xf32>
    %cst_25 = arith.constant 1.000000e+00 : f32
    %63 = vector.broadcast %cst_25 : f32 to vector<2x128xf32>
    %64 = arith.addf %63, %62 : vector<2x128xf32>
    %65 = arith.divf %63, %64 : vector<2x128xf32>
    %66 = arith.mulf %57, %14 : vector<2x128xf32>
    %67 = arith.mulf %51, %59 : vector<2x128xf32>
    %68 = arith.addf %66, %67 : vector<2x128xf32>
    %69 = math.tanh %68 : vector<2x128xf32>
    %70 = arith.mulf %65, %69 : vector<2x128xf32>
    %c0_26 = arith.constant 0 : index
    %c0_27 = arith.constant 0 : index
    %c0_28 = arith.constant 0 : index
    %71 = vector.load %arg5[%c0_26, %c0_27, %c0_28] : memref<8x2x256xf32, #tpu.memory_space<vmem>>, vector<1x2x128xf32>
    %72 = vector.shape_cast %71 : vector<1x2x128xf32> to vector<2x128xf32>
    %73 = vector.shape_cast %45 : vector<2x128xf32> to vector<1x2x128xf32>
    tpu.vector_store %arg5[%c0_26, %c0_27, %c0_28], %73 {strides = array<i32>} : memref<8x2x256xf32, #tpu.memory_space<vmem>>, vector<1x2x128xf32>,
    %c7 = arith.constant 7 : index
    %c0_29 = arith.constant 0 : index
    %c128 = arith.constant 128 : index
    %74 = vector.load %arg5[%c7, %c0_29, %c128] : memref<8x2x256xf32, #tpu.memory_space<vmem>>, vector<1x2x128xf32>
    %75 = vector.shape_cast %74 : vector<1x2x128xf32> to vector<2x128xf32>
    %76 = vector.shape_cast %70 : vector<2x128xf32> to vector<1x2x128xf32>
    tpu.vector_store %arg5[%c7, %c0_29, %c128], %76 {strides = array<i32>} : memref<8x2x256xf32, #tpu.memory_space<vmem>>, vector<1x2x128xf32>,
    %c2 = arith.constant 2 : index
    %c0_30 = arith.constant 0 : index
    %77 = vector.load %arg6[%c2, %c0_30] : memref<16x1024xf32, #tpu.memory_space<vmem>>, vector<2x512xf32>
    %cst_31 = arith.constant dense<0.000000e+00> : vector<2x512xf32>
    %78 = tpu.matmul %45, %8, %cst_31 {dimension_numbers = #tpu.dot_dimension_numbers<[1], [0], [0], [1], [0, 0, 1, 1], [], []>} : vector<2x128xf32>, vector<128x512xf32>, vector<2x512xf32> -> vector<2x512xf32>
    %79 = arith.addf %77, %78 : vector<2x512xf32>
    %c12 = arith.constant 12 : index
    %c512_32 = arith.constant 512 : index
    %80 = vector.load %arg6[%c12, %c512_32] : memref<16x1024xf32, #tpu.memory_space<vmem>>, vector<2x512xf32>
    %cst_33 = arith.constant dense<0.000000e+00> : vector<2x512xf32>
    %81 = tpu.matmul %70, %10, %cst_33 {dimension_numbers = #tpu.dot_dimension_numbers<[1], [0], [0], [1], [0, 0, 1, 1], [], []>} : vector<2x128xf32>, vector<128x512xf32>, vector<2x512xf32> -> vector<2x512xf32>
    %82 = arith.addf %80, %81 : vector<2x512xf32>
    %83 = vector.extract_strided_slice %79 {offsets = [0, 0], sizes = [2, 128], strides = [1, 1]} : vector<2x512xf32> to vector<2x128xf32>
    %84 = arith.negf %83 : vector<2x128xf32>
    %85 = math.exp %84 : vector<2x128xf32>
    %cst_34 = arith.constant 1.000000e+00 : f32
    %86 = vector.broadcast %cst_34 : f32 to vector<2x128xf32>
    %87 = arith.addf %86, %85 : vector<2x128xf32>
    %88 = arith.divf %86, %87 : vector<2x128xf32>
    %89 = vector.extract_strided_slice %79 {offsets = [0, 128], sizes = [2, 128], strides = [1, 1]} : vector<2x512xf32> to vector<2x128xf32>
    %90 = arith.negf %89 : vector<2x128xf32>
    %91 = math.exp %90 : vector<2x128xf32>
    %cst_35 = arith.constant 1.000000e+00 : f32
    %92 = vector.broadcast %cst_35 : f32 to vector<2x128xf32>
    %93 = arith.addf %92, %91 : vector<2x128xf32>
    %94 = arith.divf %92, %93 : vector<2x128xf32>
    %95 = vector.extract_strided_slice %79 {offsets = [0, 256], sizes = [2, 128], strides = [1, 1]} : vector<2x512xf32> to vector<2x128xf32>
    %96 = math.tanh %95 : vector<2x128xf32>
    %97 = vector.extract_strided_slice %79 {offsets = [0, 384], sizes = [2, 128], strides = [1, 1]} : vector<2x512xf32> to vector<2x128xf32>
    %98 = arith.negf %97 : vector<2x128xf32>
    %99 = math.exp %98 : vector<2x128xf32>
    %cst_36 = arith.constant 1.000000e+00 : f32
    %100 = vector.broadcast %cst_36 : f32 to vector<2x128xf32>
    %101 = arith.addf %100, %99 : vector<2x128xf32>
    %102 = arith.divf %100, %101 : vector<2x128xf32>
    %103 = arith.mulf %94, %43 : vector<2x128xf32>
    %104 = arith.mulf %88, %96 : vector<2x128xf32>
    %105 = arith.addf %103, %104 : vector<2x128xf32>
    %106 = math.tanh %105 : vector<2x128xf32>
    %107 = arith.mulf %102, %106 : vector<2x128xf32>
    %108 = vector.extract_strided_slice %82 {offsets = [0, 0], sizes = [2, 128], strides = [1, 1]} : vector<2x512xf32> to vector<2x128xf32>
    %109 = arith.negf %108 : vector<2x128xf32>
    %110 = math.exp %109 : vector<2x128xf32>
    %cst_37 = arith.constant 1.000000e+00 : f32
    %111 = vector.broadcast %cst_37 : f32 to vector<2x128xf32>
    %112 = arith.addf %111, %110 : vector<2x128xf32>
    %113 = arith.divf %111, %112 : vector<2x128xf32>
    %114 = vector.extract_strided_slice %82 {offsets = [0, 128], sizes = [2, 128], strides = [1, 1]} : vector<2x512xf32> to vector<2x128xf32>
    %115 = arith.negf %114 : vector<2x128xf32>
    %116 = math.exp %115 : vector<2x128xf32>
    %cst_38 = arith.constant 1.000000e+00 : f32
    %117 = vector.broadcast %cst_38 : f32 to vector<2x128xf32>
    %118 = arith.addf %117, %116 : vector<2x128xf32>
    %119 = arith.divf %117, %118 : vector<2x128xf32>
    %120 = vector.extract_strided_slice %82 {offsets = [0, 256], sizes = [2, 128], strides = [1, 1]} : vector<2x512xf32> to vector<2x128xf32>
    %121 = math.tanh %120 : vector<2x128xf32>
    %122 = vector.extract_strided_slice %82 {offsets = [0, 384], sizes = [2, 128], strides = [1, 1]} : vector<2x512xf32> to vector<2x128xf32>
    %123 = arith.negf %122 : vector<2x128xf32>
    %124 = math.exp %123 : vector<2x128xf32>
    %cst_39 = arith.constant 1.000000e+00 : f32
    %125 = vector.broadcast %cst_39 : f32 to vector<2x128xf32>
    %126 = arith.addf %125, %124 : vector<2x128xf32>
    %127 = arith.divf %125, %126 : vector<2x128xf32>
    %128 = arith.mulf %119, %68 : vector<2x128xf32>
    %129 = arith.mulf %113, %121 : vector<2x128xf32>
    %130 = arith.addf %128, %129 : vector<2x128xf32>
    %131 = math.tanh %130 : vector<2x128xf32>
    %132 = arith.mulf %127, %131 : vector<2x128xf32>
    %c1_40 = arith.constant 1 : index
    %c0_41 = arith.constant 0 : index
    %c0_42 = arith.constant 0 : index
    %133 = vector.load %arg5[%c1_40, %c0_41, %c0_42] : memref<8x2x256xf32, #tpu.memory_space<vmem>>, vector<1x2x128xf32>
    %134 = vector.shape_cast %133 : vector<1x2x128xf32> to vector<2x128xf32>
    %135 = vector.shape_cast %107 : vector<2x128xf32> to vector<1x2x128xf32>
    tpu.vector_store %arg5[%c1_40, %c0_41, %c0_42], %135 {strides = array<i32>} : memref<8x2x256xf32, #tpu.memory_space<vmem>>, vector<1x2x128xf32>,
    %c6 = arith.constant 6 : index
    %c0_43 = arith.constant 0 : index
    %c128_44 = arith.constant 128 : index
    %136 = vector.load %arg5[%c6, %c0_43, %c128_44] : memref<8x2x256xf32, #tpu.memory_space<vmem>>, vector<1x2x128xf32>
    %137 = vector.shape_cast %136 : vector<1x2x128xf32> to vector<2x128xf32>
    %138 = vector.shape_cast %132 : vector<2x128xf32> to vector<1x2x128xf32>
    tpu.vector_store %arg5[%c6, %c0_43, %c128_44], %138 {strides = array<i32>} : memref<8x2x256xf32, #tpu.memory_space<vmem>>, vector<1x2x128xf32>,
    %c4 = arith.constant 4 : index
    %c0_45 = arith.constant 0 : index
    %139 = vector.load %arg6[%c4, %c0_45] : memref<16x1024xf32, #tpu.memory_space<vmem>>, vector<2x512xf32>
    %cst_46 = arith.constant dense<0.000000e+00> : vector<2x512xf32>
    %140 = tpu.matmul %107, %8, %cst_46 {dimension_numbers = #tpu.dot_dimension_numbers<[1], [0], [0], [1], [0, 0, 1, 1], [], []>} : vector<2x128xf32>, vector<128x512xf32>, vector<2x512xf32> -> vector<2x512xf32>
    %141 = arith.addf %139, %140 : vector<2x512xf32>
    %c10 = arith.constant 10 : index
    %c512_47 = arith.constant 512 : index
    %142 = vector.load %arg6[%c10, %c512_47] : memref<16x1024xf32, #tpu.memory_space<vmem>>, vector<2x512xf32>
    %cst_48 = arith.constant dense<0.000000e+00> : vector<2x512xf32>
    %143 = tpu.matmul %132, %10, %cst_48 {dimension_numbers = #tpu.dot_dimension_numbers<[1], [0], [0], [1], [0, 0, 1, 1], [], []>} : vector<2x128xf32>, vector<128x512xf32>, vector<2x512xf32> -> vector<2x512xf32>
    %144 = arith.addf %142, %143 : vector<2x512xf32>
    %145 = vector.extract_strided_slice %141 {offsets = [0, 0], sizes = [2, 128], strides = [1, 1]} : vector<2x512xf32> to vector<2x128xf32>
    %146 = arith.negf %145 : vector<2x128xf32>
    %147 = math.exp %146 : vector<2x128xf32>
    %cst_49 = arith.constant 1.000000e+00 : f32
    %148 = vector.broadcast %cst_49 : f32 to vector<2x128xf32>
    %149 = arith.addf %148, %147 : vector<2x128xf32>
    %150 = arith.divf %148, %149 : vector<2x128xf32>
    %151 = vector.extract_strided_slice %141 {offsets = [0, 128], sizes = [2, 128], strides = [1, 1]} : vector<2x512xf32> to vector<2x128xf32>
    %152 = arith.negf %151 : vector<2x128xf32>
    %153 = math.exp %152 : vector<2x128xf32>
    %cst_50 = arith.constant 1.000000e+00 : f32
    %154 = vector.broadcast %cst_50 : f32 to vector<2x128xf32>
    %155 = arith.addf %154, %153 : vector<2x128xf32>
    %156 = arith.divf %154, %155 : vector<2x128xf32>
    %157 = vector.extract_strided_slice %141 {offsets = [0, 256], sizes = [2, 128], strides = [1, 1]} : vector<2x512xf32> to vector<2x128xf32>
    %158 = math.tanh %157 : vector<2x128xf32>
    %159 = vector.extract_strided_slice %141 {offsets = [0, 384], sizes = [2, 128], strides = [1, 1]} : vector<2x512xf32> to vector<2x128xf32>
    %160 = arith.negf %159 : vector<2x128xf32>
    %161 = math.exp %160 : vector<2x128xf32>
    %cst_51 = arith.constant 1.000000e+00 : f32
    %162 = vector.broadcast %cst_51 : f32 to vector<2x128xf32>
    %163 = arith.addf %162, %161 : vector<2x128xf32>
    %164 = arith.divf %162, %163 : vector<2x128xf32>
    %165 = arith.mulf %156, %105 : vector<2x128xf32>
    %166 = arith.mulf %150, %158 : vector<2x128xf32>
    %167 = arith.addf %165, %166 : vector<2x128xf32>
    %168 = math.tanh %167 : vector<2x128xf32>
    %169 = arith.mulf %164, %168 : vector<2x128xf32>
    %170 = vector.extract_strided_slice %144 {offsets = [0, 0], sizes = [2, 128], strides = [1, 1]} : vector<2x512xf32> to vector<2x128xf32>
    %171 = arith.negf %170 : vector<2x128xf32>
    %172 = math.exp %171 : vector<2x128xf32>
    %cst_52 = arith.constant 1.000000e+00 : f32
    %173 = vector.broadcast %cst_52 : f32 to vector<2x128xf32>
    %174 = arith.addf %173, %172 : vector<2x128xf32>
    %175 = arith.divf %173, %174 : vector<2x128xf32>
    %176 = vector.extract_strided_slice %144 {offsets = [0, 128], sizes = [2, 128], strides = [1, 1]} : vector<2x512xf32> to vector<2x128xf32>
    %177 = arith.negf %176 : vector<2x128xf32>
    %178 = math.exp %177 : vector<2x128xf32>
    %cst_53 = arith.constant 1.000000e+00 : f32
    %179 = vector.broadcast %cst_53 : f32 to vector<2x128xf32>
    %180 = arith.addf %179, %178 : vector<2x128xf32>
    %181 = arith.divf %179, %180 : vector<2x128xf32>
    %182 = vector.extract_strided_slice %144 {offsets = [0, 256], sizes = [2, 128], strides = [1, 1]} : vector<2x512xf32> to vector<2x128xf32>
    %183 = math.tanh %182 : vector<2x128xf32>
    %184 = vector.extract_strided_slice %144 {offsets = [0, 384], sizes = [2, 128], strides = [1, 1]} : vector<2x512xf32> to vector<2x128xf32>
    %185 = arith.negf %184 : vector<2x128xf32>
    %186 = math.exp %185 : vector<2x128xf32>
    %cst_54 = arith.constant 1.000000e+00 : f32
    %187 = vector.broadcast %cst_54 : f32 to vector<2x128xf32>
    %188 = arith.addf %187, %186 : vector<2x128xf32>
    %189 = arith.divf %187, %188 : vector<2x128xf32>
    %190 = arith.mulf %181, %130 : vector<2x128xf32>
    %191 = arith.mulf %175, %183 : vector<2x128xf32>
    %192 = arith.addf %190, %191 : vector<2x128xf32>
    %193 = math.tanh %192 : vector<2x128xf32>
    %194 = arith.mulf %189, %193 : vector<2x128xf32>
    %c2_55 = arith.constant 2 : index
    %c0_56 = arith.constant 0 : index
    %c0_57 = arith.constant 0 : index
    %195 = vector.load %arg5[%c2_55, %c0_56, %c0_57] : memref<8x2x256xf32, #tpu.memory_space<vmem>>, vector<1x2x128xf32>
    %196 = vector.shape_cast %195 : vector<1x2x128xf32> to vector<2x128xf32>
    %197 = vector.shape_cast %169 : vector<2x128xf32> to vector<1x2x128xf32>
    tpu.vector_store %arg5[%c2_55, %c0_56, %c0_57], %197 {strides = array<i32>} : memref<8x2x256xf32, #tpu.memory_space<vmem>>, vector<1x2x128xf32>,
    %c5 = arith.constant 5 : index
    %c0_58 = arith.constant 0 : index
    %c128_59 = arith.constant 128 : index
    %198 = vector.load %arg5[%c5, %c0_58, %c128_59] : memref<8x2x256xf32, #tpu.memory_space<vmem>>, vector<1x2x128xf32>
    %199 = vector.shape_cast %198 : vector<1x2x128xf32> to vector<2x128xf32>
    %200 = vector.shape_cast %194 : vector<2x128xf32> to vector<1x2x128xf32>
    tpu.vector_store %arg5[%c5, %c0_58, %c128_59], %200 {strides = array<i32>} : memref<8x2x256xf32, #tpu.memory_space<vmem>>, vector<1x2x128xf32>,
    %c6_60 = arith.constant 6 : index
    %c0_61 = arith.constant 0 : index
    %201 = vector.load %arg6[%c6_60, %c0_61] : memref<16x1024xf32, #tpu.memory_space<vmem>>, vector<2x512xf32>
    %cst_62 = arith.constant dense<0.000000e+00> : vector<2x512xf32>
    %202 = tpu.matmul %169, %8, %cst_62 {dimension_numbers = #tpu.dot_dimension_numbers<[1], [0], [0], [1], [0, 0, 1, 1], [], []>} : vector<2x128xf32>, vector<128x512xf32>, vector<2x512xf32> -> vector<2x512xf32>
    %203 = arith.addf %201, %202 : vector<2x512xf32>
    %c8 = arith.constant 8 : index
    %c512_63 = arith.constant 512 : index
    %204 = vector.load %arg6[%c8, %c512_63] : memref<16x1024xf32, #tpu.memory_space<vmem>>, vector<2x512xf32>
    %cst_64 = arith.constant dense<0.000000e+00> : vector<2x512xf32>
    %205 = tpu.matmul %194, %10, %cst_64 {dimension_numbers = #tpu.dot_dimension_numbers<[1], [0], [0], [1], [0, 0, 1, 1], [], []>} : vector<2x128xf32>, vector<128x512xf32>, vector<2x512xf32> -> vector<2x512xf32>
    %206 = arith.addf %204, %205 : vector<2x512xf32>
    %207 = vector.extract_strided_slice %203 {offsets = [0, 0], sizes = [2, 128], strides = [1, 1]} : vector<2x512xf32> to vector<2x128xf32>
    %208 = arith.negf %207 : vector<2x128xf32>
    %209 = math.exp %208 : vector<2x128xf32>
    %cst_65 = arith.constant 1.000000e+00 : f32
    %210 = vector.broadcast %cst_65 : f32 to vector<2x128xf32>
    %211 = arith.addf %210, %209 : vector<2x128xf32>
    %212 = arith.divf %210, %211 : vector<2x128xf32>
    %213 = vector.extract_strided_slice %203 {offsets = [0, 128], sizes = [2, 128], strides = [1, 1]} : vector<2x512xf32> to vector<2x128xf32>
    %214 = arith.negf %213 : vector<2x128xf32>
    %215 = math.exp %214 : vector<2x128xf32>
    %cst_66 = arith.constant 1.000000e+00 : f32
    %216 = vector.broadcast %cst_66 : f32 to vector<2x128xf32>
    %217 = arith.addf %216, %215 : vector<2x128xf32>
    %218 = arith.divf %216, %217 : vector<2x128xf32>
    %219 = vector.extract_strided_slice %203 {offsets = [0, 256], sizes = [2, 128], strides = [1, 1]} : vector<2x512xf32> to vector<2x128xf32>
    %220 = math.tanh %219 : vector<2x128xf32>
    %221 = vector.extract_strided_slice %203 {offsets = [0, 384], sizes = [2, 128], strides = [1, 1]} : vector<2x512xf32> to vector<2x128xf32>
    %222 = arith.negf %221 : vector<2x128xf32>
    %223 = math.exp %222 : vector<2x128xf32>
    %cst_67 = arith.constant 1.000000e+00 : f32
    %224 = vector.broadcast %cst_67 : f32 to vector<2x128xf32>
    %225 = arith.addf %224, %223 : vector<2x128xf32>
    %226 = arith.divf %224, %225 : vector<2x128xf32>
    %227 = arith.mulf %218, %167 : vector<2x128xf32>
    %228 = arith.mulf %212, %220 : vector<2x128xf32>
    %229 = arith.addf %227, %228 : vector<2x128xf32>
    %230 = math.tanh %229 : vector<2x128xf32>
    %231 = arith.mulf %226, %230 : vector<2x128xf32>
    %232 = vector.extract_strided_slice %206 {offsets = [0, 0], sizes = [2, 128], strides = [1, 1]} : vector<2x512xf32> to vector<2x128xf32>
    %233 = arith.negf %232 : vector<2x128xf32>
    %234 = math.exp %233 : vector<2x128xf32>
    %cst_68 = arith.constant 1.000000e+00 : f32
    %235 = vector.broadcast %cst_68 : f32 to vector<2x128xf32>
    %236 = arith.addf %235, %234 : vector<2x128xf32>
    %237 = arith.divf %235, %236 : vector<2x128xf32>
    %238 = vector.extract_strided_slice %206 {offsets = [0, 128], sizes = [2, 128], strides = [1, 1]} : vector<2x512xf32> to vector<2x128xf32>
    %239 = arith.negf %238 : vector<2x128xf32>
    %240 = math.exp %239 : vector<2x128xf32>
    %cst_69 = arith.constant 1.000000e+00 : f32
    %241 = vector.broadcast %cst_69 : f32 to vector<2x128xf32>
    %242 = arith.addf %241, %240 : vector<2x128xf32>
    %243 = arith.divf %241, %242 : vector<2x128xf32>
    %244 = vector.extract_strided_slice %206 {offsets = [0, 256], sizes = [2, 128], strides = [1, 1]} : vector<2x512xf32> to vector<2x128xf32>
    %245 = math.tanh %244 : vector<2x128xf32>
    %246 = vector.extract_strided_slice %206 {offsets = [0, 384], sizes = [2, 128], strides = [1, 1]} : vector<2x512xf32> to vector<2x128xf32>
    %247 = arith.negf %246 : vector<2x128xf32>
    %248 = math.exp %247 : vector<2x128xf32>
    %cst_70 = arith.constant 1.000000e+00 : f32
    %249 = vector.broadcast %cst_70 : f32 to vector<2x128xf32>
    %250 = arith.addf %249, %248 : vector<2x128xf32>
    %251 = arith.divf %249, %250 : vector<2x128xf32>
    %252 = arith.mulf %243, %192 : vector<2x128xf32>
    %253 = arith.mulf %237, %245 : vector<2x128xf32>
    %254 = arith.addf %252, %253 : vector<2x128xf32>
    %255 = math.tanh %254 : vector<2x128xf32>
    %256 = arith.mulf %251, %255 : vector<2x128xf32>
    %c3 = arith.constant 3 : index
    %c0_71 = arith.constant 0 : index
    %c0_72 = arith.constant 0 : index
    %257 = vector.load %arg5[%c3, %c0_71, %c0_72] : memref<8x2x256xf32, #tpu.memory_space<vmem>>, vector<1x2x128xf32>
    %258 = vector.shape_cast %257 : vector<1x2x128xf32> to vector<2x128xf32>
    %259 = vector.shape_cast %231 : vector<2x128xf32> to vector<1x2x128xf32>
    tpu.vector_store %arg5[%c3, %c0_71, %c0_72], %259 {strides = array<i32>} : memref<8x2x256xf32, #tpu.memory_space<vmem>>, vector<1x2x128xf32>,
    %c4_73 = arith.constant 4 : index
    %c0_74 = arith.constant 0 : index
    %c128_75 = arith.constant 128 : index
    %260 = vector.load %arg5[%c4_73, %c0_74, %c128_75] : memref<8x2x256xf32, #tpu.memory_space<vmem>>, vector<1x2x128xf32>
    %261 = vector.shape_cast %260 : vector<1x2x128xf32> to vector<2x128xf32>
    %262 = vector.shape_cast %256 : vector<2x128xf32> to vector<1x2x128xf32>
    tpu.vector_store %arg5[%c4_73, %c0_74, %c128_75], %262 {strides = array<i32>} : memref<8x2x256xf32, #tpu.memory_space<vmem>>, vector<1x2x128xf32>,
    %c8_76 = arith.constant 8 : index
    %c0_77 = arith.constant 0 : index
    %263 = vector.load %arg6[%c8_76, %c0_77] : memref<16x1024xf32, #tpu.memory_space<vmem>>, vector<2x512xf32>
    %cst_78 = arith.constant dense<0.000000e+00> : vector<2x512xf32>
    %264 = tpu.matmul %231, %8, %cst_78 {dimension_numbers = #tpu.dot_dimension_numbers<[1], [0], [0], [1], [0, 0, 1, 1], [], []>} : vector<2x128xf32>, vector<128x512xf32>, vector<2x512xf32> -> vector<2x512xf32>
    %265 = arith.addf %263, %264 : vector<2x512xf32>
    %c6_79 = arith.constant 6 : index
    %c512_80 = arith.constant 512 : index
    %266 = vector.load %arg6[%c6_79, %c512_80] : memref<16x1024xf32, #tpu.memory_space<vmem>>, vector<2x512xf32>
    %cst_81 = arith.constant dense<0.000000e+00> : vector<2x512xf32>
    %267 = tpu.matmul %256, %10, %cst_81 {dimension_numbers = #tpu.dot_dimension_numbers<[1], [0], [0], [1], [0, 0, 1, 1], [], []>} : vector<2x128xf32>, vector<128x512xf32>, vector<2x512xf32> -> vector<2x512xf32>
    %268 = arith.addf %266, %267 : vector<2x512xf32>
    %269 = vector.extract_strided_slice %265 {offsets = [0, 0], sizes = [2, 128], strides = [1, 1]} : vector<2x512xf32> to vector<2x128xf32>
    %270 = arith.negf %269 : vector<2x128xf32>
    %271 = math.exp %270 : vector<2x128xf32>
    %cst_82 = arith.constant 1.000000e+00 : f32
    %272 = vector.broadcast %cst_82 : f32 to vector<2x128xf32>
    %273 = arith.addf %272, %271 : vector<2x128xf32>
    %274 = arith.divf %272, %273 : vector<2x128xf32>
    %275 = vector.extract_strided_slice %265 {offsets = [0, 128], sizes = [2, 128], strides = [1, 1]} : vector<2x512xf32> to vector<2x128xf32>
    %276 = arith.negf %275 : vector<2x128xf32>
    %277 = math.exp %276 : vector<2x128xf32>
    %cst_83 = arith.constant 1.000000e+00 : f32
    %278 = vector.broadcast %cst_83 : f32 to vector<2x128xf32>
    %279 = arith.addf %278, %277 : vector<2x128xf32>
    %280 = arith.divf %278, %279 : vector<2x128xf32>
    %281 = vector.extract_strided_slice %265 {offsets = [0, 256], sizes = [2, 128], strides = [1, 1]} : vector<2x512xf32> to vector<2x128xf32>
    %282 = math.tanh %281 : vector<2x128xf32>
    %283 = vector.extract_strided_slice %265 {offsets = [0, 384], sizes = [2, 128], strides = [1, 1]} : vector<2x512xf32> to vector<2x128xf32>
    %284 = arith.negf %283 : vector<2x128xf32>
    %285 = math.exp %284 : vector<2x128xf32>
    %cst_84 = arith.constant 1.000000e+00 : f32
    %286 = vector.broadcast %cst_84 : f32 to vector<2x128xf32>
    %287 = arith.addf %286, %285 : vector<2x128xf32>
    %288 = arith.divf %286, %287 : vector<2x128xf32>
    %289 = arith.mulf %280, %229 : vector<2x128xf32>
    %290 = arith.mulf %274, %282 : vector<2x128xf32>
    %291 = arith.addf %289, %290 : vector<2x128xf32>
    %292 = math.tanh %291 : vector<2x128xf32>
    %293 = arith.mulf %288, %292 : vector<2x128xf32>
    %294 = vector.extract_strided_slice %268 {offsets = [0, 0], sizes = [2, 128], strides = [1, 1]} : vector<2x512xf32> to vector<2x128xf32>
    %295 = arith.negf %294 : vector<2x128xf32>
    %296 = math.exp %295 : vector<2x128xf32>
    %cst_85 = arith.constant 1.000000e+00 : f32
    %297 = vector.broadcast %cst_85 : f32 to vector<2x128xf32>
    %298 = arith.addf %297, %296 : vector<2x128xf32>
    %299 = arith.divf %297, %298 : vector<2x128xf32>
    %300 = vector.extract_strided_slice %268 {offsets = [0, 128], sizes = [2, 128], strides = [1, 1]} : vector<2x512xf32> to vector<2x128xf32>
    %301 = arith.negf %300 : vector<2x128xf32>
    %302 = math.exp %301 : vector<2x128xf32>
    %cst_86 = arith.constant 1.000000e+00 : f32
    %303 = vector.broadcast %cst_86 : f32 to vector<2x128xf32>
    %304 = arith.addf %303, %302 : vector<2x128xf32>
    %305 = arith.divf %303, %304 : vector<2x128xf32>
    %306 = vector.extract_strided_slice %268 {offsets = [0, 256], sizes = [2, 128], strides = [1, 1]} : vector<2x512xf32> to vector<2x128xf32>
    %307 = math.tanh %306 : vector<2x128xf32>
    %308 = vector.extract_strided_slice %268 {offsets = [0, 384], sizes = [2, 128], strides = [1, 1]} : vector<2x512xf32> to vector<2x128xf32>
    %309 = arith.negf %308 : vector<2x128xf32>
    %310 = math.exp %309 : vector<2x128xf32>
    %cst_87 = arith.constant 1.000000e+00 : f32
    %311 = vector.broadcast %cst_87 : f32 to vector<2x128xf32>
    %312 = arith.addf %311, %310 : vector<2x128xf32>
    %313 = arith.divf %311, %312 : vector<2x128xf32>
    %314 = arith.mulf %305, %254 : vector<2x128xf32>
    %315 = arith.mulf %299, %307 : vector<2x128xf32>
    %316 = arith.addf %314, %315 : vector<2x128xf32>
    %317 = math.tanh %316 : vector<2x128xf32>
    %318 = arith.mulf %313, %317 : vector<2x128xf32>
    %c4_88 = arith.constant 4 : index
    %c0_89 = arith.constant 0 : index
    %c0_90 = arith.constant 0 : index
    %319 = vector.load %arg5[%c4_88, %c0_89, %c0_90] : memref<8x2x256xf32, #tpu.memory_space<vmem>>, vector<1x2x128xf32>
    %320 = vector.shape_cast %319 : vector<1x2x128xf32> to vector<2x128xf32>
    %321 = vector.shape_cast %293 : vector<2x128xf32> to vector<1x2x128xf32>
    tpu.vector_store %arg5[%c4_88, %c0_89, %c0_90], %321 {strides = array<i32>} : memref<8x2x256xf32, #tpu.memory_space<vmem>>, vector<1x2x128xf32>,
    %c3_91 = arith.constant 3 : index
    %c0_92 = arith.constant 0 : index
    %c128_93 = arith.constant 128 : index
    %322 = vector.load %arg5[%c3_91, %c0_92, %c128_93] : memref<8x2x256xf32, #tpu.memory_space<vmem>>, vector<1x2x128xf32>
    %323 = vector.shape_cast %322 : vector<1x2x128xf32> to vector<2x128xf32>
    %324 = vector.shape_cast %318 : vector<2x128xf32> to vector<1x2x128xf32>
    tpu.vector_store %arg5[%c3_91, %c0_92, %c128_93], %324 {strides = array<i32>} : memref<8x2x256xf32, #tpu.memory_space<vmem>>, vector<1x2x128xf32>,
    %c10_94 = arith.constant 10 : index
    %c0_95 = arith.constant 0 : index
    %325 = vector.load %arg6[%c10_94, %c0_95] : memref<16x1024xf32, #tpu.memory_space<vmem>>, vector<2x512xf32>
    %cst_96 = arith.constant dense<0.000000e+00> : vector<2x512xf32>
    %326 = tpu.matmul %293, %8, %cst_96 {dimension_numbers = #tpu.dot_dimension_numbers<[1], [0], [0], [1], [0, 0, 1, 1], [], []>} : vector<2x128xf32>, vector<128x512xf32>, vector<2x512xf32> -> vector<2x512xf32>
    %327 = arith.addf %325, %326 : vector<2x512xf32>
    %c4_97 = arith.constant 4 : index
    %c512_98 = arith.constant 512 : index
    %328 = vector.load %arg6[%c4_97, %c512_98] : memref<16x1024xf32, #tpu.memory_space<vmem>>, vector<2x512xf32>
    %cst_99 = arith.constant dense<0.000000e+00> : vector<2x512xf32>
    %329 = tpu.matmul %318, %10, %cst_99 {dimension_numbers = #tpu.dot_dimension_numbers<[1], [0], [0], [1], [0, 0, 1, 1], [], []>} : vector<2x128xf32>, vector<128x512xf32>, vector<2x512xf32> -> vector<2x512xf32>
    %330 = arith.addf %328, %329 : vector<2x512xf32>
    %331 = vector.extract_strided_slice %327 {offsets = [0, 0], sizes = [2, 128], strides = [1, 1]} : vector<2x512xf32> to vector<2x128xf32>
    %332 = arith.negf %331 : vector<2x128xf32>
    %333 = math.exp %332 : vector<2x128xf32>
    %cst_100 = arith.constant 1.000000e+00 : f32
    %334 = vector.broadcast %cst_100 : f32 to vector<2x128xf32>
    %335 = arith.addf %334, %333 : vector<2x128xf32>
    %336 = arith.divf %334, %335 : vector<2x128xf32>
    %337 = vector.extract_strided_slice %327 {offsets = [0, 128], sizes = [2, 128], strides = [1, 1]} : vector<2x512xf32> to vector<2x128xf32>
    %338 = arith.negf %337 : vector<2x128xf32>
    %339 = math.exp %338 : vector<2x128xf32>
    %cst_101 = arith.constant 1.000000e+00 : f32
    %340 = vector.broadcast %cst_101 : f32 to vector<2x128xf32>
    %341 = arith.addf %340, %339 : vector<2x128xf32>
    %342 = arith.divf %340, %341 : vector<2x128xf32>
    %343 = vector.extract_strided_slice %327 {offsets = [0, 256], sizes = [2, 128], strides = [1, 1]} : vector<2x512xf32> to vector<2x128xf32>
    %344 = math.tanh %343 : vector<2x128xf32>
    %345 = vector.extract_strided_slice %327 {offsets = [0, 384], sizes = [2, 128], strides = [1, 1]} : vector<2x512xf32> to vector<2x128xf32>
    %346 = arith.negf %345 : vector<2x128xf32>
    %347 = math.exp %346 : vector<2x128xf32>
    %cst_102 = arith.constant 1.000000e+00 : f32
    %348 = vector.broadcast %cst_102 : f32 to vector<2x128xf32>
    %349 = arith.addf %348, %347 : vector<2x128xf32>
    %350 = arith.divf %348, %349 : vector<2x128xf32>
    %351 = arith.mulf %342, %291 : vector<2x128xf32>
    %352 = arith.mulf %336, %344 : vector<2x128xf32>
    %353 = arith.addf %351, %352 : vector<2x128xf32>
    %354 = math.tanh %353 : vector<2x128xf32>
    %355 = arith.mulf %350, %354 : vector<2x128xf32>
    %356 = vector.extract_strided_slice %330 {offsets = [0, 0], sizes = [2, 128], strides = [1, 1]} : vector<2x512xf32> to vector<2x128xf32>
    %357 = arith.negf %356 : vector<2x128xf32>
    %358 = math.exp %357 : vector<2x128xf32>
    %cst_103 = arith.constant 1.000000e+00 : f32
    %359 = vector.broadcast %cst_103 : f32 to vector<2x128xf32>
    %360 = arith.addf %359, %358 : vector<2x128xf32>
    %361 = arith.divf %359, %360 : vector<2x128xf32>
    %362 = vector.extract_strided_slice %330 {offsets = [0, 128], sizes = [2, 128], strides = [1, 1]} : vector<2x512xf32> to vector<2x128xf32>
    %363 = arith.negf %362 : vector<2x128xf32>
    %364 = math.exp %363 : vector<2x128xf32>
    %cst_104 = arith.constant 1.000000e+00 : f32
    %365 = vector.broadcast %cst_104 : f32 to vector<2x128xf32>
    %366 = arith.addf %365, %364 : vector<2x128xf32>
    %367 = arith.divf %365, %366 : vector<2x128xf32>
    %368 = vector.extract_strided_slice %330 {offsets = [0, 256], sizes = [2, 128], strides = [1, 1]} : vector<2x512xf32> to vector<2x128xf32>
    %369 = math.tanh %368 : vector<2x128xf32>
    %370 = vector.extract_strided_slice %330 {offsets = [0, 384], sizes = [2, 128], strides = [1, 1]} : vector<2x512xf32> to vector<2x128xf32>
    %371 = arith.negf %370 : vector<2x128xf32>
    %372 = math.exp %371 : vector<2x128xf32>
    %cst_105 = arith.constant 1.000000e+00 : f32
    %373 = vector.broadcast %cst_105 : f32 to vector<2x128xf32>
    %374 = arith.addf %373, %372 : vector<2x128xf32>
    %375 = arith.divf %373, %374 : vector<2x128xf32>
    %376 = arith.mulf %367, %316 : vector<2x128xf32>
    %377 = arith.mulf %361, %369 : vector<2x128xf32>
    %378 = arith.addf %376, %377 : vector<2x128xf32>
    %379 = math.tanh %378 : vector<2x128xf32>
    %380 = arith.mulf %375, %379 : vector<2x128xf32>
    %c5_106 = arith.constant 5 : index
    %c0_107 = arith.constant 0 : index
    %c0_108 = arith.constant 0 : index
    %381 = vector.load %arg5[%c5_106, %c0_107, %c0_108] : memref<8x2x256xf32, #tpu.memory_space<vmem>>, vector<1x2x128xf32>
    %382 = vector.shape_cast %381 : vector<1x2x128xf32> to vector<2x128xf32>
    %383 = vector.shape_cast %355 : vector<2x128xf32> to vector<1x2x128xf32>
    tpu.vector_store %arg5[%c5_106, %c0_107, %c0_108], %383 {strides = array<i32>} : memref<8x2x256xf32, #tpu.memory_space<vmem>>, vector<1x2x128xf32>,
    %c2_109 = arith.constant 2 : index
    %c0_110 = arith.constant 0 : index
    %c128_111 = arith.constant 128 : index
    %384 = vector.load %arg5[%c2_109, %c0_110, %c128_111] : memref<8x2x256xf32, #tpu.memory_space<vmem>>, vector<1x2x128xf32>
    %385 = vector.shape_cast %384 : vector<1x2x128xf32> to vector<2x128xf32>
    %386 = vector.shape_cast %380 : vector<2x128xf32> to vector<1x2x128xf32>
    tpu.vector_store %arg5[%c2_109, %c0_110, %c128_111], %386 {strides = array<i32>} : memref<8x2x256xf32, #tpu.memory_space<vmem>>, vector<1x2x128xf32>,
    %c12_112 = arith.constant 12 : index
    %c0_113 = arith.constant 0 : index
    %387 = vector.load %arg6[%c12_112, %c0_113] : memref<16x1024xf32, #tpu.memory_space<vmem>>, vector<2x512xf32>
    %cst_114 = arith.constant dense<0.000000e+00> : vector<2x512xf32>
    %388 = tpu.matmul %355, %8, %cst_114 {dimension_numbers = #tpu.dot_dimension_numbers<[1], [0], [0], [1], [0, 0, 1, 1], [], []>} : vector<2x128xf32>, vector<128x512xf32>, vector<2x512xf32> -> vector<2x512xf32>
    %389 = arith.addf %387, %388 : vector<2x512xf32>
    %c2_115 = arith.constant 2 : index
    %c512_116 = arith.constant 512 : index
    %390 = vector.load %arg6[%c2_115, %c512_116] : memref<16x1024xf32, #tpu.memory_space<vmem>>, vector<2x512xf32>
    %cst_117 = arith.constant dense<0.000000e+00> : vector<2x512xf32>
    %391 = tpu.matmul %380, %10, %cst_117 {dimension_numbers = #tpu.dot_dimension_numbers<[1], [0], [0], [1], [0, 0, 1, 1], [], []>} : vector<2x128xf32>, vector<128x512xf32>, vector<2x512xf32> -> vector<2x512xf32>
    %392 = arith.addf %390, %391 : vector<2x512xf32>
    %393 = vector.extract_strided_slice %389 {offsets = [0, 0], sizes = [2, 128], strides = [1, 1]} : vector<2x512xf32> to vector<2x128xf32>
    %394 = arith.negf %393 : vector<2x128xf32>
    %395 = math.exp %394 : vector<2x128xf32>
    %cst_118 = arith.constant 1.000000e+00 : f32
    %396 = vector.broadcast %cst_118 : f32 to vector<2x128xf32>
    %397 = arith.addf %396, %395 : vector<2x128xf32>
    %398 = arith.divf %396, %397 : vector<2x128xf32>
    %399 = vector.extract_strided_slice %389 {offsets = [0, 128], sizes = [2, 128], strides = [1, 1]} : vector<2x512xf32> to vector<2x128xf32>
    %400 = arith.negf %399 : vector<2x128xf32>
    %401 = math.exp %400 : vector<2x128xf32>
    %cst_119 = arith.constant 1.000000e+00 : f32
    %402 = vector.broadcast %cst_119 : f32 to vector<2x128xf32>
    %403 = arith.addf %402, %401 : vector<2x128xf32>
    %404 = arith.divf %402, %403 : vector<2x128xf32>
    %405 = vector.extract_strided_slice %389 {offsets = [0, 256], sizes = [2, 128], strides = [1, 1]} : vector<2x512xf32> to vector<2x128xf32>
    %406 = math.tanh %405 : vector<2x128xf32>
    %407 = vector.extract_strided_slice %389 {offsets = [0, 384], sizes = [2, 128], strides = [1, 1]} : vector<2x512xf32> to vector<2x128xf32>
    %408 = arith.negf %407 : vector<2x128xf32>
    %409 = math.exp %408 : vector<2x128xf32>
    %cst_120 = arith.constant 1.000000e+00 : f32
    %410 = vector.broadcast %cst_120 : f32 to vector<2x128xf32>
    %411 = arith.addf %410, %409 : vector<2x128xf32>
    %412 = arith.divf %410, %411 : vector<2x128xf32>
    %413 = arith.mulf %404, %353 : vector<2x128xf32>
    %414 = arith.mulf %398, %406 : vector<2x128xf32>
    %415 = arith.addf %413, %414 : vector<2x128xf32>
    %416 = math.tanh %415 : vector<2x128xf32>
    %417 = arith.mulf %412, %416 : vector<2x128xf32>
    %418 = vector.extract_strided_slice %392 {offsets = [0, 0], sizes = [2, 128], strides = [1, 1]} : vector<2x512xf32> to vector<2x128xf32>
    %419 = arith.negf %418 : vector<2x128xf32>
    %420 = math.exp %419 : vector<2x128xf32>
    %cst_121 = arith.constant 1.000000e+00 : f32
    %421 = vector.broadcast %cst_121 : f32 to vector<2x128xf32>
    %422 = arith.addf %421, %420 : vector<2x128xf32>
    %423 = arith.divf %421, %422 : vector<2x128xf32>
    %424 = vector.extract_strided_slice %392 {offsets = [0, 128], sizes = [2, 128], strides = [1, 1]} : vector<2x512xf32> to vector<2x128xf32>
    %425 = arith.negf %424 : vector<2x128xf32>
    %426 = math.exp %425 : vector<2x128xf32>
    %cst_122 = arith.constant 1.000000e+00 : f32
    %427 = vector.broadcast %cst_122 : f32 to vector<2x128xf32>
    %428 = arith.addf %427, %426 : vector<2x128xf32>
    %429 = arith.divf %427, %428 : vector<2x128xf32>
    %430 = vector.extract_strided_slice %392 {offsets = [0, 256], sizes = [2, 128], strides = [1, 1]} : vector<2x512xf32> to vector<2x128xf32>
    %431 = math.tanh %430 : vector<2x128xf32>
    %432 = vector.extract_strided_slice %392 {offsets = [0, 384], sizes = [2, 128], strides = [1, 1]} : vector<2x512xf32> to vector<2x128xf32>
    %433 = arith.negf %432 : vector<2x128xf32>
    %434 = math.exp %433 : vector<2x128xf32>
    %cst_123 = arith.constant 1.000000e+00 : f32
    %435 = vector.broadcast %cst_123 : f32 to vector<2x128xf32>
    %436 = arith.addf %435, %434 : vector<2x128xf32>
    %437 = arith.divf %435, %436 : vector<2x128xf32>
    %438 = arith.mulf %429, %378 : vector<2x128xf32>
    %439 = arith.mulf %423, %431 : vector<2x128xf32>
    %440 = arith.addf %438, %439 : vector<2x128xf32>
    %441 = math.tanh %440 : vector<2x128xf32>
    %442 = arith.mulf %437, %441 : vector<2x128xf32>
    %c6_124 = arith.constant 6 : index
    %c0_125 = arith.constant 0 : index
    %c0_126 = arith.constant 0 : index
    %443 = vector.load %arg5[%c6_124, %c0_125, %c0_126] : memref<8x2x256xf32, #tpu.memory_space<vmem>>, vector<1x2x128xf32>
    %444 = vector.shape_cast %443 : vector<1x2x128xf32> to vector<2x128xf32>
    %445 = vector.shape_cast %417 : vector<2x128xf32> to vector<1x2x128xf32>
    tpu.vector_store %arg5[%c6_124, %c0_125, %c0_126], %445 {strides = array<i32>} : memref<8x2x256xf32, #tpu.memory_space<vmem>>, vector<1x2x128xf32>,
    %c1_127 = arith.constant 1 : index
    %c0_128 = arith.constant 0 : index
    %c128_129 = arith.constant 128 : index
    %446 = vector.load %arg5[%c1_127, %c0_128, %c128_129] : memref<8x2x256xf32, #tpu.memory_space<vmem>>, vector<1x2x128xf32>
    %447 = vector.shape_cast %446 : vector<1x2x128xf32> to vector<2x128xf32>
    %448 = vector.shape_cast %442 : vector<2x128xf32> to vector<1x2x128xf32>
    tpu.vector_store %arg5[%c1_127, %c0_128, %c128_129], %448 {strides = array<i32>} : memref<8x2x256xf32, #tpu.memory_space<vmem>>, vector<1x2x128xf32>,
    %c14_130 = arith.constant 14 : index
    %c0_131 = arith.constant 0 : index
    %449 = vector.load %arg6[%c14_130, %c0_131] : memref<16x1024xf32, #tpu.memory_space<vmem>>, vector<2x512xf32>
    %cst_132 = arith.constant dense<0.000000e+00> : vector<2x512xf32>
    %450 = tpu.matmul %417, %8, %cst_132 {dimension_numbers = #tpu.dot_dimension_numbers<[1], [0], [0], [1], [0, 0, 1, 1], [], []>} : vector<2x128xf32>, vector<128x512xf32>, vector<2x512xf32> -> vector<2x512xf32>
    %451 = arith.addf %449, %450 : vector<2x512xf32>
    %c0_133 = arith.constant 0 : index
    %c512_134 = arith.constant 512 : index
    %452 = vector.load %arg6[%c0_133, %c512_134] : memref<16x1024xf32, #tpu.memory_space<vmem>>, vector<2x512xf32>
    %cst_135 = arith.constant dense<0.000000e+00> : vector<2x512xf32>
    %453 = tpu.matmul %442, %10, %cst_135 {dimension_numbers = #tpu.dot_dimension_numbers<[1], [0], [0], [1], [0, 0, 1, 1], [], []>} : vector<2x128xf32>, vector<128x512xf32>, vector<2x512xf32> -> vector<2x512xf32>
    %454 = arith.addf %452, %453 : vector<2x512xf32>
    %455 = vector.extract_strided_slice %451 {offsets = [0, 0], sizes = [2, 128], strides = [1, 1]} : vector<2x512xf32> to vector<2x128xf32>
    %456 = arith.negf %455 : vector<2x128xf32>
    %457 = math.exp %456 : vector<2x128xf32>
    %cst_136 = arith.constant 1.000000e+00 : f32
    %458 = vector.broadcast %cst_136 : f32 to vector<2x128xf32>
    %459 = arith.addf %458, %457 : vector<2x128xf32>
    %460 = arith.divf %458, %459 : vector<2x128xf32>
    %461 = vector.extract_strided_slice %451 {offsets = [0, 128], sizes = [2, 128], strides = [1, 1]} : vector<2x512xf32> to vector<2x128xf32>
    %462 = arith.negf %461 : vector<2x128xf32>
    %463 = math.exp %462 : vector<2x128xf32>
    %cst_137 = arith.constant 1.000000e+00 : f32
    %464 = vector.broadcast %cst_137 : f32 to vector<2x128xf32>
    %465 = arith.addf %464, %463 : vector<2x128xf32>
    %466 = arith.divf %464, %465 : vector<2x128xf32>
    %467 = vector.extract_strided_slice %451 {offsets = [0, 256], sizes = [2, 128], strides = [1, 1]} : vector<2x512xf32> to vector<2x128xf32>
    %468 = math.tanh %467 : vector<2x128xf32>
    %469 = vector.extract_strided_slice %451 {offsets = [0, 384], sizes = [2, 128], strides = [1, 1]} : vector<2x512xf32> to vector<2x128xf32>
    %470 = arith.negf %469 : vector<2x128xf32>
    %471 = math.exp %470 : vector<2x128xf32>
    %cst_138 = arith.constant 1.000000e+00 : f32
    %472 = vector.broadcast %cst_138 : f32 to vector<2x128xf32>
    %473 = arith.addf %472, %471 : vector<2x128xf32>
    %474 = arith.divf %472, %473 : vector<2x128xf32>
    %475 = arith.mulf %466, %415 : vector<2x128xf32>
    %476 = arith.mulf %460, %468 : vector<2x128xf32>
    %477 = arith.addf %475, %476 : vector<2x128xf32>
    %478 = math.tanh %477 : vector<2x128xf32>
    %479 = arith.mulf %474, %478 : vector<2x128xf32>
    %480 = vector.extract_strided_slice %454 {offsets = [0, 0], sizes = [2, 128], strides = [1, 1]} : vector<2x512xf32> to vector<2x128xf32>
    %481 = arith.negf %480 : vector<2x128xf32>
    %482 = math.exp %481 : vector<2x128xf32>
    %cst_139 = arith.constant 1.000000e+00 : f32
    %483 = vector.broadcast %cst_139 : f32 to vector<2x128xf32>
    %484 = arith.addf %483, %482 : vector<2x128xf32>
    %485 = arith.divf %483, %484 : vector<2x128xf32>
    %486 = vector.extract_strided_slice %454 {offsets = [0, 128], sizes = [2, 128], strides = [1, 1]} : vector<2x512xf32> to vector<2x128xf32>
    %487 = arith.negf %486 : vector<2x128xf32>
    %488 = math.exp %487 : vector<2x128xf32>
    %cst_140 = arith.constant 1.000000e+00 : f32
    %489 = vector.broadcast %cst_140 : f32 to vector<2x128xf32>
    %490 = arith.addf %489, %488 : vector<2x128xf32>
    %491 = arith.divf %489, %490 : vector<2x128xf32>
    %492 = vector.extract_strided_slice %454 {offsets = [0, 256], sizes = [2, 128], strides = [1, 1]} : vector<2x512xf32> to vector<2x128xf32>
    %493 = math.tanh %492 : vector<2x128xf32>
    %494 = vector.extract_strided_slice %454 {offsets = [0, 384], sizes = [2, 128], strides = [1, 1]} : vector<2x512xf32> to vector<2x128xf32>
    %495 = arith.negf %494 : vector<2x128xf32>
    %496 = math.exp %495 : vector<2x128xf32>
    %cst_141 = arith.constant 1.000000e+00 : f32
    %497 = vector.broadcast %cst_141 : f32 to vector<2x128xf32>
    %498 = arith.addf %497, %496 : vector<2x128xf32>
    %499 = arith.divf %497, %498 : vector<2x128xf32>
    %500 = arith.mulf %491, %440 : vector<2x128xf32>
    %501 = arith.mulf %485, %493 : vector<2x128xf32>
    %502 = arith.addf %500, %501 : vector<2x128xf32>
    %503 = math.tanh %502 : vector<2x128xf32>
    %504 = arith.mulf %499, %503 : vector<2x128xf32>
    %c7_142 = arith.constant 7 : index
    %c0_143 = arith.constant 0 : index
    %c0_144 = arith.constant 0 : index
    %505 = vector.load %arg5[%c7_142, %c0_143, %c0_144] : memref<8x2x256xf32, #tpu.memory_space<vmem>>, vector<1x2x128xf32>
    %506 = vector.shape_cast %505 : vector<1x2x128xf32> to vector<2x128xf32>
    %507 = vector.shape_cast %479 : vector<2x128xf32> to vector<1x2x128xf32>
    tpu.vector_store %arg5[%c7_142, %c0_143, %c0_144], %507 {strides = array<i32>} : memref<8x2x256xf32, #tpu.memory_space<vmem>>, vector<1x2x128xf32>,
    %c0_145 = arith.constant 0 : index
    %c0_146 = arith.constant 0 : index
    %c128_147 = arith.constant 128 : index
    %508 = vector.load %arg5[%c0_145, %c0_146, %c128_147] : memref<8x2x256xf32, #tpu.memory_space<vmem>>, vector<1x2x128xf32>
    %509 = vector.shape_cast %508 : vector<1x2x128xf32> to vector<2x128xf32>
    %510 = vector.shape_cast %504 : vector<2x128xf32> to vector<1x2x128xf32>
    tpu.vector_store %arg5[%c0_145, %c0_146, %c128_147], %510 {strides = array<i32>} : memref<8x2x256xf32, #tpu.memory_space<vmem>>, vector<1x2x128xf32>,
    return
  }
  func.func @transform_0(%arg0: i32) -> (i32, i32) {
    %c0_i32 = arith.constant 0 : i32
    %c0_i32_0 = arith.constant 0 : i32
    %c0_i32_1 = arith.constant 0 : i32
    return %c0_i32, %c0_i32_0 : i32, i32
  }
  func.func @transform_1(%arg0: i32) -> (i32, i32) {
    %c0_i32 = arith.constant 0 : i32
    %c0_i32_0 = arith.constant 0 : i32
    %c0_i32_1 = arith.constant 0 : i32
    return %c0_i32, %c0_i32_0 : i32, i32
  }
  func.func @transform_2(%arg0: i32) -> (i32, i32, i32) {
    %c0_i32 = arith.constant 0 : i32
    %c0_i32_0 = arith.constant 0 : i32
    %c0_i32_1 = arith.constant 0 : i32
    %c0_i32_2 = arith.constant 0 : i32
    return %c0_i32, %c0_i32_0, %c0_i32_1 : i32, i32, i32
  }
  func.func @transform_3(%arg0: i32) -> (i32, i32) {
    %c0_i32 = arith.constant 0 : i32
    %c0_i32_0 = arith.constant 0 : i32
    %c0_i32_1 = arith.constant 0 : i32
    return %c0_i32, %c0_i32_0 : i32, i32
  }
  func.func @transform_4(%arg0: i32) -> (i32, i32, i32) {
    %c0_i32 = arith.constant 0 : i32
    %c0_i32_0 = arith.constant 0 : i32
    %c0_i32_1 = arith.constant 0 : i32
    %c0_i32_2 = arith.constant 0 : i32
    return %c0_i32, %c0_i32_0, %c0_i32_1 : i32, i32, i32
  }
}

module attributes {stable_mosaic.version = 11 : i64} {
  func.func @_fc_softmax_kernel(%arg0: i32, %arg1: memref<16x256xf32, #tpu.memory_space<vmem>>, %arg2: memref<256x4xf32, #tpu.memory_space<vmem>>, %arg3: memref<1x4xf32, #tpu.memory_space<vmem>>, %arg4: memref<8x2x4xf32, #tpu.memory_space<vmem>>) attributes {dimension_semantics = [#tpu.dimension_semantics<arbitrary>], iteration_bounds = array<i64: 1>, scalar_prefetch = 0 : i64, scratch_operands = 0 : i64, tpu.core_type = #tpu.core_type<tc>, window_params = [{pipeline_mode = #tpu.pipeline_mode<synchronous>, transform_indices = @transform_0, window_bounds = array<i64: 16, 256>}, {pipeline_mode = #tpu.pipeline_mode<synchronous>, transform_indices = @transform_1, window_bounds = array<i64: 256, 4>}, {pipeline_mode = #tpu.pipeline_mode<synchronous>, transform_indices = @transform_2, window_bounds = array<i64: 1, 4>}, {pipeline_mode = #tpu.pipeline_mode<synchronous>, transform_indices = @transform_3, window_bounds = array<i64: 8, 2, 4>}]} {
    %c0 = arith.constant 0 : index
    %c0_0 = arith.constant 0 : index
    %0 = vector.load %arg1[%c0, %c0_0] : memref<16x256xf32, #tpu.memory_space<vmem>>, vector<16x256xf32>
    %c0_1 = arith.constant 0 : index
    %c0_2 = arith.constant 0 : index
    %1 = vector.load %arg2[%c0_1, %c0_2] : memref<256x4xf32, #tpu.memory_space<vmem>>, vector<256x4xf32>
    %cst = arith.constant dense<0.000000e+00> : vector<16x4xf32>
    %2 = tpu.matmul %0, %1, %cst {dimension_numbers = #tpu.dot_dimension_numbers<[1], [0], [0], [1], [0, 0, 1, 1], [], []>} : vector<16x256xf32>, vector<256x4xf32>, vector<16x4xf32> -> vector<16x4xf32>
    %c0_3 = arith.constant 0 : index
    %c0_4 = arith.constant 0 : index
    %3 = vector.load %arg3[%c0_3, %c0_4] : memref<1x4xf32, #tpu.memory_space<vmem>>, vector<1x4xf32>
    %4 = vector.broadcast %3 : vector<1x4xf32> to vector<16x4xf32>
    %5 = arith.addf %2, %4 : vector<16x4xf32>
    %6 = vector.extract_strided_slice %5 {offsets = [0, 0], sizes = [2, 4], strides = [1, 1]} : vector<16x4xf32> to vector<2x4xf32>
    %7 = vector.extract_strided_slice %5 {offsets = [2, 0], sizes = [2, 4], strides = [1, 1]} : vector<16x4xf32> to vector<2x4xf32>
    %8 = vector.extract_strided_slice %5 {offsets = [4, 0], sizes = [2, 4], strides = [1, 1]} : vector<16x4xf32> to vector<2x4xf32>
    %9 = vector.extract_strided_slice %5 {offsets = [6, 0], sizes = [2, 4], strides = [1, 1]} : vector<16x4xf32> to vector<2x4xf32>
    %10 = vector.extract_strided_slice %5 {offsets = [8, 0], sizes = [2, 4], strides = [1, 1]} : vector<16x4xf32> to vector<2x4xf32>
    %11 = vector.extract_strided_slice %5 {offsets = [10, 0], sizes = [2, 4], strides = [1, 1]} : vector<16x4xf32> to vector<2x4xf32>
    %12 = vector.extract_strided_slice %5 {offsets = [12, 0], sizes = [2, 4], strides = [1, 1]} : vector<16x4xf32> to vector<2x4xf32>
    %13 = vector.extract_strided_slice %5 {offsets = [14, 0], sizes = [2, 4], strides = [1, 1]} : vector<16x4xf32> to vector<2x4xf32>
    %14 = arith.maximumf %6, %7 : vector<2x4xf32>
    %15 = arith.maximumf %14, %8 : vector<2x4xf32>
    %16 = arith.maximumf %15, %9 : vector<2x4xf32>
    %17 = arith.maximumf %16, %10 : vector<2x4xf32>
    %18 = arith.maximumf %17, %11 : vector<2x4xf32>
    %19 = arith.maximumf %18, %12 : vector<2x4xf32>
    %20 = arith.maximumf %19, %13 : vector<2x4xf32>
    %21 = arith.subf %6, %20 : vector<2x4xf32>
    %22 = math.exp %21 : vector<2x4xf32>
    %23 = arith.subf %7, %20 : vector<2x4xf32>
    %24 = math.exp %23 : vector<2x4xf32>
    %25 = arith.subf %8, %20 : vector<2x4xf32>
    %26 = math.exp %25 : vector<2x4xf32>
    %27 = arith.subf %9, %20 : vector<2x4xf32>
    %28 = math.exp %27 : vector<2x4xf32>
    %29 = arith.subf %10, %20 : vector<2x4xf32>
    %30 = math.exp %29 : vector<2x4xf32>
    %31 = arith.subf %11, %20 : vector<2x4xf32>
    %32 = math.exp %31 : vector<2x4xf32>
    %33 = arith.subf %12, %20 : vector<2x4xf32>
    %34 = math.exp %33 : vector<2x4xf32>
    %35 = arith.subf %13, %20 : vector<2x4xf32>
    %36 = math.exp %35 : vector<2x4xf32>
    %37 = arith.addf %22, %24 : vector<2x4xf32>
    %38 = arith.addf %37, %26 : vector<2x4xf32>
    %39 = arith.addf %38, %28 : vector<2x4xf32>
    %40 = arith.addf %39, %30 : vector<2x4xf32>
    %41 = arith.addf %40, %32 : vector<2x4xf32>
    %42 = arith.addf %41, %34 : vector<2x4xf32>
    %43 = arith.addf %42, %36 : vector<2x4xf32>
    %44 = tpu.reciprocal %43 {approx = true} : vector<2x4xf32> -> vector<2x4xf32>
    %45 = arith.mulf %22, %44 : vector<2x4xf32>
    %c0_5 = arith.constant 0 : index
    %c0_6 = arith.constant 0 : index
    %c0_7 = arith.constant 0 : index
    %46 = vector.load %arg4[%c0_5, %c0_6, %c0_7] : memref<8x2x4xf32, #tpu.memory_space<vmem>>, vector<1x2x4xf32>
    %47 = vector.shape_cast %46 : vector<1x2x4xf32> to vector<2x4xf32>
    %48 = vector.shape_cast %45 : vector<2x4xf32> to vector<1x2x4xf32>
    tpu.vector_store %arg4[%c0_5, %c0_6, %c0_7], %48 {strides = array<i32>} : memref<8x2x4xf32, #tpu.memory_space<vmem>>, vector<1x2x4xf32>,
    %49 = arith.mulf %24, %44 : vector<2x4xf32>
    %c1 = arith.constant 1 : index
    %c0_8 = arith.constant 0 : index
    %c0_9 = arith.constant 0 : index
    %50 = vector.load %arg4[%c1, %c0_8, %c0_9] : memref<8x2x4xf32, #tpu.memory_space<vmem>>, vector<1x2x4xf32>
    %51 = vector.shape_cast %50 : vector<1x2x4xf32> to vector<2x4xf32>
    %52 = vector.shape_cast %49 : vector<2x4xf32> to vector<1x2x4xf32>
    tpu.vector_store %arg4[%c1, %c0_8, %c0_9], %52 {strides = array<i32>} : memref<8x2x4xf32, #tpu.memory_space<vmem>>, vector<1x2x4xf32>,
    %53 = arith.mulf %26, %44 : vector<2x4xf32>
    %c2 = arith.constant 2 : index
    %c0_10 = arith.constant 0 : index
    %c0_11 = arith.constant 0 : index
    %54 = vector.load %arg4[%c2, %c0_10, %c0_11] : memref<8x2x4xf32, #tpu.memory_space<vmem>>, vector<1x2x4xf32>
    %55 = vector.shape_cast %54 : vector<1x2x4xf32> to vector<2x4xf32>
    %56 = vector.shape_cast %53 : vector<2x4xf32> to vector<1x2x4xf32>
    tpu.vector_store %arg4[%c2, %c0_10, %c0_11], %56 {strides = array<i32>} : memref<8x2x4xf32, #tpu.memory_space<vmem>>, vector<1x2x4xf32>,
    %57 = arith.mulf %28, %44 : vector<2x4xf32>
    %c3 = arith.constant 3 : index
    %c0_12 = arith.constant 0 : index
    %c0_13 = arith.constant 0 : index
    %58 = vector.load %arg4[%c3, %c0_12, %c0_13] : memref<8x2x4xf32, #tpu.memory_space<vmem>>, vector<1x2x4xf32>
    %59 = vector.shape_cast %58 : vector<1x2x4xf32> to vector<2x4xf32>
    %60 = vector.shape_cast %57 : vector<2x4xf32> to vector<1x2x4xf32>
    tpu.vector_store %arg4[%c3, %c0_12, %c0_13], %60 {strides = array<i32>} : memref<8x2x4xf32, #tpu.memory_space<vmem>>, vector<1x2x4xf32>,
    %61 = arith.mulf %30, %44 : vector<2x4xf32>
    %c4 = arith.constant 4 : index
    %c0_14 = arith.constant 0 : index
    %c0_15 = arith.constant 0 : index
    %62 = vector.load %arg4[%c4, %c0_14, %c0_15] : memref<8x2x4xf32, #tpu.memory_space<vmem>>, vector<1x2x4xf32>
    %63 = vector.shape_cast %62 : vector<1x2x4xf32> to vector<2x4xf32>
    %64 = vector.shape_cast %61 : vector<2x4xf32> to vector<1x2x4xf32>
    tpu.vector_store %arg4[%c4, %c0_14, %c0_15], %64 {strides = array<i32>} : memref<8x2x4xf32, #tpu.memory_space<vmem>>, vector<1x2x4xf32>,
    %65 = arith.mulf %32, %44 : vector<2x4xf32>
    %c5 = arith.constant 5 : index
    %c0_16 = arith.constant 0 : index
    %c0_17 = arith.constant 0 : index
    %66 = vector.load %arg4[%c5, %c0_16, %c0_17] : memref<8x2x4xf32, #tpu.memory_space<vmem>>, vector<1x2x4xf32>
    %67 = vector.shape_cast %66 : vector<1x2x4xf32> to vector<2x4xf32>
    %68 = vector.shape_cast %65 : vector<2x4xf32> to vector<1x2x4xf32>
    tpu.vector_store %arg4[%c5, %c0_16, %c0_17], %68 {strides = array<i32>} : memref<8x2x4xf32, #tpu.memory_space<vmem>>, vector<1x2x4xf32>,
    %69 = arith.mulf %34, %44 : vector<2x4xf32>
    %c6 = arith.constant 6 : index
    %c0_18 = arith.constant 0 : index
    %c0_19 = arith.constant 0 : index
    %70 = vector.load %arg4[%c6, %c0_18, %c0_19] : memref<8x2x4xf32, #tpu.memory_space<vmem>>, vector<1x2x4xf32>
    %71 = vector.shape_cast %70 : vector<1x2x4xf32> to vector<2x4xf32>
    %72 = vector.shape_cast %69 : vector<2x4xf32> to vector<1x2x4xf32>
    tpu.vector_store %arg4[%c6, %c0_18, %c0_19], %72 {strides = array<i32>} : memref<8x2x4xf32, #tpu.memory_space<vmem>>, vector<1x2x4xf32>,
    %73 = arith.mulf %36, %44 : vector<2x4xf32>
    %c7 = arith.constant 7 : index
    %c0_20 = arith.constant 0 : index
    %c0_21 = arith.constant 0 : index
    %74 = vector.load %arg4[%c7, %c0_20, %c0_21] : memref<8x2x4xf32, #tpu.memory_space<vmem>>, vector<1x2x4xf32>
    %75 = vector.shape_cast %74 : vector<1x2x4xf32> to vector<2x4xf32>
    %76 = vector.shape_cast %73 : vector<2x4xf32> to vector<1x2x4xf32>
    tpu.vector_store %arg4[%c7, %c0_20, %c0_21], %76 {strides = array<i32>} : memref<8x2x4xf32, #tpu.memory_space<vmem>>, vector<1x2x4xf32>,
    return
  }
  func.func @transform_0(%arg0: i32) -> (i32, i32) {
    %c0_i32 = arith.constant 0 : i32
    %c0_i32_0 = arith.constant 0 : i32
    %c0_i32_1 = arith.constant 0 : i32
    return %c0_i32, %c0_i32_0 : i32, i32
  }
  func.func @transform_1(%arg0: i32) -> (i32, i32) {
    %c0_i32 = arith.constant 0 : i32
    %c0_i32_0 = arith.constant 0 : i32
    %c0_i32_1 = arith.constant 0 : i32
    return %c0_i32, %c0_i32_0 : i32, i32
  }
  func.func @transform_2(%arg0: i32) -> (i32, i32) {
    %c0_i32 = arith.constant 0 : i32
    %c0_i32_0 = arith.constant 0 : i32
    %c0_i32_1 = arith.constant 0 : i32
    return %c0_i32, %c0_i32_0 : i32, i32
  }
  func.func @transform_3(%arg0: i32) -> (i32, i32, i32) {
    %c0_i32 = arith.constant 0 : i32
    %c0_i32_0 = arith.constant 0 : i32
    %c0_i32_1 = arith.constant 0 : i32
    %c0_i32_2 = arith.constant 0 : i32
    return %c0_i32, %c0_i32_0, %c0_i32_1 : i32, i32, i32
  }
}

</mosaic_0001>

<llo_original>
// kernel: _lambda_.5
$region0: #{_lambda_.5}
  #allocation0 [shape = 'u32[]', space=smem, size = 0x4, offset = 0x4, fixed_abs, tag = 'smem constant byte address 0x4 - core index']
  #allocation1 [shape = 'u32[144,128]{1,0:T(1,128)}', space=vmem, size = 0x12000, scoped, tag = 'internal scratch']
  %s0 = inlined_call_operand.vmem [shape: f32[16,256], index: 0, kind: input, shape index: {}]
  %s1 = inlined_call_operand.vmem [shape: f32[256,4], index: 1, kind: input, shape index: {}]
  %s2 = inlined_call_operand.vmem [shape: f32[1,4], index: 2, kind: input, shape index: {}]
  %s3 = inlined_call_operand.vmem [shape: f32[8,2,4], index: 3, kind: output, shape index: {}]
  %s4 = sld [smem:[#allocation0]]
  $region22: #{_lambda_.5} parent=0
    _
  %s6 = ssub.s32 1, %s4
  %s7 = scalar_select 0, %s6, %s4
  // Predicated region
  $region2: #{_lambda_.5} parent=0 // pred_check
    _
  $region3: #{_lambda_.5} parent=0 // pred_check_branch
    %9 = sbr.rel (0) target = $region5
  $region4: #{_lambda_.5} parent=0 // pred_region
    _
  $region5: #{_lambda_.5} parent=0 // pred_fallthru
    _
  // Predicated region
  $region6: #{_lambda_.5} parent=0 // pred_check
    _
  $region7: #{_lambda_.5} parent=0 // pred_check_branch
    %11 = sbr.rel (0) target = $region9
  $region8: #{_lambda_.5} parent=0 // pred_region
    _
  $region9: #{_lambda_.5} parent=0 // pred_fallthru
    _
  // Predicated region
  $region10: #{_lambda_.5} parent=0 // pred_check
    _
  $region11: #{_lambda_.5} parent=0 // pred_check_branch
    %13 = sbr.rel (0) target = $region13
  $region12: #{_lambda_.5} parent=0 // pred_region
    _
  $region13: #{_lambda_.5} parent=0 // pred_fallthru
    _
  %v14 = vld [vmem:[%s0] sm:$0xff]
  %v15 = vld [vmem:[%s0 + $0x8] sm:$0xff]
  %v16 = vld [vmem:[%s0 + $0x10] sm:$0xff]
  %v17 = vld [vmem:[%s0 + $0x18] sm:$0xff]
  %v18 = vld [vmem:[%s1] sm:$0xff]
  %v19 = vld [vmem:[%s1 + $0x8] sm:$0xff]
  %v20 = vld [vmem:[%s1 + $0x10] sm:$0xff]
  %v21 = vld [vmem:[%s1 + $0x18] sm:$0xff]
  %v22 = vld [vmem:[%s1 + $0x20] sm:$0xff]
  %v23 = vld [vmem:[%s1 + $0x28] sm:$0xff]
  %v24 = vld [vmem:[%s1 + $0x30] sm:$0xff]
  %v25 = vld [vmem:[%s1 + $0x38] sm:$0xff]
  %v26 = vld [vmem:[%s1 + $0x40] sm:$0xff]
  %v27 = vld [vmem:[%s1 + $0x48] sm:$0xff]
  %v28 = vld [vmem:[%s1 + $0x50] sm:$0xff]
  %v29 = vld [vmem:[%s1 + $0x58] sm:$0xff]
  %v30 = vld [vmem:[%s1 + $0x60] sm:$0xff]
  %v31 = vld [vmem:[%s1 + $0x68] sm:$0xff]
  %v32 = vld [vmem:[%s1 + $0x70] sm:$0xff]
  %v33 = vld [vmem:[%s1 + $0x78] sm:$0xff]
  %v34 = vld [vmem:[%s1 + $0x80] sm:$0xff]
  %v35 = vld [vmem:[%s1 + $0x88] sm:$0xff]
  %v36 = vld [vmem:[%s1 + $0x90] sm:$0xff]
  %v37 = vld [vmem:[%s1 + $0x98] sm:$0xff]
  %v38 = vld [vmem:[%s1 + $0xa0] sm:$0xff]
  %v39 = vld [vmem:[%s1 + $0xa8] sm:$0xff]
  %v40 = vld [vmem:[%s1 + $0xb0] sm:$0xff]
  %v41 = vld [vmem:[%s1 + $0xb8] sm:$0xff]
  %v42 = vld [vmem:[%s1 + $0xc0] sm:$0xff]
  %v43 = vld [vmem:[%s1 + $0xc8] sm:$0xff]
  %v44 = vld [vmem:[%s1 + $0xd0] sm:$0xff]
  %v45 = vld [vmem:[%s1 + $0xd8] sm:$0xff]
  %v46 = vld [vmem:[%s1 + $0xe0] sm:$0xff]
  %v47 = vld [vmem:[%s1 + $0xe8] sm:$0xff]
  %v48 = vld [vmem:[%s1 + $0xf0] sm:$0xff]
  %v49 = vld [vmem:[%s1 + $0xf8] sm:$0xff]
  %v50 = vld [vmem:[%s2] sm:$0x1]
  %v52 = vlaneseq
  %v53 = vshrl.u32 %v52, 7
  %v54 = vsub.s32 0, %v53
  %v55 = vrot.slane %v50, %v54
  %57 = vmatprep.subr.mxu0 0.0
  %58 = vmatpush1.msra.mxu0 %v18
  %59 = vmatprep.subr.mxu0 0.0
  %60 = vmatpush1.msra.mxu0 %v19
  %61 = vmatprep.subr.mxu0 0.0
  %62 = vmatpush1.msra.mxu0 %v20
  %63 = vmatprep.subr.mxu0 0.0
  %64 = vmatpush1.msra.mxu0 %v21
  %65 = vmatprep.subr.mxu0 0.0
  %66 = vmatpush1.msra.mxu0 %v22
  %67 = vmatprep.subr.mxu0 0.0
  %68 = vmatpush1.msra.mxu0 %v23
  %69 = vmatprep.subr.mxu0 0.0
  %70 = vmatpush1.msra.mxu0 %v24
  %71 = vmatprep.subr.mxu0 0.0
  %72 = vmatpush1.msra.mxu0 %v25
  %73 = vmatprep.subr.mxu0 0.0
  %74 = vmatpush1.msra.mxu0 %v26
  %75 = vmatprep.subr.mxu0 0.0
  %76 = vmatpush1.msra.mxu0 %v27
  %77 = vmatprep.subr.mxu0 0.0
  %78 = vmatpush1.msra.mxu0 %v28
  %79 = vmatprep.subr.mxu0 0.0
  %80 = vmatpush1.msra.mxu0 %v29
  %81 = vmatprep.subr.mxu0 0.0
  %82 = vmatpush1.msra.mxu0 %v30
  %83 = vmatprep.subr.mxu0 0.0
  %84 = vmatpush1.msra.mxu0 %v31
  %85 = vmatprep.subr.mxu0 0.0
  %86 = vmatpush1.msra.mxu0 %v32
  %87 = vmatprep.subr.mxu0 0.0
  %88 = vmatpush1.msra.mxu0 %v33
  %89 = vmatprep.subr.mxu0 0.0
  %90 = vmatpush1.msra.mxu0 %v34
  %91 = vmatprep.subr.mxu0 0.0
  %92 = vmatpush1.msra.mxu0 %v35
  %93 = vmatprep.subr.mxu0 0.0
  %94 = vmatpush1.msra.mxu0 %v36
  %95 = vmatprep.subr.mxu0 0.0
  %96 = vmatpush1.msra.mxu0 %v37
  %97 = vmatprep.subr.mxu0 0.0
  %98 = vmatpush1.msra.mxu0 %v38
  %99 = vmatprep.subr.mxu0 0.0
  %100 = vmatpush1.msra.mxu0 %v39
  %101 = vmatprep.subr.mxu0 0.0
  %102 = vmatpush1.msra.mxu0 %v40
  %103 = vmatprep.subr.mxu0 0.0
  %104 = vmatpush1.msra.mxu0 %v41
  %105 = vmatprep.subr.mxu0 0.0
  %106 = vmatpush1.msra.mxu0 %v42
  %107 = vmatprep.subr.mxu0 0.0
  %108 = vmatpush1.msra.mxu0 %v43
  %109 = vmatprep.subr.mxu0 0.0
  %110 = vmatpush1.msra.mxu0 %v44
  %111 = vmatprep.subr.mxu0 0.0
  %112 = vmatpush1.msra.mxu0 %v45
  %113 = vmatprep.subr.mxu0 0.0
  %114 = vmatpush1.msra.mxu0 %v46
  %115 = vmatprep.subr.mxu0 0.0
  %116 = vmatpush1.msra.mxu0 %v47
  %117 = vmatprep.subr.mxu0 0.0
  %118 = vmatpush1.msra.mxu0 %v48
  %119 = vmatprep.subr.mxu0 0.0
  %120 = vmatpush1.msra.mxu0 %v49
  %121 = vmatprep.mubr.f32.mxu0 %v15
  %122 = vmatmul.mubr.f32.gmra.mrb[0].mxu0 %v14
  %v123 = vpop.f32.mrb[0].mxu0
  %v124 = vadd.f32 %v55, %v123
  %v125 = vpop.f32.mrb[0].mxu0
  %126 = vmatprep.mubr.f32.mxu0 %v17
  %127 = vmatmul.mubr.f32.gmra.mrb[0].mxu0 %v16
  %v128 = vpop.f32.mrb[0].mxu0
  %v129 = vadd.f32 %v55, %v128
  %v130 = vpop.f32.mrb[0].mxu0
  %131 = vdwg.mxu0
  %v133 = vrot.slane %v124, 2
  %v135 = vmax.f32 %v124, %v133
  %v136 = vrot.slane %v124, 4
  %v138 = vmax.f32 %v135, %v136
  %v139 = vrot.slane %v124, 6
  %v141 = vmax.f32 %v138, %v139
  %v142 = vmax.f32 %v141, %v129
  %v144 = vrot.slane %v129, 2
  %v146 = vmax.f32 %v142, %v144
  %v147 = vrot.slane %v129, 4
  %v149 = vmax.f32 %v146, %v147
  %v150 = vrot.slane %v129, 6
  %v152 = vmax.f32 %v149, %v150
  %v153 = vsub.f32 %v124, %v152
  %v154 = vmul.f32 %v153, 1.442695
  %v155 = vpow.pop %v154
  %v157 = vrot.slane %v152, 6
  %v159 = vsub.f32 %v124, %v157
  %v160 = vmul.f32 %v159, 1.442695
  %v161 = vpow.pop %v160
  %v162 = vrot.slane %v152, 4
  %v164 = vsub.f32 %v124, %v162
  %v165 = vmul.f32 %v164, 1.442695
  %v166 = vpow.pop %v165
  %v167 = vrot.slane %v152, 2
  %v169 = vsub.f32 %v124, %v167
  %v170 = vmul.f32 %v169, 1.442695
  %v171 = vpow.pop %v170
  %v172 = vsub.f32 %v129, %v152
  %v173 = vmul.f32 %v172, 1.442695
  %v174 = vpow.pop %v173
  %v175 = vsub.f32 %v129, %v157
  %v176 = vmul.f32 %v175, 1.442695
  %v177 = vpow.pop %v176
  %v178 = vsub.f32 %v129, %v162
  %v179 = vmul.f32 %v178, 1.442695
  %v180 = vpow.pop %v179
  %v181 = vsub.f32 %v129, %v167
  %v182 = vmul.f32 %v181, 1.442695
  %v183 = vpow.pop %v182
  %v185 = vrot.slane %v161, 2
  %v187 = vadd.f32 %v155, %v185
  %v189 = vrot.slane %v166, 4
  %v191 = vadd.f32 %v187, %v189
  %v193 = vrot.slane %v171, 6
  %v195 = vadd.f32 %v191, %v193
  %v196 = vadd.f32 %v195, %v174
  %v198 = vrot.slane %v177, 2
  %v200 = vadd.f32 %v196, %v198
  %v202 = vrot.slane %v180, 4
  %v204 = vadd.f32 %v200, %v202
  %v206 = vrot.slane %v183, 6
  %v208 = vadd.f32 %v204, %v206
  %v209 = vrcp.pop %v208
  %v210 = vmul.f32 %v155, %v209
  %vm211 = vcmask 25600
  %212 = vst.msk [vmem:[%s3] sm:$0x3] %vm211, %v210
  %v214 = vrot.slane %v209, 6
  %v216 = vmul.f32 %v161, %v214
  %s217 = scalar_lea.vmem %s3, 2
  %vm218 = vcmask 27650
  %219 = vst.msk [vmem:[%s217 - $0x2] sm:$0xc] %vm218, %v216
  %v220 = vrot.slane %v209, 4
  %v222 = vmul.f32 %v166, %v220
  %s223 = scalar_lea.vmem %s3, 4
  %vm224 = vcmask 29700
  %225 = vst.msk [vmem:[%s223 - $0x4] sm:$0x30] %vm224, %v222
  %v226 = vrot.slane %v209, 2
  %v228 = vmul.f32 %v171, %v226
  %s229 = scalar_lea.vmem %s3, 6
  %vm230 = vcmask 31750
  %231 = vst.msk [vmem:[%s229 - $0x6] sm:$0xc0] %vm230, %v228
  %v232 = vmul.f32 %v174, %v209
  %s233 = scalar_lea.vmem %s3, 8
  %234 = vst.msk [vmem:[%s233] sm:$0x3] %vm211, %v232
  %v235 = vmul.f32 %v177, %v214
  %s236 = scalar_lea.vmem %s3, 10
  %237 = vst.msk [vmem:[%s236 - $0x2] sm:$0xc] %vm218, %v235
  %v238 = vmul.f32 %v180, %v220
  %s239 = scalar_lea.vmem %s3, 12
  %240 = vst.msk [vmem:[%s239 - $0x4] sm:$0x30] %vm224, %v238
  %v241 = vmul.f32 %v183, %v226
  %s242 = scalar_lea.vmem %s3, 14
  %243 = vst.msk [vmem:[%s242 - $0x6] sm:$0xc0] %vm230, %v241
  // Predicated region
  $region14: #{_lambda_.5} parent=0 // pred_check
    _
  $region15: #{_lambda_.5} parent=0 // pred_check_branch
    %245 = sbr.rel (0) target = $region17
  $region16: #{_lambda_.5} parent=0 // pred_region
    _
  $region17: #{_lambda_.5} parent=0 // pred_fallthru
    _
  // Predicated region
  $region18: #{_lambda_.5} parent=0 // pred_check
    _
  $region19: #{_lambda_.5} parent=0 // pred_check_branch
    %247 = sbr.rel (0) target = $region21
  $region20: #{_lambda_.5} parent=0 // pred_region
    _
  $region21: #{_lambda_.5} parent=0 // pred_fallthru
    _

// kernel: _lambda_.3
$region0: #{_lambda_.3}
  #allocation0 [shape = 'u32[]', space=smem, size = 0x4, offset = 0x4, fixed_abs, tag = 'smem constant byte address 0x4 - core index']
  #allocation1 [shape = 'u32[144,128]{1,0:T(1,128)}', space=vmem, size = 0x12000, scoped, tag = 'internal scratch']
  #allocation2 [shape = 'f32[16,1024]{1,0:T(8,128)}', space=vmem, size = 0x10000, scoped, tag = 'scratch operand']
  %s0 = inlined_call_operand.vmem [shape: f32[16,16], index: 0, kind: input, shape index: {}]
  %s1 = inlined_call_operand.hbm [shape: f32[16,1024], index: 1, kind: input, shape index: {}]
  %s2 = inlined_call_operand.hbm [shape: f32[2,128,512], index: 2, kind: input, shape index: {}]
  %s3 = inlined_call_operand.hbm [shape: f32[1,1024], index: 3, kind: input, shape index: {}]
  %s4 = inlined_call_operand.vmem [shape: f32[8,2,256], index: 4, kind: output, shape index: {}]
  %s5 = sld [smem:[#allocation0]]
  $region38: #{_lambda_.3} parent=0
    _
  %s7 = ssub.s32 1, %s5
  %s8 = scalar_select 0, %s7, %s5
  $region1: #{_lambda_.3} parent=0
    #allocation3 [shape = 'u8[65536]{0}', space=vmem, size = 0x10000, scoped, tag = 'input window, operand 1, single buffered']
    #allocation4 [shape = 's32[1]{0}', space=sflag, size = 0x4, scoped, tag = 'scoped memory for _lambda_.3']
    #allocation5 [shape = 'u8[524288]{0}', space=vmem, size = 0x80000, scoped, tag = 'input window, operand 2, single buffered']
    #allocation6 [shape = 's32[1]{0}', space=sflag, size = 0x4, scoped, tag = 'scoped memory for _lambda_.3']
    #allocation7 [shape = 'u8[4096]{0}', space=vmem, size = 0x1000, scoped, tag = 'input window, operand 3, single buffered']
    %9 = vsyncpa [#allocation4], 0
    %10 = vsyncpa [#allocation6], 0
    // Predicated region
    $region2: #{_lambda_.3} parent=1 // pred_check
      _
    $region3: #{_lambda_.3} parent=1 // pred_check_branch
      %12 = sbr.rel (0) target = $region5
    $region4: #{_lambda_.3} parent=1 // pred_region
      _
    $region5: #{_lambda_.3} parent=1 // pred_fallthru
      _
    // Predicated region
    $region6: #{_lambda_.3} parent=1 // pred_check
      _
    $region7: #{_lambda_.3} parent=1 // pred_check_branch
      %14 = sbr.rel (0) target = $region9
    $region8: #{_lambda_.3} parent=1 // pred_region
      %s16 = ssub.s32 2048, 2048
      %17 = vsyncadd [#allocation4], %s16
      %s18 = sshll.u32 [#allocation3], 4
      %s19 = int_to_ptr.vmem [resolvable:$true] %s18
      %24 = dma.hbm_to_vmem [thread:$0]  %s1, 2048, %s19, [#allocation4], 1024, 1024, 64
    $region9: #{_lambda_.3} parent=1 // pred_fallthru
      _
    // Predicated region
    $region10: #{_lambda_.3} parent=1 // pred_check
      _
    $region11: #{_lambda_.3} parent=1 // pred_check_branch
      %26 = sbr.rel (0) target = $region13
    $region12: #{_lambda_.3} parent=1 // pred_region
      %s28 = ssub.s32 16384, 16384
      %29 = vsyncadd [#allocation6], %s28
      %s30 = sshll.u32 [#allocation5], 4
      %s31 = int_to_ptr.vmem [resolvable:$true] %s30
      %36 = dma.hbm_to_vmem [thread:$0]  %s2, 16384, %s31, [#allocation6], 512, 512, 32
    $region13: #{_lambda_.3} parent=1 // pred_fallthru
      _
    // Predicated region
    $region14: #{_lambda_.3} parent=1 // pred_check
      _
    $region15: #{_lambda_.3} parent=1 // pred_check_branch
      %38 = sbr.rel (0) target = $region17
    $region16: #{_lambda_.3} parent=1 // pred_region
      %s40 = ssub.s32 128, 128
      %41 = vsyncadd [#allocation6], %s40
      %s43 = sshll.u32 [#allocation7], 4
      %s44 = int_to_ptr.vmem [resolvable:$true] %s43
      %46 = dma.hbm_to_vmem [thread:$0]  %s3, 128, %s44, [#allocation6]
    $region17: #{_lambda_.3} parent=1 // pred_fallthru
      _
    // Predicated region
    $region18: #{_lambda_.3} parent=1 // pred_check
      _
    $region19: #{_lambda_.3} parent=1 // pred_check_branch
      %48 = sbr.rel (0) target = $region21
    $region20: #{_lambda_.3} parent=1 // pred_region
      %49 = dma.done [#allocation4], 2048
    $region21: #{_lambda_.3} parent=1 // pred_fallthru
      _
    // Predicated region
    $region22: #{_lambda_.3} parent=1 // pred_check
      _
    $region23: #{_lambda_.3} parent=1 // pred_check_branch
      %51 = sbr.rel (0) target = $region25
    $region24: #{_lambda_.3} parent=1 // pred_region
      %52 = dma.done [#allocation6], 16384
    $region25: #{_lambda_.3} parent=1 // pred_fallthru
      _
    // Predicated region
    $region26: #{_lambda_.3} parent=1 // pred_check
      _
    $region27: #{_lambda_.3} parent=1 // pred_check_branch
      %54 = sbr.rel (0) target = $region29
    $region28: #{_lambda_.3} parent=1 // pred_region
      %55 = dma.done [#allocation6], 128
    $region29: #{_lambda_.3} parent=1 // pred_fallthru
      _
    %v56 = vld [vmem:[%s0] sm:$0xff]
    %v57 = vld [vmem:[%s0 + $0x8] sm:$0xff]
    %v58 = vld [vmem:[#allocation3] sm:$0xff]
    %v59 = vld [vmem:[#allocation3 + $0x8] sm:$0xff]
    %v60 = vld [vmem:[#allocation3 + $0x10] sm:$0xff]
    %v61 = vld [vmem:[#allocation3 + $0x18] sm:$0xff]
    %v62 = vld [vmem:[#allocation3 + $0x20] sm:$0xff]
    %v63 = vld [vmem:[#allocation3 + $0x28] sm:$0xff]
    %v64 = vld [vmem:[#allocation3 + $0x30] sm:$0xff]
    %v65 = vld [vmem:[#allocation3 + $0x38] sm:$0xff]
    %v66 = vld [vmem:[#allocation3 + $0x40] sm:$0xff]
    %v67 = vld [vmem:[#allocation3 + $0x48] sm:$0xff]
    %v68 = vld [vmem:[#allocation3 + $0x50] sm:$0xff]
    %v69 = vld [vmem:[#allocation3 + $0x58] sm:$0xff]
    %v70 = vld [vmem:[#allocation3 + $0x60] sm:$0xff]
    %v71 = vld [vmem:[#allocation3 + $0x68] sm:$0xff]
    %v72 = vld [vmem:[#allocation3 + $0x70] sm:$0xff]
    %v73 = vld [vmem:[#allocation3 + $0x78] sm:$0xff]
    %v74 = vld [vmem:[#allocation7] sm:$0xff]
    %v76 = vlaneseq
    %v77 = vshrl.u32 %v76, 7
    %v78 = vsub.s32 0, %v77
    %v79 = vrot.slane %v74, %v78
    %v80 = vlaneseq
    %v81 = vshrl.u32 %v80, 7
    %v82 = vsub.s32 1, %v81
    %v83 = vrot.slane %v74, %v82
    %v84 = vlaneseq
    %v85 = vshrl.u32 %v84, 7
    %v86 = vsub.s32 2, %v85
    %v87 = vrot.slane %v74, %v86
    %v88 = vlaneseq
    %v89 = vshrl.u32 %v88, 7
    %v90 = vsub.s32 3, %v89
    %v91 = vrot.slane %v74, %v90
    %v92 = vlaneseq
    %v93 = vshrl.u32 %v92, 7
    %v94 = vsub.s32 4, %v93
    %v95 = vrot.slane %v74, %v94
    %v96 = vlaneseq
    %v97 = vshrl.u32 %v96, 7
    %v98 = vsub.s32 5, %v97
    %v99 = vrot.slane %v74, %v98
    %v100 = vlaneseq
    %v101 = vshrl.u32 %v100, 7
    %v102 = vsub.s32 6, %v101
    %v103 = vrot.slane %v74, %v102
    %v104 = vlaneseq
    %v105 = vshrl.u32 %v104, 7
    %v106 = vsub.s32 7, %v105
    %v107 = vrot.slane %v74, %v106
    %vm116 = vcmask 130048
    %v118 = vsel %vm116, %v56, 0
    %v121 = vsel %vm116, %v57, 0
    %123 = vmatprep.subr.mxu0 %v59
    %124 = vmatpush1.msra.mxu0 %v58
    %125 = vmatprep.subr.mxu0 %v67
    %126 = vmatpush1.msra.mxu0 %v66
    %127 = vmatprep.subr.mxu0 0.0
    %128 = vmatpush1.msra.mxu0 0.0
    %129 = vmatprep.subr.mxu0 0.0
    %130 = vmatpush1.msra.mxu0 0.0
    %131 = vmatprep.subr.mxu0 0.0
    %132 = vmatpush1.msra.mxu0 0.0
    %133 = vmatprep.subr.mxu0 0.0
    %134 = vmatpush1.msra.mxu0 0.0
    %135 = vmatprep.subr.mxu0 0.0
    %136 = vmatpush1.msra.mxu0 0.0
    %137 = vmatprep.subr.mxu0 0.0
    %138 = vmatpush1.msra.mxu0 0.0
    %139 = vmatprep.subr.mxu0 0.0
    %140 = vmatpush1.msra.mxu0 0.0
    %141 = vmatprep.subr.mxu0 0.0
    %142 = vmatpush1.msra.mxu0 0.0
    %143 = vmatprep.subr.mxu0 0.0
    %144 = vmatpush1.msra.mxu0 0.0
    %145 = vmatprep.subr.mxu0 0.0
    %146 = vmatpush1.msra.mxu0 0.0
    %147 = vmatprep.subr.mxu0 0.0
    %148 = vmatpush1.msra.mxu0 0.0
    %149 = vmatprep.subr.mxu0 0.0
    %150 = vmatpush1.msra.mxu0 0.0
    %151 = vmatprep.subr.mxu0 0.0
    %152 = vmatpush1.msra.mxu0 0.0
    %153 = vmatprep.subr.mxu0 0.0
    %154 = vmatpush1.msra.mxu0 0.0
    %155 = vmatprep.subr.mxu0 0.0
    %156 = vmatpush1.msra.mxu0 0.0
    %157 = vmatprep.subr.mxu0 0.0
    %158 = vmatpush1.msra.mxu0 0.0
    %159 = vmatprep.subr.mxu0 0.0
    %160 = vmatpush1.msra.mxu0 0.0
    %161 = vmatprep.subr.mxu0 0.0
    %162 = vmatpush1.msra.mxu0 0.0
    %163 = vmatprep.subr.mxu0 0.0
    %164 = vmatpush1.msra.mxu0 0.0
    %165 = vmatprep.subr.mxu0 0.0
    %166 = vmatpush1.msra.mxu0 0.0
    %167 = vmatprep.subr.mxu0 0.0
    %168 = vmatpush1.msra.mxu0 0.0
    %169 = vmatprep.subr.mxu0 0.0
    %170 = vmatpush1.msra.mxu0 0.0
    %171 = vmatprep.subr.mxu0 0.0
    %172 = vmatpush1.msra.mxu0 0.0
    %173 = vmatprep.subr.mxu0 0.0
    %174 = vmatpush1.msra.mxu0 0.0
    %175 = vmatprep.subr.mxu0 0.0
    %176 = vmatpush1.msra.mxu0 0.0
    %177 = vmatprep.subr.mxu0 0.0
    %178 = vmatpush1.msra.mxu0 0.0
    %179 = vmatprep.subr.mxu0 0.0
    %180 = vmatpush1.msra.mxu0 0.0
    %181 = vmatprep.subr.mxu0 0.0
    %182 = vmatpush1.msra.mxu0 0.0
    %183 = vmatprep.subr.mxu0 0.0
    %184 = vmatpush1.msra.mxu0 0.0
    %185 = vmatprep.subr.mxu0 0.0
    %186 = vmatpush1.msra.mxu0 0.0
    %187 = vmatprep.mubr.f32.mxu0 0.0
    %188 = vmatmul.mubr.f32.gmra.mrb[0].mxu0 %v118
    %v189 = vpop.f32.mrb[0].mxu0
    %v190 = vadd.f32 %v79, %v189
    %v191 = vpop.f32.mrb[0].mxu0
    %v192 = vadd.f32 %v83, %v191
    %193 = vmatprep.mubr.f32.mxu0 0.0
    %194 = vmatmul.mubr.f32.gmra.mrb[0].mxu0 %v121
    %v195 = vpop.f32.mrb[0].mxu0
    %v196 = vadd.f32 %v79, %v195
    %v197 = vpop.f32.mrb[0].mxu0
    %v198 = vadd.f32 %v83, %v197
    %199 = vdwg.mxu0
    %200 = vmatprep.subr.mxu0 %v61
    %201 = vmatpush1.msra.mxu0 %v60
    %202 = vmatprep.subr.mxu0 %v69
    %203 = vmatpush1.msra.mxu0 %v68
    %204 = vmatprep.subr.mxu0 0.0
    %205 = vmatpush1.msra.mxu0 0.0
    %206 = vmatprep.subr.mxu0 0.0
    %207 = vmatpush1.msra.mxu0 0.0
    %208 = vmatprep.subr.mxu0 0.0
    %209 = vmatpush1.msra.mxu0 0.0
    %210 = vmatprep.subr.mxu0 0.0
    %211 = vmatpush1.msra.mxu0 0.0
    %212 = vmatprep.subr.mxu0 0.0
    %213 = vmatpush1.msra.mxu0 0.0
    %214 = vmatprep.subr.mxu0 0.0
    %215 = vmatpush1.msra.mxu0 0.0
    %216 = vmatprep.subr.mxu0 0.0
    %217 = vmatpush1.msra.mxu0 0.0
    %218 = vmatprep.subr.mxu0 0.0
    %219 = vmatpush1.msra.mxu0 0.0
    %220 = vmatprep.subr.mxu0 0.0
    %221 = vmatpush1.msra.mxu0 0.0
    %222 = vmatprep.subr.mxu0 0.0
    %223 = vmatpush1.msra.mxu0 0.0
    %224 = vmatprep.subr.mxu0 0.0
    %225 = vmatpush1.msra.mxu0 0.0
    %226 = vmatprep.subr.mxu0 0.0
    %227 = vmatpush1.msra.mxu0 0.0
    %228 = vmatprep.subr.mxu0 0.0
    %229 = vmatpush1.msra.mxu0 0.0
    %230 = vmatprep.subr.mxu0 0.0
    %231 = vmatpush1.msra.mxu0 0.0
    %232 = vmatprep.subr.mxu0 0.0
    %233 = vmatpush1.msra.mxu0 0.0
    %234 = vmatprep.subr.mxu0 0.0
    %235 = vmatpush1.msra.mxu0 0.0
    %236 = vmatprep.subr.mxu0 0.0
    %237 = vmatpush1.msra.mxu0 0.0
    %238 = vmatprep.subr.mxu0 0.0
    %239 = vmatpush1.msra.mxu0 0.0
    %240 = vmatprep.subr.mxu0 0.0
    %241 = vmatpush1.msra.mxu0 0.0
    %242 = vmatprep.subr.mxu0 0.0
    %243 = vmatpush1.msra.mxu0 0.0
    %244 = vmatprep.subr.mxu0 0.0
    %245 = vmatpush1.msra.mxu0 0.0
    %246 = vmatprep.subr.mxu0 0.0
    %247 = vmatpush1.msra.mxu0 0.0
    %248 = vmatprep.subr.mxu0 0.0
    %249 = vmatpush1.msra.mxu0 0.0
    %250 = vmatprep.subr.mxu0 0.0
    %251 = vmatpush1.msra.mxu0 0.0
    %252 = vmatprep.subr.mxu0 0.0
    %253 = vmatpush1.msra.mxu0 0.0
    %254 = vmatprep.subr.mxu0 0.0
    %255 = vmatpush1.msra.mxu0 0.0
    %256 = vmatprep.subr.mxu0 0.0
    %257 = vmatpush1.msra.mxu0 0.0
    %258 = vmatprep.subr.mxu0 0.0
    %259 = vmatpush1.msra.mxu0 0.0
    %260 = vmatprep.subr.mxu0 0.0
    %261 = vmatpush1.msra.mxu0 0.0
    %262 = vmatprep.subr.mxu0 0.0
    %263 = vmatpush1.msra.mxu0 0.0
    %264 = vmatprep.mubr.f32.mxu0 0.0
    %265 = vmatmul.mubr.f32.gmra.mrb[0].mxu0 %v118
    %v266 = vpop.f32.mrb[0].mxu0
    %v267 = vadd.f32 %v87, %v266
    %v268 = vpop.f32.mrb[0].mxu0
    %v269 = vadd.f32 %v91, %v268
    %270 = vmatprep.mubr.f32.mxu0 0.0
    %271 = vmatmul.mubr.f32.gmra.mrb[0].mxu0 %v121
    %v272 = vpop.f32.mrb[0].mxu0
    %v273 = vadd.f32 %v87, %v272
    %v274 = vpop.f32.mrb[0].mxu0
    %v275 = vadd.f32 %v91, %v274
    %276 = vdwg.mxu0
    %277 = vmatprep.subr.mxu0 %v63
    %278 = vmatpush1.msra.mxu0 %v62
    %279 = vmatprep.subr.mxu0 %v71
    %280 = vmatpush1.msra.mxu0 %v70
    %281 = vmatprep.subr.mxu0 0.0
    %282 = vmatpush1.msra.mxu0 0.0
    %283 = vmatprep.subr.mxu0 0.0
    %284 = vmatpush1.msra.mxu0 0.0
    %285 = vmatprep.subr.mxu0 0.0
    %286 = vmatpush1.msra.mxu0 0.0
    %287 = vmatprep.subr.mxu0 0.0
    %288 = vmatpush1.msra.mxu0 0.0
    %289 = vmatprep.subr.mxu0 0.0
    %290 = vmatpush1.msra.mxu0 0.0
    %291 = vmatprep.subr.mxu0 0.0
    %292 = vmatpush1.msra.mxu0 0.0
    %293 = vmatprep.subr.mxu0 0.0
    %294 = vmatpush1.msra.mxu0 0.0
    %295 = vmatprep.subr.mxu0 0.0
    %296 = vmatpush1.msra.mxu0 0.0
    %297 = vmatprep.subr.mxu0 0.0
    %298 = vmatpush1.msra.mxu0 0.0
    %299 = vmatprep.subr.mxu0 0.0
    %300 = vmatpush1.msra.mxu0 0.0
    %301 = vmatprep.subr.mxu0 0.0
    %302 = vmatpush1.msra.mxu0 0.0
    %303 = vmatprep.subr.mxu0 0.0
    %304 = vmatpush1.msra.mxu0 0.0
    %305 = vmatprep.subr.mxu0 0.0
    %306 = vmatpush1.msra.mxu0 0.0
    %307 = vmatprep.subr.mxu0 0.0
    %308 = vmatpush1.msra.mxu0 0.0
    %309 = vmatprep.subr.mxu0 0.0
    %310 = vmatpush1.msra.mxu0 0.0
    %311 = vmatprep.subr.mxu0 0.0
    %312 = vmatpush1.msra.mxu0 0.0
    %313 = vmatprep.subr.mxu0 0.0
    %314 = vmatpush1.msra.mxu0 0.0
    %315 = vmatprep.subr.mxu0 0.0
    %316 = vmatpush1.msra.mxu0 0.0
    %317 = vmatprep.subr.mxu0 0.0
    %318 = vmatpush1.msra.mxu0 0.0
    %319 = vmatprep.subr.mxu0 0.0
    %320 = vmatpush1.msra.mxu0 0.0
    %321 = vmatprep.subr.mxu0 0.0
    %322 = vmatpush1.msra.mxu0 0.0
    %323 = vmatprep.subr.mxu0 0.0
    %324 = vmatpush1.msra.mxu0 0.0
    %325 = vmatprep.subr.mxu0 0.0
    %326 = vmatpush1.msra.mxu0 0.0
    %327 = vmatprep.subr.mxu0 0.0
    %328 = vmatpush1.msra.mxu0 0.0
    %329 = vmatprep.subr.mxu0 0.0
    %330 = vmatpush1.msra.mxu0 0.0
    %331 = vmatprep.subr.mxu0 0.0
    %332 = vmatpush1.msra.mxu0 0.0
    %333 = vmatprep.subr.mxu0 0.0
    %334 = vmatpush1.msra.mxu0 0.0
    %335 = vmatprep.subr.mxu0 0.0
    %336 = vmatpush1.msra.mxu0 0.0
    %337 = vmatprep.subr.mxu0 0.0
    %338 = vmatpush1.msra.mxu0 0.0
    %339 = vmatprep.subr.mxu0 0.0
    %340 = vmatpush1.msra.mxu0 0.0
    %341 = vmatprep.mubr.f32.mxu0 0.0
    %342 = vmatmul.mubr.f32.gmra.mrb[0].mxu0 %v118
    %v343 = vpop.f32.mrb[0].mxu0
    %v344 = vadd.f32 %v95, %v343
    %v345 = vpop.f32.mrb[0].mxu0
    %v346 = vadd.f32 %v99, %v345
    %347 = vmatprep.mubr.f32.mxu0 0.0
    %348 = vmatmul.mubr.f32.gmra.mrb[0].mxu0 %v121
    %v349 = vpop.f32.mrb[0].mxu0
    %v350 = vadd.f32 %v95, %v349
    %v351 = vpop.f32.mrb[0].mxu0
    %v352 = vadd.f32 %v99, %v351
    %353 = vdwg.mxu0
    %354 = vmatprep.subr.mxu0 %v65
    %355 = vmatpush1.msra.mxu0 %v64
    %356 = vmatprep.subr.mxu0 %v73
    %357 = vmatpush1.msra.mxu0 %v72
    %358 = vmatprep.subr.mxu0 0.0
    %359 = vmatpush1.msra.mxu0 0.0
    %360 = vmatprep.subr.mxu0 0.0
    %361 = vmatpush1.msra.mxu0 0.0
    %362 = vmatprep.subr.mxu0 0.0
    %363 = vmatpush1.msra.mxu0 0.0
    %364 = vmatprep.subr.mxu0 0.0
    %365 = vmatpush1.msra.mxu0 0.0
    %366 = vmatprep.subr.mxu0 0.0
    %367 = vmatpush1.msra.mxu0 0.0
    %368 = vmatprep.subr.mxu0 0.0
    %369 = vmatpush1.msra.mxu0 0.0
    %370 = vmatprep.subr.mxu0 0.0
    %371 = vmatpush1.msra.mxu0 0.0
    %372 = vmatprep.subr.mxu0 0.0
    %373 = vmatpush1.msra.mxu0 0.0
    %374 = vmatprep.subr.mxu0 0.0
    %375 = vmatpush1.msra.mxu0 0.0
    %376 = vmatprep.subr.mxu0 0.0
    %377 = vmatpush1.msra.mxu0 0.0
    %378 = vmatprep.subr.mxu0 0.0
    %379 = vmatpush1.msra.mxu0 0.0
    %380 = vmatprep.subr.mxu0 0.0
    %381 = vmatpush1.msra.mxu0 0.0
    %382 = vmatprep.subr.mxu0 0.0
    %383 = vmatpush1.msra.mxu0 0.0
    %384 = vmatprep.subr.mxu0 0.0
    %385 = vmatpush1.msra.mxu0 0.0
    %386 = vmatprep.subr.mxu0 0.0
    %387 = vmatpush1.msra.mxu0 0.0
    %388 = vmatprep.subr.mxu0 0.0
    %389 = vmatpush1.msra.mxu0 0.0
    %390 = vmatprep.subr.mxu0 0.0
    %391 = vmatpush1.msra.mxu0 0.0
    %392 = vmatprep.subr.mxu0 0.0
    %393 = vmatpush1.msra.mxu0 0.0
    %394 = vmatprep.subr.mxu0 0.0
    %395 = vmatpush1.msra.mxu0 0.0
    %396 = vmatprep.subr.mxu0 0.0
    %397 = vmatpush1.msra.mxu0 0.0
    %398 = vmatprep.subr.mxu0 0.0
    %399 = vmatpush1.msra.mxu0 0.0
    %400 = vmatprep.subr.mxu0 0.0
    %401 = vmatpush1.msra.mxu0 0.0
    %402 = vmatprep.subr.mxu0 0.0
    %403 = vmatpush1.msra.mxu0 0.0
    %404 = vmatprep.subr.mxu0 0.0
    %405 = vmatpush1.msra.mxu0 0.0
    %406 = vmatprep.subr.mxu0 0.0
    %407 = vmatpush1.msra.mxu0 0.0
    %408 = vmatprep.subr.mxu0 0.0
    %409 = vmatpush1.msra.mxu0 0.0
    %410 = vmatprep.subr.mxu0 0.0
    %411 = vmatpush1.msra.mxu0 0.0
    %412 = vmatprep.subr.mxu0 0.0
    %413 = vmatpush1.msra.mxu0 0.0
    %414 = vmatprep.subr.mxu0 0.0
    %415 = vmatpush1.msra.mxu0 0.0
    %416 = vmatprep.subr.mxu0 0.0
    %417 = vmatpush1.msra.mxu0 0.0
    %418 = vmatprep.mubr.f32.mxu0 0.0
    %419 = vmatmul.mubr.f32.gmra.mrb[0].mxu0 %v118
    %v420 = vpop.f32.mrb[0].mxu0
    %v421 = vadd.f32 %v103, %v420
    %v422 = vpop.f32.mrb[0].mxu0
    %v423 = vadd.f32 %v107, %v422
    %424 = vmatprep.mubr.f32.mxu0 0.0
    %425 = vmatmul.mubr.f32.gmra.mrb[0].mxu0 %v121
    %v426 = vpop.f32.mrb[0].mxu0
    %v427 = vadd.f32 %v103, %v426
    %v428 = vpop.f32.mrb[0].mxu0
    %v429 = vadd.f32 %v107, %v428
    %430 = vdwg.mxu0
    %431 = vst [vmem:[#allocation2] sm:$0xff] %v190
    %432 = vst [vmem:[#allocation2 + $0x8] sm:$0xff] %v192
    %433 = vst [vmem:[#allocation2 + $0x10] sm:$0xff] %v267
    %434 = vst [vmem:[#allocation2 + $0x18] sm:$0xff] %v269
    %435 = vst [vmem:[#allocation2 + $0x20] sm:$0xff] %v344
    %436 = vst [vmem:[#allocation2 + $0x28] sm:$0xff] %v346
    %437 = vst [vmem:[#allocation2 + $0x30] sm:$0xff] %v421
    %438 = vst [vmem:[#allocation2 + $0x38] sm:$0xff] %v423
    %439 = vst [vmem:[#allocation2 + $0x40] sm:$0xff] %v196
    %440 = vst [vmem:[#allocation2 + $0x48] sm:$0xff] %v198
    %441 = vst [vmem:[#allocation2 + $0x50] sm:$0xff] %v273
    %442 = vst [vmem:[#allocation2 + $0x58] sm:$0xff] %v275
    %443 = vst [vmem:[#allocation2 + $0x60] sm:$0xff] %v350
    %444 = vst [vmem:[#allocation2 + $0x68] sm:$0xff] %v352
    %445 = vst [vmem:[#allocation2 + $0x70] sm:$0xff] %v427
    %446 = vst [vmem:[#allocation2 + $0x78] sm:$0xff] %v429
    %v447 = vld [vmem:[#allocation5] sm:$0xff]
    %v448 = vld [vmem:[#allocation5 + $0x8] sm:$0xff]
    %v449 = vld [vmem:[#allocation5 + $0x10] sm:$0xff]
    %v450 = vld [vmem:[#allocation5 + $0x18] sm:$0xff]
    %v451 = vld [vmem:[#allocation5 + $0x20] sm:$0xff]
    %v452 = vld [vmem:[#allocation5 + $0x28] sm:$0xff]
    %v453 = vld [vmem:[#allocation5 + $0x30] sm:$0xff]
    %v454 = vld [vmem:[#allocation5 + $0x38] sm:$0xff]
    %v455 = vld [vmem:[#allocation5 + $0x40] sm:$0xff]
    %v456 = vld [vmem:[#allocation5 + $0x48] sm:$0xff]
    %v457 = vld [vmem:[#allocation5 + $0x50] sm:$0xff]
    %v458 = vld [vmem:[#allocation5 + $0x58] sm:$0xff]
    %v459 = vld [vmem:[#allocation5 + $0x60] sm:$0xff]
    %v460 = vld [vmem:[#allocation5 + $0x68] sm:$0xff]
    %v461 = vld [vmem:[#allocation5 + $0x70] sm:$0xff]
    %v462 = vld [vmem:[#allocation5 + $0x78] sm:$0xff]
    %v463 = vld [vmem:[#allocation5 + $0x80] sm:$0xff]
    %v464 = vld [vmem:[#allocation5 + $0x88] sm:$0xff]
    %v465 = vld [vmem:[#allocation5 + $0x90] sm:$0xff]
    %v466 = vld [vmem:[#allocation5 + $0x98] sm:$0xff]
    %v467 = vld [vmem:[#allocation5 + $0xa0] sm:$0xff]
    %v468 = vld [vmem:[#allocation5 + $0xa8] sm:$0xff]
    %v469 = vld [vmem:[#allocation5 + $0xb0] sm:$0xff]
    %v470 = vld [vmem:[#allocation5 + $0xb8] sm:$0xff]
    %v471 = vld [vmem:[#allocation5 + $0xc0] sm:$0xff]
    %v472 = vld [vmem:[#allocation5 + $0xc8] sm:$0xff]
    %v473 = vld [vmem:[#allocation5 + $0xd0] sm:$0xff]
    %v474 = vld [vmem:[#allocation5 + $0xd8] sm:$0xff]
    %v475 = vld [vmem:[#allocation5 + $0xe0] sm:$0xff]
    %v476 = vld [vmem:[#allocation5 + $0xe8] sm:$0xff]
    %v477 = vld [vmem:[#allocation5 + $0xf0] sm:$0xff]
    %v478 = vld [vmem:[#allocation5 + $0xf8] sm:$0xff]
    %v479 = vld [vmem:[#allocation5 + $0x100] sm:$0xff]
    %v480 = vld [vmem:[#allocation5 + $0x108] sm:$0xff]
    %v481 = vld [vmem:[#allocation5 + $0x110] sm:$0xff]
    %v482 = vld [vmem:[#allocation5 + $0x118] sm:$0xff]
    %v483 = vld [vmem:[#allocation5 + $0x120] sm:$0xff]
    %v484 = vld [vmem:[#allocation5 + $0x128] sm:$0xff]
    %v485 = vld [vmem:[#allocation5 + $0x130] sm:$0xff]
    %v486 = vld [vmem:[#allocation5 + $0x138] sm:$0xff]
    %v487 = vld [vmem:[#allocation5 + $0x140] sm:$0xff]
    %v488 = vld [vmem:[#allocation5 + $0x148] sm:$0xff]
    %v489 = vld [vmem:[#allocation5 + $0x150] sm:$0xff]
    %v490 = vld [vmem:[#allocation5 + $0x158] sm:$0xff]
    %v491 = vld [vmem:[#allocation5 + $0x160] sm:$0xff]
    %v492 = vld [vmem:[#allocation5 + $0x168] sm:$0xff]
    %v493 = vld [vmem:[#allocation5 + $0x170] sm:$0xff]
    %v494 = vld [vmem:[#allocation5 + $0x178] sm:$0xff]
    %v495 = vld [vmem:[#allocation5 + $0x180] sm:$0xff]
    %v496 = vld [vmem:[#allocation5 + $0x188] sm:$0xff]
    %v497 = vld [vmem:[#allocation5 + $0x190] sm:$0xff]
    %v498 = vld [vmem:[#allocation5 + $0x198] sm:$0xff]
    %v499 = vld [vmem:[#allocation5 + $0x1a0] sm:$0xff]
    %v500 = vld [vmem:[#allocation5 + $0x1a8] sm:$0xff]
    %v501 = vld [vmem:[#allocation5 + $0x1b0] sm:$0xff]
    %v502 = vld [vmem:[#allocation5 + $0x1b8] sm:$0xff]
    %v503 = vld [vmem:[#allocation5 + $0x1c0] sm:$0xff]
    %v504 = vld [vmem:[#allocation5 + $0x1c8] sm:$0xff]
    %v505 = vld [vmem:[#allocation5 + $0x1d0] sm:$0xff]
    %v506 = vld [vmem:[#allocation5 + $0x1d8] sm:$0xff]
    %v507 = vld [vmem:[#allocation5 + $0x1e0] sm:$0xff]
    %v508 = vld [vmem:[#allocation5 + $0x1e8] sm:$0xff]
    %v509 = vld [vmem:[#allocation5 + $0x1f0] sm:$0xff]
    %v510 = vld [vmem:[#allocation5 + $0x1f8] sm:$0xff]
    %s511 = scalar_lea.vmem [#allocation5], 512
    %v512 = vld [vmem:[%s511] sm:$0xff]
    %v513 = vld [vmem:[%s511 + $0x8] sm:$0xff]
    %v514 = vld [vmem:[%s511 + $0x10] sm:$0xff]
    %v515 = vld [vmem:[%s511 + $0x18] sm:$0xff]
    %v516 = vld [vmem:[%s511 + $0x20] sm:$0xff]
    %v517 = vld [vmem:[%s511 + $0x28] sm:$0xff]
    %v518 = vld [vmem:[%s511 + $0x30] sm:$0xff]
    %v519 = vld [vmem:[%s511 + $0x38] sm:$0xff]
    %v520 = vld [vmem:[%s511 + $0x40] sm:$0xff]
    %v521 = vld [vmem:[%s511 + $0x48] sm:$0xff]
    %v522 = vld [vmem:[%s511 + $0x50] sm:$0xff]
    %v523 = vld [vmem:[%s511 + $0x58] sm:$0xff]
    %v524 = vld [vmem:[%s511 + $0x60] sm:$0xff]
    %v525 = vld [vmem:[%s511 + $0x68] sm:$0xff]
    %v526 = vld [vmem:[%s511 + $0x70] sm:$0xff]
    %v527 = vld [vmem:[%s511 + $0x78] sm:$0xff]
    %v528 = vld [vmem:[%s511 + $0x80] sm:$0xff]
    %v529 = vld [vmem:[%s511 + $0x88] sm:$0xff]
    %v530 = vld [vmem:[%s511 + $0x90] sm:$0xff]
    %v531 = vld [vmem:[%s511 + $0x98] sm:$0xff]
    %v532 = vld [vmem:[%s511 + $0xa0] sm:$0xff]
    %v533 = vld [vmem:[%s511 + $0xa8] sm:$0xff]
    %v534 = vld [vmem:[%s511 + $0xb0] sm:$0xff]
    %v535 = vld [vmem:[%s511 + $0xb8] sm:$0xff]
    %v536 = vld [vmem:[%s511 + $0xc0] sm:$0xff]
    %v537 = vld [vmem:[%s511 + $0xc8] sm:$0xff]
    %v538 = vld [vmem:[%s511 + $0xd0] sm:$0xff]
    %v539 = vld [vmem:[%s511 + $0xd8] sm:$0xff]
    %v540 = vld [vmem:[%s511 + $0xe0] sm:$0xff]
    %v541 = vld [vmem:[%s511 + $0xe8] sm:$0xff]
    %v542 = vld [vmem:[%s511 + $0xf0] sm:$0xff]
    %v543 = vld [vmem:[%s511 + $0xf8] sm:$0xff]
    %v544 = vld [vmem:[%s511 + $0x100] sm:$0xff]
    %v545 = vld [vmem:[%s511 + $0x108] sm:$0xff]
    %v546 = vld [vmem:[%s511 + $0x110] sm:$0xff]
    %v547 = vld [vmem:[%s511 + $0x118] sm:$0xff]
    %v548 = vld [vmem:[%s511 + $0x120] sm:$0xff]
    %v549 = vld [vmem:[%s511 + $0x128] sm:$0xff]
    %v550 = vld [vmem:[%s511 + $0x130] sm:$0xff]
    %v551 = vld [vmem:[%s511 + $0x138] sm:$0xff]
    %v552 = vld [vmem:[%s511 + $0x140] sm:$0xff]
    %v553 = vld [vmem:[%s511 + $0x148] sm:$0xff]
    %v554 = vld [vmem:[%s511 + $0x150] sm:$0xff]
    %v555 = vld [vmem:[%s511 + $0x158] sm:$0xff]
    %v556 = vld [vmem:[%s511 + $0x160] sm:$0xff]
    %v557 = vld [vmem:[%s511 + $0x168] sm:$0xff]
    %v558 = vld [vmem:[%s511 + $0x170] sm:$0xff]
    %v559 = vld [vmem:[%s511 + $0x178] sm:$0xff]
    %v560 = vld [vmem:[%s511 + $0x180] sm:$0xff]
    %v561 = vld [vmem:[%s511 + $0x188] sm:$0xff]
    %v562 = vld [vmem:[%s511 + $0x190] sm:$0xff]
    %v563 = vld [vmem:[%s511 + $0x198] sm:$0xff]
    %v564 = vld [vmem:[%s511 + $0x1a0] sm:$0xff]
    %v565 = vld [vmem:[%s511 + $0x1a8] sm:$0xff]
    %v566 = vld [vmem:[%s511 + $0x1b0] sm:$0xff]
    %v567 = vld [vmem:[%s511 + $0x1b8] sm:$0xff]
    %v568 = vld [vmem:[%s511 + $0x1c0] sm:$0xff]
    %v569 = vld [vmem:[%s511 + $0x1c8] sm:$0xff]
    %v570 = vld [vmem:[%s511 + $0x1d0] sm:$0xff]
    %v571 = vld [vmem:[%s511 + $0x1d8] sm:$0xff]
    %v572 = vld [vmem:[%s511 + $0x1e0] sm:$0xff]
    %v573 = vld [vmem:[%s511 + $0x1e8] sm:$0xff]
    %v574 = vld [vmem:[%s511 + $0x1f0] sm:$0xff]
    %v575 = vld [vmem:[%s511 + $0x1f8] sm:$0xff]
    %v576 = vld [vmem:[#allocation2] sm:$0x3]
    %v577 = vld [vmem:[#allocation2 + $0x8] sm:$0x3]
    %v578 = vld [vmem:[#allocation2 + $0x10] sm:$0x3]
    %v579 = vld [vmem:[#allocation2 + $0x18] sm:$0x3]
    %580 = vmatprep.subr.mxu0 %v448
    %581 = vmatpush1.msra.mxu0 %v447
    %582 = vmatprep.subr.mxu0 %v452
    %583 = vmatpush1.msra.mxu0 %v451
    %584 = vmatprep.subr.mxu0 %v456
    %585 = vmatpush1.msra.mxu0 %v455
    %586 = vmatprep.subr.mxu0 %v460
    %587 = vmatpush1.msra.mxu0 %v459
    %588 = vmatprep.subr.mxu0 %v464
    %589 = vmatpush1.msra.mxu0 %v463
    %590 = vmatprep.subr.mxu0 %v468
    %591 = vmatpush1.msra.mxu0 %v467
    %592 = vmatprep.subr.mxu0 %v472
    %593 = vmatpush1.msra.mxu0 %v471
    %594 = vmatprep.subr.mxu0 %v476
    %595 = vmatpush1.msra.mxu0 %v475
    %596 = vmatprep.subr.mxu0 %v480
    %597 = vmatpush1.msra.mxu0 %v479
    %598 = vmatprep.subr.mxu0 %v484
    %599 = vmatpush1.msra.mxu0 %v483
    %600 = vmatprep.subr.mxu0 %v488
    %601 = vmatpush1.msra.mxu0 %v487
    %602 = vmatprep.subr.mxu0 %v492
    %603 = vmatpush1.msra.mxu0 %v491
    %604 = vmatprep.subr.mxu0 %v496
    %605 = vmatpush1.msra.mxu0 %v495
    %606 = vmatprep.subr.mxu0 %v500
    %607 = vmatpush1.msra.mxu0 %v499
    %608 = vmatprep.subr.mxu0 %v504
    %609 = vmatpush1.msra.mxu0 %v503
    %610 = vmatprep.subr.mxu0 %v508
    %611 = vmatpush1.msra.mxu0 %v507
    %612 = vmatprep.subr.mxu0 0.0
    %613 = vmatpush1.msra.mxu0 0.0
    %614 = vmatprep.subr.mxu0 0.0
    %615 = vmatpush1.msra.mxu0 0.0
    %616 = vmatprep.subr.mxu0 0.0
    %617 = vmatpush1.msra.mxu0 0.0
    %618 = vmatprep.subr.mxu0 0.0
    %619 = vmatpush1.msra.mxu0 0.0
    %620 = vmatprep.subr.mxu0 0.0
    %621 = vmatpush1.msra.mxu0 0.0
    %622 = vmatprep.subr.mxu0 0.0
    %623 = vmatpush1.msra.mxu0 0.0
    %624 = vmatprep.subr.mxu0 0.0
    %625 = vmatpush1.msra.mxu0 0.0
    %626 = vmatprep.subr.mxu0 0.0
    %627 = vmatpush1.msra.mxu0 0.0
    %628 = vmatprep.subr.mxu0 0.0
    %629 = vmatpush1.msra.mxu0 0.0
    %630 = vmatprep.subr.mxu0 0.0
    %631 = vmatpush1.msra.mxu0 0.0
    %632 = vmatprep.subr.mxu0 0.0
    %633 = vmatpush1.msra.mxu0 0.0
    %634 = vmatprep.subr.mxu0 0.0
    %635 = vmatpush1.msra.mxu0 0.0
    %636 = vmatprep.subr.mxu0 0.0
    %637 = vmatpush1.msra.mxu0 0.0
    %638 = vmatprep.subr.mxu0 0.0
    %639 = vmatpush1.msra.mxu0 0.0
    %640 = vmatprep.subr.mxu0 0.0
    %641 = vmatpush1.msra.mxu0 0.0
    %642 = vmatprep.subr.mxu0 0.0
    %643 = vmatpush1.msra.mxu0 0.0
    %644 = vmatprep.mubr.f32.mxu0 0.0
    %645 = vmatmul.mubr.f32.gmra.mrb[0].mxu0 0.0
    %v646 = vpop.f32.mrb[0].mxu0
    %v647 = vadd.f32 0.0, %v646
    %v648 = vpop.f32.mrb[0].mxu0
    %v649 = vadd.f32 0.0, %v648
    %650 = vdwg.mxu0
    %651 = vmatprep.subr.mxu0 %v450
    %652 = vmatpush1.msra.mxu0 %v449
    %653 = vmatprep.subr.mxu0 %v454
    %654 = vmatpush1.msra.mxu0 %v453
    %655 = vmatprep.subr.mxu0 %v458
    %656 = vmatpush1.msra.mxu0 %v457
    %657 = vmatprep.subr.mxu0 %v462
    %658 = vmatpush1.msra.mxu0 %v461
    %659 = vmatprep.subr.mxu0 %v466
    %660 = vmatpush1.msra.mxu0 %v465
    %661 = vmatprep.subr.mxu0 %v470
    %662 = vmatpush1.msra.mxu0 %v469
    %663 = vmatprep.subr.mxu0 %v474
    %664 = vmatpush1.msra.mxu0 %v473
    %665 = vmatprep.subr.mxu0 %v478
    %666 = vmatpush1.msra.mxu0 %v477
    %667 = vmatprep.subr.mxu0 %v482
    %668 = vmatpush1.msra.mxu0 %v481
    %669 = vmatprep.subr.mxu0 %v486
    %670 = vmatpush1.msra.mxu0 %v485
    %671 = vmatprep.subr.mxu0 %v490
    %672 = vmatpush1.msra.mxu0 %v489
    %673 = vmatprep.subr.mxu0 %v494
    %674 = vmatpush1.msra.mxu0 %v493
    %675 = vmatprep.subr.mxu0 %v498
    %676 = vmatpush1.msra.mxu0 %v497
    %677 = vmatprep.subr.mxu0 %v502
    %678 = vmatpush1.msra.mxu0 %v501
    %679 = vmatprep.subr.mxu0 %v506
    %680 = vmatpush1.msra.mxu0 %v505
    %681 = vmatprep.subr.mxu0 %v510
    %682 = vmatpush1.msra.mxu0 %v509
    %683 = vmatprep.subr.mxu0 0.0
    %684 = vmatpush1.msra.mxu0 0.0
    %685 = vmatprep.subr.mxu0 0.0
    %686 = vmatpush1.msra.mxu0 0.0
    %687 = vmatprep.subr.mxu0 0.0
    %688 = vmatpush1.msra.mxu0 0.0
    %689 = vmatprep.subr.mxu0 0.0
    %690 = vmatpush1.msra.mxu0 0.0
    %691 = vmatprep.subr.mxu0 0.0
    %692 = vmatpush1.msra.mxu0 0.0
    %693 = vmatprep.subr.mxu0 0.0
    %694 = vmatpush1.msra.mxu0 0.0
    %695 = vmatprep.subr.mxu0 0.0
    %696 = vmatpush1.msra.mxu0 0.0
    %697 = vmatprep.subr.mxu0 0.0
    %698 = vmatpush1.msra.mxu0 0.0
    %699 = vmatprep.subr.mxu0 0.0
    %700 = vmatpush1.msra.mxu0 0.0
    %701 = vmatprep.subr.mxu0 0.0
    %702 = vmatpush1.msra.mxu0 0.0
    %703 = vmatprep.subr.mxu0 0.0
    %704 = vmatpush1.msra.mxu0 0.0
    %705 = vmatprep.subr.mxu0 0.0
    %706 = vmatpush1.msra.mxu0 0.0
    %707 = vmatprep.subr.mxu0 0.0
    %708 = vmatpush1.msra.mxu0 0.0
    %709 = vmatprep.subr.mxu0 0.0
    %710 = vmatpush1.msra.mxu0 0.0
    %711 = vmatprep.subr.mxu0 0.0
    %712 = vmatpush1.msra.mxu0 0.0
    %713 = vmatprep.subr.mxu0 0.0
    %714 = vmatpush1.msra.mxu0 0.0
    %715 = vmatprep.mubr.f32.mxu0 0.0
    %716 = vmatmul.mubr.f32.gmra.mrb[0].mxu0 0.0
    %v717 = vpop.f32.mrb[0].mxu0
    %v718 = vadd.f32 0.0, %v717
    %v719 = vpop.f32.mrb[0].mxu0
    %v720 = vadd.f32 0.0, %v719
    %721 = vdwg.mxu0
    %v722 = vadd.f32 %v576, %v647
    %v723 = vadd.f32 %v577, %v649
    %v724 = vadd.f32 %v578, %v718
    %v725 = vadd.f32 %v579, %v720
    %v726 = vld [vmem:[#allocation2 + $0x60] sm:$0xc0]
    %v727 = vld [vmem:[#allocation2 + $0x68] sm:$0xc0]
    %v728 = vld [vmem:[#allocation2 + $0x70] sm:$0xc0]
    %v729 = vld [vmem:[#allocation2 + $0x78] sm:$0xc0]
    %730 = vmatprep.subr.mxu0 %v513
    %731 = vmatpush1.msra.mxu0 %v512
    %732 = vmatprep.subr.mxu0 %v517
    %733 = vmatpush1.msra.mxu0 %v516
    %734 = vmatprep.subr.mxu0 %v521
    %735 = vmatpush1.msra.mxu0 %v520
    %736 = vmatprep.subr.mxu0 %v525
    %737 = vmatpush1.msra.mxu0 %v524
    %738 = vmatprep.subr.mxu0 %v529
    %739 = vmatpush1.msra.mxu0 %v528
    %740 = vmatprep.subr.mxu0 %v533
    %741 = vmatpush1.msra.mxu0 %v532
    %742 = vmatprep.subr.mxu0 %v537
    %743 = vmatpush1.msra.mxu0 %v536
    %744 = vmatprep.subr.mxu0 %v541
    %745 = vmatpush1.msra.mxu0 %v540
    %746 = vmatprep.subr.mxu0 %v545
    %747 = vmatpush1.msra.mxu0 %v544
    %748 = vmatprep.subr.mxu0 %v549
    %749 = vmatpush1.msra.mxu0 %v548
    %750 = vmatprep.subr.mxu0 %v553
    %751 = vmatpush1.msra.mxu0 %v552
    %752 = vmatprep.subr.mxu0 %v557
    %753 = vmatpush1.msra.mxu0 %v556
    %754 = vmatprep.subr.mxu0 %v561
    %755 = vmatpush1.msra.mxu0 %v560
    %756 = vmatprep.subr.mxu0 %v565
    %757 = vmatpush1.msra.mxu0 %v564
    %758 = vmatprep.subr.mxu0 %v569
    %759 = vmatpush1.msra.mxu0 %v568
    %760 = vmatprep.subr.mxu0 %v573
    %761 = vmatpush1.msra.mxu0 %v572
    %762 = vmatprep.subr.mxu0 0.0
    %763 = vmatpush1.msra.mxu0 0.0
    %764 = vmatprep.subr.mxu0 0.0
    %765 = vmatpush1.msra.mxu0 0.0
    %766 = vmatprep.subr.mxu0 0.0
    %767 = vmatpush1.msra.mxu0 0.0
    %768 = vmatprep.subr.mxu0 0.0
    %769 = vmatpush1.msra.mxu0 0.0
    %770 = vmatprep.subr.mxu0 0.0
    %771 = vmatpush1.msra.mxu0 0.0
    %772 = vmatprep.subr.mxu0 0.0
    %773 = vmatpush1.msra.mxu0 0.0
    %774 = vmatprep.subr.mxu0 0.0
    %775 = vmatpush1.msra.mxu0 0.0
    %776 = vmatprep.subr.mxu0 0.0
    %777 = vmatpush1.msra.mxu0 0.0
    %778 = vmatprep.subr.mxu0 0.0
    %779 = vmatpush1.msra.mxu0 0.0
    %780 = vmatprep.subr.mxu0 0.0
    %781 = vmatpush1.msra.mxu0 0.0
    %782 = vmatprep.subr.mxu0 0.0
    %783 = vmatpush1.msra.mxu0 0.0
    %784 = vmatprep.subr.mxu0 0.0
    %785 = vmatpush1.msra.mxu0 0.0
    %786 = vmatprep.subr.mxu0 0.0
    %787 = vmatpush1.msra.mxu0 0.0
    %788 = vmatprep.subr.mxu0 0.0
    %789 = vmatpush1.msra.mxu0 0.0
    %790 = vmatprep.subr.mxu0 0.0
    %791 = vmatpush1.msra.mxu0 0.0
    %792 = vmatprep.subr.mxu0 0.0
    %793 = vmatpush1.msra.mxu0 0.0
    %794 = vmatprep.mubr.f32.mxu0 0.0
    %795 = vmatmul.mubr.f32.gmra.mrb[0].mxu0 0.0
    %v796 = vpop.f32.mrb[0].mxu0
    %v797 = vadd.f32 0.0, %v796
    %v798 = vpop.f32.mrb[0].mxu0
    %v799 = vadd.f32 0.0, %v798
    %800 = vdwg.mxu0
    %801 = vmatprep.subr.mxu0 %v515
    %802 = vmatpush1.msra.mxu0 %v514
    %803 = vmatprep.subr.mxu0 %v519
    %804 = vmatpush1.msra.mxu0 %v518
    %805 = vmatprep.subr.mxu0 %v523
    %806 = vmatpush1.msra.mxu0 %v522
    %807 = vmatprep.subr.mxu0 %v527
    %808 = vmatpush1.msra.mxu0 %v526
    %809 = vmatprep.subr.mxu0 %v531
    %810 = vmatpush1.msra.mxu0 %v530
    %811 = vmatprep.subr.mxu0 %v535
    %812 = vmatpush1.msra.mxu0 %v534
    %813 = vmatprep.subr.mxu0 %v539
    %814 = vmatpush1.msra.mxu0 %v538
    %815 = vmatprep.subr.mxu0 %v543
    %816 = vmatpush1.msra.mxu0 %v542
    %817 = vmatprep.subr.mxu0 %v547
    %818 = vmatpush1.msra.mxu0 %v546
    %819 = vmatprep.subr.mxu0 %v551
    %820 = vmatpush1.msra.mxu0 %v550
    %821 = vmatprep.subr.mxu0 %v555
    %822 = vmatpush1.msra.mxu0 %v554
    %823 = vmatprep.subr.mxu0 %v559
    %824 = vmatpush1.msra.mxu0 %v558
    %825 = vmatprep.subr.mxu0 %v563
    %826 = vmatpush1.msra.mxu0 %v562
    %827 = vmatprep.subr.mxu0 %v567
    %828 = vmatpush1.msra.mxu0 %v566
    %829 = vmatprep.subr.mxu0 %v571
    %830 = vmatpush1.msra.mxu0 %v570
    %831 = vmatprep.subr.mxu0 %v575
    %832 = vmatpush1.msra.mxu0 %v574
    %833 = vmatprep.subr.mxu0 0.0
    %834 = vmatpush1.msra.mxu0 0.0
    %835 = vmatprep.subr.mxu0 0.0
    %836 = vmatpush1.msra.mxu0 0.0
    %837 = vmatprep.subr.mxu0 0.0
    %838 = vmatpush1.msra.mxu0 0.0
    %839 = vmatprep.subr.mxu0 0.0
    %840 = vmatpush1.msra.mxu0 0.0
    %841 = vmatprep.subr.mxu0 0.0
    %842 = vmatpush1.msra.mxu0 0.0
    %843 = vmatprep.subr.mxu0 0.0
    %844 = vmatpush1.msra.mxu0 0.0
    %845 = vmatprep.subr.mxu0 0.0
    %846 = vmatpush1.msra.mxu0 0.0
    %847 = vmatprep.subr.mxu0 0.0
    %848 = vmatpush1.msra.mxu0 0.0
    %849 = vmatprep.subr.mxu0 0.0
    %850 = vmatpush1.msra.mxu0 0.0
    %851 = vmatprep.subr.mxu0 0.0
    %852 = vmatpush1.msra.mxu0 0.0
    %853 = vmatprep.subr.mxu0 0.0
    %854 = vmatpush1.msra.mxu0 0.0
    %855 = vmatprep.subr.mxu0 0.0
    %856 = vmatpush1.msra.mxu0 0.0
    %857 = vmatprep.subr.mxu0 0.0
    %858 = vmatpush1.msra.mxu0 0.0
    %859 = vmatprep.subr.mxu0 0.0
    %860 = vmatpush1.msra.mxu0 0.0
    %861 = vmatprep.subr.mxu0 0.0
    %862 = vmatpush1.msra.mxu0 0.0
    %863 = vmatprep.subr.mxu0 0.0
    %864 = vmatpush1.msra.mxu0 0.0
    %865 = vmatprep.mubr.f32.mxu0 0.0
    %866 = vmatmul.mubr.f32.gmra.mrb[0].mxu0 0.0
    %v867 = vpop.f32.mrb[0].mxu0
    %v868 = vadd.f32 0.0, %v867
    %v869 = vpop.f32.mrb[0].mxu0
    %v870 = vadd.f32 0.0, %v869
    %871 = vdwg.mxu0
    %v876 = vrot.slane %v797, 2
    %v877 = vrot.slane %v799, 2
    %v878 = vrot.slane %v868, 2
    %v879 = vrot.slane %v870, 2
    %v884 = vadd.f32 %v726, %v876
    %v885 = vadd.f32 %v727, %v877
    %v886 = vadd.f32 %v728, %v878
    %v887 = vadd.f32 %v729, %v879
    %v888 = vxor.u32 %v722, 2147483648
    %v889 = vmul.f32 %v888, 1.442695
    %v890 = vpow.pop %v889
    %v891 = vadd.f32 %v890, 1.0
    %v892 = vrcp.pop %v891
    %v893 = vmul.f32 1.0, %v892
    %v894 = vxor.u32 %v723, 2147483648
    %v895 = vmul.f32 %v894, 1.442695
    %v896 = vpow.pop %v895
    %v897 = vadd.f32 %v896, 1.0
    %v898 = vrcp.pop %v897
    %v899 = vmul.f32 1.0, %v898
    %v900 = vtanh.pop %v724
    %v901 = vxor.u32 %v725, 2147483648
    %v902 = vmul.f32 %v901, 1.442695
    %v903 = vpow.pop %v902
    %v904 = vadd.f32 %v903, 1.0
    %v905 = vrcp.pop %v904
    %v906 = vmul.f32 1.0, %v905
    %v907 = vmul.f32 %v899, 0.0
    %v908 = vmul.f32 %v893, %v900
    %v909 = vadd.f32 %v907, %v908
    %v910 = vtanh.pop %v909
    %v911 = vmul.f32 %v906, %v910
    %v912 = vxor.u32 %v884, 2147483648
    %v913 = vmul.f32 %v912, 1.442695
    %v914 = vpow.pop %v913
    %v915 = vadd.f32 %v914, 1.0
    %v916 = vrcp.pop %v915
    %v917 = vmul.f32 1.0, %v916
    %v918 = vxor.u32 %v885, 2147483648
    %v919 = vmul.f32 %v918, 1.442695
    %v920 = vpow.pop %v919
    %v921 = vadd.f32 %v920, 1.0
    %v922 = vrcp.pop %v921
    %v923 = vmul.f32 1.0, %v922
    %v924 = vtanh.pop %v886
    %v925 = vxor.u32 %v887, 2147483648
    %v926 = vmul.f32 %v925, 1.442695
    %v927 = vpow.pop %v926
    %v928 = vadd.f32 %v927, 1.0
    %v929 = vrcp.pop %v928
    %v930 = vmul.f32 1.0, %v929
    %v931 = vmul.f32 %v923, 0.0
    %v932 = vmul.f32 %v917, %v924
    %v933 = vadd.f32 %v931, %v932
    %v934 = vtanh.pop %v933
    %v935 = vmul.f32 %v930, %v934
    %936 = vst [vmem:[%s4] sm:$0x3] %v911
    %v938 = vcombine.high %v935, %v935
    %v940 = vunpack.c.l.s4 1983009808
    %v941 = vunpack.c.0.s8 %v940
    %v942 = vlaneseq
    %v943 = vshrl.u32 %v942, 7
    %v944 = vsub.s32 %v941, %v943
    %v945 = vrot.slane %v938, %v944
    %v946 = vcombine.high %v945, %v945
    %s948 = scalar_lea.vmem %s4, 28
    %949 = vst [vmem:[%s948 + $0x2] sm:$0x3] %v946
    %v950 = vld [vmem:[#allocation2] sm:$0xc]
    %v951 = vld [vmem:[#allocation2 + $0x8] sm:$0xc]
    %v952 = vld [vmem:[#allocation2 + $0x10] sm:$0xc]
    %v953 = vld [vmem:[#allocation2 + $0x18] sm:$0xc]
    %954 = vmatprep.subr.mxu0 %v448
    %955 = vmatpush1.msra.mxu0 %v447
    %956 = vmatprep.subr.mxu0 %v452
    %957 = vmatpush1.msra.mxu0 %v451
    %958 = vmatprep.subr.mxu0 %v456
    %959 = vmatpush1.msra.mxu0 %v455
    %960 = vmatprep.subr.mxu0 %v460
    %961 = vmatpush1.msra.mxu0 %v459
    %962 = vmatprep.subr.mxu0 %v464
    %963 = vmatpush1.msra.mxu0 %v463
    %964 = vmatprep.subr.mxu0 %v468
    %965 = vmatpush1.msra.mxu0 %v467
    %966 = vmatprep.subr.mxu0 %v472
    %967 = vmatpush1.msra.mxu0 %v471
    %968 = vmatprep.subr.mxu0 %v476
    %969 = vmatpush1.msra.mxu0 %v475
    %970 = vmatprep.subr.mxu0 %v480
    %971 = vmatpush1.msra.mxu0 %v479
    %972 = vmatprep.subr.mxu0 %v484
    %973 = vmatpush1.msra.mxu0 %v483
    %974 = vmatprep.subr.mxu0 %v488
    %975 = vmatpush1.msra.mxu0 %v487
    %976 = vmatprep.subr.mxu0 %v492
    %977 = vmatpush1.msra.mxu0 %v491
    %978 = vmatprep.subr.mxu0 %v496
    %979 = vmatpush1.msra.mxu0 %v495
    %980 = vmatprep.subr.mxu0 %v500
    %981 = vmatpush1.msra.mxu0 %v499
    %982 = vmatprep.subr.mxu0 %v504
    %983 = vmatpush1.msra.mxu0 %v503
    %984 = vmatprep.subr.mxu0 %v508
    %985 = vmatpush1.msra.mxu0 %v507
    %986 = vmatprep.subr.mxu0 0.0
    %987 = vmatpush1.msra.mxu0 0.0
    %988 = vmatprep.subr.mxu0 0.0
    %989 = vmatpush1.msra.mxu0 0.0
    %990 = vmatprep.subr.mxu0 0.0
    %991 = vmatpush1.msra.mxu0 0.0
    %992 = vmatprep.subr.mxu0 0.0
    %993 = vmatpush1.msra.mxu0 0.0
    %994 = vmatprep.subr.mxu0 0.0
    %995 = vmatpush1.msra.mxu0 0.0
    %996 = vmatprep.subr.mxu0 0.0
    %997 = vmatpush1.msra.mxu0 0.0
    %998 = vmatprep.subr.mxu0 0.0
    %999 = vmatpush1.msra.mxu0 0.0
    %1000 = vmatprep.subr.mxu0 0.0
    %1001 = vmatpush1.msra.mxu0 0.0
    %1002 = vmatprep.subr.mxu0 0.0
    %1003 = vmatpush1.msra.mxu0 0.0
    %1004 = vmatprep.subr.mxu0 0.0
    %1005 = vmatpush1.msra.mxu0 0.0
    %1006 = vmatprep.subr.mxu0 0.0
    %1007 = vmatpush1.msra.mxu0 0.0
    %1008 = vmatprep.subr.mxu0 0.0
    %1009 = vmatpush1.msra.mxu0 0.0
    %1010 = vmatprep.subr.mxu0 0.0
    %1011 = vmatpush1.msra.mxu0 0.0
    %1012 = vmatprep.subr.mxu0 0.0
    %1013 = vmatpush1.msra.mxu0 0.0
    %1014 = vmatprep.subr.mxu0 0.0
    %1015 = vmatpush1.msra.mxu0 0.0
    %1016 = vmatprep.subr.mxu0 0.0
    %1017 = vmatpush1.msra.mxu0 0.0
    %1018 = vmatprep.mubr.f32.mxu0 0.0
    %1019 = vmatmul.mubr.f32.gmra.mrb[0].mxu0 %v911
    %v1020 = vpop.f32.mrb[0].mxu0
    %v1021 = vadd.f32 0.0, %v1020
    %v1022 = vpop.f32.mrb[0].mxu0
    %v1023 = vadd.f32 0.0, %v1022
    %1024 = vdwg.mxu0
    %1025 = vmatprep.subr.mxu0 %v450
    %1026 = vmatpush1.msra.mxu0 %v449
    %1027 = vmatprep.subr.mxu0 %v454
    %1028 = vmatpush1.msra.mxu0 %v453
    %1029 = vmatprep.subr.mxu0 %v458
    %1030 = vmatpush1.msra.mxu0 %v457
    %1031 = vmatprep.subr.mxu0 %v462
    %1032 = vmatpush1.msra.mxu0 %v461
    %1033 = vmatprep.subr.mxu0 %v466
    %1034 = vmatpush1.msra.mxu0 %v465
    %1035 = vmatprep.subr.mxu0 %v470
    %1036 = vmatpush1.msra.mxu0 %v469
    %1037 = vmatprep.subr.mxu0 %v474
    %1038 = vmatpush1.msra.mxu0 %v473
    %1039 = vmatprep.subr.mxu0 %v478
    %1040 = vmatpush1.msra.mxu0 %v477
    %1041 = vmatprep.subr.mxu0 %v482
    %1042 = vmatpush1.msra.mxu0 %v481
    %1043 = vmatprep.subr.mxu0 %v486
    %1044 = vmatpush1.msra.mxu0 %v485
    %1045 = vmatprep.subr.mxu0 %v490
    %1046 = vmatpush1.msra.mxu0 %v489
    %1047 = vmatprep.subr.mxu0 %v494
    %1048 = vmatpush1.msra.mxu0 %v493
    %1049 = vmatprep.subr.mxu0 %v498
    %1050 = vmatpush1.msra.mxu0 %v497
    %1051 = vmatprep.subr.mxu0 %v502
    %1052 = vmatpush1.msra.mxu0 %v501
    %1053 = vmatprep.subr.mxu0 %v506
    %1054 = vmatpush1.msra.mxu0 %v505
    %1055 = vmatprep.subr.mxu0 %v510
    %1056 = vmatpush1.msra.mxu0 %v509
    %1057 = vmatprep.subr.mxu0 0.0
    %1058 = vmatpush1.msra.mxu0 0.0
    %1059 = vmatprep.subr.mxu0 0.0
    %1060 = vmatpush1.msra.mxu0 0.0
    %1061 = vmatprep.subr.mxu0 0.0
    %1062 = vmatpush1.msra.mxu0 0.0
    %1063 = vmatprep.subr.mxu0 0.0
    %1064 = vmatpush1.msra.mxu0 0.0
    %1065 = vmatprep.subr.mxu0 0.0
    %1066 = vmatpush1.msra.mxu0 0.0
    %1067 = vmatprep.subr.mxu0 0.0
    %1068 = vmatpush1.msra.mxu0 0.0
    %1069 = vmatprep.subr.mxu0 0.0
    %1070 = vmatpush1.msra.mxu0 0.0
    %1071 = vmatprep.subr.mxu0 0.0
    %1072 = vmatpush1.msra.mxu0 0.0
    %1073 = vmatprep.subr.mxu0 0.0
    %1074 = vmatpush1.msra.mxu0 0.0
    %1075 = vmatprep.subr.mxu0 0.0
    %1076 = vmatpush1.msra.mxu0 0.0
    %1077 = vmatprep.subr.mxu0 0.0
    %1078 = vmatpush1.msra.mxu0 0.0
    %1079 = vmatprep.subr.mxu0 0.0
    %1080 = vmatpush1.msra.mxu0 0.0
    %1081 = vmatprep.subr.mxu0 0.0
    %1082 = vmatpush1.msra.mxu0 0.0
    %1083 = vmatprep.subr.mxu0 0.0
    %1084 = vmatpush1.msra.mxu0 0.0
    %1085 = vmatprep.subr.mxu0 0.0
    %1086 = vmatpush1.msra.mxu0 0.0
    %1087 = vmatprep.subr.mxu0 0.0
    %1088 = vmatpush1.msra.mxu0 0.0
    %1089 = vmatprep.mubr.f32.mxu0 0.0
    %1090 = vmatmul.mubr.f32.gmra.mrb[0].mxu0 %v911
    %v1091 = vpop.f32.mrb[0].mxu0
    %v1092 = vadd.f32 0.0, %v1091
    %v1093 = vpop.f32.mrb[0].mxu0
    %v1094 = vadd.f32 0.0, %v1093
    %1095 = vdwg.mxu0
    %v1100 = vrot.slane %v1021, 6
    %v1101 = vrot.slane %v1023, 6
    %v1102 = vrot.slane %v1092, 6
    %v1103 = vrot.slane %v1094, 6
    %v1108 = vadd.f32 %v950, %v1100
    %v1109 = vadd.f32 %v951, %v1101
    %v1110 = vadd.f32 %v952, %v1102
    %v1111 = vadd.f32 %v953, %v1103
    %v1112 = vld [vmem:[#allocation2 + $0x60] sm:$0x30]
    %v1113 = vld [vmem:[#allocation2 + $0x68] sm:$0x30]
    %v1114 = vld [vmem:[#allocation2 + $0x70] sm:$0x30]
    %v1115 = vld [vmem:[#allocation2 + $0x78] sm:$0x30]
    %v1116 = vrot.slane %v935, 6
    %1118 = vmatprep.subr.mxu0 %v513
    %1119 = vmatpush1.msra.mxu0 %v512
    %1120 = vmatprep.subr.mxu0 %v517
    %1121 = vmatpush1.msra.mxu0 %v516
    %1122 = vmatprep.subr.mxu0 %v521
    %1123 = vmatpush1.msra.mxu0 %v520
    %1124 = vmatprep.subr.mxu0 %v525
    %1125 = vmatpush1.msra.mxu0 %v524
    %1126 = vmatprep.subr.mxu0 %v529
    %1127 = vmatpush1.msra.mxu0 %v528
    %1128 = vmatprep.subr.mxu0 %v533
    %1129 = vmatpush1.msra.mxu0 %v532
    %1130 = vmatprep.subr.mxu0 %v537
    %1131 = vmatpush1.msra.mxu0 %v536
    %1132 = vmatprep.subr.mxu0 %v541
    %1133 = vmatpush1.msra.mxu0 %v540
    %1134 = vmatprep.subr.mxu0 %v545
    %1135 = vmatpush1.msra.mxu0 %v544
    %1136 = vmatprep.subr.mxu0 %v549
    %1137 = vmatpush1.msra.mxu0 %v548
    %1138 = vmatprep.subr.mxu0 %v553
    %1139 = vmatpush1.msra.mxu0 %v552
    %1140 = vmatprep.subr.mxu0 %v557
    %1141 = vmatpush1.msra.mxu0 %v556
    %1142 = vmatprep.subr.mxu0 %v561
    %1143 = vmatpush1.msra.mxu0 %v560
    %1144 = vmatprep.subr.mxu0 %v565
    %1145 = vmatpush1.msra.mxu0 %v564
    %1146 = vmatprep.subr.mxu0 %v569
    %1147 = vmatpush1.msra.mxu0 %v568
    %1148 = vmatprep.subr.mxu0 %v573
    %1149 = vmatpush1.msra.mxu0 %v572
    %1150 = vmatprep.subr.mxu0 0.0
    %1151 = vmatpush1.msra.mxu0 0.0
    %1152 = vmatprep.subr.mxu0 0.0
    %1153 = vmatpush1.msra.mxu0 0.0
    %1154 = vmatprep.subr.mxu0 0.0
    %1155 = vmatpush1.msra.mxu0 0.0
    %1156 = vmatprep.subr.mxu0 0.0
    %1157 = vmatpush1.msra.mxu0 0.0
    %1158 = vmatprep.subr.mxu0 0.0
    %1159 = vmatpush1.msra.mxu0 0.0
    %1160 = vmatprep.subr.mxu0 0.0
    %1161 = vmatpush1.msra.mxu0 0.0
    %1162 = vmatprep.subr.mxu0 0.0
    %1163 = vmatpush1.msra.mxu0 0.0
    %1164 = vmatprep.subr.mxu0 0.0
    %1165 = vmatpush1.msra.mxu0 0.0
    %1166 = vmatprep.subr.mxu0 0.0
    %1167 = vmatpush1.msra.mxu0 0.0
    %1168 = vmatprep.subr.mxu0 0.0
    %1169 = vmatpush1.msra.mxu0 0.0
    %1170 = vmatprep.subr.mxu0 0.0
    %1171 = vmatpush1.msra.mxu0 0.0
    %1172 = vmatprep.subr.mxu0 0.0
    %1173 = vmatpush1.msra.mxu0 0.0
    %1174 = vmatprep.subr.mxu0 0.0
    %1175 = vmatpush1.msra.mxu0 0.0
    %1176 = vmatprep.subr.mxu0 0.0
    %1177 = vmatpush1.msra.mxu0 0.0
    %1178 = vmatprep.subr.mxu0 0.0
    %1179 = vmatpush1.msra.mxu0 0.0
    %1180 = vmatprep.subr.mxu0 0.0
    %1181 = vmatpush1.msra.mxu0 0.0
    %1182 = vmatprep.mubr.f32.mxu0 0.0
    %1183 = vmatmul.mubr.f32.gmra.mrb[0].mxu0 %v1116
    %v1184 = vpop.f32.mrb[0].mxu0
    %v1185 = vadd.f32 0.0, %v1184
    %v1186 = vpop.f32.mrb[0].mxu0
    %v1187 = vadd.f32 0.0, %v1186
    %1188 = vdwg.mxu0
    %1189 = vmatprep.subr.mxu0 %v515
    %1190 = vmatpush1.msra.mxu0 %v514
    %1191 = vmatprep.subr.mxu0 %v519
    %1192 = vmatpush1.msra.mxu0 %v518
    %1193 = vmatprep.subr.mxu0 %v523
    %1194 = vmatpush1.msra.mxu0 %v522
    %1195 = vmatprep.subr.mxu0 %v527
    %1196 = vmatpush1.msra.mxu0 %v526
    %1197 = vmatprep.subr.mxu0 %v531
    %1198 = vmatpush1.msra.mxu0 %v530
    %1199 = vmatprep.subr.mxu0 %v535
    %1200 = vmatpush1.msra.mxu0 %v534
    %1201 = vmatprep.subr.mxu0 %v539
    %1202 = vmatpush1.msra.mxu0 %v538
    %1203 = vmatprep.subr.mxu0 %v543
    %1204 = vmatpush1.msra.mxu0 %v542
    %1205 = vmatprep.subr.mxu0 %v547
    %1206 = vmatpush1.msra.mxu0 %v546
    %1207 = vmatprep.subr.mxu0 %v551
    %1208 = vmatpush1.msra.mxu0 %v550
    %1209 = vmatprep.subr.mxu0 %v555
    %1210 = vmatpush1.msra.mxu0 %v554
    %1211 = vmatprep.subr.mxu0 %v559
    %1212 = vmatpush1.msra.mxu0 %v558
    %1213 = vmatprep.subr.mxu0 %v563
    %1214 = vmatpush1.msra.mxu0 %v562
    %1215 = vmatprep.subr.mxu0 %v567
    %1216 = vmatpush1.msra.mxu0 %v566
    %1217 = vmatprep.subr.mxu0 %v571
    %1218 = vmatpush1.msra.mxu0 %v570
    %1219 = vmatprep.subr.mxu0 %v575
    %1220 = vmatpush1.msra.mxu0 %v574
    %1221 = vmatprep.subr.mxu0 0.0
    %1222 = vmatpush1.msra.mxu0 0.0
    %1223 = vmatprep.subr.mxu0 0.0
    %1224 = vmatpush1.msra.mxu0 0.0
    %1225 = vmatprep.subr.mxu0 0.0
    %1226 = vmatpush1.msra.mxu0 0.0
    %1227 = vmatprep.subr.mxu0 0.0
    %1228 = vmatpush1.msra.mxu0 0.0
    %1229 = vmatprep.subr.mxu0 0.0
    %1230 = vmatpush1.msra.mxu0 0.0
    %1231 = vmatprep.subr.mxu0 0.0
    %1232 = vmatpush1.msra.mxu0 0.0
    %1233 = vmatprep.subr.mxu0 0.0
    %1234 = vmatpush1.msra.mxu0 0.0
    %1235 = vmatprep.subr.mxu0 0.0
    %1236 = vmatpush1.msra.mxu0 0.0
    %1237 = vmatprep.subr.mxu0 0.0
    %1238 = vmatpush1.msra.mxu0 0.0
    %1239 = vmatprep.subr.mxu0 0.0
    %1240 = vmatpush1.msra.mxu0 0.0
    %1241 = vmatprep.subr.mxu0 0.0
    %1242 = vmatpush1.msra.mxu0 0.0
    %1243 = vmatprep.subr.mxu0 0.0
    %1244 = vmatpush1.msra.mxu0 0.0
    %1245 = vmatprep.subr.mxu0 0.0
    %1246 = vmatpush1.msra.mxu0 0.0
    %1247 = vmatprep.subr.mxu0 0.0
    %1248 = vmatpush1.msra.mxu0 0.0
    %1249 = vmatprep.subr.mxu0 0.0
    %1250 = vmatpush1.msra.mxu0 0.0
    %1251 = vmatprep.subr.mxu0 0.0
    %1252 = vmatpush1.msra.mxu0 0.0
    %1253 = vmatprep.mubr.f32.mxu0 0.0
    %1254 = vmatmul.mubr.f32.gmra.mrb[0].mxu0 %v1116
    %v1255 = vpop.f32.mrb[0].mxu0
    %v1256 = vadd.f32 0.0, %v1255
    %v1257 = vpop.f32.mrb[0].mxu0
    %v1258 = vadd.f32 0.0, %v1257
    %1259 = vdwg.mxu0
    %v1264 = vrot.slane %v1185, 4
    %v1265 = vrot.slane %v1187, 4
    %v1266 = vrot.slane %v1256, 4
    %v1267 = vrot.slane %v1258, 4
    %v1272 = vadd.f32 %v1112, %v1264
    %v1273 = vadd.f32 %v1113, %v1265
    %v1274 = vadd.f32 %v1114, %v1266
    %v1275 = vadd.f32 %v1115, %v1267
    %v1276 = vxor.u32 %v1108, 2147483648
    %v1277 = vmul.f32 %v1276, 1.442695
    %v1278 = vpow.pop %v1277
    %v1279 = vadd.f32 %v1278, 1.0
    %v1280 = vrcp.pop %v1279
    %v1281 = vmul.f32 1.0, %v1280
    %v1282 = vxor.u32 %v1109, 2147483648
    %v1283 = vmul.f32 %v1282, 1.442695
    %v1284 = vpow.pop %v1283
    %v1285 = vadd.f32 %v1284, 1.0
    %v1286 = vrcp.pop %v1285
    %v1287 = vmul.f32 1.0, %v1286
    %v1288 = vtanh.pop %v1110
    %v1289 = vxor.u32 %v1111, 2147483648
    %v1290 = vmul.f32 %v1289, 1.442695
    %v1291 = vpow.pop %v1290
    %v1292 = vadd.f32 %v1291, 1.0
    %v1293 = vrcp.pop %v1292
    %v1294 = vmul.f32 1.0, %v1293
    %v1296 = vrot.slane %v909, 6
    %v1298 = vmul.f32 %v1287, %v1296
    %v1299 = vmul.f32 %v1281, %v1288
    %v1300 = vadd.f32 %v1298, %v1299
    %v1301 = vtanh.pop %v1300
    %v1302 = vmul.f32 %v1294, %v1301
    %v1303 = vxor.u32 %v1272, 2147483648
    %v1304 = vmul.f32 %v1303, 1.442695
    %v1305 = vpow.pop %v1304
    %v1306 = vadd.f32 %v1305, 1.0
    %v1307 = vrcp.pop %v1306
    %v1308 = vmul.f32 1.0, %v1307
    %v1309 = vxor.u32 %v1273, 2147483648
    %v1310 = vmul.f32 %v1309, 1.442695
    %v1311 = vpow.pop %v1310
    %v1312 = vadd.f32 %v1311, 1.0
    %v1313 = vrcp.pop %v1312
    %v1314 = vmul.f32 1.0, %v1313
    %v1315 = vtanh.pop %v1274
    %v1316 = vxor.u32 %v1275, 2147483648
    %v1317 = vmul.f32 %v1316, 1.442695
    %v1318 = vpow.pop %v1317
    %v1319 = vadd.f32 %v1318, 1.0
    %v1320 = vrcp.pop %v1319
    %v1321 = vmul.f32 1.0, %v1320
    %v1323 = vrot.slane %v933, 2
    %v1325 = vmul.f32 %v1314, %v1323
    %v1326 = vmul.f32 %v1308, %v1315
    %v1327 = vadd.f32 %v1325, %v1326
    %v1328 = vtanh.pop %v1327
    %v1329 = vmul.f32 %v1321, %v1328
    %v1332 = vunpack.c.l.s4 1983009808
    %v1333 = vunpack.c.0.s8 %v1332
    %v1334 = vlaneseq
    %v1335 = vshrl.u32 %v1334, 7
    %v1336 = vsub.s32 %v1333, %v1335
    %v1337 = vrot.slane %v1302, %v1336
    %v1338 = vcombine.high %v1337, %v1337
    %s1340 = scalar_lea.vmem %s4, 4
    %1341 = vst [vmem:[%s1340] sm:$0x3] %v1338
    %v1343 = vcombine.high %v1329, %v1329
    %v1345 = vunpack.c.l.s4 1983009808
    %v1346 = vunpack.c.0.s8 %v1345
    %v1347 = vlaneseq
    %v1348 = vshrl.u32 %v1347, 7
    %v1349 = vsub.s32 %v1346, %v1348
    %v1350 = vrot.slane %v1343, %v1349
    %s1352 = scalar_lea.vmem %s4, 24
    %1353 = vst [vmem:[%s1352 + $0x2] sm:$0x3] %v1350
    %v1354 = vld [vmem:[#allocation2] sm:$0x30]
    %v1355 = vld [vmem:[#allocation2 + $0x8] sm:$0x30]
    %v1356 = vld [vmem:[#allocation2 + $0x10] sm:$0x30]
    %v1357 = vld [vmem:[#allocation2 + $0x18] sm:$0x30]
    %v1358 = vrot.slane %v1302, 2
    %1360 = vmatprep.subr.mxu0 %v448
    %1361 = vmatpush1.msra.mxu0 %v447
    %1362 = vmatprep.subr.mxu0 %v452
    %1363 = vmatpush1.msra.mxu0 %v451
    %1364 = vmatprep.subr.mxu0 %v456
    %1365 = vmatpush1.msra.mxu0 %v455
    %1366 = vmatprep.subr.mxu0 %v460
    %1367 = vmatpush1.msra.mxu0 %v459
    %1368 = vmatprep.subr.mxu0 %v464
    %1369 = vmatpush1.msra.mxu0 %v463
    %1370 = vmatprep.subr.mxu0 %v468
    %1371 = vmatpush1.msra.mxu0 %v467
    %1372 = vmatprep.subr.mxu0 %v472
    %1373 = vmatpush1.msra.mxu0 %v471
    %1374 = vmatprep.subr.mxu0 %v476
    %1375 = vmatpush1.msra.mxu0 %v475
    %1376 = vmatprep.subr.mxu0 %v480
    %1377 = vmatpush1.msra.mxu0 %v479
    %1378 = vmatprep.subr.mxu0 %v484
    %1379 = vmatpush1.msra.mxu0 %v483
    %1380 = vmatprep.subr.mxu0 %v488
    %1381 = vmatpush1.msra.mxu0 %v487
    %1382 = vmatprep.subr.mxu0 %v492
    %1383 = vmatpush1.msra.mxu0 %v491
    %1384 = vmatprep.subr.mxu0 %v496
    %1385 = vmatpush1.msra.mxu0 %v495
    %1386 = vmatprep.subr.mxu0 %v500
    %1387 = vmatpush1.msra.mxu0 %v499
    %1388 = vmatprep.subr.mxu0 %v504
    %1389 = vmatpush1.msra.mxu0 %v503
    %1390 = vmatprep.subr.mxu0 %v508
    %1391 = vmatpush1.msra.mxu0 %v507
    %1392 = vmatprep.subr.mxu0 0.0
    %1393 = vmatpush1.msra.mxu0 0.0
    %1394 = vmatprep.subr.mxu0 0.0
    %1395 = vmatpush1.msra.mxu0 0.0
    %1396 = vmatprep.subr.mxu0 0.0
    %1397 = vmatpush1.msra.mxu0 0.0
    %1398 = vmatprep.subr.mxu0 0.0
    %1399 = vmatpush1.msra.mxu0 0.0
    %1400 = vmatprep.subr.mxu0 0.0
    %1401 = vmatpush1.msra.mxu0 0.0
    %1402 = vmatprep.subr.mxu0 0.0
    %1403 = vmatpush1.msra.mxu0 0.0
    %1404 = vmatprep.subr.mxu0 0.0
    %1405 = vmatpush1.msra.mxu0 0.0
    %1406 = vmatprep.subr.mxu0 0.0
    %1407 = vmatpush1.msra.mxu0 0.0
    %1408 = vmatprep.subr.mxu0 0.0
    %1409 = vmatpush1.msra.mxu0 0.0
    %1410 = vmatprep.subr.mxu0 0.0
    %1411 = vmatpush1.msra.mxu0 0.0
    %1412 = vmatprep.subr.mxu0 0.0
    %1413 = vmatpush1.msra.mxu0 0.0
    %1414 = vmatprep.subr.mxu0 0.0
    %1415 = vmatpush1.msra.mxu0 0.0
    %1416 = vmatprep.subr.mxu0 0.0
    %1417 = vmatpush1.msra.mxu0 0.0
    %1418 = vmatprep.subr.mxu0 0.0
    %1419 = vmatpush1.msra.mxu0 0.0
    %1420 = vmatprep.subr.mxu0 0.0
    %1421 = vmatpush1.msra.mxu0 0.0
    %1422 = vmatprep.subr.mxu0 0.0
    %1423 = vmatpush1.msra.mxu0 0.0
    %1424 = vmatprep.mubr.f32.mxu0 0.0
    %1425 = vmatmul.mubr.f32.gmra.mrb[0].mxu0 %v1358
    %v1426 = vpop.f32.mrb[0].mxu0
    %v1427 = vadd.f32 0.0, %v1426
    %v1428 = vpop.f32.mrb[0].mxu0
    %v1429 = vadd.f32 0.0, %v1428
    %1430 = vdwg.mxu0
    %1431 = vmatprep.subr.mxu0 %v450
    %1432 = vmatpush1.msra.mxu0 %v449
    %1433 = vmatprep.subr.mxu0 %v454
    %1434 = vmatpush1.msra.mxu0 %v453
    %1435 = vmatprep.subr.mxu0 %v458
    %1436 = vmatpush1.msra.mxu0 %v457
    %1437 = vmatprep.subr.mxu0 %v462
    %1438 = vmatpush1.msra.mxu0 %v461
    %1439 = vmatprep.subr.mxu0 %v466
    %1440 = vmatpush1.msra.mxu0 %v465
    %1441 = vmatprep.subr.mxu0 %v470
    %1442 = vmatpush1.msra.mxu0 %v469
    %1443 = vmatprep.subr.mxu0 %v474
    %1444 = vmatpush1.msra.mxu0 %v473
    %1445 = vmatprep.subr.mxu0 %v478
    %1446 = vmatpush1.msra.mxu0 %v477
    %1447 = vmatprep.subr.mxu0 %v482
    %1448 = vmatpush1.msra.mxu0 %v481
    %1449 = vmatprep.subr.mxu0 %v486
    %1450 = vmatpush1.msra.mxu0 %v485
    %1451 = vmatprep.subr.mxu0 %v490
    %1452 = vmatpush1.msra.mxu0 %v489
    %1453 = vmatprep.subr.mxu0 %v494
    %1454 = vmatpush1.msra.mxu0 %v493
    %1455 = vmatprep.subr.mxu0 %v498
    %1456 = vmatpush1.msra.mxu0 %v497
    %1457 = vmatprep.subr.mxu0 %v502
    %1458 = vmatpush1.msra.mxu0 %v501
    %1459 = vmatprep.subr.mxu0 %v506
    %1460 = vmatpush1.msra.mxu0 %v505
    %1461 = vmatprep.subr.mxu0 %v510
    %1462 = vmatpush1.msra.mxu0 %v509
    %1463 = vmatprep.subr.mxu0 0.0
    %1464 = vmatpush1.msra.mxu0 0.0
    %1465 = vmatprep.subr.mxu0 0.0
    %1466 = vmatpush1.msra.mxu0 0.0
    %1467 = vmatprep.subr.mxu0 0.0
    %1468 = vmatpush1.msra.mxu0 0.0
    %1469 = vmatprep.subr.mxu0 0.0
    %1470 = vmatpush1.msra.mxu0 0.0
    %1471 = vmatprep.subr.mxu0 0.0
    %1472 = vmatpush1.msra.mxu0 0.0
    %1473 = vmatprep.subr.mxu0 0.0
    %1474 = vmatpush1.msra.mxu0 0.0
    %1475 = vmatprep.subr.mxu0 0.0
    %1476 = vmatpush1.msra.mxu0 0.0
    %1477 = vmatprep.subr.mxu0 0.0
    %1478 = vmatpush1.msra.mxu0 0.0
    %1479 = vmatprep.subr.mxu0 0.0
    %1480 = vmatpush1.msra.mxu0 0.0
    %1481 = vmatprep.subr.mxu0 0.0
    %1482 = vmatpush1.msra.mxu0 0.0
    %1483 = vmatprep.subr.mxu0 0.0
    %1484 = vmatpush1.msra.mxu0 0.0
    %1485 = vmatprep.subr.mxu0 0.0
    %1486 = vmatpush1.msra.mxu0 0.0
    %1487 = vmatprep.subr.mxu0 0.0
    %1488 = vmatpush1.msra.mxu0 0.0
    %1489 = vmatprep.subr.mxu0 0.0
    %1490 = vmatpush1.msra.mxu0 0.0
    %1491 = vmatprep.subr.mxu0 0.0
    %1492 = vmatpush1.msra.mxu0 0.0
    %1493 = vmatprep.subr.mxu0 0.0
    %1494 = vmatpush1.msra.mxu0 0.0
    %1495 = vmatprep.mubr.f32.mxu0 0.0
    %1496 = vmatmul.mubr.f32.gmra.mrb[0].mxu0 %v1358
    %v1497 = vpop.f32.mrb[0].mxu0
    %v1498 = vadd.f32 0.0, %v1497
    %v1499 = vpop.f32.mrb[0].mxu0
    %v1500 = vadd.f32 0.0, %v1499
    %1501 = vdwg.mxu0
    %v1506 = vrot.slane %v1427, 4
    %v1507 = vrot.slane %v1429, 4
    %v1508 = vrot.slane %v1498, 4
    %v1509 = vrot.slane %v1500, 4
    %v1514 = vadd.f32 %v1354, %v1506
    %v1515 = vadd.f32 %v1355, %v1507
    %v1516 = vadd.f32 %v1356, %v1508
    %v1517 = vadd.f32 %v1357, %v1509
    %v1518 = vld [vmem:[#allocation2 + $0x60] sm:$0xc]
    %v1519 = vld [vmem:[#allocation2 + $0x68] sm:$0xc]
    %v1520 = vld [vmem:[#allocation2 + $0x70] sm:$0xc]
    %v1521 = vld [vmem:[#allocation2 + $0x78] sm:$0xc]
    %v1522 = vrot.slane %v1329, 4
    %1524 = vmatprep.subr.mxu0 %v513
    %1525 = vmatpush1.msra.mxu0 %v512
    %1526 = vmatprep.subr.mxu0 %v517
    %1527 = vmatpush1.msra.mxu0 %v516
    %1528 = vmatprep.subr.mxu0 %v521
    %1529 = vmatpush1.msra.mxu0 %v520
    %1530 = vmatprep.subr.mxu0 %v525
    %1531 = vmatpush1.msra.mxu0 %v524
    %1532 = vmatprep.subr.mxu0 %v529
    %1533 = vmatpush1.msra.mxu0 %v528
    %1534 = vmatprep.subr.mxu0 %v533
    %1535 = vmatpush1.msra.mxu0 %v532
    %1536 = vmatprep.subr.mxu0 %v537
    %1537 = vmatpush1.msra.mxu0 %v536
    %1538 = vmatprep.subr.mxu0 %v541
    %1539 = vmatpush1.msra.mxu0 %v540
    %1540 = vmatprep.subr.mxu0 %v545
    %1541 = vmatpush1.msra.mxu0 %v544
    %1542 = vmatprep.subr.mxu0 %v549
    %1543 = vmatpush1.msra.mxu0 %v548
    %1544 = vmatprep.subr.mxu0 %v553
    %1545 = vmatpush1.msra.mxu0 %v552
    %1546 = vmatprep.subr.mxu0 %v557
    %1547 = vmatpush1.msra.mxu0 %v556
    %1548 = vmatprep.subr.mxu0 %v561
    %1549 = vmatpush1.msra.mxu0 %v560
    %1550 = vmatprep.subr.mxu0 %v565
    %1551 = vmatpush1.msra.mxu0 %v564
    %1552 = vmatprep.subr.mxu0 %v569
    %1553 = vmatpush1.msra.mxu0 %v568
    %1554 = vmatprep.subr.mxu0 %v573
    %1555 = vmatpush1.msra.mxu0 %v572
    %1556 = vmatprep.subr.mxu0 0.0
    %1557 = vmatpush1.msra.mxu0 0.0
    %1558 = vmatprep.subr.mxu0 0.0
    %1559 = vmatpush1.msra.mxu0 0.0
    %1560 = vmatprep.subr.mxu0 0.0
    %1561 = vmatpush1.msra.mxu0 0.0
    %1562 = vmatprep.subr.mxu0 0.0
    %1563 = vmatpush1.msra.mxu0 0.0
    %1564 = vmatprep.subr.mxu0 0.0
    %1565 = vmatpush1.msra.mxu0 0.0
    %1566 = vmatprep.subr.mxu0 0.0
    %1567 = vmatpush1.msra.mxu0 0.0
    %1568 = vmatprep.subr.mxu0 0.0
    %1569 = vmatpush1.msra.mxu0 0.0
    %1570 = vmatprep.subr.mxu0 0.0
    %1571 = vmatpush1.msra.mxu0 0.0
    %1572 = vmatprep.subr.mxu0 0.0
    %1573 = vmatpush1.msra.mxu0 0.0
    %1574 = vmatprep.subr.mxu0 0.0
    %1575 = vmatpush1.msra.mxu0 0.0
    %1576 = vmatprep.subr.mxu0 0.0
    %1577 = vmatpush1.msra.mxu0 0.0
    %1578 = vmatprep.subr.mxu0 0.0
    %1579 = vmatpush1.msra.mxu0 0.0
    %1580 = vmatprep.subr.mxu0 0.0
    %1581 = vmatpush1.msra.mxu0 0.0
    %1582 = vmatprep.subr.mxu0 0.0
    %1583 = vmatpush1.msra.mxu0 0.0
    %1584 = vmatprep.subr.mxu0 0.0
    %1585 = vmatpush1.msra.mxu0 0.0
    %1586 = vmatprep.subr.mxu0 0.0
    %1587 = vmatpush1.msra.mxu0 0.0
    %1588 = vmatprep.mubr.f32.mxu0 0.0
    %1589 = vmatmul.mubr.f32.gmra.mrb[0].mxu0 %v1522
    %v1590 = vpop.f32.mrb[0].mxu0
    %v1591 = vadd.f32 0.0, %v1590
    %v1592 = vpop.f32.mrb[0].mxu0
    %v1593 = vadd.f32 0.0, %v1592
    %1594 = vdwg.mxu0
    %1595 = vmatprep.subr.mxu0 %v515
    %1596 = vmatpush1.msra.mxu0 %v514
    %1597 = vmatprep.subr.mxu0 %v519
    %1598 = vmatpush1.msra.mxu0 %v518
    %1599 = vmatprep.subr.mxu0 %v523
    %1600 = vmatpush1.msra.mxu0 %v522
    %1601 = vmatprep.subr.mxu0 %v527
    %1602 = vmatpush1.msra.mxu0 %v526
    %1603 = vmatprep.subr.mxu0 %v531
    %1604 = vmatpush1.msra.mxu0 %v530
    %1605 = vmatprep.subr.mxu0 %v535
    %1606 = vmatpush1.msra.mxu0 %v534
    %1607 = vmatprep.subr.mxu0 %v539
    %1608 = vmatpush1.msra.mxu0 %v538
    %1609 = vmatprep.subr.mxu0 %v543
    %1610 = vmatpush1.msra.mxu0 %v542
    %1611 = vmatprep.subr.mxu0 %v547
    %1612 = vmatpush1.msra.mxu0 %v546
    %1613 = vmatprep.subr.mxu0 %v551
    %1614 = vmatpush1.msra.mxu0 %v550
    %1615 = vmatprep.subr.mxu0 %v555
    %1616 = vmatpush1.msra.mxu0 %v554
    %1617 = vmatprep.subr.mxu0 %v559
    %1618 = vmatpush1.msra.mxu0 %v558
    %1619 = vmatprep.subr.mxu0 %v563
    %1620 = vmatpush1.msra.mxu0 %v562
    %1621 = vmatprep.subr.mxu0 %v567
    %1622 = vmatpush1.msra.mxu0 %v566
    %1623 = vmatprep.subr.mxu0 %v571
    %1624 = vmatpush1.msra.mxu0 %v570
    %1625 = vmatprep.subr.mxu0 %v575
    %1626 = vmatpush1.msra.mxu0 %v574
    %1627 = vmatprep.subr.mxu0 0.0
    %1628 = vmatpush1.msra.mxu0 0.0
    %1629 = vmatprep.subr.mxu0 0.0
    %1630 = vmatpush1.msra.mxu0 0.0
    %1631 = vmatprep.subr.mxu0 0.0
    %1632 = vmatpush1.msra.mxu0 0.0
    %1633 = vmatprep.subr.mxu0 0.0
    %1634 = vmatpush1.msra.mxu0 0.0
    %1635 = vmatprep.subr.mxu0 0.0
    %1636 = vmatpush1.msra.mxu0 0.0
    %1637 = vmatprep.subr.mxu0 0.0
    %1638 = vmatpush1.msra.mxu0 0.0
    %1639 = vmatprep.subr.mxu0 0.0
    %1640 = vmatpush1.msra.mxu0 0.0
    %1641 = vmatprep.subr.mxu0 0.0
    %1642 = vmatpush1.msra.mxu0 0.0
    %1643 = vmatprep.subr.mxu0 0.0
    %1644 = vmatpush1.msra.mxu0 0.0
    %1645 = vmatprep.subr.mxu0 0.0
    %1646 = vmatpush1.msra.mxu0 0.0
    %1647 = vmatprep.subr.mxu0 0.0
    %1648 = vmatpush1.msra.mxu0 0.0
    %1649 = vmatprep.subr.mxu0 0.0
    %1650 = vmatpush1.msra.mxu0 0.0
    %1651 = vmatprep.subr.mxu0 0.0
    %1652 = vmatpush1.msra.mxu0 0.0
    %1653 = vmatprep.subr.mxu0 0.0
    %1654 = vmatpush1.msra.mxu0 0.0
    %1655 = vmatprep.subr.mxu0 0.0
    %1656 = vmatpush1.msra.mxu0 0.0
    %1657 = vmatprep.subr.mxu0 0.0
    %1658 = vmatpush1.msra.mxu0 0.0
    %1659 = vmatprep.mubr.f32.mxu0 0.0
    %1660 = vmatmul.mubr.f32.gmra.mrb[0].mxu0 %v1522
    %v1661 = vpop.f32.mrb[0].mxu0
    %v1662 = vadd.f32 0.0, %v1661
    %v1663 = vpop.f32.mrb[0].mxu0
    %v1664 = vadd.f32 0.0, %v1663
    %1665 = vdwg.mxu0
    %v1670 = vrot.slane %v1591, 6
    %v1671 = vrot.slane %v1593, 6
    %v1672 = vrot.slane %v1662, 6
    %v1673 = vrot.slane %v1664, 6
    %v1678 = vadd.f32 %v1518, %v1670
    %v1679 = vadd.f32 %v1519, %v1671
    %v1680 = vadd.f32 %v1520, %v1672
    %v1681 = vadd.f32 %v1521, %v1673
    %v1682 = vxor.u32 %v1514, 2147483648
    %v1683 = vmul.f32 %v1682, 1.442695
    %v1684 = vpow.pop %v1683
    %v1685 = vadd.f32 %v1684, 1.0
    %v1686 = vrcp.pop %v1685
    %v1687 = vmul.f32 1.0, %v1686
    %v1688 = vxor.u32 %v1515, 2147483648
    %v1689 = vmul.f32 %v1688, 1.442695
    %v1690 = vpow.pop %v1689
    %v1691 = vadd.f32 %v1690, 1.0
    %v1692 = vrcp.pop %v1691
    %v1693 = vmul.f32 1.0, %v1692
    %v1694 = vtanh.pop %v1516
    %v1695 = vxor.u32 %v1517, 2147483648
    %v1696 = vmul.f32 %v1695, 1.442695
    %v1697 = vpow.pop %v1696
    %v1698 = vadd.f32 %v1697, 1.0
    %v1699 = vrcp.pop %v1698
    %v1700 = vmul.f32 1.0, %v1699
    %v1702 = vrot.slane %v1300, 6
    %v1704 = vmul.f32 %v1693, %v1702
    %v1705 = vmul.f32 %v1687, %v1694
    %v1706 = vadd.f32 %v1704, %v1705
    %v1707 = vtanh.pop %v1706
    %v1708 = vmul.f32 %v1700, %v1707
    %v1709 = vxor.u32 %v1678, 2147483648
    %v1710 = vmul.f32 %v1709, 1.442695
    %v1711 = vpow.pop %v1710
    %v1712 = vadd.f32 %v1711, 1.0
    %v1713 = vrcp.pop %v1712
    %v1714 = vmul.f32 1.0, %v1713
    %v1715 = vxor.u32 %v1679, 2147483648
    %v1716 = vmul.f32 %v1715, 1.442695
    %v1717 = vpow.pop %v1716
    %v1718 = vadd.f32 %v1717, 1.0
    %v1719 = vrcp.pop %v1718
    %v1720 = vmul.f32 1.0, %v1719
    %v1721 = vtanh.pop %v1680
    %v1722 = vxor.u32 %v1681, 2147483648
    %v1723 = vmul.f32 %v1722, 1.442695
    %v1724 = vpow.pop %v1723
    %v1725 = vadd.f32 %v1724, 1.0
    %v1726 = vrcp.pop %v1725
    %v1727 = vmul.f32 1.0, %v1726
    %v1729 = vrot.slane %v1327, 2
    %v1731 = vmul.f32 %v1720, %v1729
    %v1732 = vmul.f32 %v1714, %v1721
    %v1733 = vadd.f32 %v1731, %v1732
    %v1734 = vtanh.pop %v1733
    %v1735 = vmul.f32 %v1727, %v1734
    %v1737 = vcombine.high %v1708, %v1708
    %v1739 = vunpack.c.l.s4 1983009808
    %v1740 = vunpack.c.0.s8 %v1739
    %v1741 = vlaneseq
    %v1742 = vshrl.u32 %v1741, 7
    %v1743 = vsub.s32 %v1740, %v1742
    %v1744 = vrot.slane %v1737, %v1743
    %s1746 = scalar_lea.vmem %s4, 8
    %1747 = vst [vmem:[%s1746] sm:$0x3] %v1744
    %v1750 = vunpack.c.l.s4 1983009808
    %v1751 = vunpack.c.0.s8 %v1750
    %v1752 = vlaneseq
    %v1753 = vshrl.u32 %v1752, 7
    %v1754 = vsub.s32 %v1751, %v1753
    %v1755 = vrot.slane %v1735, %v1754
    %v1756 = vcombine.high %v1755, %v1755
    %s1758 = scalar_lea.vmem %s4, 20
    %1759 = vst [vmem:[%s1758 + $0x2] sm:$0x3] %v1756
    %v1760 = vld [vmem:[#allocation2] sm:$0xc0]
    %v1761 = vld [vmem:[#allocation2 + $0x8] sm:$0xc0]
    %v1762 = vld [vmem:[#allocation2 + $0x10] sm:$0xc0]
    %v1763 = vld [vmem:[#allocation2 + $0x18] sm:$0xc0]
    %v1764 = vrot.slane %v1708, 4
    %1766 = vmatprep.subr.mxu0 %v448
    %1767 = vmatpush1.msra.mxu0 %v447
    %1768 = vmatprep.subr.mxu0 %v452
    %1769 = vmatpush1.msra.mxu0 %v451
    %1770 = vmatprep.subr.mxu0 %v456
    %1771 = vmatpush1.msra.mxu0 %v455
    %1772 = vmatprep.subr.mxu0 %v460
    %1773 = vmatpush1.msra.mxu0 %v459
    %1774 = vmatprep.subr.mxu0 %v464
    %1775 = vmatpush1.msra.mxu0 %v463
    %1776 = vmatprep.subr.mxu0 %v468
    %1777 = vmatpush1.msra.mxu0 %v467
    %1778 = vmatprep.subr.mxu0 %v472
    %1779 = vmatpush1.msra.mxu0 %v471
    %1780 = vmatprep.subr.mxu0 %v476
    %1781 = vmatpush1.msra.mxu0 %v475
    %1782 = vmatprep.subr.mxu0 %v480
    %1783 = vmatpush1.msra.mxu0 %v479
    %1784 = vmatprep.subr.mxu0 %v484
    %1785 = vmatpush1.msra.mxu0 %v483
    %1786 = vmatprep.subr.mxu0 %v488
    %1787 = vmatpush1.msra.mxu0 %v487
    %1788 = vmatprep.subr.mxu0 %v492
    %1789 = vmatpush1.msra.mxu0 %v491
    %1790 = vmatprep.subr.mxu0 %v496
    %1791 = vmatpush1.msra.mxu0 %v495
    %1792 = vmatprep.subr.mxu0 %v500
    %1793 = vmatpush1.msra.mxu0 %v499
    %1794 = vmatprep.subr.mxu0 %v504
    %1795 = vmatpush1.msra.mxu0 %v503
    %1796 = vmatprep.subr.mxu0 %v508
    %1797 = vmatpush1.msra.mxu0 %v507
    %1798 = vmatprep.subr.mxu0 0.0
    %1799 = vmatpush1.msra.mxu0 0.0
    %1800 = vmatprep.subr.mxu0 0.0
    %1801 = vmatpush1.msra.mxu0 0.0
    %1802 = vmatprep.subr.mxu0 0.0
    %1803 = vmatpush1.msra.mxu0 0.0
    %1804 = vmatprep.subr.mxu0 0.0
    %1805 = vmatpush1.msra.mxu0 0.0
    %1806 = vmatprep.subr.mxu0 0.0
    %1807 = vmatpush1.msra.mxu0 0.0
    %1808 = vmatprep.subr.mxu0 0.0
    %1809 = vmatpush1.msra.mxu0 0.0
    %1810 = vmatprep.subr.mxu0 0.0
    %1811 = vmatpush1.msra.mxu0 0.0
    %1812 = vmatprep.subr.mxu0 0.0
    %1813 = vmatpush1.msra.mxu0 0.0
    %1814 = vmatprep.subr.mxu0 0.0
    %1815 = vmatpush1.msra.mxu0 0.0
    %1816 = vmatprep.subr.mxu0 0.0
    %1817 = vmatpush1.msra.mxu0 0.0
    %1818 = vmatprep.subr.mxu0 0.0
    %1819 = vmatpush1.msra.mxu0 0.0
    %1820 = vmatprep.subr.mxu0 0.0
    %1821 = vmatpush1.msra.mxu0 0.0
    %1822 = vmatprep.subr.mxu0 0.0
    %1823 = vmatpush1.msra.mxu0 0.0
    %1824 = vmatprep.subr.mxu0 0.0
    %1825 = vmatpush1.msra.mxu0 0.0
    %1826 = vmatprep.subr.mxu0 0.0
    %1827 = vmatpush1.msra.mxu0 0.0
    %1828 = vmatprep.subr.mxu0 0.0
    %1829 = vmatpush1.msra.mxu0 0.0
    %1830 = vmatprep.mubr.f32.mxu0 0.0
    %1831 = vmatmul.mubr.f32.gmra.mrb[0].mxu0 %v1764
    %v1832 = vpop.f32.mrb[0].mxu0
    %v1833 = vadd.f32 0.0, %v1832
    %v1834 = vpop.f32.mrb[0].mxu0
    %v1835 = vadd.f32 0.0, %v1834
    %1836 = vdwg.mxu0
    %1837 = vmatprep.subr.mxu0 %v450
    %1838 = vmatpush1.msra.mxu0 %v449
    %1839 = vmatprep.subr.mxu0 %v454
    %1840 = vmatpush1.msra.mxu0 %v453
    %1841 = vmatprep.subr.mxu0 %v458
    %1842 = vmatpush1.msra.mxu0 %v457
    %1843 = vmatprep.subr.mxu0 %v462
    %1844 = vmatpush1.msra.mxu0 %v461
    %1845 = vmatprep.subr.mxu0 %v466
    %1846 = vmatpush1.msra.mxu0 %v465
    %1847 = vmatprep.subr.mxu0 %v470
    %1848 = vmatpush1.msra.mxu0 %v469
    %1849 = vmatprep.subr.mxu0 %v474
    %1850 = vmatpush1.msra.mxu0 %v473
    %1851 = vmatprep.subr.mxu0 %v478
    %1852 = vmatpush1.msra.mxu0 %v477
    %1853 = vmatprep.subr.mxu0 %v482
    %1854 = vmatpush1.msra.mxu0 %v481
    %1855 = vmatprep.subr.mxu0 %v486
    %1856 = vmatpush1.msra.mxu0 %v485
    %1857 = vmatprep.subr.mxu0 %v490
    %1858 = vmatpush1.msra.mxu0 %v489
    %1859 = vmatprep.subr.mxu0 %v494
    %1860 = vmatpush1.msra.mxu0 %v493
    %1861 = vmatprep.subr.mxu0 %v498
    %1862 = vmatpush1.msra.mxu0 %v497
    %1863 = vmatprep.subr.mxu0 %v502
    %1864 = vmatpush1.msra.mxu0 %v501
    %1865 = vmatprep.subr.mxu0 %v506
    %1866 = vmatpush1.msra.mxu0 %v505
    %1867 = vmatprep.subr.mxu0 %v510
    %1868 = vmatpush1.msra.mxu0 %v509
    %1869 = vmatprep.subr.mxu0 0.0
    %1870 = vmatpush1.msra.mxu0 0.0
    %1871 = vmatprep.subr.mxu0 0.0
    %1872 = vmatpush1.msra.mxu0 0.0
    %1873 = vmatprep.subr.mxu0 0.0
    %1874 = vmatpush1.msra.mxu0 0.0
    %1875 = vmatprep.subr.mxu0 0.0
    %1876 = vmatpush1.msra.mxu0 0.0
    %1877 = vmatprep.subr.mxu0 0.0
    %1878 = vmatpush1.msra.mxu0 0.0
    %1879 = vmatprep.subr.mxu0 0.0
    %1880 = vmatpush1.msra.mxu0 0.0
    %1881 = vmatprep.subr.mxu0 0.0
    %1882 = vmatpush1.msra.mxu0 0.0
    %1883 = vmatprep.subr.mxu0 0.0
    %1884 = vmatpush1.msra.mxu0 0.0
    %1885 = vmatprep.subr.mxu0 0.0
    %1886 = vmatpush1.msra.mxu0 0.0
    %1887 = vmatprep.subr.mxu0 0.0
    %1888 = vmatpush1.msra.mxu0 0.0
    %1889 = vmatprep.subr.mxu0 0.0
    %1890 = vmatpush1.msra.mxu0 0.0
    %1891 = vmatprep.subr.mxu0 0.0
    %1892 = vmatpush1.msra.mxu0 0.0
    %1893 = vmatprep.subr.mxu0 0.0
    %1894 = vmatpush1.msra.mxu0 0.0
    %1895 = vmatprep.subr.mxu0 0.0
    %1896 = vmatpush1.msra.mxu0 0.0
    %1897 = vmatprep.subr.mxu0 0.0
    %1898 = vmatpush1.msra.mxu0 0.0
    %1899 = vmatprep.subr.mxu0 0.0
    %1900 = vmatpush1.msra.mxu0 0.0
    %1901 = vmatprep.mubr.f32.mxu0 0.0
    %1902 = vmatmul.mubr.f32.gmra.mrb[0].mxu0 %v1764
    %v1903 = vpop.f32.mrb[0].mxu0
    %v1904 = vadd.f32 0.0, %v1903
    %v1905 = vpop.f32.mrb[0].mxu0
    %v1906 = vadd.f32 0.0, %v1905
    %1907 = vdwg.mxu0
    %v1912 = vrot.slane %v1833, 2
    %v1913 = vrot.slane %v1835, 2
    %v1914 = vrot.slane %v1904, 2
    %v1915 = vrot.slane %v1906, 2
    %v1920 = vadd.f32 %v1760, %v1912
    %v1921 = vadd.f32 %v1761, %v1913
    %v1922 = vadd.f32 %v1762, %v1914
    %v1923 = vadd.f32 %v1763, %v1915
    %v1924 = vld [vmem:[#allocation2 + $0x60] sm:$0x3]
    %v1925 = vld [vmem:[#allocation2 + $0x68] sm:$0x3]
    %v1926 = vld [vmem:[#allocation2 + $0x70] sm:$0x3]
    %v1927 = vld [vmem:[#allocation2 + $0x78] sm:$0x3]
    %v1928 = vrot.slane %v1735, 2
    %1930 = vmatprep.subr.mxu0 %v513
    %1931 = vmatpush1.msra.mxu0 %v512
    %1932 = vmatprep.subr.mxu0 %v517
    %1933 = vmatpush1.msra.mxu0 %v516
    %1934 = vmatprep.subr.mxu0 %v521
    %1935 = vmatpush1.msra.mxu0 %v520
    %1936 = vmatprep.subr.mxu0 %v525
    %1937 = vmatpush1.msra.mxu0 %v524
    %1938 = vmatprep.subr.mxu0 %v529
    %1939 = vmatpush1.msra.mxu0 %v528
    %1940 = vmatprep.subr.mxu0 %v533
    %1941 = vmatpush1.msra.mxu0 %v532
    %1942 = vmatprep.subr.mxu0 %v537
    %1943 = vmatpush1.msra.mxu0 %v536
    %1944 = vmatprep.subr.mxu0 %v541
    %1945 = vmatpush1.msra.mxu0 %v540
    %1946 = vmatprep.subr.mxu0 %v545
    %1947 = vmatpush1.msra.mxu0 %v544
    %1948 = vmatprep.subr.mxu0 %v549
    %1949 = vmatpush1.msra.mxu0 %v548
    %1950 = vmatprep.subr.mxu0 %v553
    %1951 = vmatpush1.msra.mxu0 %v552
    %1952 = vmatprep.subr.mxu0 %v557
    %1953 = vmatpush1.msra.mxu0 %v556
    %1954 = vmatprep.subr.mxu0 %v561
    %1955 = vmatpush1.msra.mxu0 %v560
    %1956 = vmatprep.subr.mxu0 %v565
    %1957 = vmatpush1.msra.mxu0 %v564
    %1958 = vmatprep.subr.mxu0 %v569
    %1959 = vmatpush1.msra.mxu0 %v568
    %1960 = vmatprep.subr.mxu0 %v573
    %1961 = vmatpush1.msra.mxu0 %v572
    %1962 = vmatprep.subr.mxu0 0.0
    %1963 = vmatpush1.msra.mxu0 0.0
    %1964 = vmatprep.subr.mxu0 0.0
    %1965 = vmatpush1.msra.mxu0 0.0
    %1966 = vmatprep.subr.mxu0 0.0
    %1967 = vmatpush1.msra.mxu0 0.0
    %1968 = vmatprep.subr.mxu0 0.0
    %1969 = vmatpush1.msra.mxu0 0.0
    %1970 = vmatprep.subr.mxu0 0.0
    %1971 = vmatpush1.msra.mxu0 0.0
    %1972 = vmatprep.subr.mxu0 0.0
    %1973 = vmatpush1.msra.mxu0 0.0
    %1974 = vmatprep.subr.mxu0 0.0
    %1975 = vmatpush1.msra.mxu0 0.0
    %1976 = vmatprep.subr.mxu0 0.0
    %1977 = vmatpush1.msra.mxu0 0.0
    %1978 = vmatprep.subr.mxu0 0.0
    %1979 = vmatpush1.msra.mxu0 0.0
    %1980 = vmatprep.subr.mxu0 0.0
    %1981 = vmatpush1.msra.mxu0 0.0
    %1982 = vmatprep.subr.mxu0 0.0
    %1983 = vmatpush1.msra.mxu0 0.0
    %1984 = vmatprep.subr.mxu0 0.0
    %1985 = vmatpush1.msra.mxu0 0.0
    %1986 = vmatprep.subr.mxu0 0.0
    %1987 = vmatpush1.msra.mxu0 0.0
    %1988 = vmatprep.subr.mxu0 0.0
    %1989 = vmatpush1.msra.mxu0 0.0
    %1990 = vmatprep.subr.mxu0 0.0
    %1991 = vmatpush1.msra.mxu0 0.0
    %1992 = vmatprep.subr.mxu0 0.0
    %1993 = vmatpush1.msra.mxu0 0.0
    %1994 = vmatprep.mubr.f32.mxu0 0.0
    %1995 = vmatmul.mubr.f32.gmra.mrb[0].mxu0 %v1928
    %v1996 = vpop.f32.mrb[0].mxu0
    %v1997 = vadd.f32 0.0, %v1996
    %v1998 = vpop.f32.mrb[0].mxu0
    %v1999 = vadd.f32 0.0, %v1998
    %2000 = vdwg.mxu0
    %2001 = vmatprep.subr.mxu0 %v515
    %2002 = vmatpush1.msra.mxu0 %v514
    %2003 = vmatprep.subr.mxu0 %v519
    %2004 = vmatpush1.msra.mxu0 %v518
    %2005 = vmatprep.subr.mxu0 %v523
    %2006 = vmatpush1.msra.mxu0 %v522
    %2007 = vmatprep.subr.mxu0 %v527
    %2008 = vmatpush1.msra.mxu0 %v526
    %2009 = vmatprep.subr.mxu0 %v531
    %2010 = vmatpush1.msra.mxu0 %v530
    %2011 = vmatprep.subr.mxu0 %v535
    %2012 = vmatpush1.msra.mxu0 %v534
    %2013 = vmatprep.subr.mxu0 %v539
    %2014 = vmatpush1.msra.mxu0 %v538
    %2015 = vmatprep.subr.mxu0 %v543
    %2016 = vmatpush1.msra.mxu0 %v542
    %2017 = vmatprep.subr.mxu0 %v547
    %2018 = vmatpush1.msra.mxu0 %v546
    %2019 = vmatprep.subr.mxu0 %v551
    %2020 = vmatpush1.msra.mxu0 %v550
    %2021 = vmatprep.subr.mxu0 %v555
    %2022 = vmatpush1.msra.mxu0 %v554
    %2023 = vmatprep.subr.mxu0 %v559
    %2024 = vmatpush1.msra.mxu0 %v558
    %2025 = vmatprep.subr.mxu0 %v563
    %2026 = vmatpush1.msra.mxu0 %v562
    %2027 = vmatprep.subr.mxu0 %v567
    %2028 = vmatpush1.msra.mxu0 %v566
    %2029 = vmatprep.subr.mxu0 %v571
    %2030 = vmatpush1.msra.mxu0 %v570
    %2031 = vmatprep.subr.mxu0 %v575
    %2032 = vmatpush1.msra.mxu0 %v574
    %2033 = vmatprep.subr.mxu0 0.0
    %2034 = vmatpush1.msra.mxu0 0.0
    %2035 = vmatprep.subr.mxu0 0.0
    %2036 = vmatpush1.msra.mxu0 0.0
    %2037 = vmatprep.subr.mxu0 0.0
    %2038 = vmatpush1.msra.mxu0 0.0
    %2039 = vmatprep.subr.mxu0 0.0
    %2040 = vmatpush1.msra.mxu0 0.0
    %2041 = vmatprep.subr.mxu0 0.0
    %2042 = vmatpush1.msra.mxu0 0.0
    %2043 = vmatprep.subr.mxu0 0.0
    %2044 = vmatpush1.msra.mxu0 0.0
    %2045 = vmatprep.subr.mxu0 0.0
    %2046 = vmatpush1.msra.mxu0 0.0
    %2047 = vmatprep.subr.mxu0 0.0
    %2048 = vmatpush1.msra.mxu0 0.0
    %2049 = vmatprep.subr.mxu0 0.0
    %2050 = vmatpush1.msra.mxu0 0.0
    %2051 = vmatprep.subr.mxu0 0.0
    %2052 = vmatpush1.msra.mxu0 0.0
    %2053 = vmatprep.subr.mxu0 0.0
    %2054 = vmatpush1.msra.mxu0 0.0
    %2055 = vmatprep.subr.mxu0 0.0
    %2056 = vmatpush1.msra.mxu0 0.0
    %2057 = vmatprep.subr.mxu0 0.0
    %2058 = vmatpush1.msra.mxu0 0.0
    %2059 = vmatprep.subr.mxu0 0.0
    %2060 = vmatpush1.msra.mxu0 0.0
    %2061 = vmatprep.subr.mxu0 0.0
    %2062 = vmatpush1.msra.mxu0 0.0
    %2063 = vmatprep.subr.mxu0 0.0
    %2064 = vmatpush1.msra.mxu0 0.0
    %2065 = vmatprep.mubr.f32.mxu0 0.0
    %2066 = vmatmul.mubr.f32.gmra.mrb[0].mxu0 %v1928
    %v2067 = vpop.f32.mrb[0].mxu0
    %v2068 = vadd.f32 0.0, %v2067
    %v2069 = vpop.f32.mrb[0].mxu0
    %v2070 = vadd.f32 0.0, %v2069
    %2071 = vdwg.mxu0
    %v2072 = vadd.f32 %v1924, %v1997
    %v2073 = vadd.f32 %v1925, %v1999
    %v2074 = vadd.f32 %v1926, %v2068
    %v2075 = vadd.f32 %v1927, %v2070
    %v2076 = vxor.u32 %v1920, 2147483648
    %v2077 = vmul.f32 %v2076, 1.442695
    %v2078 = vpow.pop %v2077
    %v2079 = vadd.f32 %v2078, 1.0
    %v2080 = vrcp.pop %v2079
    %v2081 = vmul.f32 1.0, %v2080
    %v2082 = vxor.u32 %v1921, 2147483648
    %v2083 = vmul.f32 %v2082, 1.442695
    %v2084 = vpow.pop %v2083
    %v2085 = vadd.f32 %v2084, 1.0
    %v2086 = vrcp.pop %v2085
    %v2087 = vmul.f32 1.0, %v2086
    %v2088 = vtanh.pop %v1922
    %v2089 = vxor.u32 %v1923, 2147483648
    %v2090 = vmul.f32 %v2089, 1.442695
    %v2091 = vpow.pop %v2090
    %v2092 = vadd.f32 %v2091, 1.0
    %v2093 = vrcp.pop %v2092
    %v2094 = vmul.f32 1.0, %v2093
    %v2096 = vrot.slane %v1706, 6
    %v2098 = vmul.f32 %v2087, %v2096
    %v2099 = vmul.f32 %v2081, %v2088
    %v2100 = vadd.f32 %v2098, %v2099
    %v2101 = vtanh.pop %v2100
    %v2102 = vmul.f32 %v2094, %v2101
    %v2103 = vxor.u32 %v2072, 2147483648
    %v2104 = vmul.f32 %v2103, 1.442695
    %v2105 = vpow.pop %v2104
    %v2106 = vadd.f32 %v2105, 1.0
    %v2107 = vrcp.pop %v2106
    %v2108 = vmul.f32 1.0, %v2107
    %v2109 = vxor.u32 %v2073, 2147483648
    %v2110 = vmul.f32 %v2109, 1.442695
    %v2111 = vpow.pop %v2110
    %v2112 = vadd.f32 %v2111, 1.0
    %v2113 = vrcp.pop %v2112
    %v2114 = vmul.f32 1.0, %v2113
    %v2115 = vtanh.pop %v2074
    %v2116 = vxor.u32 %v2075, 2147483648
    %v2117 = vmul.f32 %v2116, 1.442695
    %v2118 = vpow.pop %v2117
    %v2119 = vadd.f32 %v2118, 1.0
    %v2120 = vrcp.pop %v2119
    %v2121 = vmul.f32 1.0, %v2120
    %v2123 = vrot.slane %v1733, 2
    %v2125 = vmul.f32 %v2114, %v2123
    %v2126 = vmul.f32 %v2108, %v2115
    %v2127 = vadd.f32 %v2125, %v2126
    %v2128 = vtanh.pop %v2127
    %v2129 = vmul.f32 %v2121, %v2128
    %v2131 = vcombine.high %v2102, %v2102
    %v2133 = vunpack.c.l.s4 1983009808
    %v2134 = vunpack.c.0.s8 %v2133
    %v2135 = vlaneseq
    %v2136 = vshrl.u32 %v2135, 7
    %v2137 = vsub.s32 %v2134, %v2136
    %v2138 = vrot.slane %v2131, %v2137
    %v2139 = vcombine.high %v2138, %v2138
    %s2141 = scalar_lea.vmem %s4, 12
    %2142 = vst [vmem:[%s2141] sm:$0x3] %v2139
    %s2143 = scalar_lea.vmem %s4, 16
    %2144 = vst [vmem:[%s2143 + $0x2] sm:$0x3] %v2129
    %v2145 = vld [vmem:[#allocation2 + $0x40] sm:$0x3]
    %v2146 = vld [vmem:[#allocation2 + $0x48] sm:$0x3]
    %v2147 = vld [vmem:[#allocation2 + $0x50] sm:$0x3]
    %v2148 = vld [vmem:[#allocation2 + $0x58] sm:$0x3]
    %v2149 = vrot.slane %v2102, 6
    %2151 = vmatprep.subr.mxu0 %v448
    %2152 = vmatpush1.msra.mxu0 %v447
    %2153 = vmatprep.subr.mxu0 %v452
    %2154 = vmatpush1.msra.mxu0 %v451
    %2155 = vmatprep.subr.mxu0 %v456
    %2156 = vmatpush1.msra.mxu0 %v455
    %2157 = vmatprep.subr.mxu0 %v460
    %2158 = vmatpush1.msra.mxu0 %v459
    %2159 = vmatprep.subr.mxu0 %v464
    %2160 = vmatpush1.msra.mxu0 %v463
    %2161 = vmatprep.subr.mxu0 %v468
    %2162 = vmatpush1.msra.mxu0 %v467
    %2163 = vmatprep.subr.mxu0 %v472
    %2164 = vmatpush1.msra.mxu0 %v471
    %2165 = vmatprep.subr.mxu0 %v476
    %2166 = vmatpush1.msra.mxu0 %v475
    %2167 = vmatprep.subr.mxu0 %v480
    %2168 = vmatpush1.msra.mxu0 %v479
    %2169 = vmatprep.subr.mxu0 %v484
    %2170 = vmatpush1.msra.mxu0 %v483
    %2171 = vmatprep.subr.mxu0 %v488
    %2172 = vmatpush1.msra.mxu0 %v487
    %2173 = vmatprep.subr.mxu0 %v492
    %2174 = vmatpush1.msra.mxu0 %v491
    %2175 = vmatprep.subr.mxu0 %v496
    %2176 = vmatpush1.msra.mxu0 %v495
    %2177 = vmatprep.subr.mxu0 %v500
    %2178 = vmatpush1.msra.mxu0 %v499
    %2179 = vmatprep.subr.mxu0 %v504
    %2180 = vmatpush1.msra.mxu0 %v503
    %2181 = vmatprep.subr.mxu0 %v508
    %2182 = vmatpush1.msra.mxu0 %v507
    %2183 = vmatprep.subr.mxu0 0.0
    %2184 = vmatpush1.msra.mxu0 0.0
    %2185 = vmatprep.subr.mxu0 0.0
    %2186 = vmatpush1.msra.mxu0 0.0
    %2187 = vmatprep.subr.mxu0 0.0
    %2188 = vmatpush1.msra.mxu0 0.0
    %2189 = vmatprep.subr.mxu0 0.0
    %2190 = vmatpush1.msra.mxu0 0.0
    %2191 = vmatprep.subr.mxu0 0.0
    %2192 = vmatpush1.msra.mxu0 0.0
    %2193 = vmatprep.subr.mxu0 0.0
    %2194 = vmatpush1.msra.mxu0 0.0
    %2195 = vmatprep.subr.mxu0 0.0
    %2196 = vmatpush1.msra.mxu0 0.0
    %2197 = vmatprep.subr.mxu0 0.0
    %2198 = vmatpush1.msra.mxu0 0.0
    %2199 = vmatprep.subr.mxu0 0.0
    %2200 = vmatpush1.msra.mxu0 0.0
    %2201 = vmatprep.subr.mxu0 0.0
    %2202 = vmatpush1.msra.mxu0 0.0
    %2203 = vmatprep.subr.mxu0 0.0
    %2204 = vmatpush1.msra.mxu0 0.0
    %2205 = vmatprep.subr.mxu0 0.0
    %2206 = vmatpush1.msra.mxu0 0.0
    %2207 = vmatprep.subr.mxu0 0.0
    %2208 = vmatpush1.msra.mxu0 0.0
    %2209 = vmatprep.subr.mxu0 0.0
    %2210 = vmatpush1.msra.mxu0 0.0
    %2211 = vmatprep.subr.mxu0 0.0
    %2212 = vmatpush1.msra.mxu0 0.0
    %2213 = vmatprep.subr.mxu0 0.0
    %2214 = vmatpush1.msra.mxu0 0.0
    %2215 = vmatprep.mubr.f32.mxu0 0.0
    %2216 = vmatmul.mubr.f32.gmra.mrb[0].mxu0 %v2149
    %v2217 = vpop.f32.mrb[0].mxu0
    %v2218 = vadd.f32 0.0, %v2217
    %v2219 = vpop.f32.mrb[0].mxu0
    %v2220 = vadd.f32 0.0, %v2219
    %2221 = vdwg.mxu0
    %2222 = vmatprep.subr.mxu0 %v450
    %2223 = vmatpush1.msra.mxu0 %v449
    %2224 = vmatprep.subr.mxu0 %v454
    %2225 = vmatpush1.msra.mxu0 %v453
    %2226 = vmatprep.subr.mxu0 %v458
    %2227 = vmatpush1.msra.mxu0 %v457
    %2228 = vmatprep.subr.mxu0 %v462
    %2229 = vmatpush1.msra.mxu0 %v461
    %2230 = vmatprep.subr.mxu0 %v466
    %2231 = vmatpush1.msra.mxu0 %v465
    %2232 = vmatprep.subr.mxu0 %v470
    %2233 = vmatpush1.msra.mxu0 %v469
    %2234 = vmatprep.subr.mxu0 %v474
    %2235 = vmatpush1.msra.mxu0 %v473
    %2236 = vmatprep.subr.mxu0 %v478
    %2237 = vmatpush1.msra.mxu0 %v477
    %2238 = vmatprep.subr.mxu0 %v482
    %2239 = vmatpush1.msra.mxu0 %v481
    %2240 = vmatprep.subr.mxu0 %v486
    %2241 = vmatpush1.msra.mxu0 %v485
    %2242 = vmatprep.subr.mxu0 %v490
    %2243 = vmatpush1.msra.mxu0 %v489
    %2244 = vmatprep.subr.mxu0 %v494
    %2245 = vmatpush1.msra.mxu0 %v493
    %2246 = vmatprep.subr.mxu0 %v498
    %2247 = vmatpush1.msra.mxu0 %v497
    %2248 = vmatprep.subr.mxu0 %v502
    %2249 = vmatpush1.msra.mxu0 %v501
    %2250 = vmatprep.subr.mxu0 %v506
    %2251 = vmatpush1.msra.mxu0 %v505
    %2252 = vmatprep.subr.mxu0 %v510
    %2253 = vmatpush1.msra.mxu0 %v509
    %2254 = vmatprep.subr.mxu0 0.0
    %2255 = vmatpush1.msra.mxu0 0.0
    %2256 = vmatprep.subr.mxu0 0.0
    %2257 = vmatpush1.msra.mxu0 0.0
    %2258 = vmatprep.subr.mxu0 0.0
    %2259 = vmatpush1.msra.mxu0 0.0
    %2260 = vmatprep.subr.mxu0 0.0
    %2261 = vmatpush1.msra.mxu0 0.0
    %2262 = vmatprep.subr.mxu0 0.0
    %2263 = vmatpush1.msra.mxu0 0.0
    %2264 = vmatprep.subr.mxu0 0.0
    %2265 = vmatpush1.msra.mxu0 0.0
    %2266 = vmatprep.subr.mxu0 0.0
    %2267 = vmatpush1.msra.mxu0 0.0
    %2268 = vmatprep.subr.mxu0 0.0
    %2269 = vmatpush1.msra.mxu0 0.0
    %2270 = vmatprep.subr.mxu0 0.0
    %2271 = vmatpush1.msra.mxu0 0.0
    %2272 = vmatprep.subr.mxu0 0.0
    %2273 = vmatpush1.msra.mxu0 0.0
    %2274 = vmatprep.subr.mxu0 0.0
    %2275 = vmatpush1.msra.mxu0 0.0
    %2276 = vmatprep.subr.mxu0 0.0
    %2277 = vmatpush1.msra.mxu0 0.0
    %2278 = vmatprep.subr.mxu0 0.0
    %2279 = vmatpush1.msra.mxu0 0.0
    %2280 = vmatprep.subr.mxu0 0.0
    %2281 = vmatpush1.msra.mxu0 0.0
    %2282 = vmatprep.subr.mxu0 0.0
    %2283 = vmatpush1.msra.mxu0 0.0
    %2284 = vmatprep.subr.mxu0 0.0
    %2285 = vmatpush1.msra.mxu0 0.0
    %2286 = vmatprep.mubr.f32.mxu0 0.0
    %2287 = vmatmul.mubr.f32.gmra.mrb[0].mxu0 %v2149
    %v2288 = vpop.f32.mrb[0].mxu0
    %v2289 = vadd.f32 0.0, %v2288
    %v2290 = vpop.f32.mrb[0].mxu0
    %v2291 = vadd.f32 0.0, %v2290
    %2292 = vdwg.mxu0
    %v2293 = vadd.f32 %v2145, %v2218
    %v2294 = vadd.f32 %v2146, %v2220
    %v2295 = vadd.f32 %v2147, %v2289
    %v2296 = vadd.f32 %v2148, %v2291
    %v2297 = vld [vmem:[#allocation2 + $0x20] sm:$0xc0]
    %v2298 = vld [vmem:[#allocation2 + $0x28] sm:$0xc0]
    %v2299 = vld [vmem:[#allocation2 + $0x30] sm:$0xc0]
    %v2300 = vld [vmem:[#allocation2 + $0x38] sm:$0xc0]
    %2301 = vmatprep.subr.mxu0 %v513
    %2302 = vmatpush1.msra.mxu0 %v512
    %2303 = vmatprep.subr.mxu0 %v517
    %2304 = vmatpush1.msra.mxu0 %v516
    %2305 = vmatprep.subr.mxu0 %v521
    %2306 = vmatpush1.msra.mxu0 %v520
    %2307 = vmatprep.subr.mxu0 %v525
    %2308 = vmatpush1.msra.mxu0 %v524
    %2309 = vmatprep.subr.mxu0 %v529
    %2310 = vmatpush1.msra.mxu0 %v528
    %2311 = vmatprep.subr.mxu0 %v533
    %2312 = vmatpush1.msra.mxu0 %v532
    %2313 = vmatprep.subr.mxu0 %v537
    %2314 = vmatpush1.msra.mxu0 %v536
    %2315 = vmatprep.subr.mxu0 %v541
    %2316 = vmatpush1.msra.mxu0 %v540
    %2317 = vmatprep.subr.mxu0 %v545
    %2318 = vmatpush1.msra.mxu0 %v544
    %2319 = vmatprep.subr.mxu0 %v549
    %2320 = vmatpush1.msra.mxu0 %v548
    %2321 = vmatprep.subr.mxu0 %v553
    %2322 = vmatpush1.msra.mxu0 %v552
    %2323 = vmatprep.subr.mxu0 %v557
    %2324 = vmatpush1.msra.mxu0 %v556
    %2325 = vmatprep.subr.mxu0 %v561
    %2326 = vmatpush1.msra.mxu0 %v560
    %2327 = vmatprep.subr.mxu0 %v565
    %2328 = vmatpush1.msra.mxu0 %v564
    %2329 = vmatprep.subr.mxu0 %v569
    %2330 = vmatpush1.msra.mxu0 %v568
    %2331 = vmatprep.subr.mxu0 %v573
    %2332 = vmatpush1.msra.mxu0 %v572
    %2333 = vmatprep.subr.mxu0 0.0
    %2334 = vmatpush1.msra.mxu0 0.0
    %2335 = vmatprep.subr.mxu0 0.0
    %2336 = vmatpush1.msra.mxu0 0.0
    %2337 = vmatprep.subr.mxu0 0.0
    %2338 = vmatpush1.msra.mxu0 0.0
    %2339 = vmatprep.subr.mxu0 0.0
    %2340 = vmatpush1.msra.mxu0 0.0
    %2341 = vmatprep.subr.mxu0 0.0
    %2342 = vmatpush1.msra.mxu0 0.0
    %2343 = vmatprep.subr.mxu0 0.0
    %2344 = vmatpush1.msra.mxu0 0.0
    %2345 = vmatprep.subr.mxu0 0.0
    %2346 = vmatpush1.msra.mxu0 0.0
    %2347 = vmatprep.subr.mxu0 0.0
    %2348 = vmatpush1.msra.mxu0 0.0
    %2349 = vmatprep.subr.mxu0 0.0
    %2350 = vmatpush1.msra.mxu0 0.0
    %2351 = vmatprep.subr.mxu0 0.0
    %2352 = vmatpush1.msra.mxu0 0.0
    %2353 = vmatprep.subr.mxu0 0.0
    %2354 = vmatpush1.msra.mxu0 0.0
    %2355 = vmatprep.subr.mxu0 0.0
    %2356 = vmatpush1.msra.mxu0 0.0
    %2357 = vmatprep.subr.mxu0 0.0
    %2358 = vmatpush1.msra.mxu0 0.0
    %2359 = vmatprep.subr.mxu0 0.0
    %2360 = vmatpush1.msra.mxu0 0.0
    %2361 = vmatprep.subr.mxu0 0.0
    %2362 = vmatpush1.msra.mxu0 0.0
    %2363 = vmatprep.subr.mxu0 0.0
    %2364 = vmatpush1.msra.mxu0 0.0
    %2365 = vmatprep.mubr.f32.mxu0 0.0
    %2366 = vmatmul.mubr.f32.gmra.mrb[0].mxu0 %v2129
    %v2367 = vpop.f32.mrb[0].mxu0
    %v2368 = vadd.f32 0.0, %v2367
    %v2369 = vpop.f32.mrb[0].mxu0
    %v2370 = vadd.f32 0.0, %v2369
    %2371 = vdwg.mxu0
    %2372 = vmatprep.subr.mxu0 %v515
    %2373 = vmatpush1.msra.mxu0 %v514
    %2374 = vmatprep.subr.mxu0 %v519
    %2375 = vmatpush1.msra.mxu0 %v518
    %2376 = vmatprep.subr.mxu0 %v523
    %2377 = vmatpush1.msra.mxu0 %v522
    %2378 = vmatprep.subr.mxu0 %v527
    %2379 = vmatpush1.msra.mxu0 %v526
    %2380 = vmatprep.subr.mxu0 %v531
    %2381 = vmatpush1.msra.mxu0 %v530
    %2382 = vmatprep.subr.mxu0 %v535
    %2383 = vmatpush1.msra.mxu0 %v534
    %2384 = vmatprep.subr.mxu0 %v539
    %2385 = vmatpush1.msra.mxu0 %v538
    %2386 = vmatprep.subr.mxu0 %v543
    %2387 = vmatpush1.msra.mxu0 %v542
    %2388 = vmatprep.subr.mxu0 %v547
    %2389 = vmatpush1.msra.mxu0 %v546
    %2390 = vmatprep.subr.mxu0 %v551
    %2391 = vmatpush1.msra.mxu0 %v550
    %2392 = vmatprep.subr.mxu0 %v555
    %2393 = vmatpush1.msra.mxu0 %v554
    %2394 = vmatprep.subr.mxu0 %v559
    %2395 = vmatpush1.msra.mxu0 %v558
    %2396 = vmatprep.subr.mxu0 %v563
    %2397 = vmatpush1.msra.mxu0 %v562
    %2398 = vmatprep.subr.mxu0 %v567
    %2399 = vmatpush1.msra.mxu0 %v566
    %2400 = vmatprep.subr.mxu0 %v571
    %2401 = vmatpush1.msra.mxu0 %v570
    %2402 = vmatprep.subr.mxu0 %v575
    %2403 = vmatpush1.msra.mxu0 %v574
    %2404 = vmatprep.subr.mxu0 0.0
    %2405 = vmatpush1.msra.mxu0 0.0
    %2406 = vmatprep.subr.mxu0 0.0
    %2407 = vmatpush1.msra.mxu0 0.0
    %2408 = vmatprep.subr.mxu0 0.0
    %2409 = vmatpush1.msra.mxu0 0.0
    %2410 = vmatprep.subr.mxu0 0.0
    %2411 = vmatpush1.msra.mxu0 0.0
    %2412 = vmatprep.subr.mxu0 0.0
    %2413 = vmatpush1.msra.mxu0 0.0
    %2414 = vmatprep.subr.mxu0 0.0
    %2415 = vmatpush1.msra.mxu0 0.0
    %2416 = vmatprep.subr.mxu0 0.0
    %2417 = vmatpush1.msra.mxu0 0.0
    %2418 = vmatprep.subr.mxu0 0.0
    %2419 = vmatpush1.msra.mxu0 0.0
    %2420 = vmatprep.subr.mxu0 0.0
    %2421 = vmatpush1.msra.mxu0 0.0
    %2422 = vmatprep.subr.mxu0 0.0
    %2423 = vmatpush1.msra.mxu0 0.0
    %2424 = vmatprep.subr.mxu0 0.0
    %2425 = vmatpush1.msra.mxu0 0.0
    %2426 = vmatprep.subr.mxu0 0.0
    %2427 = vmatpush1.msra.mxu0 0.0
    %2428 = vmatprep.subr.mxu0 0.0
    %2429 = vmatpush1.msra.mxu0 0.0
    %2430 = vmatprep.subr.mxu0 0.0
    %2431 = vmatpush1.msra.mxu0 0.0
    %2432 = vmatprep.subr.mxu0 0.0
    %2433 = vmatpush1.msra.mxu0 0.0
    %2434 = vmatprep.subr.mxu0 0.0
    %2435 = vmatpush1.msra.mxu0 0.0
    %2436 = vmatprep.mubr.f32.mxu0 0.0
    %2437 = vmatmul.mubr.f32.gmra.mrb[0].mxu0 %v2129
    %v2438 = vpop.f32.mrb[0].mxu0
    %v2439 = vadd.f32 0.0, %v2438
    %v2440 = vpop.f32.mrb[0].mxu0
    %v2441 = vadd.f32 0.0, %v2440
    %2442 = vdwg.mxu0
    %v2447 = vrot.slane %v2368, 2
    %v2448 = vrot.slane %v2370, 2
    %v2449 = vrot.slane %v2439, 2
    %v2450 = vrot.slane %v2441, 2
    %v2455 = vadd.f32 %v2297, %v2447
    %v2456 = vadd.f32 %v2298, %v2448
    %v2457 = vadd.f32 %v2299, %v2449
    %v2458 = vadd.f32 %v2300, %v2450
    %v2459 = vxor.u32 %v2293, 2147483648
    %v2460 = vmul.f32 %v2459, 1.442695
    %v2461 = vpow.pop %v2460
    %v2462 = vadd.f32 %v2461, 1.0
    %v2463 = vrcp.pop %v2462
    %v2464 = vmul.f32 1.0, %v2463
    %v2465 = vxor.u32 %v2294, 2147483648
    %v2466 = vmul.f32 %v2465, 1.442695
    %v2467 = vpow.pop %v2466
    %v2468 = vadd.f32 %v2467, 1.0
    %v2469 = vrcp.pop %v2468
    %v2470 = vmul.f32 1.0, %v2469
    %v2471 = vtanh.pop %v2295
    %v2472 = vxor.u32 %v2296, 2147483648
    %v2473 = vmul.f32 %v2472, 1.442695
    %v2474 = vpow.pop %v2473
    %v2475 = vadd.f32 %v2474, 1.0
    %v2476 = vrcp.pop %v2475
    %v2477 = vmul.f32 1.0, %v2476
    %v2479 = vrot.slane %v2100, 6
    %v2481 = vmul.f32 %v2470, %v2479
    %v2482 = vmul.f32 %v2464, %v2471
    %v2483 = vadd.f32 %v2481, %v2482
    %v2484 = vtanh.pop %v2483
    %v2485 = vmul.f32 %v2477, %v2484
    %v2486 = vxor.u32 %v2455, 2147483648
    %v2487 = vmul.f32 %v2486, 1.442695
    %v2488 = vpow.pop %v2487
    %v2489 = vadd.f32 %v2488, 1.0
    %v2490 = vrcp.pop %v2489
    %v2491 = vmul.f32 1.0, %v2490
    %v2492 = vxor.u32 %v2456, 2147483648
    %v2493 = vmul.f32 %v2492, 1.442695
    %v2494 = vpow.pop %v2493
    %v2495 = vadd.f32 %v2494, 1.0
    %v2496 = vrcp.pop %v2495
    %v2497 = vmul.f32 1.0, %v2496
    %v2498 = vtanh.pop %v2457
    %v2499 = vxor.u32 %v2458, 2147483648
    %v2500 = vmul.f32 %v2499, 1.442695
    %v2501 = vpow.pop %v2500
    %v2502 = vadd.f32 %v2501, 1.0
    %v2503 = vrcp.pop %v2502
    %v2504 = vmul.f32 1.0, %v2503
    %v2506 = vrot.slane %v2127, 2
    %v2508 = vmul.f32 %v2497, %v2506
    %v2509 = vmul.f32 %v2491, %v2498
    %v2510 = vadd.f32 %v2508, %v2509
    %v2511 = vtanh.pop %v2510
    %v2512 = vmul.f32 %v2504, %v2511
    %2513 = vst [vmem:[%s2143] sm:$0x3] %v2485
    %v2515 = vcombine.high %v2512, %v2512
    %v2517 = vunpack.c.l.s4 1983009808
    %v2518 = vunpack.c.0.s8 %v2517
    %v2519 = vlaneseq
    %v2520 = vshrl.u32 %v2519, 7
    %v2521 = vsub.s32 %v2518, %v2520
    %v2522 = vrot.slane %v2515, %v2521
    %v2523 = vcombine.high %v2522, %v2522
    %2525 = vst [vmem:[%s2141 + $0x2] sm:$0x3] %v2523
    %v2526 = vld [vmem:[#allocation2 + $0x40] sm:$0xc]
    %v2527 = vld [vmem:[#allocation2 + $0x48] sm:$0xc]
    %v2528 = vld [vmem:[#allocation2 + $0x50] sm:$0xc]
    %v2529 = vld [vmem:[#allocation2 + $0x58] sm:$0xc]
    %2530 = vmatprep.subr.mxu0 %v448
    %2531 = vmatpush1.msra.mxu0 %v447
    %2532 = vmatprep.subr.mxu0 %v452
    %2533 = vmatpush1.msra.mxu0 %v451
    %2534 = vmatprep.subr.mxu0 %v456
    %2535 = vmatpush1.msra.mxu0 %v455
    %2536 = vmatprep.subr.mxu0 %v460
    %2537 = vmatpush1.msra.mxu0 %v459
    %2538 = vmatprep.subr.mxu0 %v464
    %2539 = vmatpush1.msra.mxu0 %v463
    %2540 = vmatprep.subr.mxu0 %v468
    %2541 = vmatpush1.msra.mxu0 %v467
    %2542 = vmatprep.subr.mxu0 %v472
    %2543 = vmatpush1.msra.mxu0 %v471
    %2544 = vmatprep.subr.mxu0 %v476
    %2545 = vmatpush1.msra.mxu0 %v475
    %2546 = vmatprep.subr.mxu0 %v480
    %2547 = vmatpush1.msra.mxu0 %v479
    %2548 = vmatprep.subr.mxu0 %v484
    %2549 = vmatpush1.msra.mxu0 %v483
    %2550 = vmatprep.subr.mxu0 %v488
    %2551 = vmatpush1.msra.mxu0 %v487
    %2552 = vmatprep.subr.mxu0 %v492
    %2553 = vmatpush1.msra.mxu0 %v491
    %2554 = vmatprep.subr.mxu0 %v496
    %2555 = vmatpush1.msra.mxu0 %v495
    %2556 = vmatprep.subr.mxu0 %v500
    %2557 = vmatpush1.msra.mxu0 %v499
    %2558 = vmatprep.subr.mxu0 %v504
    %2559 = vmatpush1.msra.mxu0 %v503
    %2560 = vmatprep.subr.mxu0 %v508
    %2561 = vmatpush1.msra.mxu0 %v507
    %2562 = vmatprep.subr.mxu0 0.0
    %2563 = vmatpush1.msra.mxu0 0.0
    %2564 = vmatprep.subr.mxu0 0.0
    %2565 = vmatpush1.msra.mxu0 0.0
    %2566 = vmatprep.subr.mxu0 0.0
    %2567 = vmatpush1.msra.mxu0 0.0
    %2568 = vmatprep.subr.mxu0 0.0
    %2569 = vmatpush1.msra.mxu0 0.0
    %2570 = vmatprep.subr.mxu0 0.0
    %2571 = vmatpush1.msra.mxu0 0.0
    %2572 = vmatprep.subr.mxu0 0.0
    %2573 = vmatpush1.msra.mxu0 0.0
    %2574 = vmatprep.subr.mxu0 0.0
    %2575 = vmatpush1.msra.mxu0 0.0
    %2576 = vmatprep.subr.mxu0 0.0
    %2577 = vmatpush1.msra.mxu0 0.0
    %2578 = vmatprep.subr.mxu0 0.0
    %2579 = vmatpush1.msra.mxu0 0.0
    %2580 = vmatprep.subr.mxu0 0.0
    %2581 = vmatpush1.msra.mxu0 0.0
    %2582 = vmatprep.subr.mxu0 0.0
    %2583 = vmatpush1.msra.mxu0 0.0
    %2584 = vmatprep.subr.mxu0 0.0
    %2585 = vmatpush1.msra.mxu0 0.0
    %2586 = vmatprep.subr.mxu0 0.0
    %2587 = vmatpush1.msra.mxu0 0.0
    %2588 = vmatprep.subr.mxu0 0.0
    %2589 = vmatpush1.msra.mxu0 0.0
    %2590 = vmatprep.subr.mxu0 0.0
    %2591 = vmatpush1.msra.mxu0 0.0
    %2592 = vmatprep.subr.mxu0 0.0
    %2593 = vmatpush1.msra.mxu0 0.0
    %2594 = vmatprep.mubr.f32.mxu0 0.0
    %2595 = vmatmul.mubr.f32.gmra.mrb[0].mxu0 %v2485
    %v2596 = vpop.f32.mrb[0].mxu0
    %v2597 = vadd.f32 0.0, %v2596
    %v2598 = vpop.f32.mrb[0].mxu0
    %v2599 = vadd.f32 0.0, %v2598
    %2600 = vdwg.mxu0
    %2601 = vmatprep.subr.mxu0 %v450
    %2602 = vmatpush1.msra.mxu0 %v449
    %2603 = vmatprep.subr.mxu0 %v454
    %2604 = vmatpush1.msra.mxu0 %v453
    %2605 = vmatprep.subr.mxu0 %v458
    %2606 = vmatpush1.msra.mxu0 %v457
    %2607 = vmatprep.subr.mxu0 %v462
    %2608 = vmatpush1.msra.mxu0 %v461
    %2609 = vmatprep.subr.mxu0 %v466
    %2610 = vmatpush1.msra.mxu0 %v465
    %2611 = vmatprep.subr.mxu0 %v470
    %2612 = vmatpush1.msra.mxu0 %v469
    %2613 = vmatprep.subr.mxu0 %v474
    %2614 = vmatpush1.msra.mxu0 %v473
    %2615 = vmatprep.subr.mxu0 %v478
    %2616 = vmatpush1.msra.mxu0 %v477
    %2617 = vmatprep.subr.mxu0 %v482
    %2618 = vmatpush1.msra.mxu0 %v481
    %2619 = vmatprep.subr.mxu0 %v486
    %2620 = vmatpush1.msra.mxu0 %v485
    %2621 = vmatprep.subr.mxu0 %v490
    %2622 = vmatpush1.msra.mxu0 %v489
    %2623 = vmatprep.subr.mxu0 %v494
    %2624 = vmatpush1.msra.mxu0 %v493
    %2625 = vmatprep.subr.mxu0 %v498
    %2626 = vmatpush1.msra.mxu0 %v497
    %2627 = vmatprep.subr.mxu0 %v502
    %2628 = vmatpush1.msra.mxu0 %v501
    %2629 = vmatprep.subr.mxu0 %v506
    %2630 = vmatpush1.msra.mxu0 %v505
    %2631 = vmatprep.subr.mxu0 %v510
    %2632 = vmatpush1.msra.mxu0 %v509
    %2633 = vmatprep.subr.mxu0 0.0
    %2634 = vmatpush1.msra.mxu0 0.0
    %2635 = vmatprep.subr.mxu0 0.0
    %2636 = vmatpush1.msra.mxu0 0.0
    %2637 = vmatprep.subr.mxu0 0.0
    %2638 = vmatpush1.msra.mxu0 0.0
    %2639 = vmatprep.subr.mxu0 0.0
    %2640 = vmatpush1.msra.mxu0 0.0
    %2641 = vmatprep.subr.mxu0 0.0
    %2642 = vmatpush1.msra.mxu0 0.0
    %2643 = vmatprep.subr.mxu0 0.0
    %2644 = vmatpush1.msra.mxu0 0.0
    %2645 = vmatprep.subr.mxu0 0.0
    %2646 = vmatpush1.msra.mxu0 0.0
    %2647 = vmatprep.subr.mxu0 0.0
    %2648 = vmatpush1.msra.mxu0 0.0
    %2649 = vmatprep.subr.mxu0 0.0
    %2650 = vmatpush1.msra.mxu0 0.0
    %2651 = vmatprep.subr.mxu0 0.0
    %2652 = vmatpush1.msra.mxu0 0.0
    %2653 = vmatprep.subr.mxu0 0.0
    %2654 = vmatpush1.msra.mxu0 0.0
    %2655 = vmatprep.subr.mxu0 0.0
    %2656 = vmatpush1.msra.mxu0 0.0
    %2657 = vmatprep.subr.mxu0 0.0
    %2658 = vmatpush1.msra.mxu0 0.0
    %2659 = vmatprep.subr.mxu0 0.0
    %2660 = vmatpush1.msra.mxu0 0.0
    %2661 = vmatprep.subr.mxu0 0.0
    %2662 = vmatpush1.msra.mxu0 0.0
    %2663 = vmatprep.subr.mxu0 0.0
    %2664 = vmatpush1.msra.mxu0 0.0
    %2665 = vmatprep.mubr.f32.mxu0 0.0
    %2666 = vmatmul.mubr.f32.gmra.mrb[0].mxu0 %v2485
    %v2667 = vpop.f32.mrb[0].mxu0
    %v2668 = vadd.f32 0.0, %v2667
    %v2669 = vpop.f32.mrb[0].mxu0
    %v2670 = vadd.f32 0.0, %v2669
    %2671 = vdwg.mxu0
    %v2676 = vrot.slane %v2597, 6
    %v2677 = vrot.slane %v2599, 6
    %v2678 = vrot.slane %v2668, 6
    %v2679 = vrot.slane %v2670, 6
    %v2684 = vadd.f32 %v2526, %v2676
    %v2685 = vadd.f32 %v2527, %v2677
    %v2686 = vadd.f32 %v2528, %v2678
    %v2687 = vadd.f32 %v2529, %v2679
    %v2688 = vld [vmem:[#allocation2 + $0x20] sm:$0x30]
    %v2689 = vld [vmem:[#allocation2 + $0x28] sm:$0x30]
    %v2690 = vld [vmem:[#allocation2 + $0x30] sm:$0x30]
    %v2691 = vld [vmem:[#allocation2 + $0x38] sm:$0x30]
    %v2692 = vrot.slane %v2512, 6
    %2694 = vmatprep.subr.mxu0 %v513
    %2695 = vmatpush1.msra.mxu0 %v512
    %2696 = vmatprep.subr.mxu0 %v517
    %2697 = vmatpush1.msra.mxu0 %v516
    %2698 = vmatprep.subr.mxu0 %v521
    %2699 = vmatpush1.msra.mxu0 %v520
    %2700 = vmatprep.subr.mxu0 %v525
    %2701 = vmatpush1.msra.mxu0 %v524
    %2702 = vmatprep.subr.mxu0 %v529
    %2703 = vmatpush1.msra.mxu0 %v528
    %2704 = vmatprep.subr.mxu0 %v533
    %2705 = vmatpush1.msra.mxu0 %v532
    %2706 = vmatprep.subr.mxu0 %v537
    %2707 = vmatpush1.msra.mxu0 %v536
    %2708 = vmatprep.subr.mxu0 %v541
    %2709 = vmatpush1.msra.mxu0 %v540
    %2710 = vmatprep.subr.mxu0 %v545
    %2711 = vmatpush1.msra.mxu0 %v544
    %2712 = vmatprep.subr.mxu0 %v549
    %2713 = vmatpush1.msra.mxu0 %v548
    %2714 = vmatprep.subr.mxu0 %v553
    %2715 = vmatpush1.msra.mxu0 %v552
    %2716 = vmatprep.subr.mxu0 %v557
    %2717 = vmatpush1.msra.mxu0 %v556
    %2718 = vmatprep.subr.mxu0 %v561
    %2719 = vmatpush1.msra.mxu0 %v560
    %2720 = vmatprep.subr.mxu0 %v565
    %2721 = vmatpush1.msra.mxu0 %v564
    %2722 = vmatprep.subr.mxu0 %v569
    %2723 = vmatpush1.msra.mxu0 %v568
    %2724 = vmatprep.subr.mxu0 %v573
    %2725 = vmatpush1.msra.mxu0 %v572
    %2726 = vmatprep.subr.mxu0 0.0
    %2727 = vmatpush1.msra.mxu0 0.0
    %2728 = vmatprep.subr.mxu0 0.0
    %2729 = vmatpush1.msra.mxu0 0.0
    %2730 = vmatprep.subr.mxu0 0.0
    %2731 = vmatpush1.msra.mxu0 0.0
    %2732 = vmatprep.subr.mxu0 0.0
    %2733 = vmatpush1.msra.mxu0 0.0
    %2734 = vmatprep.subr.mxu0 0.0
    %2735 = vmatpush1.msra.mxu0 0.0
    %2736 = vmatprep.subr.mxu0 0.0
    %2737 = vmatpush1.msra.mxu0 0.0
    %2738 = vmatprep.subr.mxu0 0.0
    %2739 = vmatpush1.msra.mxu0 0.0
    %2740 = vmatprep.subr.mxu0 0.0
    %2741 = vmatpush1.msra.mxu0 0.0
    %2742 = vmatprep.subr.mxu0 0.0
    %2743 = vmatpush1.msra.mxu0 0.0
    %2744 = vmatprep.subr.mxu0 0.0
    %2745 = vmatpush1.msra.mxu0 0.0
    %2746 = vmatprep.subr.mxu0 0.0
    %2747 = vmatpush1.msra.mxu0 0.0
    %2748 = vmatprep.subr.mxu0 0.0
    %2749 = vmatpush1.msra.mxu0 0.0
    %2750 = vmatprep.subr.mxu0 0.0
    %2751 = vmatpush1.msra.mxu0 0.0
    %2752 = vmatprep.subr.mxu0 0.0
    %2753 = vmatpush1.msra.mxu0 0.0
    %2754 = vmatprep.subr.mxu0 0.0
    %2755 = vmatpush1.msra.mxu0 0.0
    %2756 = vmatprep.subr.mxu0 0.0
    %2757 = vmatpush1.msra.mxu0 0.0
    %2758 = vmatprep.mubr.f32.mxu0 0.0
    %2759 = vmatmul.mubr.f32.gmra.mrb[0].mxu0 %v2692
    %v2760 = vpop.f32.mrb[0].mxu0
    %v2761 = vadd.f32 0.0, %v2760
    %v2762 = vpop.f32.mrb[0].mxu0
    %v2763 = vadd.f32 0.0, %v2762
    %2764 = vdwg.mxu0
    %2765 = vmatprep.subr.mxu0 %v515
    %2766 = vmatpush1.msra.mxu0 %v514
    %2767 = vmatprep.subr.mxu0 %v519
    %2768 = vmatpush1.msra.mxu0 %v518
    %2769 = vmatprep.subr.mxu0 %v523
    %2770 = vmatpush1.msra.mxu0 %v522
    %2771 = vmatprep.subr.mxu0 %v527
    %2772 = vmatpush1.msra.mxu0 %v526
    %2773 = vmatprep.subr.mxu0 %v531
    %2774 = vmatpush1.msra.mxu0 %v530
    %2775 = vmatprep.subr.mxu0 %v535
    %2776 = vmatpush1.msra.mxu0 %v534
    %2777 = vmatprep.subr.mxu0 %v539
    %2778 = vmatpush1.msra.mxu0 %v538
    %2779 = vmatprep.subr.mxu0 %v543
    %2780 = vmatpush1.msra.mxu0 %v542
    %2781 = vmatprep.subr.mxu0 %v547
    %2782 = vmatpush1.msra.mxu0 %v546
    %2783 = vmatprep.subr.mxu0 %v551
    %2784 = vmatpush1.msra.mxu0 %v550
    %2785 = vmatprep.subr.mxu0 %v555
    %2786 = vmatpush1.msra.mxu0 %v554
    %2787 = vmatprep.subr.mxu0 %v559
    %2788 = vmatpush1.msra.mxu0 %v558
    %2789 = vmatprep.subr.mxu0 %v563
    %2790 = vmatpush1.msra.mxu0 %v562
    %2791 = vmatprep.subr.mxu0 %v567
    %2792 = vmatpush1.msra.mxu0 %v566
    %2793 = vmatprep.subr.mxu0 %v571
    %2794 = vmatpush1.msra.mxu0 %v570
    %2795 = vmatprep.subr.mxu0 %v575
    %2796 = vmatpush1.msra.mxu0 %v574
    %2797 = vmatprep.subr.mxu0 0.0
    %2798 = vmatpush1.msra.mxu0 0.0
    %2799 = vmatprep.subr.mxu0 0.0
    %2800 = vmatpush1.msra.mxu0 0.0
    %2801 = vmatprep.subr.mxu0 0.0
    %2802 = vmatpush1.msra.mxu0 0.0
    %2803 = vmatprep.subr.mxu0 0.0
    %2804 = vmatpush1.msra.mxu0 0.0
    %2805 = vmatprep.subr.mxu0 0.0
    %2806 = vmatpush1.msra.mxu0 0.0
    %2807 = vmatprep.subr.mxu0 0.0
    %2808 = vmatpush1.msra.mxu0 0.0
    %2809 = vmatprep.subr.mxu0 0.0
    %2810 = vmatpush1.msra.mxu0 0.0
    %2811 = vmatprep.subr.mxu0 0.0
    %2812 = vmatpush1.msra.mxu0 0.0
    %2813 = vmatprep.subr.mxu0 0.0
    %2814 = vmatpush1.msra.mxu0 0.0
    %2815 = vmatprep.subr.mxu0 0.0
    %2816 = vmatpush1.msra.mxu0 0.0
    %2817 = vmatprep.subr.mxu0 0.0
    %2818 = vmatpush1.msra.mxu0 0.0
    %2819 = vmatprep.subr.mxu0 0.0
    %2820 = vmatpush1.msra.mxu0 0.0
    %2821 = vmatprep.subr.mxu0 0.0
    %2822 = vmatpush1.msra.mxu0 0.0
    %2823 = vmatprep.subr.mxu0 0.0
    %2824 = vmatpush1.msra.mxu0 0.0
    %2825 = vmatprep.subr.mxu0 0.0
    %2826 = vmatpush1.msra.mxu0 0.0
    %2827 = vmatprep.subr.mxu0 0.0
    %2828 = vmatpush1.msra.mxu0 0.0
    %2829 = vmatprep.mubr.f32.mxu0 0.0
    %2830 = vmatmul.mubr.f32.gmra.mrb[0].mxu0 %v2692
    %v2831 = vpop.f32.mrb[0].mxu0
    %v2832 = vadd.f32 0.0, %v2831
    %v2833 = vpop.f32.mrb[0].mxu0
    %v2834 = vadd.f32 0.0, %v2833
    %2835 = vdwg.mxu0
    %v2840 = vrot.slane %v2761, 4
    %v2841 = vrot.slane %v2763, 4
    %v2842 = vrot.slane %v2832, 4
    %v2843 = vrot.slane %v2834, 4
    %v2848 = vadd.f32 %v2688, %v2840
    %v2849 = vadd.f32 %v2689, %v2841
    %v2850 = vadd.f32 %v2690, %v2842
    %v2851 = vadd.f32 %v2691, %v2843
    %v2852 = vxor.u32 %v2684, 2147483648
    %v2853 = vmul.f32 %v2852, 1.442695
    %v2854 = vpow.pop %v2853
    %v2855 = vadd.f32 %v2854, 1.0
    %v2856 = vrcp.pop %v2855
    %v2857 = vmul.f32 1.0, %v2856
    %v2858 = vxor.u32 %v2685, 2147483648
    %v2859 = vmul.f32 %v2858, 1.442695
    %v2860 = vpow.pop %v2859
    %v2861 = vadd.f32 %v2860, 1.0
    %v2862 = vrcp.pop %v2861
    %v2863 = vmul.f32 1.0, %v2862
    %v2864 = vtanh.pop %v2686
    %v2865 = vxor.u32 %v2687, 2147483648
    %v2866 = vmul.f32 %v2865, 1.442695
    %v2867 = vpow.pop %v2866
    %v2868 = vadd.f32 %v2867, 1.0
    %v2869 = vrcp.pop %v2868
    %v2870 = vmul.f32 1.0, %v2869
    %v2872 = vrot.slane %v2483, 6
    %v2874 = vmul.f32 %v2863, %v2872
    %v2875 = vmul.f32 %v2857, %v2864
    %v2876 = vadd.f32 %v2874, %v2875
    %v2877 = vtanh.pop %v2876
    %v2878 = vmul.f32 %v2870, %v2877
    %v2879 = vxor.u32 %v2848, 2147483648
    %v2880 = vmul.f32 %v2879, 1.442695
    %v2881 = vpow.pop %v2880
    %v2882 = vadd.f32 %v2881, 1.0
    %v2883 = vrcp.pop %v2882
    %v2884 = vmul.f32 1.0, %v2883
    %v2885 = vxor.u32 %v2849, 2147483648
    %v2886 = vmul.f32 %v2885, 1.442695
    %v2887 = vpow.pop %v2886
    %v2888 = vadd.f32 %v2887, 1.0
    %v2889 = vrcp.pop %v2888
    %v2890 = vmul.f32 1.0, %v2889
    %v2891 = vtanh.pop %v2850
    %v2892 = vxor.u32 %v2851, 2147483648
    %v2893 = vmul.f32 %v2892, 1.442695
    %v2894 = vpow.pop %v2893
    %v2895 = vadd.f32 %v2894, 1.0
    %v2896 = vrcp.pop %v2895
    %v2897 = vmul.f32 1.0, %v2896
    %v2899 = vrot.slane %v2510, 2
    %v2901 = vmul.f32 %v2890, %v2899
    %v2902 = vmul.f32 %v2884, %v2891
    %v2903 = vadd.f32 %v2901, %v2902
    %v2904 = vtanh.pop %v2903
    %v2905 = vmul.f32 %v2897, %v2904
    %v2908 = vunpack.c.l.s4 1983009808
    %v2909 = vunpack.c.0.s8 %v2908
    %v2910 = vlaneseq
    %v2911 = vshrl.u32 %v2910, 7
    %v2912 = vsub.s32 %v2909, %v2911
    %v2913 = vrot.slane %v2878, %v2912
    %v2914 = vcombine.high %v2913, %v2913
    %2916 = vst [vmem:[%s1758] sm:$0x3] %v2914
    %v2918 = vcombine.high %v2905, %v2905
    %v2920 = vunpack.c.l.s4 1983009808
    %v2921 = vunpack.c.0.s8 %v2920
    %v2922 = vlaneseq
    %v2923 = vshrl.u32 %v2922, 7
    %v2924 = vsub.s32 %v2921, %v2923
    %v2925 = vrot.slane %v2918, %v2924
    %2927 = vst [vmem:[%s1746 + $0x2] sm:$0x3] %v2925
    %v2928 = vld [vmem:[#allocation2 + $0x40] sm:$0x30]
    %v2929 = vld [vmem:[#allocation2 + $0x48] sm:$0x30]
    %v2930 = vld [vmem:[#allocation2 + $0x50] sm:$0x30]
    %v2931 = vld [vmem:[#allocation2 + $0x58] sm:$0x30]
    %v2932 = vrot.slane %v2878, 2
    %2934 = vmatprep.subr.mxu0 %v448
    %2935 = vmatpush1.msra.mxu0 %v447
    %2936 = vmatprep.subr.mxu0 %v452
    %2937 = vmatpush1.msra.mxu0 %v451
    %2938 = vmatprep.subr.mxu0 %v456
    %2939 = vmatpush1.msra.mxu0 %v455
    %2940 = vmatprep.subr.mxu0 %v460
    %2941 = vmatpush1.msra.mxu0 %v459
    %2942 = vmatprep.subr.mxu0 %v464
    %2943 = vmatpush1.msra.mxu0 %v463
    %2944 = vmatprep.subr.mxu0 %v468
    %2945 = vmatpush1.msra.mxu0 %v467
    %2946 = vmatprep.subr.mxu0 %v472
    %2947 = vmatpush1.msra.mxu0 %v471
    %2948 = vmatprep.subr.mxu0 %v476
    %2949 = vmatpush1.msra.mxu0 %v475
    %2950 = vmatprep.subr.mxu0 %v480
    %2951 = vmatpush1.msra.mxu0 %v479
    %2952 = vmatprep.subr.mxu0 %v484
    %2953 = vmatpush1.msra.mxu0 %v483
    %2954 = vmatprep.subr.mxu0 %v488
    %2955 = vmatpush1.msra.mxu0 %v487
    %2956 = vmatprep.subr.mxu0 %v492
    %2957 = vmatpush1.msra.mxu0 %v491
    %2958 = vmatprep.subr.mxu0 %v496
    %2959 = vmatpush1.msra.mxu0 %v495
    %2960 = vmatprep.subr.mxu0 %v500
    %2961 = vmatpush1.msra.mxu0 %v499
    %2962 = vmatprep.subr.mxu0 %v504
    %2963 = vmatpush1.msra.mxu0 %v503
    %2964 = vmatprep.subr.mxu0 %v508
    %2965 = vmatpush1.msra.mxu0 %v507
    %2966 = vmatprep.subr.mxu0 0.0
    %2967 = vmatpush1.msra.mxu0 0.0
    %2968 = vmatprep.subr.mxu0 0.0
    %2969 = vmatpush1.msra.mxu0 0.0
    %2970 = vmatprep.subr.mxu0 0.0
    %2971 = vmatpush1.msra.mxu0 0.0
    %2972 = vmatprep.subr.mxu0 0.0
    %2973 = vmatpush1.msra.mxu0 0.0
    %2974 = vmatprep.subr.mxu0 0.0
    %2975 = vmatpush1.msra.mxu0 0.0
    %2976 = vmatprep.subr.mxu0 0.0
    %2977 = vmatpush1.msra.mxu0 0.0
    %2978 = vmatprep.subr.mxu0 0.0
    %2979 = vmatpush1.msra.mxu0 0.0
    %2980 = vmatprep.subr.mxu0 0.0
    %2981 = vmatpush1.msra.mxu0 0.0
    %2982 = vmatprep.subr.mxu0 0.0
    %2983 = vmatpush1.msra.mxu0 0.0
    %2984 = vmatprep.subr.mxu0 0.0
    %2985 = vmatpush1.msra.mxu0 0.0
    %2986 = vmatprep.subr.mxu0 0.0
    %2987 = vmatpush1.msra.mxu0 0.0
    %2988 = vmatprep.subr.mxu0 0.0
    %2989 = vmatpush1.msra.mxu0 0.0
    %2990 = vmatprep.subr.mxu0 0.0
    %2991 = vmatpush1.msra.mxu0 0.0
    %2992 = vmatprep.subr.mxu0 0.0
    %2993 = vmatpush1.msra.mxu0 0.0
    %2994 = vmatprep.subr.mxu0 0.0
    %2995 = vmatpush1.msra.mxu0 0.0
    %2996 = vmatprep.subr.mxu0 0.0
    %2997 = vmatpush1.msra.mxu0 0.0
    %2998 = vmatprep.mubr.f32.mxu0 0.0
    %2999 = vmatmul.mubr.f32.gmra.mrb[0].mxu0 %v2932
    %v3000 = vpop.f32.mrb[0].mxu0
    %v3001 = vadd.f32 0.0, %v3000
    %v3002 = vpop.f32.mrb[0].mxu0
    %v3003 = vadd.f32 0.0, %v3002
    %3004 = vdwg.mxu0
    %3005 = vmatprep.subr.mxu0 %v450
    %3006 = vmatpush1.msra.mxu0 %v449
    %3007 = vmatprep.subr.mxu0 %v454
    %3008 = vmatpush1.msra.mxu0 %v453
    %3009 = vmatprep.subr.mxu0 %v458
    %3010 = vmatpush1.msra.mxu0 %v457
    %3011 = vmatprep.subr.mxu0 %v462
    %3012 = vmatpush1.msra.mxu0 %v461
    %3013 = vmatprep.subr.mxu0 %v466
    %3014 = vmatpush1.msra.mxu0 %v465
    %3015 = vmatprep.subr.mxu0 %v470
    %3016 = vmatpush1.msra.mxu0 %v469
    %3017 = vmatprep.subr.mxu0 %v474
    %3018 = vmatpush1.msra.mxu0 %v473
    %3019 = vmatprep.subr.mxu0 %v478
    %3020 = vmatpush1.msra.mxu0 %v477
    %3021 = vmatprep.subr.mxu0 %v482
    %3022 = vmatpush1.msra.mxu0 %v481
    %3023 = vmatprep.subr.mxu0 %v486
    %3024 = vmatpush1.msra.mxu0 %v485
    %3025 = vmatprep.subr.mxu0 %v490
    %3026 = vmatpush1.msra.mxu0 %v489
    %3027 = vmatprep.subr.mxu0 %v494
    %3028 = vmatpush1.msra.mxu0 %v493
    %3029 = vmatprep.subr.mxu0 %v498
    %3030 = vmatpush1.msra.mxu0 %v497
    %3031 = vmatprep.subr.mxu0 %v502
    %3032 = vmatpush1.msra.mxu0 %v501
    %3033 = vmatprep.subr.mxu0 %v506
    %3034 = vmatpush1.msra.mxu0 %v505
    %3035 = vmatprep.subr.mxu0 %v510
    %3036 = vmatpush1.msra.mxu0 %v509
    %3037 = vmatprep.subr.mxu0 0.0
    %3038 = vmatpush1.msra.mxu0 0.0
    %3039 = vmatprep.subr.mxu0 0.0
    %3040 = vmatpush1.msra.mxu0 0.0
    %3041 = vmatprep.subr.mxu0 0.0
    %3042 = vmatpush1.msra.mxu0 0.0
    %3043 = vmatprep.subr.mxu0 0.0
    %3044 = vmatpush1.msra.mxu0 0.0
    %3045 = vmatprep.subr.mxu0 0.0
    %3046 = vmatpush1.msra.mxu0 0.0
    %3047 = vmatprep.subr.mxu0 0.0
    %3048 = vmatpush1.msra.mxu0 0.0
    %3049 = vmatprep.subr.mxu0 0.0
    %3050 = vmatpush1.msra.mxu0 0.0
    %3051 = vmatprep.subr.mxu0 0.0
    %3052 = vmatpush1.msra.mxu0 0.0
    %3053 = vmatprep.subr.mxu0 0.0
    %3054 = vmatpush1.msra.mxu0 0.0
    %3055 = vmatprep.subr.mxu0 0.0
    %3056 = vmatpush1.msra.mxu0 0.0
    %3057 = vmatprep.subr.mxu0 0.0
    %3058 = vmatpush1.msra.mxu0 0.0
    %3059 = vmatprep.subr.mxu0 0.0
    %3060 = vmatpush1.msra.mxu0 0.0
    %3061 = vmatprep.subr.mxu0 0.0
    %3062 = vmatpush1.msra.mxu0 0.0
    %3063 = vmatprep.subr.mxu0 0.0
    %3064 = vmatpush1.msra.mxu0 0.0
    %3065 = vmatprep.subr.mxu0 0.0
    %3066 = vmatpush1.msra.mxu0 0.0
    %3067 = vmatprep.subr.mxu0 0.0
    %3068 = vmatpush1.msra.mxu0 0.0
    %3069 = vmatprep.mubr.f32.mxu0 0.0
    %3070 = vmatmul.mubr.f32.gmra.mrb[0].mxu0 %v2932
    %v3071 = vpop.f32.mrb[0].mxu0
    %v3072 = vadd.f32 0.0, %v3071
    %v3073 = vpop.f32.mrb[0].mxu0
    %v3074 = vadd.f32 0.0, %v3073
    %3075 = vdwg.mxu0
    %v3080 = vrot.slane %v3001, 4
    %v3081 = vrot.slane %v3003, 4
    %v3082 = vrot.slane %v3072, 4
    %v3083 = vrot.slane %v3074, 4
    %v3088 = vadd.f32 %v2928, %v3080
    %v3089 = vadd.f32 %v2929, %v3081
    %v3090 = vadd.f32 %v2930, %v3082
    %v3091 = vadd.f32 %v2931, %v3083
    %v3092 = vld [vmem:[#allocation2 + $0x20] sm:$0xc]
    %v3093 = vld [vmem:[#allocation2 + $0x28] sm:$0xc]
    %v3094 = vld [vmem:[#allocation2 + $0x30] sm:$0xc]
    %v3095 = vld [vmem:[#allocation2 + $0x38] sm:$0xc]
    %v3096 = vrot.slane %v2905, 4
    %3098 = vmatprep.subr.mxu0 %v513
    %3099 = vmatpush1.msra.mxu0 %v512
    %3100 = vmatprep.subr.mxu0 %v517
    %3101 = vmatpush1.msra.mxu0 %v516
    %3102 = vmatprep.subr.mxu0 %v521
    %3103 = vmatpush1.msra.mxu0 %v520
    %3104 = vmatprep.subr.mxu0 %v525
    %3105 = vmatpush1.msra.mxu0 %v524
    %3106 = vmatprep.subr.mxu0 %v529
    %3107 = vmatpush1.msra.mxu0 %v528
    %3108 = vmatprep.subr.mxu0 %v533
    %3109 = vmatpush1.msra.mxu0 %v532
    %3110 = vmatprep.subr.mxu0 %v537
    %3111 = vmatpush1.msra.mxu0 %v536
    %3112 = vmatprep.subr.mxu0 %v541
    %3113 = vmatpush1.msra.mxu0 %v540
    %3114 = vmatprep.subr.mxu0 %v545
    %3115 = vmatpush1.msra.mxu0 %v544
    %3116 = vmatprep.subr.mxu0 %v549
    %3117 = vmatpush1.msra.mxu0 %v548
    %3118 = vmatprep.subr.mxu0 %v553
    %3119 = vmatpush1.msra.mxu0 %v552
    %3120 = vmatprep.subr.mxu0 %v557
    %3121 = vmatpush1.msra.mxu0 %v556
    %3122 = vmatprep.subr.mxu0 %v561
    %3123 = vmatpush1.msra.mxu0 %v560
    %3124 = vmatprep.subr.mxu0 %v565
    %3125 = vmatpush1.msra.mxu0 %v564
    %3126 = vmatprep.subr.mxu0 %v569
    %3127 = vmatpush1.msra.mxu0 %v568
    %3128 = vmatprep.subr.mxu0 %v573
    %3129 = vmatpush1.msra.mxu0 %v572
    %3130 = vmatprep.subr.mxu0 0.0
    %3131 = vmatpush1.msra.mxu0 0.0
    %3132 = vmatprep.subr.mxu0 0.0
    %3133 = vmatpush1.msra.mxu0 0.0
    %3134 = vmatprep.subr.mxu0 0.0
    %3135 = vmatpush1.msra.mxu0 0.0
    %3136 = vmatprep.subr.mxu0 0.0
    %3137 = vmatpush1.msra.mxu0 0.0
    %3138 = vmatprep.subr.mxu0 0.0
    %3139 = vmatpush1.msra.mxu0 0.0
    %3140 = vmatprep.subr.mxu0 0.0
    %3141 = vmatpush1.msra.mxu0 0.0
    %3142 = vmatprep.subr.mxu0 0.0
    %3143 = vmatpush1.msra.mxu0 0.0
    %3144 = vmatprep.subr.mxu0 0.0
    %3145 = vmatpush1.msra.mxu0 0.0
    %3146 = vmatprep.subr.mxu0 0.0
    %3147 = vmatpush1.msra.mxu0 0.0
    %3148 = vmatprep.subr.mxu0 0.0
    %3149 = vmatpush1.msra.mxu0 0.0
    %3150 = vmatprep.subr.mxu0 0.0
    %3151 = vmatpush1.msra.mxu0 0.0
    %3152 = vmatprep.subr.mxu0 0.0
    %3153 = vmatpush1.msra.mxu0 0.0
    %3154 = vmatprep.subr.mxu0 0.0
    %3155 = vmatpush1.msra.mxu0 0.0
    %3156 = vmatprep.subr.mxu0 0.0
    %3157 = vmatpush1.msra.mxu0 0.0
    %3158 = vmatprep.subr.mxu0 0.0
    %3159 = vmatpush1.msra.mxu0 0.0
    %3160 = vmatprep.subr.mxu0 0.0
    %3161 = vmatpush1.msra.mxu0 0.0
    %3162 = vmatprep.mubr.f32.mxu0 0.0
    %3163 = vmatmul.mubr.f32.gmra.mrb[0].mxu0 %v3096
    %v3164 = vpop.f32.mrb[0].mxu0
    %v3165 = vadd.f32 0.0, %v3164
    %v3166 = vpop.f32.mrb[0].mxu0
    %v3167 = vadd.f32 0.0, %v3166
    %3168 = vdwg.mxu0
    %3169 = vmatprep.subr.mxu0 %v515
    %3170 = vmatpush1.msra.mxu0 %v514
    %3171 = vmatprep.subr.mxu0 %v519
    %3172 = vmatpush1.msra.mxu0 %v518
    %3173 = vmatprep.subr.mxu0 %v523
    %3174 = vmatpush1.msra.mxu0 %v522
    %3175 = vmatprep.subr.mxu0 %v527
    %3176 = vmatpush1.msra.mxu0 %v526
    %3177 = vmatprep.subr.mxu0 %v531
    %3178 = vmatpush1.msra.mxu0 %v530
    %3179 = vmatprep.subr.mxu0 %v535
    %3180 = vmatpush1.msra.mxu0 %v534
    %3181 = vmatprep.subr.mxu0 %v539
    %3182 = vmatpush1.msra.mxu0 %v538
    %3183 = vmatprep.subr.mxu0 %v543
    %3184 = vmatpush1.msra.mxu0 %v542
    %3185 = vmatprep.subr.mxu0 %v547
    %3186 = vmatpush1.msra.mxu0 %v546
    %3187 = vmatprep.subr.mxu0 %v551
    %3188 = vmatpush1.msra.mxu0 %v550
    %3189 = vmatprep.subr.mxu0 %v555
    %3190 = vmatpush1.msra.mxu0 %v554
    %3191 = vmatprep.subr.mxu0 %v559
    %3192 = vmatpush1.msra.mxu0 %v558
    %3193 = vmatprep.subr.mxu0 %v563
    %3194 = vmatpush1.msra.mxu0 %v562
    %3195 = vmatprep.subr.mxu0 %v567
    %3196 = vmatpush1.msra.mxu0 %v566
    %3197 = vmatprep.subr.mxu0 %v571
    %3198 = vmatpush1.msra.mxu0 %v570
    %3199 = vmatprep.subr.mxu0 %v575
    %3200 = vmatpush1.msra.mxu0 %v574
    %3201 = vmatprep.subr.mxu0 0.0
    %3202 = vmatpush1.msra.mxu0 0.0
    %3203 = vmatprep.subr.mxu0 0.0
    %3204 = vmatpush1.msra.mxu0 0.0
    %3205 = vmatprep.subr.mxu0 0.0
    %3206 = vmatpush1.msra.mxu0 0.0
    %3207 = vmatprep.subr.mxu0 0.0
    %3208 = vmatpush1.msra.mxu0 0.0
    %3209 = vmatprep.subr.mxu0 0.0
    %3210 = vmatpush1.msra.mxu0 0.0
    %3211 = vmatprep.subr.mxu0 0.0
    %3212 = vmatpush1.msra.mxu0 0.0
    %3213 = vmatprep.subr.mxu0 0.0
    %3214 = vmatpush1.msra.mxu0 0.0
    %3215 = vmatprep.subr.mxu0 0.0
    %3216 = vmatpush1.msra.mxu0 0.0
    %3217 = vmatprep.subr.mxu0 0.0
    %3218 = vmatpush1.msra.mxu0 0.0
    %3219 = vmatprep.subr.mxu0 0.0
    %3220 = vmatpush1.msra.mxu0 0.0
    %3221 = vmatprep.subr.mxu0 0.0
    %3222 = vmatpush1.msra.mxu0 0.0
    %3223 = vmatprep.subr.mxu0 0.0
    %3224 = vmatpush1.msra.mxu0 0.0
    %3225 = vmatprep.subr.mxu0 0.0
    %3226 = vmatpush1.msra.mxu0 0.0
    %3227 = vmatprep.subr.mxu0 0.0
    %3228 = vmatpush1.msra.mxu0 0.0
    %3229 = vmatprep.subr.mxu0 0.0
    %3230 = vmatpush1.msra.mxu0 0.0
    %3231 = vmatprep.subr.mxu0 0.0
    %3232 = vmatpush1.msra.mxu0 0.0
    %3233 = vmatprep.mubr.f32.mxu0 0.0
    %3234 = vmatmul.mubr.f32.gmra.mrb[0].mxu0 %v3096
    %v3235 = vpop.f32.mrb[0].mxu0
    %v3236 = vadd.f32 0.0, %v3235
    %v3237 = vpop.f32.mrb[0].mxu0
    %v3238 = vadd.f32 0.0, %v3237
    %3239 = vdwg.mxu0
    %v3244 = vrot.slane %v3165, 6
    %v3245 = vrot.slane %v3167, 6
    %v3246 = vrot.slane %v3236, 6
    %v3247 = vrot.slane %v3238, 6
    %v3252 = vadd.f32 %v3092, %v3244
    %v3253 = vadd.f32 %v3093, %v3245
    %v3254 = vadd.f32 %v3094, %v3246
    %v3255 = vadd.f32 %v3095, %v3247
    %v3256 = vxor.u32 %v3088, 2147483648
    %v3257 = vmul.f32 %v3256, 1.442695
    %v3258 = vpow.pop %v3257
    %v3259 = vadd.f32 %v3258, 1.0
    %v3260 = vrcp.pop %v3259
    %v3261 = vmul.f32 1.0, %v3260
    %v3262 = vxor.u32 %v3089, 2147483648
    %v3263 = vmul.f32 %v3262, 1.442695
    %v3264 = vpow.pop %v3263
    %v3265 = vadd.f32 %v3264, 1.0
    %v3266 = vrcp.pop %v3265
    %v3267 = vmul.f32 1.0, %v3266
    %v3268 = vtanh.pop %v3090
    %v3269 = vxor.u32 %v3091, 2147483648
    %v3270 = vmul.f32 %v3269, 1.442695
    %v3271 = vpow.pop %v3270
    %v3272 = vadd.f32 %v3271, 1.0
    %v3273 = vrcp.pop %v3272
    %v3274 = vmul.f32 1.0, %v3273
    %v3276 = vrot.slane %v2876, 6
    %v3278 = vmul.f32 %v3267, %v3276
    %v3279 = vmul.f32 %v3261, %v3268
    %v3280 = vadd.f32 %v3278, %v3279
    %v3281 = vtanh.pop %v3280
    %v3282 = vmul.f32 %v3274, %v3281
    %v3283 = vxor.u32 %v3252, 2147483648
    %v3284 = vmul.f32 %v3283, 1.442695
    %v3285 = vpow.pop %v3284
    %v3286 = vadd.f32 %v3285, 1.0
    %v3287 = vrcp.pop %v3286
    %v3288 = vmul.f32 1.0, %v3287
    %v3289 = vxor.u32 %v3253, 2147483648
    %v3290 = vmul.f32 %v3289, 1.442695
    %v3291 = vpow.pop %v3290
    %v3292 = vadd.f32 %v3291, 1.0
    %v3293 = vrcp.pop %v3292
    %v3294 = vmul.f32 1.0, %v3293
    %v3295 = vtanh.pop %v3254
    %v3296 = vxor.u32 %v3255, 2147483648
    %v3297 = vmul.f32 %v3296, 1.442695
    %v3298 = vpow.pop %v3297
    %v3299 = vadd.f32 %v3298, 1.0
    %v3300 = vrcp.pop %v3299
    %v3301 = vmul.f32 1.0, %v3300
    %v3303 = vrot.slane %v2903, 2
    %v3305 = vmul.f32 %v3294, %v3303
    %v3306 = vmul.f32 %v3288, %v3295
    %v3307 = vadd.f32 %v3305, %v3306
    %v3308 = vtanh.pop %v3307
    %v3309 = vmul.f32 %v3301, %v3308
    %v3311 = vcombine.high %v3282, %v3282
    %v3313 = vunpack.c.l.s4 1983009808
    %v3314 = vunpack.c.0.s8 %v3313
    %v3315 = vlaneseq
    %v3316 = vshrl.u32 %v3315, 7
    %v3317 = vsub.s32 %v3314, %v3316
    %v3318 = vrot.slane %v3311, %v3317
    %3320 = vst [vmem:[%s1352] sm:$0x3] %v3318
    %v3323 = vunpack.c.l.s4 1983009808
    %v3324 = vunpack.c.0.s8 %v3323
    %v3325 = vlaneseq
    %v3326 = vshrl.u32 %v3325, 7
    %v3327 = vsub.s32 %v3324, %v3326
    %v3328 = vrot.slane %v3309, %v3327
    %v3329 = vcombine.high %v3328, %v3328
    %3331 = vst [vmem:[%s1340 + $0x2] sm:$0x3] %v3329
    %v3332 = vld [vmem:[#allocation2 + $0x40] sm:$0xc0]
    %v3333 = vld [vmem:[#allocation2 + $0x48] sm:$0xc0]
    %v3334 = vld [vmem:[#allocation2 + $0x50] sm:$0xc0]
    %v3335 = vld [vmem:[#allocation2 + $0x58] sm:$0xc0]
    %v3336 = vrot.slane %v3282, 4
    %3338 = vmatprep.subr.mxu0 %v448
    %3339 = vmatpush1.msra.mxu0 %v447
    %3340 = vmatprep.subr.mxu0 %v452
    %3341 = vmatpush1.msra.mxu0 %v451
    %3342 = vmatprep.subr.mxu0 %v456
    %3343 = vmatpush1.msra.mxu0 %v455
    %3344 = vmatprep.subr.mxu0 %v460
    %3345 = vmatpush1.msra.mxu0 %v459
    %3346 = vmatprep.subr.mxu0 %v464
    %3347 = vmatpush1.msra.mxu0 %v463
    %3348 = vmatprep.subr.mxu0 %v468
    %3349 = vmatpush1.msra.mxu0 %v467
    %3350 = vmatprep.subr.mxu0 %v472
    %3351 = vmatpush1.msra.mxu0 %v471
    %3352 = vmatprep.subr.mxu0 %v476
    %3353 = vmatpush1.msra.mxu0 %v475
    %3354 = vmatprep.subr.mxu0 %v480
    %3355 = vmatpush1.msra.mxu0 %v479
    %3356 = vmatprep.subr.mxu0 %v484
    %3357 = vmatpush1.msra.mxu0 %v483
    %3358 = vmatprep.subr.mxu0 %v488
    %3359 = vmatpush1.msra.mxu0 %v487
    %3360 = vmatprep.subr.mxu0 %v492
    %3361 = vmatpush1.msra.mxu0 %v491
    %3362 = vmatprep.subr.mxu0 %v496
    %3363 = vmatpush1.msra.mxu0 %v495
    %3364 = vmatprep.subr.mxu0 %v500
    %3365 = vmatpush1.msra.mxu0 %v499
    %3366 = vmatprep.subr.mxu0 %v504
    %3367 = vmatpush1.msra.mxu0 %v503
    %3368 = vmatprep.subr.mxu0 %v508
    %3369 = vmatpush1.msra.mxu0 %v507
    %3370 = vmatprep.subr.mxu0 0.0
    %3371 = vmatpush1.msra.mxu0 0.0
    %3372 = vmatprep.subr.mxu0 0.0
    %3373 = vmatpush1.msra.mxu0 0.0
    %3374 = vmatprep.subr.mxu0 0.0
    %3375 = vmatpush1.msra.mxu0 0.0
    %3376 = vmatprep.subr.mxu0 0.0
    %3377 = vmatpush1.msra.mxu0 0.0
    %3378 = vmatprep.subr.mxu0 0.0
    %3379 = vmatpush1.msra.mxu0 0.0
    %3380 = vmatprep.subr.mxu0 0.0
    %3381 = vmatpush1.msra.mxu0 0.0
    %3382 = vmatprep.subr.mxu0 0.0
    %3383 = vmatpush1.msra.mxu0 0.0
    %3384 = vmatprep.subr.mxu0 0.0
    %3385 = vmatpush1.msra.mxu0 0.0
    %3386 = vmatprep.subr.mxu0 0.0
    %3387 = vmatpush1.msra.mxu0 0.0
    %3388 = vmatprep.subr.mxu0 0.0
    %3389 = vmatpush1.msra.mxu0 0.0
    %3390 = vmatprep.subr.mxu0 0.0
    %3391 = vmatpush1.msra.mxu0 0.0
    %3392 = vmatprep.subr.mxu0 0.0
    %3393 = vmatpush1.msra.mxu0 0.0
    %3394 = vmatprep.subr.mxu0 0.0
    %3395 = vmatpush1.msra.mxu0 0.0
    %3396 = vmatprep.subr.mxu0 0.0
    %3397 = vmatpush1.msra.mxu0 0.0
    %3398 = vmatprep.subr.mxu0 0.0
    %3399 = vmatpush1.msra.mxu0 0.0
    %3400 = vmatprep.subr.mxu0 0.0
    %3401 = vmatpush1.msra.mxu0 0.0
    %3402 = vmatprep.mubr.f32.mxu0 0.0
    %3403 = vmatmul.mubr.f32.gmra.mrb[0].mxu0 %v3336
    %v3404 = vpop.f32.mrb[0].mxu0
    %v3405 = vadd.f32 0.0, %v3404
    %v3406 = vpop.f32.mrb[0].mxu0
    %v3407 = vadd.f32 0.0, %v3406
    %3408 = vdwg.mxu0
    %3409 = vmatprep.subr.mxu0 %v450
    %3410 = vmatpush1.msra.mxu0 %v449
    %3411 = vmatprep.subr.mxu0 %v454
    %3412 = vmatpush1.msra.mxu0 %v453
    %3413 = vmatprep.subr.mxu0 %v458
    %3414 = vmatpush1.msra.mxu0 %v457
    %3415 = vmatprep.subr.mxu0 %v462
    %3416 = vmatpush1.msra.mxu0 %v461
    %3417 = vmatprep.subr.mxu0 %v466
    %3418 = vmatpush1.msra.mxu0 %v465
    %3419 = vmatprep.subr.mxu0 %v470
    %3420 = vmatpush1.msra.mxu0 %v469
    %3421 = vmatprep.subr.mxu0 %v474
    %3422 = vmatpush1.msra.mxu0 %v473
    %3423 = vmatprep.subr.mxu0 %v478
    %3424 = vmatpush1.msra.mxu0 %v477
    %3425 = vmatprep.subr.mxu0 %v482
    %3426 = vmatpush1.msra.mxu0 %v481
    %3427 = vmatprep.subr.mxu0 %v486
    %3428 = vmatpush1.msra.mxu0 %v485
    %3429 = vmatprep.subr.mxu0 %v490
    %3430 = vmatpush1.msra.mxu0 %v489
    %3431 = vmatprep.subr.mxu0 %v494
    %3432 = vmatpush1.msra.mxu0 %v493
    %3433 = vmatprep.subr.mxu0 %v498
    %3434 = vmatpush1.msra.mxu0 %v497
    %3435 = vmatprep.subr.mxu0 %v502
    %3436 = vmatpush1.msra.mxu0 %v501
    %3437 = vmatprep.subr.mxu0 %v506
    %3438 = vmatpush1.msra.mxu0 %v505
    %3439 = vmatprep.subr.mxu0 %v510
    %3440 = vmatpush1.msra.mxu0 %v509
    %3441 = vmatprep.subr.mxu0 0.0
    %3442 = vmatpush1.msra.mxu0 0.0
    %3443 = vmatprep.subr.mxu0 0.0
    %3444 = vmatpush1.msra.mxu0 0.0
    %3445 = vmatprep.subr.mxu0 0.0
    %3446 = vmatpush1.msra.mxu0 0.0
    %3447 = vmatprep.subr.mxu0 0.0
    %3448 = vmatpush1.msra.mxu0 0.0
    %3449 = vmatprep.subr.mxu0 0.0
    %3450 = vmatpush1.msra.mxu0 0.0
    %3451 = vmatprep.subr.mxu0 0.0
    %3452 = vmatpush1.msra.mxu0 0.0
    %3453 = vmatprep.subr.mxu0 0.0
    %3454 = vmatpush1.msra.mxu0 0.0
    %3455 = vmatprep.subr.mxu0 0.0
    %3456 = vmatpush1.msra.mxu0 0.0
    %3457 = vmatprep.subr.mxu0 0.0
    %3458 = vmatpush1.msra.mxu0 0.0
    %3459 = vmatprep.subr.mxu0 0.0
    %3460 = vmatpush1.msra.mxu0 0.0
    %3461 = vmatprep.subr.mxu0 0.0
    %3462 = vmatpush1.msra.mxu0 0.0
    %3463 = vmatprep.subr.mxu0 0.0
    %3464 = vmatpush1.msra.mxu0 0.0
    %3465 = vmatprep.subr.mxu0 0.0
    %3466 = vmatpush1.msra.mxu0 0.0
    %3467 = vmatprep.subr.mxu0 0.0
    %3468 = vmatpush1.msra.mxu0 0.0
    %3469 = vmatprep.subr.mxu0 0.0
    %3470 = vmatpush1.msra.mxu0 0.0
    %3471 = vmatprep.subr.mxu0 0.0
    %3472 = vmatpush1.msra.mxu0 0.0
    %3473 = vmatprep.mubr.f32.mxu0 0.0
    %3474 = vmatmul.mubr.f32.gmra.mrb[0].mxu0 %v3336
    %v3475 = vpop.f32.mrb[0].mxu0
    %v3476 = vadd.f32 0.0, %v3475
    %v3477 = vpop.f32.mrb[0].mxu0
    %v3478 = vadd.f32 0.0, %v3477
    %3479 = vdwg.mxu0
    %v3484 = vrot.slane %v3405, 2
    %v3485 = vrot.slane %v3407, 2
    %v3486 = vrot.slane %v3476, 2
    %v3487 = vrot.slane %v3478, 2
    %v3492 = vadd.f32 %v3332, %v3484
    %v3493 = vadd.f32 %v3333, %v3485
    %v3494 = vadd.f32 %v3334, %v3486
    %v3495 = vadd.f32 %v3335, %v3487
    %v3496 = vld [vmem:[#allocation2 + $0x20] sm:$0x3]
    %v3497 = vld [vmem:[#allocation2 + $0x28] sm:$0x3]
    %v3498 = vld [vmem:[#allocation2 + $0x30] sm:$0x3]
    %v3499 = vld [vmem:[#allocation2 + $0x38] sm:$0x3]
    %v3500 = vrot.slane %v3309, 2
    %3502 = vmatprep.subr.mxu0 %v513
    %3503 = vmatpush1.msra.mxu0 %v512
    %3504 = vmatprep.subr.mxu0 %v517
    %3505 = vmatpush1.msra.mxu0 %v516
    %3506 = vmatprep.subr.mxu0 %v521
    %3507 = vmatpush1.msra.mxu0 %v520
    %3508 = vmatprep.subr.mxu0 %v525
    %3509 = vmatpush1.msra.mxu0 %v524
    %3510 = vmatprep.subr.mxu0 %v529
    %3511 = vmatpush1.msra.mxu0 %v528
    %3512 = vmatprep.subr.mxu0 %v533
    %3513 = vmatpush1.msra.mxu0 %v532
    %3514 = vmatprep.subr.mxu0 %v537
    %3515 = vmatpush1.msra.mxu0 %v536
    %3516 = vmatprep.subr.mxu0 %v541
    %3517 = vmatpush1.msra.mxu0 %v540
    %3518 = vmatprep.subr.mxu0 %v545
    %3519 = vmatpush1.msra.mxu0 %v544
    %3520 = vmatprep.subr.mxu0 %v549
    %3521 = vmatpush1.msra.mxu0 %v548
    %3522 = vmatprep.subr.mxu0 %v553
    %3523 = vmatpush1.msra.mxu0 %v552
    %3524 = vmatprep.subr.mxu0 %v557
    %3525 = vmatpush1.msra.mxu0 %v556
    %3526 = vmatprep.subr.mxu0 %v561
    %3527 = vmatpush1.msra.mxu0 %v560
    %3528 = vmatprep.subr.mxu0 %v565
    %3529 = vmatpush1.msra.mxu0 %v564
    %3530 = vmatprep.subr.mxu0 %v569
    %3531 = vmatpush1.msra.mxu0 %v568
    %3532 = vmatprep.subr.mxu0 %v573
    %3533 = vmatpush1.msra.mxu0 %v572
    %3534 = vmatprep.subr.mxu0 0.0
    %3535 = vmatpush1.msra.mxu0 0.0
    %3536 = vmatprep.subr.mxu0 0.0
    %3537 = vmatpush1.msra.mxu0 0.0
    %3538 = vmatprep.subr.mxu0 0.0
    %3539 = vmatpush1.msra.mxu0 0.0
    %3540 = vmatprep.subr.mxu0 0.0
    %3541 = vmatpush1.msra.mxu0 0.0
    %3542 = vmatprep.subr.mxu0 0.0
    %3543 = vmatpush1.msra.mxu0 0.0
    %3544 = vmatprep.subr.mxu0 0.0
    %3545 = vmatpush1.msra.mxu0 0.0
    %3546 = vmatprep.subr.mxu0 0.0
    %3547 = vmatpush1.msra.mxu0 0.0
    %3548 = vmatprep.subr.mxu0 0.0
    %3549 = vmatpush1.msra.mxu0 0.0
    %3550 = vmatprep.subr.mxu0 0.0
    %3551 = vmatpush1.msra.mxu0 0.0
    %3552 = vmatprep.subr.mxu0 0.0
    %3553 = vmatpush1.msra.mxu0 0.0
    %3554 = vmatprep.subr.mxu0 0.0
    %3555 = vmatpush1.msra.mxu0 0.0
    %3556 = vmatprep.subr.mxu0 0.0
    %3557 = vmatpush1.msra.mxu0 0.0
    %3558 = vmatprep.subr.mxu0 0.0
    %3559 = vmatpush1.msra.mxu0 0.0
    %3560 = vmatprep.subr.mxu0 0.0
    %3561 = vmatpush1.msra.mxu0 0.0
    %3562 = vmatprep.subr.mxu0 0.0
    %3563 = vmatpush1.msra.mxu0 0.0
    %3564 = vmatprep.subr.mxu0 0.0
    %3565 = vmatpush1.msra.mxu0 0.0
    %3566 = vmatprep.mubr.f32.mxu0 0.0
    %3567 = vmatmul.mubr.f32.gmra.mrb[0].mxu0 %v3500
    %v3568 = vpop.f32.mrb[0].mxu0
    %v3569 = vadd.f32 0.0, %v3568
    %v3570 = vpop.f32.mrb[0].mxu0
    %v3571 = vadd.f32 0.0, %v3570
    %3572 = vdwg.mxu0
    %3573 = vmatprep.subr.mxu0 %v515
    %3574 = vmatpush1.msra.mxu0 %v514
    %3575 = vmatprep.subr.mxu0 %v519
    %3576 = vmatpush1.msra.mxu0 %v518
    %3577 = vmatprep.subr.mxu0 %v523
    %3578 = vmatpush1.msra.mxu0 %v522
    %3579 = vmatprep.subr.mxu0 %v527
    %3580 = vmatpush1.msra.mxu0 %v526
    %3581 = vmatprep.subr.mxu0 %v531
    %3582 = vmatpush1.msra.mxu0 %v530
    %3583 = vmatprep.subr.mxu0 %v535
    %3584 = vmatpush1.msra.mxu0 %v534
    %3585 = vmatprep.subr.mxu0 %v539
    %3586 = vmatpush1.msra.mxu0 %v538
    %3587 = vmatprep.subr.mxu0 %v543
    %3588 = vmatpush1.msra.mxu0 %v542
    %3589 = vmatprep.subr.mxu0 %v547
    %3590 = vmatpush1.msra.mxu0 %v546
    %3591 = vmatprep.subr.mxu0 %v551
    %3592 = vmatpush1.msra.mxu0 %v550
    %3593 = vmatprep.subr.mxu0 %v555
    %3594 = vmatpush1.msra.mxu0 %v554
    %3595 = vmatprep.subr.mxu0 %v559
    %3596 = vmatpush1.msra.mxu0 %v558
    %3597 = vmatprep.subr.mxu0 %v563
    %3598 = vmatpush1.msra.mxu0 %v562
    %3599 = vmatprep.subr.mxu0 %v567
    %3600 = vmatpush1.msra.mxu0 %v566
    %3601 = vmatprep.subr.mxu0 %v571
    %3602 = vmatpush1.msra.mxu0 %v570
    %3603 = vmatprep.subr.mxu0 %v575
    %3604 = vmatpush1.msra.mxu0 %v574
    %3605 = vmatprep.subr.mxu0 0.0
    %3606 = vmatpush1.msra.mxu0 0.0
    %3607 = vmatprep.subr.mxu0 0.0
    %3608 = vmatpush1.msra.mxu0 0.0
    %3609 = vmatprep.subr.mxu0 0.0
    %3610 = vmatpush1.msra.mxu0 0.0
    %3611 = vmatprep.subr.mxu0 0.0
    %3612 = vmatpush1.msra.mxu0 0.0
    %3613 = vmatprep.subr.mxu0 0.0
    %3614 = vmatpush1.msra.mxu0 0.0
    %3615 = vmatprep.subr.mxu0 0.0
    %3616 = vmatpush1.msra.mxu0 0.0
    %3617 = vmatprep.subr.mxu0 0.0
    %3618 = vmatpush1.msra.mxu0 0.0
    %3619 = vmatprep.subr.mxu0 0.0
    %3620 = vmatpush1.msra.mxu0 0.0
    %3621 = vmatprep.subr.mxu0 0.0
    %3622 = vmatpush1.msra.mxu0 0.0
    %3623 = vmatprep.subr.mxu0 0.0
    %3624 = vmatpush1.msra.mxu0 0.0
    %3625 = vmatprep.subr.mxu0 0.0
    %3626 = vmatpush1.msra.mxu0 0.0
    %3627 = vmatprep.subr.mxu0 0.0
    %3628 = vmatpush1.msra.mxu0 0.0
    %3629 = vmatprep.subr.mxu0 0.0
    %3630 = vmatpush1.msra.mxu0 0.0
    %3631 = vmatprep.subr.mxu0 0.0
    %3632 = vmatpush1.msra.mxu0 0.0
    %3633 = vmatprep.subr.mxu0 0.0
    %3634 = vmatpush1.msra.mxu0 0.0
    %3635 = vmatprep.subr.mxu0 0.0
    %3636 = vmatpush1.msra.mxu0 0.0
    %3637 = vmatprep.mubr.f32.mxu0 0.0
    %3638 = vmatmul.mubr.f32.gmra.mrb[0].mxu0 %v3500
    %v3639 = vpop.f32.mrb[0].mxu0
    %v3640 = vadd.f32 0.0, %v3639
    %v3641 = vpop.f32.mrb[0].mxu0
    %v3642 = vadd.f32 0.0, %v3641
    %3643 = vdwg.mxu0
    %v3644 = vadd.f32 %v3496, %v3569
    %v3645 = vadd.f32 %v3497, %v3571
    %v3646 = vadd.f32 %v3498, %v3640
    %v3647 = vadd.f32 %v3499, %v3642
    %v3648 = vxor.u32 %v3492, 2147483648
    %v3649 = vmul.f32 %v3648, 1.442695
    %v3650 = vpow.pop %v3649
    %v3651 = vadd.f32 %v3650, 1.0
    %v3652 = vrcp.pop %v3651
    %v3653 = vmul.f32 1.0, %v3652
    %v3654 = vxor.u32 %v3493, 2147483648
    %v3655 = vmul.f32 %v3654, 1.442695
    %v3656 = vpow.pop %v3655
    %v3657 = vadd.f32 %v3656, 1.0
    %v3658 = vrcp.pop %v3657
    %v3659 = vmul.f32 1.0, %v3658
    %v3660 = vtanh.pop %v3494
    %v3661 = vxor.u32 %v3495, 2147483648
    %v3662 = vmul.f32 %v3661, 1.442695
    %v3663 = vpow.pop %v3662
    %v3664 = vadd.f32 %v3663, 1.0
    %v3665 = vrcp.pop %v3664
    %v3666 = vmul.f32 1.0, %v3665
    %v3668 = vrot.slane %v3280, 6
    %v3670 = vmul.f32 %v3659, %v3668
    %v3671 = vmul.f32 %v3653, %v3660
    %v3672 = vadd.f32 %v3670, %v3671
    %v3673 = vtanh.pop %v3672
    %v3674 = vmul.f32 %v3666, %v3673
    %v3675 = vxor.u32 %v3644, 2147483648
    %v3676 = vmul.f32 %v3675, 1.442695
    %v3677 = vpow.pop %v3676
    %v3678 = vadd.f32 %v3677, 1.0
    %v3679 = vrcp.pop %v3678
    %v3680 = vmul.f32 1.0, %v3679
    %v3681 = vxor.u32 %v3645, 2147483648
    %v3682 = vmul.f32 %v3681, 1.442695
    %v3683 = vpow.pop %v3682
    %v3684 = vadd.f32 %v3683, 1.0
    %v3685 = vrcp.pop %v3684
    %v3686 = vmul.f32 1.0, %v3685
    %v3687 = vtanh.pop %v3646
    %v3688 = vxor.u32 %v3647, 2147483648
    %v3689 = vmul.f32 %v3688, 1.442695
    %v3690 = vpow.pop %v3689
    %v3691 = vadd.f32 %v3690, 1.0
    %v3692 = vrcp.pop %v3691
    %v3693 = vmul.f32 1.0, %v3692
    %v3695 = vrot.slane %v3307, 2
    %v3697 = vmul.f32 %v3686, %v3695
    %v3698 = vmul.f32 %v3680, %v3687
    %v3699 = vadd.f32 %v3697, %v3698
    %v3700 = vtanh.pop %v3699
    %v3701 = vmul.f32 %v3693, %v3700
    %v3703 = vcombine.high %v3674, %v3674
    %v3705 = vunpack.c.l.s4 1983009808
    %v3706 = vunpack.c.0.s8 %v3705
    %v3707 = vlaneseq
    %v3708 = vshrl.u32 %v3707, 7
    %v3709 = vsub.s32 %v3706, %v3708
    %v3710 = vrot.slane %v3703, %v3709
    %v3711 = vcombine.high %v3710, %v3710
    %3713 = vst [vmem:[%s948] sm:$0x3] %v3711
    %3714 = vst [vmem:[%s4 + $0x2] sm:$0x3] %v3701
    // Predicated region
    $region30: #{_lambda_.3} parent=1 // pred_check
      _
    $region31: #{_lambda_.3} parent=1 // pred_check_branch
      %3716 = sbr.rel (0) target = $region33
    $region32: #{_lambda_.3} parent=1 // pred_region
      _
    $region33: #{_lambda_.3} parent=1 // pred_fallthru
      _
    // Predicated region
    $region34: #{_lambda_.3} parent=1 // pred_check
      _
    $region35: #{_lambda_.3} parent=1 // pred_check_branch
      %3718 = sbr.rel (0) target = $region37
    $region36: #{_lambda_.3} parent=1 // pred_region
      _
    $region37: #{_lambda_.3} parent=1 // pred_fallthru
      _
    %3719 = vsyncpa [#allocation4], 1
    %3720 = vsyncpa [#allocation6], 1

// kernel: _lambda_.4
$region0: #{_lambda_.4}
  #allocation0 [shape = 'u32[]', space=smem, size = 0x4, offset = 0x4, fixed_abs, tag = 'smem constant byte address 0x4 - core index']
  #allocation1 [shape = 'u32[144,128]{1,0:T(1,128)}', space=vmem, size = 0x12000, scoped, tag = 'internal scratch']
  #allocation2 [shape = 'f32[16,1024]{1,0:T(8,128)}', space=vmem, size = 0x10000, scoped, tag = 'scratch operand']
  %s0 = inlined_call_operand.vmem [shape: f32[16,256], index: 0, kind: input, shape index: {}]
  %s1 = inlined_call_operand.hbm [shape: f32[256,1024], index: 1, kind: input, shape index: {}]
  %s2 = inlined_call_operand.vmem [shape: f32[2,128,512], index: 2, kind: input, shape index: {}]
  %s3 = inlined_call_operand.vmem [shape: f32[1,1024], index: 3, kind: input, shape index: {}]
  %s4 = inlined_call_operand.vmem [shape: f32[8,2,256], index: 4, kind: output, shape index: {}]
  %s5 = sld [smem:[#allocation0]]
  $region30: #{_lambda_.4} parent=0
    _
  %s7 = ssub.s32 1, %s5
  %s8 = scalar_select 0, %s7, %s5
  $region1: #{_lambda_.4} parent=0
    #allocation3 [shape = 'u8[1048576]{0}', space=vmem, size = 0x100000, scoped, tag = 'input window, operand 1, single buffered']
    #allocation4 [shape = 's32[1]{0}', space=sflag, size = 0x4, scoped, tag = 'scoped memory for _lambda_.4']
    %9 = vsyncpa [#allocation4], 0
    // Predicated region
    $region2: #{_lambda_.4} parent=1 // pred_check
      _
    $region3: #{_lambda_.4} parent=1 // pred_check_branch
      %11 = sbr.rel (0) target = $region5
    $region4: #{_lambda_.4} parent=1 // pred_region
      _
    $region5: #{_lambda_.4} parent=1 // pred_fallthru
      _
    // Predicated region
    $region6: #{_lambda_.4} parent=1 // pred_check
      _
    $region7: #{_lambda_.4} parent=1 // pred_check_branch
      %13 = sbr.rel (0) target = $region9
    $region8: #{_lambda_.4} parent=1 // pred_region
      %s15 = ssub.s32 32768, 32768
      %16 = vsyncadd [#allocation4], %s15
      %s17 = sshll.u32 [#allocation3], 4
      %s18 = int_to_ptr.vmem [resolvable:$true] %s17
      %23 = dma.hbm_to_vmem [thread:$0]  %s1, 32768, %s18, [#allocation4], 1024, 1024, 64
    $region9: #{_lambda_.4} parent=1 // pred_fallthru
      _
    // Predicated region
    $region10: #{_lambda_.4} parent=1 // pred_check
      _
    $region11: #{_lambda_.4} parent=1 // pred_check_branch
      %25 = sbr.rel (0) target = $region13
    $region12: #{_lambda_.4} parent=1 // pred_region
      _
    $region13: #{_lambda_.4} parent=1 // pred_fallthru
      _
    // Predicated region
    $region14: #{_lambda_.4} parent=1 // pred_check
      _
    $region15: #{_lambda_.4} parent=1 // pred_check_branch
      %27 = sbr.rel (0) target = $region17
    $region16: #{_lambda_.4} parent=1 // pred_region
      _
    $region17: #{_lambda_.4} parent=1 // pred_fallthru
      _
    // Predicated region
    $region18: #{_lambda_.4} parent=1 // pred_check
      _
    $region19: #{_lambda_.4} parent=1 // pred_check_branch
      %29 = sbr.rel (0) target = $region21
    $region20: #{_lambda_.4} parent=1 // pred_region
      %30 = dma.done [#allocation4], 32768
    $region21: #{_lambda_.4} parent=1 // pred_fallthru
      _
    %v31 = vld [vmem:[%s0] sm:$0xff]
    %v32 = vld [vmem:[%s0 + $0x8] sm:$0xff]
    %v33 = vld [vmem:[%s0 + $0x10] sm:$0xff]
    %v34 = vld [vmem:[%s0 + $0x18] sm:$0xff]
    %v35 = vld [vmem:[#allocation3] sm:$0xff]
    %v36 = vld [vmem:[#allocation3 + $0x8] sm:$0xff]
    %v37 = vld [vmem:[#allocation3 + $0x10] sm:$0xff]
    %v38 = vld [vmem:[#allocation3 + $0x18] sm:$0xff]
    %v39 = vld [vmem:[#allocation3 + $0x20] sm:$0xff]
    %v40 = vld [vmem:[#allocation3 + $0x28] sm:$0xff]
    %v41 = vld [vmem:[#allocation3 + $0x30] sm:$0xff]
    %v42 = vld [vmem:[#allocation3 + $0x38] sm:$0xff]
    %v43 = vld [vmem:[#allocation3 + $0x40] sm:$0xff]
    %v44 = vld [vmem:[#allocation3 + $0x48] sm:$0xff]
    %v45 = vld [vmem:[#allocation3 + $0x50] sm:$0xff]
    %v46 = vld [vmem:[#allocation3 + $0x58] sm:$0xff]
    %v47 = vld [vmem:[#allocation3 + $0x60] sm:$0xff]
    %v48 = vld [vmem:[#allocation3 + $0x68] sm:$0xff]
    %v49 = vld [vmem:[#allocation3 + $0x70] sm:$0xff]
    %v50 = vld [vmem:[#allocation3 + $0x78] sm:$0xff]
    %v51 = vld [vmem:[#allocation3 + $0x80] sm:$0xff]
    %v52 = vld [vmem:[#allocation3 + $0x88] sm:$0xff]
    %v53 = vld [vmem:[#allocation3 + $0x90] sm:$0xff]
    %v54 = vld [vmem:[#allocation3 + $0x98] sm:$0xff]
    %v55 = vld [vmem:[#allocation3 + $0xa0] sm:$0xff]
    %v56 = vld [vmem:[#allocation3 + $0xa8] sm:$0xff]
    %v57 = vld [vmem:[#allocation3 + $0xb0] sm:$0xff]
    %v58 = vld [vmem:[#allocation3 + $0xb8] sm:$0xff]
    %v59 = vld [vmem:[#allocation3 + $0xc0] sm:$0xff]
    %v60 = vld [vmem:[#allocation3 + $0xc8] sm:$0xff]
    %v61 = vld [vmem:[#allocation3 + $0xd0] sm:$0xff]
    %v62 = vld [vmem:[#allocation3 + $0xd8] sm:$0xff]
    %v63 = vld [vmem:[#allocation3 + $0xe0] sm:$0xff]
    %v64 = vld [vmem:[#allocation3 + $0xe8] sm:$0xff]
    %v65 = vld [vmem:[#allocation3 + $0xf0] sm:$0xff]
    %v66 = vld [vmem:[#allocation3 + $0xf8] sm:$0xff]
    %v67 = vld [vmem:[#allocation3 + $0x100] sm:$0xff]
    %v68 = vld [vmem:[#allocation3 + $0x108] sm:$0xff]
    %v69 = vld [vmem:[#allocation3 + $0x110] sm:$0xff]
    %v70 = vld [vmem:[#allocation3 + $0x118] sm:$0xff]
    %v71 = vld [vmem:[#allocation3 + $0x120] sm:$0xff]
    %v72 = vld [vmem:[#allocation3 + $0x128] sm:$0xff]
    %v73 = vld [vmem:[#allocation3 + $0x130] sm:$0xff]
    %v74 = vld [vmem:[#allocation3 + $0x138] sm:$0xff]
    %v75 = vld [vmem:[#allocation3 + $0x140] sm:$0xff]
    %v76 = vld [vmem:[#allocation3 + $0x148] sm:$0xff]
    %v77 = vld [vmem:[#allocation3 + $0x150] sm:$0xff]
    %v78 = vld [vmem:[#allocation3 + $0x158] sm:$0xff]
    %v79 = vld [vmem:[#allocation3 + $0x160] sm:$0xff]
    %v80 = vld [vmem:[#allocation3 + $0x168] sm:$0xff]
    %v81 = vld [vmem:[#allocation3 + $0x170] sm:$0xff]
    %v82 = vld [vmem:[#allocation3 + $0x178] sm:$0xff]
    %v83 = vld [vmem:[#allocation3 + $0x180] sm:$0xff]
    %v84 = vld [vmem:[#allocation3 + $0x188] sm:$0xff]
    %v85 = vld [vmem:[#allocation3 + $0x190] sm:$0xff]
    %v86 = vld [vmem:[#allocation3 + $0x198] sm:$0xff]
    %v87 = vld [vmem:[#allocation3 + $0x1a0] sm:$0xff]
    %v88 = vld [vmem:[#allocation3 + $0x1a8] sm:$0xff]
    %v89 = vld [vmem:[#allocation3 + $0x1b0] sm:$0xff]
    %v90 = vld [vmem:[#allocation3 + $0x1b8] sm:$0xff]
    %v91 = vld [vmem:[#allocation3 + $0x1c0] sm:$0xff]
    %v92 = vld [vmem:[#allocation3 + $0x1c8] sm:$0xff]
    %v93 = vld [vmem:[#allocation3 + $0x1d0] sm:$0xff]
    %v94 = vld [vmem:[#allocation3 + $0x1d8] sm:$0xff]
    %v95 = vld [vmem:[#allocation3 + $0x1e0] sm:$0xff]
    %v96 = vld [vmem:[#allocation3 + $0x1e8] sm:$0xff]
    %v97 = vld [vmem:[#allocation3 + $0x1f0] sm:$0xff]
    %v98 = vld [vmem:[#allocation3 + $0x1f8] sm:$0xff]
    %v99 = vld [vmem:[#allocation3 + $0x200] sm:$0xff]
    %v100 = vld [vmem:[#allocation3 + $0x208] sm:$0xff]
    %v101 = vld [vmem:[#allocation3 + $0x210] sm:$0xff]
    %v102 = vld [vmem:[#allocation3 + $0x218] sm:$0xff]
    %v103 = vld [vmem:[#allocation3 + $0x220] sm:$0xff]
    %v104 = vld [vmem:[#allocation3 + $0x228] sm:$0xff]
    %v105 = vld [vmem:[#allocation3 + $0x230] sm:$0xff]
    %v106 = vld [vmem:[#allocation3 + $0x238] sm:$0xff]
    %v107 = vld [vmem:[#allocation3 + $0x240] sm:$0xff]
    %v108 = vld [vmem:[#allocation3 + $0x248] sm:$0xff]
    %v109 = vld [vmem:[#allocation3 + $0x250] sm:$0xff]
    %v110 = vld [vmem:[#allocation3 + $0x258] sm:$0xff]
    %v111 = vld [vmem:[#allocation3 + $0x260] sm:$0xff]
    %v112 = vld [vmem:[#allocation3 + $0x268] sm:$0xff]
    %v113 = vld [vmem:[#allocation3 + $0x270] sm:$0xff]
    %v114 = vld [vmem:[#allocation3 + $0x278] sm:$0xff]
    %v115 = vld [vmem:[#allocation3 + $0x280] sm:$0xff]
    %v116 = vld [vmem:[#allocation3 + $0x288] sm:$0xff]
    %v117 = vld [vmem:[#allocation3 + $0x290] sm:$0xff]
    %v118 = vld [vmem:[#allocation3 + $0x298] sm:$0xff]
    %v119 = vld [vmem:[#allocation3 + $0x2a0] sm:$0xff]
    %v120 = vld [vmem:[#allocation3 + $0x2a8] sm:$0xff]
    %v121 = vld [vmem:[#allocation3 + $0x2b0] sm:$0xff]
    %v122 = vld [vmem:[#allocation3 + $0x2b8] sm:$0xff]
    %v123 = vld [vmem:[#allocation3 + $0x2c0] sm:$0xff]
    %v124 = vld [vmem:[#allocation3 + $0x2c8] sm:$0xff]
    %v125 = vld [vmem:[#allocation3 + $0x2d0] sm:$0xff]
    %v126 = vld [vmem:[#allocation3 + $0x2d8] sm:$0xff]
    %v127 = vld [vmem:[#allocation3 + $0x2e0] sm:$0xff]
    %v128 = vld [vmem:[#allocation3 + $0x2e8] sm:$0xff]
    %v129 = vld [vmem:[#allocation3 + $0x2f0] sm:$0xff]
    %v130 = vld [vmem:[#allocation3 + $0x2f8] sm:$0xff]
    %v131 = vld [vmem:[#allocation3 + $0x300] sm:$0xff]
    %v132 = vld [vmem:[#allocation3 + $0x308] sm:$0xff]
    %v133 = vld [vmem:[#allocation3 + $0x310] sm:$0xff]
    %v134 = vld [vmem:[#allocation3 + $0x318] sm:$0xff]
    %v135 = vld [vmem:[#allocation3 + $0x320] sm:$0xff]
    %v136 = vld [vmem:[#allocation3 + $0x328] sm:$0xff]
    %v137 = vld [vmem:[#allocation3 + $0x330] sm:$0xff]
    %v138 = vld [vmem:[#allocation3 + $0x338] sm:$0xff]
    %v139 = vld [vmem:[#allocation3 + $0x340] sm:$0xff]
    %v140 = vld [vmem:[#allocation3 + $0x348] sm:$0xff]
    %v141 = vld [vmem:[#allocation3 + $0x350] sm:$0xff]
    %v142 = vld [vmem:[#allocation3 + $0x358] sm:$0xff]
    %v143 = vld [vmem:[#allocation3 + $0x360] sm:$0xff]
    %v144 = vld [vmem:[#allocation3 + $0x368] sm:$0xff]
    %v145 = vld [vmem:[#allocation3 + $0x370] sm:$0xff]
    %v146 = vld [vmem:[#allocation3 + $0x378] sm:$0xff]
    %v147 = vld [vmem:[#allocation3 + $0x380] sm:$0xff]
    %v148 = vld [vmem:[#allocation3 + $0x388] sm:$0xff]
    %v149 = vld [vmem:[#allocation3 + $0x390] sm:$0xff]
    %v150 = vld [vmem:[#allocation3 + $0x398] sm:$0xff]
    %v151 = vld [vmem:[#allocation3 + $0x3a0] sm:$0xff]
    %v152 = vld [vmem:[#allocation3 + $0x3a8] sm:$0xff]
    %v153 = vld [vmem:[#allocation3 + $0x3b0] sm:$0xff]
    %v154 = vld [vmem:[#allocation3 + $0x3b8] sm:$0xff]
    %v155 = vld [vmem:[#allocation3 + $0x3c0] sm:$0xff]
    %v156 = vld [vmem:[#allocation3 + $0x3c8] sm:$0xff]
    %v157 = vld [vmem:[#allocation3 + $0x3d0] sm:$0xff]
    %v158 = vld [vmem:[#allocation3 + $0x3d8] sm:$0xff]
    %v159 = vld [vmem:[#allocation3 + $0x3e0] sm:$0xff]
    %v160 = vld [vmem:[#allocation3 + $0x3e8] sm:$0xff]
    %v161 = vld [vmem:[#allocation3 + $0x3f0] sm:$0xff]
    %v162 = vld [vmem:[#allocation3 + $0x3f8] sm:$0xff]
    %v163 = vld [vmem:[#allocation3 + $0x400] sm:$0xff]
    %v164 = vld [vmem:[#allocation3 + $0x408] sm:$0xff]
    %v165 = vld [vmem:[#allocation3 + $0x410] sm:$0xff]
    %v166 = vld [vmem:[#allocation3 + $0x418] sm:$0xff]
    %v167 = vld [vmem:[#allocation3 + $0x420] sm:$0xff]
    %v168 = vld [vmem:[#allocation3 + $0x428] sm:$0xff]
    %v169 = vld [vmem:[#allocation3 + $0x430] sm:$0xff]
    %v170 = vld [vmem:[#allocation3 + $0x438] sm:$0xff]
    %v171 = vld [vmem:[#allocation3 + $0x440] sm:$0xff]
    %v172 = vld [vmem:[#allocation3 + $0x448] sm:$0xff]
    %v173 = vld [vmem:[#allocation3 + $0x450] sm:$0xff]
    %v174 = vld [vmem:[#allocation3 + $0x458] sm:$0xff]
    %v175 = vld [vmem:[#allocation3 + $0x460] sm:$0xff]
    %v176 = vld [vmem:[#allocation3 + $0x468] sm:$0xff]
    %v177 = vld [vmem:[#allocation3 + $0x470] sm:$0xff]
    %v178 = vld [vmem:[#allocation3 + $0x478] sm:$0xff]
    %v179 = vld [vmem:[#allocation3 + $0x480] sm:$0xff]
    %v180 = vld [vmem:[#allocation3 + $0x488] sm:$0xff]
    %v181 = vld [vmem:[#allocation3 + $0x490] sm:$0xff]
    %v182 = vld [vmem:[#allocation3 + $0x498] sm:$0xff]
    %v183 = vld [vmem:[#allocation3 + $0x4a0] sm:$0xff]
    %v184 = vld [vmem:[#allocation3 + $0x4a8] sm:$0xff]
    %v185 = vld [vmem:[#allocation3 + $0x4b0] sm:$0xff]
    %v186 = vld [vmem:[#allocation3 + $0x4b8] sm:$0xff]
    %v187 = vld [vmem:[#allocation3 + $0x4c0] sm:$0xff]
    %v188 = vld [vmem:[#allocation3 + $0x4c8] sm:$0xff]
    %v189 = vld [vmem:[#allocation3 + $0x4d0] sm:$0xff]
    %v190 = vld [vmem:[#allocation3 + $0x4d8] sm:$0xff]
    %v191 = vld [vmem:[#allocation3 + $0x4e0] sm:$0xff]
    %v192 = vld [vmem:[#allocation3 + $0x4e8] sm:$0xff]
    %v193 = vld [vmem:[#allocation3 + $0x4f0] sm:$0xff]
    %v194 = vld [vmem:[#allocation3 + $0x4f8] sm:$0xff]
    %v195 = vld [vmem:[#allocation3 + $0x500] sm:$0xff]
    %v196 = vld [vmem:[#allocation3 + $0x508] sm:$0xff]
    %v197 = vld [vmem:[#allocation3 + $0x510] sm:$0xff]
    %v198 = vld [vmem:[#allocation3 + $0x518] sm:$0xff]
    %v199 = vld [vmem:[#allocation3 + $0x520] sm:$0xff]
    %v200 = vld [vmem:[#allocation3 + $0x528] sm:$0xff]
    %v201 = vld [vmem:[#allocation3 + $0x530] sm:$0xff]
    %v202 = vld [vmem:[#allocation3 + $0x538] sm:$0xff]
    %v203 = vld [vmem:[#allocation3 + $0x540] sm:$0xff]
    %v204 = vld [vmem:[#allocation3 + $0x548] sm:$0xff]
    %v205 = vld [vmem:[#allocation3 + $0x550] sm:$0xff]
    %v206 = vld [vmem:[#allocation3 + $0x558] sm:$0xff]
    %v207 = vld [vmem:[#allocation3 + $0x560] sm:$0xff]
    %v208 = vld [vmem:[#allocation3 + $0x568] sm:$0xff]
    %v209 = vld [vmem:[#allocation3 + $0x570] sm:$0xff]
    %v210 = vld [vmem:[#allocation3 + $0x578] sm:$0xff]
    %v211 = vld [vmem:[#allocation3 + $0x580] sm:$0xff]
    %v212 = vld [vmem:[#allocation3 + $0x588] sm:$0xff]
    %v213 = vld [vmem:[#allocation3 + $0x590] sm:$0xff]
    %v214 = vld [vmem:[#allocation3 + $0x598] sm:$0xff]
    %v215 = vld [vmem:[#allocation3 + $0x5a0] sm:$0xff]
    %v216 = vld [vmem:[#allocation3 + $0x5a8] sm:$0xff]
    %v217 = vld [vmem:[#allocation3 + $0x5b0] sm:$0xff]
    %v218 = vld [vmem:[#allocation3 + $0x5b8] sm:$0xff]
    %v219 = vld [vmem:[#allocation3 + $0x5c0] sm:$0xff]
    %v220 = vld [vmem:[#allocation3 + $0x5c8] sm:$0xff]
    %v221 = vld [vmem:[#allocation3 + $0x5d0] sm:$0xff]
    %v222 = vld [vmem:[#allocation3 + $0x5d8] sm:$0xff]
    %v223 = vld [vmem:[#allocation3 + $0x5e0] sm:$0xff]
    %v224 = vld [vmem:[#allocation3 + $0x5e8] sm:$0xff]
    %v225 = vld [vmem:[#allocation3 + $0x5f0] sm:$0xff]
    %v226 = vld [vmem:[#allocation3 + $0x5f8] sm:$0xff]
    %v227 = vld [vmem:[#allocation3 + $0x600] sm:$0xff]
    %v228 = vld [vmem:[#allocation3 + $0x608] sm:$0xff]
    %v229 = vld [vmem:[#allocation3 + $0x610] sm:$0xff]
    %v230 = vld [vmem:[#allocation3 + $0x618] sm:$0xff]
    %v231 = vld [vmem:[#allocation3 + $0x620] sm:$0xff]
    %v232 = vld [vmem:[#allocation3 + $0x628] sm:$0xff]
    %v233 = vld [vmem:[#allocation3 + $0x630] sm:$0xff]
    %v234 = vld [vmem:[#allocation3 + $0x638] sm:$0xff]
    %v235 = vld [vmem:[#allocation3 + $0x640] sm:$0xff]
    %v236 = vld [vmem:[#allocation3 + $0x648] sm:$0xff]
    %v237 = vld [vmem:[#allocation3 + $0x650] sm:$0xff]
    %v238 = vld [vmem:[#allocation3 + $0x658] sm:$0xff]
    %v239 = vld [vmem:[#allocation3 + $0x660] sm:$0xff]
    %v240 = vld [vmem:[#allocation3 + $0x668] sm:$0xff]
    %v241 = vld [vmem:[#allocation3 + $0x670] sm:$0xff]
    %v242 = vld [vmem:[#allocation3 + $0x678] sm:$0xff]
    %v243 = vld [vmem:[#allocation3 + $0x680] sm:$0xff]
    %v244 = vld [vmem:[#allocation3 + $0x688] sm:$0xff]
    %v245 = vld [vmem:[#allocation3 + $0x690] sm:$0xff]
    %v246 = vld [vmem:[#allocation3 + $0x698] sm:$0xff]
    %v247 = vld [vmem:[#allocation3 + $0x6a0] sm:$0xff]
    %v248 = vld [vmem:[#allocation3 + $0x6a8] sm:$0xff]
    %v249 = vld [vmem:[#allocation3 + $0x6b0] sm:$0xff]
    %v250 = vld [vmem:[#allocation3 + $0x6b8] sm:$0xff]
    %v251 = vld [vmem:[#allocation3 + $0x6c0] sm:$0xff]
    %v252 = vld [vmem:[#allocation3 + $0x6c8] sm:$0xff]
    %v253 = vld [vmem:[#allocation3 + $0x6d0] sm:$0xff]
    %v254 = vld [vmem:[#allocation3 + $0x6d8] sm:$0xff]
    %v255 = vld [vmem:[#allocation3 + $0x6e0] sm:$0xff]
    %v256 = vld [vmem:[#allocation3 + $0x6e8] sm:$0xff]
    %v257 = vld [vmem:[#allocation3 + $0x6f0] sm:$0xff]
    %v258 = vld [vmem:[#allocation3 + $0x6f8] sm:$0xff]
    %v259 = vld [vmem:[#allocation3 + $0x700] sm:$0xff]
    %v260 = vld [vmem:[#allocation3 + $0x708] sm:$0xff]
    %v261 = vld [vmem:[#allocation3 + $0x710] sm:$0xff]
    %v262 = vld [vmem:[#allocation3 + $0x718] sm:$0xff]
    %v263 = vld [vmem:[#allocation3 + $0x720] sm:$0xff]
    %v264 = vld [vmem:[#allocation3 + $0x728] sm:$0xff]
    %v265 = vld [vmem:[#allocation3 + $0x730] sm:$0xff]
    %v266 = vld [vmem:[#allocation3 + $0x738] sm:$0xff]
    %v267 = vld [vmem:[#allocation3 + $0x740] sm:$0xff]
    %v268 = vld [vmem:[#allocation3 + $0x748] sm:$0xff]
    %v269 = vld [vmem:[#allocation3 + $0x750] sm:$0xff]
    %v270 = vld [vmem:[#allocation3 + $0x758] sm:$0xff]
    %v271 = vld [vmem:[#allocation3 + $0x760] sm:$0xff]
    %v272 = vld [vmem:[#allocation3 + $0x768] sm:$0xff]
    %v273 = vld [vmem:[#allocation3 + $0x770] sm:$0xff]
    %v274 = vld [vmem:[#allocation3 + $0x778] sm:$0xff]
    %v275 = vld [vmem:[#allocation3 + $0x780] sm:$0xff]
    %v276 = vld [vmem:[#allocation3 + $0x788] sm:$0xff]
    %v277 = vld [vmem:[#allocation3 + $0x790] sm:$0xff]
    %v278 = vld [vmem:[#allocation3 + $0x798] sm:$0xff]
    %v279 = vld [vmem:[#allocation3 + $0x7a0] sm:$0xff]
    %v280 = vld [vmem:[#allocation3 + $0x7a8] sm:$0xff]
    %v281 = vld [vmem:[#allocation3 + $0x7b0] sm:$0xff]
    %v282 = vld [vmem:[#allocation3 + $0x7b8] sm:$0xff]
    %v283 = vld [vmem:[#allocation3 + $0x7c0] sm:$0xff]
    %v284 = vld [vmem:[#allocation3 + $0x7c8] sm:$0xff]
    %v285 = vld [vmem:[#allocation3 + $0x7d0] sm:$0xff]
    %v286 = vld [vmem:[#allocation3 + $0x7d8] sm:$0xff]
    %v287 = vld [vmem:[#allocation3 + $0x7e0] sm:$0xff]
    %v288 = vld [vmem:[#allocation3 + $0x7e8] sm:$0xff]
    %v289 = vld [vmem:[#allocation3 + $0x7f0] sm:$0xff]
    %v290 = vld [vmem:[#allocation3 + $0x7f8] sm:$0xff]
    %v291 = vld [vmem:[%s3] sm:$0xff]
    %v293 = vlaneseq
    %v294 = vshrl.u32 %v293, 7
    %v295 = vsub.s32 0, %v294
    %v296 = vrot.slane %v291, %v295
    %v297 = vlaneseq
    %v298 = vshrl.u32 %v297, 7
    %v299 = vsub.s32 1, %v298
    %v300 = vrot.slane %v291, %v299
    %v301 = vlaneseq
    %v302 = vshrl.u32 %v301, 7
    %v303 = vsub.s32 2, %v302
    %v304 = vrot.slane %v291, %v303
    %v305 = vlaneseq
    %v306 = vshrl.u32 %v305, 7
    %v307 = vsub.s32 3, %v306
    %v308 = vrot.slane %v291, %v307
    %v309 = vlaneseq
    %v310 = vshrl.u32 %v309, 7
    %v311 = vsub.s32 4, %v310
    %v312 = vrot.slane %v291, %v311
    %v313 = vlaneseq
    %v314 = vshrl.u32 %v313, 7
    %v315 = vsub.s32 5, %v314
    %v316 = vrot.slane %v291, %v315
    %v317 = vlaneseq
    %v318 = vshrl.u32 %v317, 7
    %v319 = vsub.s32 6, %v318
    %v320 = vrot.slane %v291, %v319
    %v321 = vlaneseq
    %v322 = vshrl.u32 %v321, 7
    %v323 = vsub.s32 7, %v322
    %v324 = vrot.slane %v291, %v323
    %333 = vmatprep.subr.mxu0 %v36
    %334 = vmatpush1.msra.mxu0 %v35
    %335 = vmatprep.subr.mxu0 %v44
    %336 = vmatpush1.msra.mxu0 %v43
    %337 = vmatprep.subr.mxu0 %v52
    %338 = vmatpush1.msra.mxu0 %v51
    %339 = vmatprep.subr.mxu0 %v60
    %340 = vmatpush1.msra.mxu0 %v59
    %341 = vmatprep.subr.mxu0 %v68
    %342 = vmatpush1.msra.mxu0 %v67
    %343 = vmatprep.subr.mxu0 %v76
    %344 = vmatpush1.msra.mxu0 %v75
    %345 = vmatprep.subr.mxu0 %v84
    %346 = vmatpush1.msra.mxu0 %v83
    %347 = vmatprep.subr.mxu0 %v92
    %348 = vmatpush1.msra.mxu0 %v91
    %349 = vmatprep.subr.mxu0 %v100
    %350 = vmatpush1.msra.mxu0 %v99
    %351 = vmatprep.subr.mxu0 %v108
    %352 = vmatpush1.msra.mxu0 %v107
    %353 = vmatprep.subr.mxu0 %v116
    %354 = vmatpush1.msra.mxu0 %v115
    %355 = vmatprep.subr.mxu0 %v124
    %356 = vmatpush1.msra.mxu0 %v123
    %357 = vmatprep.subr.mxu0 %v132
    %358 = vmatpush1.msra.mxu0 %v131
    %359 = vmatprep.subr.mxu0 %v140
    %360 = vmatpush1.msra.mxu0 %v139
    %361 = vmatprep.subr.mxu0 %v148
    %362 = vmatpush1.msra.mxu0 %v147
    %363 = vmatprep.subr.mxu0 %v156
    %364 = vmatpush1.msra.mxu0 %v155
    %365 = vmatprep.subr.mxu0 %v164
    %366 = vmatpush1.msra.mxu0 %v163
    %367 = vmatprep.subr.mxu0 %v172
    %368 = vmatpush1.msra.mxu0 %v171
    %369 = vmatprep.subr.mxu0 %v180
    %370 = vmatpush1.msra.mxu0 %v179
    %371 = vmatprep.subr.mxu0 %v188
    %372 = vmatpush1.msra.mxu0 %v187
    %373 = vmatprep.subr.mxu0 %v196
    %374 = vmatpush1.msra.mxu0 %v195
    %375 = vmatprep.subr.mxu0 %v204
    %376 = vmatpush1.msra.mxu0 %v203
    %377 = vmatprep.subr.mxu0 %v212
    %378 = vmatpush1.msra.mxu0 %v211
    %379 = vmatprep.subr.mxu0 %v220
    %380 = vmatpush1.msra.mxu0 %v219
    %381 = vmatprep.subr.mxu0 %v228
    %382 = vmatpush1.msra.mxu0 %v227
    %383 = vmatprep.subr.mxu0 %v236
    %384 = vmatpush1.msra.mxu0 %v235
    %385 = vmatprep.subr.mxu0 %v244
    %386 = vmatpush1.msra.mxu0 %v243
    %387 = vmatprep.subr.mxu0 %v252
    %388 = vmatpush1.msra.mxu0 %v251
    %389 = vmatprep.subr.mxu0 %v260
    %390 = vmatpush1.msra.mxu0 %v259
    %391 = vmatprep.subr.mxu0 %v268
    %392 = vmatpush1.msra.mxu0 %v267
    %393 = vmatprep.subr.mxu0 %v276
    %394 = vmatpush1.msra.mxu0 %v275
    %395 = vmatprep.subr.mxu0 %v284
    %396 = vmatpush1.msra.mxu0 %v283
    %397 = vmatprep.mubr.f32.mxu0 %v32
    %398 = vmatmul.mubr.f32.gmra.mrb[0].mxu0 %v31
    %v399 = vpop.f32.mrb[0].mxu0
    %v400 = vadd.f32 %v296, %v399
    %v401 = vpop.f32.mrb[0].mxu0
    %v402 = vadd.f32 %v300, %v401
    %403 = vmatprep.mubr.f32.mxu0 %v34
    %404 = vmatmul.mubr.f32.gmra.mrb[0].mxu0 %v33
    %v405 = vpop.f32.mrb[0].mxu0
    %v406 = vadd.f32 %v296, %v405
    %v407 = vpop.f32.mrb[0].mxu0
    %v408 = vadd.f32 %v300, %v407
    %409 = vdwg.mxu0
    %410 = vmatprep.subr.mxu0 %v38
    %411 = vmatpush1.msra.mxu0 %v37
    %412 = vmatprep.subr.mxu0 %v46
    %413 = vmatpush1.msra.mxu0 %v45
    %414 = vmatprep.subr.mxu0 %v54
    %415 = vmatpush1.msra.mxu0 %v53
    %416 = vmatprep.subr.mxu0 %v62
    %417 = vmatpush1.msra.mxu0 %v61
    %418 = vmatprep.subr.mxu0 %v70
    %419 = vmatpush1.msra.mxu0 %v69
    %420 = vmatprep.subr.mxu0 %v78
    %421 = vmatpush1.msra.mxu0 %v77
    %422 = vmatprep.subr.mxu0 %v86
    %423 = vmatpush1.msra.mxu0 %v85
    %424 = vmatprep.subr.mxu0 %v94
    %425 = vmatpush1.msra.mxu0 %v93
    %426 = vmatprep.subr.mxu0 %v102
    %427 = vmatpush1.msra.mxu0 %v101
    %428 = vmatprep.subr.mxu0 %v110
    %429 = vmatpush1.msra.mxu0 %v109
    %430 = vmatprep.subr.mxu0 %v118
    %431 = vmatpush1.msra.mxu0 %v117
    %432 = vmatprep.subr.mxu0 %v126
    %433 = vmatpush1.msra.mxu0 %v125
    %434 = vmatprep.subr.mxu0 %v134
    %435 = vmatpush1.msra.mxu0 %v133
    %436 = vmatprep.subr.mxu0 %v142
    %437 = vmatpush1.msra.mxu0 %v141
    %438 = vmatprep.subr.mxu0 %v150
    %439 = vmatpush1.msra.mxu0 %v149
    %440 = vmatprep.subr.mxu0 %v158
    %441 = vmatpush1.msra.mxu0 %v157
    %442 = vmatprep.subr.mxu0 %v166
    %443 = vmatpush1.msra.mxu0 %v165
    %444 = vmatprep.subr.mxu0 %v174
    %445 = vmatpush1.msra.mxu0 %v173
    %446 = vmatprep.subr.mxu0 %v182
    %447 = vmatpush1.msra.mxu0 %v181
    %448 = vmatprep.subr.mxu0 %v190
    %449 = vmatpush1.msra.mxu0 %v189
    %450 = vmatprep.subr.mxu0 %v198
    %451 = vmatpush1.msra.mxu0 %v197
    %452 = vmatprep.subr.mxu0 %v206
    %453 = vmatpush1.msra.mxu0 %v205
    %454 = vmatprep.subr.mxu0 %v214
    %455 = vmatpush1.msra.mxu0 %v213
    %456 = vmatprep.subr.mxu0 %v222
    %457 = vmatpush1.msra.mxu0 %v221
    %458 = vmatprep.subr.mxu0 %v230
    %459 = vmatpush1.msra.mxu0 %v229
    %460 = vmatprep.subr.mxu0 %v238
    %461 = vmatpush1.msra.mxu0 %v237
    %462 = vmatprep.subr.mxu0 %v246
    %463 = vmatpush1.msra.mxu0 %v245
    %464 = vmatprep.subr.mxu0 %v254
    %465 = vmatpush1.msra.mxu0 %v253
    %466 = vmatprep.subr.mxu0 %v262
    %467 = vmatpush1.msra.mxu0 %v261
    %468 = vmatprep.subr.mxu0 %v270
    %469 = vmatpush1.msra.mxu0 %v269
    %470 = vmatprep.subr.mxu0 %v278
    %471 = vmatpush1.msra.mxu0 %v277
    %472 = vmatprep.subr.mxu0 %v286
    %473 = vmatpush1.msra.mxu0 %v285
    %474 = vmatprep.mubr.f32.mxu0 %v32
    %475 = vmatmul.mubr.f32.gmra.mrb[0].mxu0 %v31
    %v476 = vpop.f32.mrb[0].mxu0
    %v477 = vadd.f32 %v304, %v476
    %v478 = vpop.f32.mrb[0].mxu0
    %v479 = vadd.f32 %v308, %v478
    %480 = vmatprep.mubr.f32.mxu0 %v34
    %481 = vmatmul.mubr.f32.gmra.mrb[0].mxu0 %v33
    %v482 = vpop.f32.mrb[0].mxu0
    %v483 = vadd.f32 %v304, %v482
    %v484 = vpop.f32.mrb[0].mxu0
    %v485 = vadd.f32 %v308, %v484
    %486 = vdwg.mxu0
    %487 = vmatprep.subr.mxu0 %v40
    %488 = vmatpush1.msra.mxu0 %v39
    %489 = vmatprep.subr.mxu0 %v48
    %490 = vmatpush1.msra.mxu0 %v47
    %491 = vmatprep.subr.mxu0 %v56
    %492 = vmatpush1.msra.mxu0 %v55
    %493 = vmatprep.subr.mxu0 %v64
    %494 = vmatpush1.msra.mxu0 %v63
    %495 = vmatprep.subr.mxu0 %v72
    %496 = vmatpush1.msra.mxu0 %v71
    %497 = vmatprep.subr.mxu0 %v80
    %498 = vmatpush1.msra.mxu0 %v79
    %499 = vmatprep.subr.mxu0 %v88
    %500 = vmatpush1.msra.mxu0 %v87
    %501 = vmatprep.subr.mxu0 %v96
    %502 = vmatpush1.msra.mxu0 %v95
    %503 = vmatprep.subr.mxu0 %v104
    %504 = vmatpush1.msra.mxu0 %v103
    %505 = vmatprep.subr.mxu0 %v112
    %506 = vmatpush1.msra.mxu0 %v111
    %507 = vmatprep.subr.mxu0 %v120
    %508 = vmatpush1.msra.mxu0 %v119
    %509 = vmatprep.subr.mxu0 %v128
    %510 = vmatpush1.msra.mxu0 %v127
    %511 = vmatprep.subr.mxu0 %v136
    %512 = vmatpush1.msra.mxu0 %v135
    %513 = vmatprep.subr.mxu0 %v144
    %514 = vmatpush1.msra.mxu0 %v143
    %515 = vmatprep.subr.mxu0 %v152
    %516 = vmatpush1.msra.mxu0 %v151
    %517 = vmatprep.subr.mxu0 %v160
    %518 = vmatpush1.msra.mxu0 %v159
    %519 = vmatprep.subr.mxu0 %v168
    %520 = vmatpush1.msra.mxu0 %v167
    %521 = vmatprep.subr.mxu0 %v176
    %522 = vmatpush1.msra.mxu0 %v175
    %523 = vmatprep.subr.mxu0 %v184
    %524 = vmatpush1.msra.mxu0 %v183
    %525 = vmatprep.subr.mxu0 %v192
    %526 = vmatpush1.msra.mxu0 %v191
    %527 = vmatprep.subr.mxu0 %v200
    %528 = vmatpush1.msra.mxu0 %v199
    %529 = vmatprep.subr.mxu0 %v208
    %530 = vmatpush1.msra.mxu0 %v207
    %531 = vmatprep.subr.mxu0 %v216
    %532 = vmatpush1.msra.mxu0 %v215
    %533 = vmatprep.subr.mxu0 %v224
    %534 = vmatpush1.msra.mxu0 %v223
    %535 = vmatprep.subr.mxu0 %v232
    %536 = vmatpush1.msra.mxu0 %v231
    %537 = vmatprep.subr.mxu0 %v240
    %538 = vmatpush1.msra.mxu0 %v239
    %539 = vmatprep.subr.mxu0 %v248
    %540 = vmatpush1.msra.mxu0 %v247
    %541 = vmatprep.subr.mxu0 %v256
    %542 = vmatpush1.msra.mxu0 %v255
    %543 = vmatprep.subr.mxu0 %v264
    %544 = vmatpush1.msra.mxu0 %v263
    %545 = vmatprep.subr.mxu0 %v272
    %546 = vmatpush1.msra.mxu0 %v271
    %547 = vmatprep.subr.mxu0 %v280
    %548 = vmatpush1.msra.mxu0 %v279
    %549 = vmatprep.subr.mxu0 %v288
    %550 = vmatpush1.msra.mxu0 %v287
    %551 = vmatprep.mubr.f32.mxu0 %v32
    %552 = vmatmul.mubr.f32.gmra.mrb[0].mxu0 %v31
    %v553 = vpop.f32.mrb[0].mxu0
    %v554 = vadd.f32 %v312, %v553
    %v555 = vpop.f32.mrb[0].mxu0
    %v556 = vadd.f32 %v316, %v555
    %557 = vmatprep.mubr.f32.mxu0 %v34
    %558 = vmatmul.mubr.f32.gmra.mrb[0].mxu0 %v33
    %v559 = vpop.f32.mrb[0].mxu0
    %v560 = vadd.f32 %v312, %v559
    %v561 = vpop.f32.mrb[0].mxu0
    %v562 = vadd.f32 %v316, %v561
    %563 = vdwg.mxu0
    %564 = vmatprep.subr.mxu0 %v42
    %565 = vmatpush1.msra.mxu0 %v41
    %566 = vmatprep.subr.mxu0 %v50
    %567 = vmatpush1.msra.mxu0 %v49
    %568 = vmatprep.subr.mxu0 %v58
    %569 = vmatpush1.msra.mxu0 %v57
    %570 = vmatprep.subr.mxu0 %v66
    %571 = vmatpush1.msra.mxu0 %v65
    %572 = vmatprep.subr.mxu0 %v74
    %573 = vmatpush1.msra.mxu0 %v73
    %574 = vmatprep.subr.mxu0 %v82
    %575 = vmatpush1.msra.mxu0 %v81
    %576 = vmatprep.subr.mxu0 %v90
    %577 = vmatpush1.msra.mxu0 %v89
    %578 = vmatprep.subr.mxu0 %v98
    %579 = vmatpush1.msra.mxu0 %v97
    %580 = vmatprep.subr.mxu0 %v106
    %581 = vmatpush1.msra.mxu0 %v105
    %582 = vmatprep.subr.mxu0 %v114
    %583 = vmatpush1.msra.mxu0 %v113
    %584 = vmatprep.subr.mxu0 %v122
    %585 = vmatpush1.msra.mxu0 %v121
    %586 = vmatprep.subr.mxu0 %v130
    %587 = vmatpush1.msra.mxu0 %v129
    %588 = vmatprep.subr.mxu0 %v138
    %589 = vmatpush1.msra.mxu0 %v137
    %590 = vmatprep.subr.mxu0 %v146
    %591 = vmatpush1.msra.mxu0 %v145
    %592 = vmatprep.subr.mxu0 %v154
    %593 = vmatpush1.msra.mxu0 %v153
    %594 = vmatprep.subr.mxu0 %v162
    %595 = vmatpush1.msra.mxu0 %v161
    %596 = vmatprep.subr.mxu0 %v170
    %597 = vmatpush1.msra.mxu0 %v169
    %598 = vmatprep.subr.mxu0 %v178
    %599 = vmatpush1.msra.mxu0 %v177
    %600 = vmatprep.subr.mxu0 %v186
    %601 = vmatpush1.msra.mxu0 %v185
    %602 = vmatprep.subr.mxu0 %v194
    %603 = vmatpush1.msra.mxu0 %v193
    %604 = vmatprep.subr.mxu0 %v202
    %605 = vmatpush1.msra.mxu0 %v201
    %606 = vmatprep.subr.mxu0 %v210
    %607 = vmatpush1.msra.mxu0 %v209
    %608 = vmatprep.subr.mxu0 %v218
    %609 = vmatpush1.msra.mxu0 %v217
    %610 = vmatprep.subr.mxu0 %v226
    %611 = vmatpush1.msra.mxu0 %v225
    %612 = vmatprep.subr.mxu0 %v234
    %613 = vmatpush1.msra.mxu0 %v233
    %614 = vmatprep.subr.mxu0 %v242
    %615 = vmatpush1.msra.mxu0 %v241
    %616 = vmatprep.subr.mxu0 %v250
    %617 = vmatpush1.msra.mxu0 %v249
    %618 = vmatprep.subr.mxu0 %v258
    %619 = vmatpush1.msra.mxu0 %v257
    %620 = vmatprep.subr.mxu0 %v266
    %621 = vmatpush1.msra.mxu0 %v265
    %622 = vmatprep.subr.mxu0 %v274
    %623 = vmatpush1.msra.mxu0 %v273
    %624 = vmatprep.subr.mxu0 %v282
    %625 = vmatpush1.msra.mxu0 %v281
    %626 = vmatprep.subr.mxu0 %v290
    %627 = vmatpush1.msra.mxu0 %v289
    %628 = vmatprep.mubr.f32.mxu0 %v32
    %629 = vmatmul.mubr.f32.gmra.mrb[0].mxu0 %v31
    %v630 = vpop.f32.mrb[0].mxu0
    %v631 = vadd.f32 %v320, %v630
    %v632 = vpop.f32.mrb[0].mxu0
    %v633 = vadd.f32 %v324, %v632
    %634 = vmatprep.mubr.f32.mxu0 %v34
    %635 = vmatmul.mubr.f32.gmra.mrb[0].mxu0 %v33
    %v636 = vpop.f32.mrb[0].mxu0
    %v637 = vadd.f32 %v320, %v636
    %v638 = vpop.f32.mrb[0].mxu0
    %v639 = vadd.f32 %v324, %v638
    %640 = vdwg.mxu0
    %641 = vst [vmem:[#allocation2] sm:$0xff] %v400
    %642 = vst [vmem:[#allocation2 + $0x8] sm:$0xff] %v402
    %643 = vst [vmem:[#allocation2 + $0x10] sm:$0xff] %v477
    %644 = vst [vmem:[#allocation2 + $0x18] sm:$0xff] %v479
    %645 = vst [vmem:[#allocation2 + $0x20] sm:$0xff] %v554
    %646 = vst [vmem:[#allocation2 + $0x28] sm:$0xff] %v556
    %647 = vst [vmem:[#allocation2 + $0x30] sm:$0xff] %v631
    %648 = vst [vmem:[#allocation2 + $0x38] sm:$0xff] %v633
    %649 = vst [vmem:[#allocation2 + $0x40] sm:$0xff] %v406
    %650 = vst [vmem:[#allocation2 + $0x48] sm:$0xff] %v408
    %651 = vst [vmem:[#allocation2 + $0x50] sm:$0xff] %v483
    %652 = vst [vmem:[#allocation2 + $0x58] sm:$0xff] %v485
    %653 = vst [vmem:[#allocation2 + $0x60] sm:$0xff] %v560
    %654 = vst [vmem:[#allocation2 + $0x68] sm:$0xff] %v562
    %655 = vst [vmem:[#allocation2 + $0x70] sm:$0xff] %v637
    %656 = vst [vmem:[#allocation2 + $0x78] sm:$0xff] %v639
    %v657 = vld [vmem:[%s2] sm:$0xff]
    %v658 = vld [vmem:[%s2 + $0x8] sm:$0xff]
    %v659 = vld [vmem:[%s2 + $0x10] sm:$0xff]
    %v660 = vld [vmem:[%s2 + $0x18] sm:$0xff]
    %v661 = vld [vmem:[%s2 + $0x20] sm:$0xff]
    %v662 = vld [vmem:[%s2 + $0x28] sm:$0xff]
    %v663 = vld [vmem:[%s2 + $0x30] sm:$0xff]
    %v664 = vld [vmem:[%s2 + $0x38] sm:$0xff]
    %v665 = vld [vmem:[%s2 + $0x40] sm:$0xff]
    %v666 = vld [vmem:[%s2 + $0x48] sm:$0xff]
    %v667 = vld [vmem:[%s2 + $0x50] sm:$0xff]
    %v668 = vld [vmem:[%s2 + $0x58] sm:$0xff]
    %v669 = vld [vmem:[%s2 + $0x60] sm:$0xff]
    %v670 = vld [vmem:[%s2 + $0x68] sm:$0xff]
    %v671 = vld [vmem:[%s2 + $0x70] sm:$0xff]
    %v672 = vld [vmem:[%s2 + $0x78] sm:$0xff]
    %v673 = vld [vmem:[%s2 + $0x80] sm:$0xff]
    %v674 = vld [vmem:[%s2 + $0x88] sm:$0xff]
    %v675 = vld [vmem:[%s2 + $0x90] sm:$0xff]
    %v676 = vld [vmem:[%s2 + $0x98] sm:$0xff]
    %v677 = vld [vmem:[%s2 + $0xa0] sm:$0xff]
    %v678 = vld [vmem:[%s2 + $0xa8] sm:$0xff]
    %v679 = vld [vmem:[%s2 + $0xb0] sm:$0xff]
    %v680 = vld [vmem:[%s2 + $0xb8] sm:$0xff]
    %v681 = vld [vmem:[%s2 + $0xc0] sm:$0xff]
    %v682 = vld [vmem:[%s2 + $0xc8] sm:$0xff]
    %v683 = vld [vmem:[%s2 + $0xd0] sm:$0xff]
    %v684 = vld [vmem:[%s2 + $0xd8] sm:$0xff]
    %v685 = vld [vmem:[%s2 + $0xe0] sm:$0xff]
    %v686 = vld [vmem:[%s2 + $0xe8] sm:$0xff]
    %v687 = vld [vmem:[%s2 + $0xf0] sm:$0xff]
    %v688 = vld [vmem:[%s2 + $0xf8] sm:$0xff]
    %v689 = vld [vmem:[%s2 + $0x100] sm:$0xff]
    %v690 = vld [vmem:[%s2 + $0x108] sm:$0xff]
    %v691 = vld [vmem:[%s2 + $0x110] sm:$0xff]
    %v692 = vld [vmem:[%s2 + $0x118] sm:$0xff]
    %v693 = vld [vmem:[%s2 + $0x120] sm:$0xff]
    %v694 = vld [vmem:[%s2 + $0x128] sm:$0xff]
    %v695 = vld [vmem:[%s2 + $0x130] sm:$0xff]
    %v696 = vld [vmem:[%s2 + $0x138] sm:$0xff]
    %v697 = vld [vmem:[%s2 + $0x140] sm:$0xff]
    %v698 = vld [vmem:[%s2 + $0x148] sm:$0xff]
    %v699 = vld [vmem:[%s2 + $0x150] sm:$0xff]
    %v700 = vld [vmem:[%s2 + $0x158] sm:$0xff]
    %v701 = vld [vmem:[%s2 + $0x160] sm:$0xff]
    %v702 = vld [vmem:[%s2 + $0x168] sm:$0xff]
    %v703 = vld [vmem:[%s2 + $0x170] sm:$0xff]
    %v704 = vld [vmem:[%s2 + $0x178] sm:$0xff]
    %v705 = vld [vmem:[%s2 + $0x180] sm:$0xff]
    %v706 = vld [vmem:[%s2 + $0x188] sm:$0xff]
    %v707 = vld [vmem:[%s2 + $0x190] sm:$0xff]
    %v708 = vld [vmem:[%s2 + $0x198] sm:$0xff]
    %v709 = vld [vmem:[%s2 + $0x1a0] sm:$0xff]
    %v710 = vld [vmem:[%s2 + $0x1a8] sm:$0xff]
    %v711 = vld [vmem:[%s2 + $0x1b0] sm:$0xff]
    %v712 = vld [vmem:[%s2 + $0x1b8] sm:$0xff]
    %v713 = vld [vmem:[%s2 + $0x1c0] sm:$0xff]
    %v714 = vld [vmem:[%s2 + $0x1c8] sm:$0xff]
    %v715 = vld [vmem:[%s2 + $0x1d0] sm:$0xff]
    %v716 = vld [vmem:[%s2 + $0x1d8] sm:$0xff]
    %v717 = vld [vmem:[%s2 + $0x1e0] sm:$0xff]
    %v718 = vld [vmem:[%s2 + $0x1e8] sm:$0xff]
    %v719 = vld [vmem:[%s2 + $0x1f0] sm:$0xff]
    %v720 = vld [vmem:[%s2 + $0x1f8] sm:$0xff]
    %s721 = scalar_lea.vmem %s2, 512
    %v722 = vld [vmem:[%s721] sm:$0xff]
    %v723 = vld [vmem:[%s721 + $0x8] sm:$0xff]
    %v724 = vld [vmem:[%s721 + $0x10] sm:$0xff]
    %v725 = vld [vmem:[%s721 + $0x18] sm:$0xff]
    %v726 = vld [vmem:[%s721 + $0x20] sm:$0xff]
    %v727 = vld [vmem:[%s721 + $0x28] sm:$0xff]
    %v728 = vld [vmem:[%s721 + $0x30] sm:$0xff]
    %v729 = vld [vmem:[%s721 + $0x38] sm:$0xff]
    %v730 = vld [vmem:[%s721 + $0x40] sm:$0xff]
    %v731 = vld [vmem:[%s721 + $0x48] sm:$0xff]
    %v732 = vld [vmem:[%s721 + $0x50] sm:$0xff]
    %v733 = vld [vmem:[%s721 + $0x58] sm:$0xff]
    %v734 = vld [vmem:[%s721 + $0x60] sm:$0xff]
    %v735 = vld [vmem:[%s721 + $0x68] sm:$0xff]
    %v736 = vld [vmem:[%s721 + $0x70] sm:$0xff]
    %v737 = vld [vmem:[%s721 + $0x78] sm:$0xff]
    %v738 = vld [vmem:[%s721 + $0x80] sm:$0xff]
    %v739 = vld [vmem:[%s721 + $0x88] sm:$0xff]
    %v740 = vld [vmem:[%s721 + $0x90] sm:$0xff]
    %v741 = vld [vmem:[%s721 + $0x98] sm:$0xff]
    %v742 = vld [vmem:[%s721 + $0xa0] sm:$0xff]
    %v743 = vld [vmem:[%s721 + $0xa8] sm:$0xff]
    %v744 = vld [vmem:[%s721 + $0xb0] sm:$0xff]
    %v745 = vld [vmem:[%s721 + $0xb8] sm:$0xff]
    %v746 = vld [vmem:[%s721 + $0xc0] sm:$0xff]
    %v747 = vld [vmem:[%s721 + $0xc8] sm:$0xff]
    %v748 = vld [vmem:[%s721 + $0xd0] sm:$0xff]
    %v749 = vld [vmem:[%s721 + $0xd8] sm:$0xff]
    %v750 = vld [vmem:[%s721 + $0xe0] sm:$0xff]
    %v751 = vld [vmem:[%s721 + $0xe8] sm:$0xff]
    %v752 = vld [vmem:[%s721 + $0xf0] sm:$0xff]
    %v753 = vld [vmem:[%s721 + $0xf8] sm:$0xff]
    %v754 = vld [vmem:[%s721 + $0x100] sm:$0xff]
    %v755 = vld [vmem:[%s721 + $0x108] sm:$0xff]
    %v756 = vld [vmem:[%s721 + $0x110] sm:$0xff]
    %v757 = vld [vmem:[%s721 + $0x118] sm:$0xff]
    %v758 = vld [vmem:[%s721 + $0x120] sm:$0xff]
    %v759 = vld [vmem:[%s721 + $0x128] sm:$0xff]
    %v760 = vld [vmem:[%s721 + $0x130] sm:$0xff]
    %v761 = vld [vmem:[%s721 + $0x138] sm:$0xff]
    %v762 = vld [vmem:[%s721 + $0x140] sm:$0xff]
    %v763 = vld [vmem:[%s721 + $0x148] sm:$0xff]
    %v764 = vld [vmem:[%s721 + $0x150] sm:$0xff]
    %v765 = vld [vmem:[%s721 + $0x158] sm:$0xff]
    %v766 = vld [vmem:[%s721 + $0x160] sm:$0xff]
    %v767 = vld [vmem:[%s721 + $0x168] sm:$0xff]
    %v768 = vld [vmem:[%s721 + $0x170] sm:$0xff]
    %v769 = vld [vmem:[%s721 + $0x178] sm:$0xff]
    %v770 = vld [vmem:[%s721 + $0x180] sm:$0xff]
    %v771 = vld [vmem:[%s721 + $0x188] sm:$0xff]
    %v772 = vld [vmem:[%s721 + $0x190] sm:$0xff]
    %v773 = vld [vmem:[%s721 + $0x198] sm:$0xff]
    %v774 = vld [vmem:[%s721 + $0x1a0] sm:$0xff]
    %v775 = vld [vmem:[%s721 + $0x1a8] sm:$0xff]
    %v776 = vld [vmem:[%s721 + $0x1b0] sm:$0xff]
    %v777 = vld [vmem:[%s721 + $0x1b8] sm:$0xff]
    %v778 = vld [vmem:[%s721 + $0x1c0] sm:$0xff]
    %v779 = vld [vmem:[%s721 + $0x1c8] sm:$0xff]
    %v780 = vld [vmem:[%s721 + $0x1d0] sm:$0xff]
    %v781 = vld [vmem:[%s721 + $0x1d8] sm:$0xff]
    %v782 = vld [vmem:[%s721 + $0x1e0] sm:$0xff]
    %v783 = vld [vmem:[%s721 + $0x1e8] sm:$0xff]
    %v784 = vld [vmem:[%s721 + $0x1f0] sm:$0xff]
    %v785 = vld [vmem:[%s721 + $0x1f8] sm:$0xff]
    %v786 = vld [vmem:[#allocation2] sm:$0x3]
    %v787 = vld [vmem:[#allocation2 + $0x8] sm:$0x3]
    %v788 = vld [vmem:[#allocation2 + $0x10] sm:$0x3]
    %v789 = vld [vmem:[#allocation2 + $0x18] sm:$0x3]
    %790 = vmatprep.subr.mxu0 %v658
    %791 = vmatpush1.msra.mxu0 %v657
    %792 = vmatprep.subr.mxu0 %v662
    %793 = vmatpush1.msra.mxu0 %v661
    %794 = vmatprep.subr.mxu0 %v666
    %795 = vmatpush1.msra.mxu0 %v665
    %796 = vmatprep.subr.mxu0 %v670
    %797 = vmatpush1.msra.mxu0 %v669
    %798 = vmatprep.subr.mxu0 %v674
    %799 = vmatpush1.msra.mxu0 %v673
    %800 = vmatprep.subr.mxu0 %v678
    %801 = vmatpush1.msra.mxu0 %v677
    %802 = vmatprep.subr.mxu0 %v682
    %803 = vmatpush1.msra.mxu0 %v681
    %804 = vmatprep.subr.mxu0 %v686
    %805 = vmatpush1.msra.mxu0 %v685
    %806 = vmatprep.subr.mxu0 %v690
    %807 = vmatpush1.msra.mxu0 %v689
    %808 = vmatprep.subr.mxu0 %v694
    %809 = vmatpush1.msra.mxu0 %v693
    %810 = vmatprep.subr.mxu0 %v698
    %811 = vmatpush1.msra.mxu0 %v697
    %812 = vmatprep.subr.mxu0 %v702
    %813 = vmatpush1.msra.mxu0 %v701
    %814 = vmatprep.subr.mxu0 %v706
    %815 = vmatpush1.msra.mxu0 %v705
    %816 = vmatprep.subr.mxu0 %v710
    %817 = vmatpush1.msra.mxu0 %v709
    %818 = vmatprep.subr.mxu0 %v714
    %819 = vmatpush1.msra.mxu0 %v713
    %820 = vmatprep.subr.mxu0 %v718
    %821 = vmatpush1.msra.mxu0 %v717
    %822 = vmatprep.subr.mxu0 0.0
    %823 = vmatpush1.msra.mxu0 0.0
    %824 = vmatprep.subr.mxu0 0.0
    %825 = vmatpush1.msra.mxu0 0.0
    %826 = vmatprep.subr.mxu0 0.0
    %827 = vmatpush1.msra.mxu0 0.0
    %828 = vmatprep.subr.mxu0 0.0
    %829 = vmatpush1.msra.mxu0 0.0
    %830 = vmatprep.subr.mxu0 0.0
    %831 = vmatpush1.msra.mxu0 0.0
    %832 = vmatprep.subr.mxu0 0.0
    %833 = vmatpush1.msra.mxu0 0.0
    %834 = vmatprep.subr.mxu0 0.0
    %835 = vmatpush1.msra.mxu0 0.0
    %836 = vmatprep.subr.mxu0 0.0
    %837 = vmatpush1.msra.mxu0 0.0
    %838 = vmatprep.subr.mxu0 0.0
    %839 = vmatpush1.msra.mxu0 0.0
    %840 = vmatprep.subr.mxu0 0.0
    %841 = vmatpush1.msra.mxu0 0.0
    %842 = vmatprep.subr.mxu0 0.0
    %843 = vmatpush1.msra.mxu0 0.0
    %844 = vmatprep.subr.mxu0 0.0
    %845 = vmatpush1.msra.mxu0 0.0
    %846 = vmatprep.subr.mxu0 0.0
    %847 = vmatpush1.msra.mxu0 0.0
    %848 = vmatprep.subr.mxu0 0.0
    %849 = vmatpush1.msra.mxu0 0.0
    %850 = vmatprep.subr.mxu0 0.0
    %851 = vmatpush1.msra.mxu0 0.0
    %852 = vmatprep.subr.mxu0 0.0
    %853 = vmatpush1.msra.mxu0 0.0
    %854 = vmatprep.mubr.f32.mxu0 0.0
    %855 = vmatmul.mubr.f32.gmra.mrb[0].mxu0 0.0
    %v856 = vpop.f32.mrb[0].mxu0
    %v857 = vadd.f32 0.0, %v856
    %v858 = vpop.f32.mrb[0].mxu0
    %v859 = vadd.f32 0.0, %v858
    %860 = vdwg.mxu0
    %861 = vmatprep.subr.mxu0 %v660
    %862 = vmatpush1.msra.mxu0 %v659
    %863 = vmatprep.subr.mxu0 %v664
    %864 = vmatpush1.msra.mxu0 %v663
    %865 = vmatprep.subr.mxu0 %v668
    %866 = vmatpush1.msra.mxu0 %v667
    %867 = vmatprep.subr.mxu0 %v672
    %868 = vmatpush1.msra.mxu0 %v671
    %869 = vmatprep.subr.mxu0 %v676
    %870 = vmatpush1.msra.mxu0 %v675
    %871 = vmatprep.subr.mxu0 %v680
    %872 = vmatpush1.msra.mxu0 %v679
    %873 = vmatprep.subr.mxu0 %v684
    %874 = vmatpush1.msra.mxu0 %v683
    %875 = vmatprep.subr.mxu0 %v688
    %876 = vmatpush1.msra.mxu0 %v687
    %877 = vmatprep.subr.mxu0 %v692
    %878 = vmatpush1.msra.mxu0 %v691
    %879 = vmatprep.subr.mxu0 %v696
    %880 = vmatpush1.msra.mxu0 %v695
    %881 = vmatprep.subr.mxu0 %v700
    %882 = vmatpush1.msra.mxu0 %v699
    %883 = vmatprep.subr.mxu0 %v704
    %884 = vmatpush1.msra.mxu0 %v703
    %885 = vmatprep.subr.mxu0 %v708
    %886 = vmatpush1.msra.mxu0 %v707
    %887 = vmatprep.subr.mxu0 %v712
    %888 = vmatpush1.msra.mxu0 %v711
    %889 = vmatprep.subr.mxu0 %v716
    %890 = vmatpush1.msra.mxu0 %v715
    %891 = vmatprep.subr.mxu0 %v720
    %892 = vmatpush1.msra.mxu0 %v719
    %893 = vmatprep.subr.mxu0 0.0
    %894 = vmatpush1.msra.mxu0 0.0
    %895 = vmatprep.subr.mxu0 0.0
    %896 = vmatpush1.msra.mxu0 0.0
    %897 = vmatprep.subr.mxu0 0.0
    %898 = vmatpush1.msra.mxu0 0.0
    %899 = vmatprep.subr.mxu0 0.0
    %900 = vmatpush1.msra.mxu0 0.0
    %901 = vmatprep.subr.mxu0 0.0
    %902 = vmatpush1.msra.mxu0 0.0
    %903 = vmatprep.subr.mxu0 0.0
    %904 = vmatpush1.msra.mxu0 0.0
    %905 = vmatprep.subr.mxu0 0.0
    %906 = vmatpush1.msra.mxu0 0.0
    %907 = vmatprep.subr.mxu0 0.0
    %908 = vmatpush1.msra.mxu0 0.0
    %909 = vmatprep.subr.mxu0 0.0
    %910 = vmatpush1.msra.mxu0 0.0
    %911 = vmatprep.subr.mxu0 0.0
    %912 = vmatpush1.msra.mxu0 0.0
    %913 = vmatprep.subr.mxu0 0.0
    %914 = vmatpush1.msra.mxu0 0.0
    %915 = vmatprep.subr.mxu0 0.0
    %916 = vmatpush1.msra.mxu0 0.0
    %917 = vmatprep.subr.mxu0 0.0
    %918 = vmatpush1.msra.mxu0 0.0
    %919 = vmatprep.subr.mxu0 0.0
    %920 = vmatpush1.msra.mxu0 0.0
    %921 = vmatprep.subr.mxu0 0.0
    %922 = vmatpush1.msra.mxu0 0.0
    %923 = vmatprep.subr.mxu0 0.0
    %924 = vmatpush1.msra.mxu0 0.0
    %925 = vmatprep.mubr.f32.mxu0 0.0
    %926 = vmatmul.mubr.f32.gmra.mrb[0].mxu0 0.0
    %v927 = vpop.f32.mrb[0].mxu0
    %v928 = vadd.f32 0.0, %v927
    %v929 = vpop.f32.mrb[0].mxu0
    %v930 = vadd.f32 0.0, %v929
    %931 = vdwg.mxu0
    %v932 = vadd.f32 %v786, %v857
    %v933 = vadd.f32 %v787, %v859
    %v934 = vadd.f32 %v788, %v928
    %v935 = vadd.f32 %v789, %v930
    %v936 = vld [vmem:[#allocation2 + $0x60] sm:$0xc0]
    %v937 = vld [vmem:[#allocation2 + $0x68] sm:$0xc0]
    %v938 = vld [vmem:[#allocation2 + $0x70] sm:$0xc0]
    %v939 = vld [vmem:[#allocation2 + $0x78] sm:$0xc0]
    %940 = vmatprep.subr.mxu0 %v723
    %941 = vmatpush1.msra.mxu0 %v722
    %942 = vmatprep.subr.mxu0 %v727
    %943 = vmatpush1.msra.mxu0 %v726
    %944 = vmatprep.subr.mxu0 %v731
    %945 = vmatpush1.msra.mxu0 %v730
    %946 = vmatprep.subr.mxu0 %v735
    %947 = vmatpush1.msra.mxu0 %v734
    %948 = vmatprep.subr.mxu0 %v739
    %949 = vmatpush1.msra.mxu0 %v738
    %950 = vmatprep.subr.mxu0 %v743
    %951 = vmatpush1.msra.mxu0 %v742
    %952 = vmatprep.subr.mxu0 %v747
    %953 = vmatpush1.msra.mxu0 %v746
    %954 = vmatprep.subr.mxu0 %v751
    %955 = vmatpush1.msra.mxu0 %v750
    %956 = vmatprep.subr.mxu0 %v755
    %957 = vmatpush1.msra.mxu0 %v754
    %958 = vmatprep.subr.mxu0 %v759
    %959 = vmatpush1.msra.mxu0 %v758
    %960 = vmatprep.subr.mxu0 %v763
    %961 = vmatpush1.msra.mxu0 %v762
    %962 = vmatprep.subr.mxu0 %v767
    %963 = vmatpush1.msra.mxu0 %v766
    %964 = vmatprep.subr.mxu0 %v771
    %965 = vmatpush1.msra.mxu0 %v770
    %966 = vmatprep.subr.mxu0 %v775
    %967 = vmatpush1.msra.mxu0 %v774
    %968 = vmatprep.subr.mxu0 %v779
    %969 = vmatpush1.msra.mxu0 %v778
    %970 = vmatprep.subr.mxu0 %v783
    %971 = vmatpush1.msra.mxu0 %v782
    %972 = vmatprep.subr.mxu0 0.0
    %973 = vmatpush1.msra.mxu0 0.0
    %974 = vmatprep.subr.mxu0 0.0
    %975 = vmatpush1.msra.mxu0 0.0
    %976 = vmatprep.subr.mxu0 0.0
    %977 = vmatpush1.msra.mxu0 0.0
    %978 = vmatprep.subr.mxu0 0.0
    %979 = vmatpush1.msra.mxu0 0.0
    %980 = vmatprep.subr.mxu0 0.0
    %981 = vmatpush1.msra.mxu0 0.0
    %982 = vmatprep.subr.mxu0 0.0
    %983 = vmatpush1.msra.mxu0 0.0
    %984 = vmatprep.subr.mxu0 0.0
    %985 = vmatpush1.msra.mxu0 0.0
    %986 = vmatprep.subr.mxu0 0.0
    %987 = vmatpush1.msra.mxu0 0.0
    %988 = vmatprep.subr.mxu0 0.0
    %989 = vmatpush1.msra.mxu0 0.0
    %990 = vmatprep.subr.mxu0 0.0
    %991 = vmatpush1.msra.mxu0 0.0
    %992 = vmatprep.subr.mxu0 0.0
    %993 = vmatpush1.msra.mxu0 0.0
    %994 = vmatprep.subr.mxu0 0.0
    %995 = vmatpush1.msra.mxu0 0.0
    %996 = vmatprep.subr.mxu0 0.0
    %997 = vmatpush1.msra.mxu0 0.0
    %998 = vmatprep.subr.mxu0 0.0
    %999 = vmatpush1.msra.mxu0 0.0
    %1000 = vmatprep.subr.mxu0 0.0
    %1001 = vmatpush1.msra.mxu0 0.0
    %1002 = vmatprep.subr.mxu0 0.0
    %1003 = vmatpush1.msra.mxu0 0.0
    %1004 = vmatprep.mubr.f32.mxu0 0.0
    %1005 = vmatmul.mubr.f32.gmra.mrb[0].mxu0 0.0
    %v1006 = vpop.f32.mrb[0].mxu0
    %v1007 = vadd.f32 0.0, %v1006
    %v1008 = vpop.f32.mrb[0].mxu0
    %v1009 = vadd.f32 0.0, %v1008
    %1010 = vdwg.mxu0
    %1011 = vmatprep.subr.mxu0 %v725
    %1012 = vmatpush1.msra.mxu0 %v724
    %1013 = vmatprep.subr.mxu0 %v729
    %1014 = vmatpush1.msra.mxu0 %v728
    %1015 = vmatprep.subr.mxu0 %v733
    %1016 = vmatpush1.msra.mxu0 %v732
    %1017 = vmatprep.subr.mxu0 %v737
    %1018 = vmatpush1.msra.mxu0 %v736
    %1019 = vmatprep.subr.mxu0 %v741
    %1020 = vmatpush1.msra.mxu0 %v740
    %1021 = vmatprep.subr.mxu0 %v745
    %1022 = vmatpush1.msra.mxu0 %v744
    %1023 = vmatprep.subr.mxu0 %v749
    %1024 = vmatpush1.msra.mxu0 %v748
    %1025 = vmatprep.subr.mxu0 %v753
    %1026 = vmatpush1.msra.mxu0 %v752
    %1027 = vmatprep.subr.mxu0 %v757
    %1028 = vmatpush1.msra.mxu0 %v756
    %1029 = vmatprep.subr.mxu0 %v761
    %1030 = vmatpush1.msra.mxu0 %v760
    %1031 = vmatprep.subr.mxu0 %v765
    %1032 = vmatpush1.msra.mxu0 %v764
    %1033 = vmatprep.subr.mxu0 %v769
    %1034 = vmatpush1.msra.mxu0 %v768
    %1035 = vmatprep.subr.mxu0 %v773
    %1036 = vmatpush1.msra.mxu0 %v772
    %1037 = vmatprep.subr.mxu0 %v777
    %1038 = vmatpush1.msra.mxu0 %v776
    %1039 = vmatprep.subr.mxu0 %v781
    %1040 = vmatpush1.msra.mxu0 %v780
    %1041 = vmatprep.subr.mxu0 %v785
    %1042 = vmatpush1.msra.mxu0 %v784
    %1043 = vmatprep.subr.mxu0 0.0
    %1044 = vmatpush1.msra.mxu0 0.0
    %1045 = vmatprep.subr.mxu0 0.0
    %1046 = vmatpush1.msra.mxu0 0.0
    %1047 = vmatprep.subr.mxu0 0.0
    %1048 = vmatpush1.msra.mxu0 0.0
    %1049 = vmatprep.subr.mxu0 0.0
    %1050 = vmatpush1.msra.mxu0 0.0
    %1051 = vmatprep.subr.mxu0 0.0
    %1052 = vmatpush1.msra.mxu0 0.0
    %1053 = vmatprep.subr.mxu0 0.0
    %1054 = vmatpush1.msra.mxu0 0.0
    %1055 = vmatprep.subr.mxu0 0.0
    %1056 = vmatpush1.msra.mxu0 0.0
    %1057 = vmatprep.subr.mxu0 0.0
    %1058 = vmatpush1.msra.mxu0 0.0
    %1059 = vmatprep.subr.mxu0 0.0
    %1060 = vmatpush1.msra.mxu0 0.0
    %1061 = vmatprep.subr.mxu0 0.0
    %1062 = vmatpush1.msra.mxu0 0.0
    %1063 = vmatprep.subr.mxu0 0.0
    %1064 = vmatpush1.msra.mxu0 0.0
    %1065 = vmatprep.subr.mxu0 0.0
    %1066 = vmatpush1.msra.mxu0 0.0
    %1067 = vmatprep.subr.mxu0 0.0
    %1068 = vmatpush1.msra.mxu0 0.0
    %1069 = vmatprep.subr.mxu0 0.0
    %1070 = vmatpush1.msra.mxu0 0.0
    %1071 = vmatprep.subr.mxu0 0.0
    %1072 = vmatpush1.msra.mxu0 0.0
    %1073 = vmatprep.subr.mxu0 0.0
    %1074 = vmatpush1.msra.mxu0 0.0
    %1075 = vmatprep.mubr.f32.mxu0 0.0
    %1076 = vmatmul.mubr.f32.gmra.mrb[0].mxu0 0.0
    %v1077 = vpop.f32.mrb[0].mxu0
    %v1078 = vadd.f32 0.0, %v1077
    %v1079 = vpop.f32.mrb[0].mxu0
    %v1080 = vadd.f32 0.0, %v1079
    %1081 = vdwg.mxu0
    %v1086 = vrot.slane %v1007, 2
    %v1087 = vrot.slane %v1009, 2
    %v1088 = vrot.slane %v1078, 2
    %v1089 = vrot.slane %v1080, 2
    %v1094 = vadd.f32 %v936, %v1086
    %v1095 = vadd.f32 %v937, %v1087
    %v1096 = vadd.f32 %v938, %v1088
    %v1097 = vadd.f32 %v939, %v1089
    %v1098 = vxor.u32 %v932, 2147483648
    %v1099 = vmul.f32 %v1098, 1.442695
    %v1100 = vpow.pop %v1099
    %v1101 = vadd.f32 %v1100, 1.0
    %v1102 = vrcp.pop %v1101
    %v1103 = vmul.f32 1.0, %v1102
    %v1104 = vxor.u32 %v933, 2147483648
    %v1105 = vmul.f32 %v1104, 1.442695
    %v1106 = vpow.pop %v1105
    %v1107 = vadd.f32 %v1106, 1.0
    %v1108 = vrcp.pop %v1107
    %v1109 = vmul.f32 1.0, %v1108
    %v1110 = vtanh.pop %v934
    %v1111 = vxor.u32 %v935, 2147483648
    %v1112 = vmul.f32 %v1111, 1.442695
    %v1113 = vpow.pop %v1112
    %v1114 = vadd.f32 %v1113, 1.0
    %v1115 = vrcp.pop %v1114
    %v1116 = vmul.f32 1.0, %v1115
    %v1117 = vmul.f32 %v1109, 0.0
    %v1118 = vmul.f32 %v1103, %v1110
    %v1119 = vadd.f32 %v1117, %v1118
    %v1120 = vtanh.pop %v1119
    %v1121 = vmul.f32 %v1116, %v1120
    %v1122 = vxor.u32 %v1094, 2147483648
    %v1123 = vmul.f32 %v1122, 1.442695
    %v1124 = vpow.pop %v1123
    %v1125 = vadd.f32 %v1124, 1.0
    %v1126 = vrcp.pop %v1125
    %v1127 = vmul.f32 1.0, %v1126
    %v1128 = vxor.u32 %v1095, 2147483648
    %v1129 = vmul.f32 %v1128, 1.442695
    %v1130 = vpow.pop %v1129
    %v1131 = vadd.f32 %v1130, 1.0
    %v1132 = vrcp.pop %v1131
    %v1133 = vmul.f32 1.0, %v1132
    %v1134 = vtanh.pop %v1096
    %v1135 = vxor.u32 %v1097, 2147483648
    %v1136 = vmul.f32 %v1135, 1.442695
    %v1137 = vpow.pop %v1136
    %v1138 = vadd.f32 %v1137, 1.0
    %v1139 = vrcp.pop %v1138
    %v1140 = vmul.f32 1.0, %v1139
    %v1141 = vmul.f32 %v1133, 0.0
    %v1142 = vmul.f32 %v1127, %v1134
    %v1143 = vadd.f32 %v1141, %v1142
    %v1144 = vtanh.pop %v1143
    %v1145 = vmul.f32 %v1140, %v1144
    %1146 = vst [vmem:[%s4] sm:$0x3] %v1121
    %v1148 = vcombine.high %v1145, %v1145
    %v1150 = vunpack.c.l.s4 1983009808
    %v1151 = vunpack.c.0.s8 %v1150
    %v1152 = vlaneseq
    %v1153 = vshrl.u32 %v1152, 7
    %v1154 = vsub.s32 %v1151, %v1153
    %v1155 = vrot.slane %v1148, %v1154
    %v1156 = vcombine.high %v1155, %v1155
    %s1158 = scalar_lea.vmem %s4, 28
    %1159 = vst [vmem:[%s1158 + $0x2] sm:$0x3] %v1156
    %v1160 = vld [vmem:[#allocation2] sm:$0xc]
    %v1161 = vld [vmem:[#allocation2 + $0x8] sm:$0xc]
    %v1162 = vld [vmem:[#allocation2 + $0x10] sm:$0xc]
    %v1163 = vld [vmem:[#allocation2 + $0x18] sm:$0xc]
    %1164 = vmatprep.subr.mxu0 %v658
    %1165 = vmatpush1.msra.mxu0 %v657
    %1166 = vmatprep.subr.mxu0 %v662
    %1167 = vmatpush1.msra.mxu0 %v661
    %1168 = vmatprep.subr.mxu0 %v666
    %1169 = vmatpush1.msra.mxu0 %v665
    %1170 = vmatprep.subr.mxu0 %v670
    %1171 = vmatpush1.msra.mxu0 %v669
    %1172 = vmatprep.subr.mxu0 %v674
    %1173 = vmatpush1.msra.mxu0 %v673
    %1174 = vmatprep.subr.mxu0 %v678
    %1175 = vmatpush1.msra.mxu0 %v677
    %1176 = vmatprep.subr.mxu0 %v682
    %1177 = vmatpush1.msra.mxu0 %v681
    %1178 = vmatprep.subr.mxu0 %v686
    %1179 = vmatpush1.msra.mxu0 %v685
    %1180 = vmatprep.subr.mxu0 %v690
    %1181 = vmatpush1.msra.mxu0 %v689
    %1182 = vmatprep.subr.mxu0 %v694
    %1183 = vmatpush1.msra.mxu0 %v693
    %1184 = vmatprep.subr.mxu0 %v698
    %1185 = vmatpush1.msra.mxu0 %v697
    %1186 = vmatprep.subr.mxu0 %v702
    %1187 = vmatpush1.msra.mxu0 %v701
    %1188 = vmatprep.subr.mxu0 %v706
    %1189 = vmatpush1.msra.mxu0 %v705
    %1190 = vmatprep.subr.mxu0 %v710
    %1191 = vmatpush1.msra.mxu0 %v709
    %1192 = vmatprep.subr.mxu0 %v714
    %1193 = vmatpush1.msra.mxu0 %v713
    %1194 = vmatprep.subr.mxu0 %v718
    %1195 = vmatpush1.msra.mxu0 %v717
    %1196 = vmatprep.subr.mxu0 0.0
    %1197 = vmatpush1.msra.mxu0 0.0
    %1198 = vmatprep.subr.mxu0 0.0
    %1199 = vmatpush1.msra.mxu0 0.0
    %1200 = vmatprep.subr.mxu0 0.0
    %1201 = vmatpush1.msra.mxu0 0.0
    %1202 = vmatprep.subr.mxu0 0.0
    %1203 = vmatpush1.msra.mxu0 0.0
    %1204 = vmatprep.subr.mxu0 0.0
    %1205 = vmatpush1.msra.mxu0 0.0
    %1206 = vmatprep.subr.mxu0 0.0
    %1207 = vmatpush1.msra.mxu0 0.0
    %1208 = vmatprep.subr.mxu0 0.0
    %1209 = vmatpush1.msra.mxu0 0.0
    %1210 = vmatprep.subr.mxu0 0.0
    %1211 = vmatpush1.msra.mxu0 0.0
    %1212 = vmatprep.subr.mxu0 0.0
    %1213 = vmatpush1.msra.mxu0 0.0
    %1214 = vmatprep.subr.mxu0 0.0
    %1215 = vmatpush1.msra.mxu0 0.0
    %1216 = vmatprep.subr.mxu0 0.0
    %1217 = vmatpush1.msra.mxu0 0.0
    %1218 = vmatprep.subr.mxu0 0.0
    %1219 = vmatpush1.msra.mxu0 0.0
    %1220 = vmatprep.subr.mxu0 0.0
    %1221 = vmatpush1.msra.mxu0 0.0
    %1222 = vmatprep.subr.mxu0 0.0
    %1223 = vmatpush1.msra.mxu0 0.0
    %1224 = vmatprep.subr.mxu0 0.0
    %1225 = vmatpush1.msra.mxu0 0.0
    %1226 = vmatprep.subr.mxu0 0.0
    %1227 = vmatpush1.msra.mxu0 0.0
    %1228 = vmatprep.mubr.f32.mxu0 0.0
    %1229 = vmatmul.mubr.f32.gmra.mrb[0].mxu0 %v1121
    %v1230 = vpop.f32.mrb[0].mxu0
    %v1231 = vadd.f32 0.0, %v1230
    %v1232 = vpop.f32.mrb[0].mxu0
    %v1233 = vadd.f32 0.0, %v1232
    %1234 = vdwg.mxu0
    %1235 = vmatprep.subr.mxu0 %v660
    %1236 = vmatpush1.msra.mxu0 %v659
    %1237 = vmatprep.subr.mxu0 %v664
    %1238 = vmatpush1.msra.mxu0 %v663
    %1239 = vmatprep.subr.mxu0 %v668
    %1240 = vmatpush1.msra.mxu0 %v667
    %1241 = vmatprep.subr.mxu0 %v672
    %1242 = vmatpush1.msra.mxu0 %v671
    %1243 = vmatprep.subr.mxu0 %v676
    %1244 = vmatpush1.msra.mxu0 %v675
    %1245 = vmatprep.subr.mxu0 %v680
    %1246 = vmatpush1.msra.mxu0 %v679
    %1247 = vmatprep.subr.mxu0 %v684
    %1248 = vmatpush1.msra.mxu0 %v683
    %1249 = vmatprep.subr.mxu0 %v688
    %1250 = vmatpush1.msra.mxu0 %v687
    %1251 = vmatprep.subr.mxu0 %v692
    %1252 = vmatpush1.msra.mxu0 %v691
    %1253 = vmatprep.subr.mxu0 %v696
    %1254 = vmatpush1.msra.mxu0 %v695
    %1255 = vmatprep.subr.mxu0 %v700
    %1256 = vmatpush1.msra.mxu0 %v699
    %1257 = vmatprep.subr.mxu0 %v704
    %1258 = vmatpush1.msra.mxu0 %v703
    %1259 = vmatprep.subr.mxu0 %v708
    %1260 = vmatpush1.msra.mxu0 %v707
    %1261 = vmatprep.subr.mxu0 %v712
    %1262 = vmatpush1.msra.mxu0 %v711
    %1263 = vmatprep.subr.mxu0 %v716
    %1264 = vmatpush1.msra.mxu0 %v715
    %1265 = vmatprep.subr.mxu0 %v720
    %1266 = vmatpush1.msra.mxu0 %v719
    %1267 = vmatprep.subr.mxu0 0.0
    %1268 = vmatpush1.msra.mxu0 0.0
    %1269 = vmatprep.subr.mxu0 0.0
    %1270 = vmatpush1.msra.mxu0 0.0
    %1271 = vmatprep.subr.mxu0 0.0
    %1272 = vmatpush1.msra.mxu0 0.0
    %1273 = vmatprep.subr.mxu0 0.0
    %1274 = vmatpush1.msra.mxu0 0.0
    %1275 = vmatprep.subr.mxu0 0.0
    %1276 = vmatpush1.msra.mxu0 0.0
    %1277 = vmatprep.subr.mxu0 0.0
    %1278 = vmatpush1.msra.mxu0 0.0
    %1279 = vmatprep.subr.mxu0 0.0
    %1280 = vmatpush1.msra.mxu0 0.0
    %1281 = vmatprep.subr.mxu0 0.0
    %1282 = vmatpush1.msra.mxu0 0.0
    %1283 = vmatprep.subr.mxu0 0.0
    %1284 = vmatpush1.msra.mxu0 0.0
    %1285 = vmatprep.subr.mxu0 0.0
    %1286 = vmatpush1.msra.mxu0 0.0
    %1287 = vmatprep.subr.mxu0 0.0
    %1288 = vmatpush1.msra.mxu0 0.0
    %1289 = vmatprep.subr.mxu0 0.0
    %1290 = vmatpush1.msra.mxu0 0.0
    %1291 = vmatprep.subr.mxu0 0.0
    %1292 = vmatpush1.msra.mxu0 0.0
    %1293 = vmatprep.subr.mxu0 0.0
    %1294 = vmatpush1.msra.mxu0 0.0
    %1295 = vmatprep.subr.mxu0 0.0
    %1296 = vmatpush1.msra.mxu0 0.0
    %1297 = vmatprep.subr.mxu0 0.0
    %1298 = vmatpush1.msra.mxu0 0.0
    %1299 = vmatprep.mubr.f32.mxu0 0.0
    %1300 = vmatmul.mubr.f32.gmra.mrb[0].mxu0 %v1121
    %v1301 = vpop.f32.mrb[0].mxu0
    %v1302 = vadd.f32 0.0, %v1301
    %v1303 = vpop.f32.mrb[0].mxu0
    %v1304 = vadd.f32 0.0, %v1303
    %1305 = vdwg.mxu0
    %v1310 = vrot.slane %v1231, 6
    %v1311 = vrot.slane %v1233, 6
    %v1312 = vrot.slane %v1302, 6
    %v1313 = vrot.slane %v1304, 6
    %v1318 = vadd.f32 %v1160, %v1310
    %v1319 = vadd.f32 %v1161, %v1311
    %v1320 = vadd.f32 %v1162, %v1312
    %v1321 = vadd.f32 %v1163, %v1313
    %v1322 = vld [vmem:[#allocation2 + $0x60] sm:$0x30]
    %v1323 = vld [vmem:[#allocation2 + $0x68] sm:$0x30]
    %v1324 = vld [vmem:[#allocation2 + $0x70] sm:$0x30]
    %v1325 = vld [vmem:[#allocation2 + $0x78] sm:$0x30]
    %v1326 = vrot.slane %v1145, 6
    %1328 = vmatprep.subr.mxu0 %v723
    %1329 = vmatpush1.msra.mxu0 %v722
    %1330 = vmatprep.subr.mxu0 %v727
    %1331 = vmatpush1.msra.mxu0 %v726
    %1332 = vmatprep.subr.mxu0 %v731
    %1333 = vmatpush1.msra.mxu0 %v730
    %1334 = vmatprep.subr.mxu0 %v735
    %1335 = vmatpush1.msra.mxu0 %v734
    %1336 = vmatprep.subr.mxu0 %v739
    %1337 = vmatpush1.msra.mxu0 %v738
    %1338 = vmatprep.subr.mxu0 %v743
    %1339 = vmatpush1.msra.mxu0 %v742
    %1340 = vmatprep.subr.mxu0 %v747
    %1341 = vmatpush1.msra.mxu0 %v746
    %1342 = vmatprep.subr.mxu0 %v751
    %1343 = vmatpush1.msra.mxu0 %v750
    %1344 = vmatprep.subr.mxu0 %v755
    %1345 = vmatpush1.msra.mxu0 %v754
    %1346 = vmatprep.subr.mxu0 %v759
    %1347 = vmatpush1.msra.mxu0 %v758
    %1348 = vmatprep.subr.mxu0 %v763
    %1349 = vmatpush1.msra.mxu0 %v762
    %1350 = vmatprep.subr.mxu0 %v767
    %1351 = vmatpush1.msra.mxu0 %v766
    %1352 = vmatprep.subr.mxu0 %v771
    %1353 = vmatpush1.msra.mxu0 %v770
    %1354 = vmatprep.subr.mxu0 %v775
    %1355 = vmatpush1.msra.mxu0 %v774
    %1356 = vmatprep.subr.mxu0 %v779
    %1357 = vmatpush1.msra.mxu0 %v778
    %1358 = vmatprep.subr.mxu0 %v783
    %1359 = vmatpush1.msra.mxu0 %v782
    %1360 = vmatprep.subr.mxu0 0.0
    %1361 = vmatpush1.msra.mxu0 0.0
    %1362 = vmatprep.subr.mxu0 0.0
    %1363 = vmatpush1.msra.mxu0 0.0
    %1364 = vmatprep.subr.mxu0 0.0
    %1365 = vmatpush1.msra.mxu0 0.0
    %1366 = vmatprep.subr.mxu0 0.0
    %1367 = vmatpush1.msra.mxu0 0.0
    %1368 = vmatprep.subr.mxu0 0.0
    %1369 = vmatpush1.msra.mxu0 0.0
    %1370 = vmatprep.subr.mxu0 0.0
    %1371 = vmatpush1.msra.mxu0 0.0
    %1372 = vmatprep.subr.mxu0 0.0
    %1373 = vmatpush1.msra.mxu0 0.0
    %1374 = vmatprep.subr.mxu0 0.0
    %1375 = vmatpush1.msra.mxu0 0.0
    %1376 = vmatprep.subr.mxu0 0.0
    %1377 = vmatpush1.msra.mxu0 0.0
    %1378 = vmatprep.subr.mxu0 0.0
    %1379 = vmatpush1.msra.mxu0 0.0
    %1380 = vmatprep.subr.mxu0 0.0
    %1381 = vmatpush1.msra.mxu0 0.0
    %1382 = vmatprep.subr.mxu0 0.0
    %1383 = vmatpush1.msra.mxu0 0.0
    %1384 = vmatprep.subr.mxu0 0.0
    %1385 = vmatpush1.msra.mxu0 0.0
    %1386 = vmatprep.subr.mxu0 0.0
    %1387 = vmatpush1.msra.mxu0 0.0
    %1388 = vmatprep.subr.mxu0 0.0
    %1389 = vmatpush1.msra.mxu0 0.0
    %1390 = vmatprep.subr.mxu0 0.0
    %1391 = vmatpush1.msra.mxu0 0.0
    %1392 = vmatprep.mubr.f32.mxu0 0.0
    %1393 = vmatmul.mubr.f32.gmra.mrb[0].mxu0 %v1326
    %v1394 = vpop.f32.mrb[0].mxu0
    %v1395 = vadd.f32 0.0, %v1394
    %v1396 = vpop.f32.mrb[0].mxu0
    %v1397 = vadd.f32 0.0, %v1396
    %1398 = vdwg.mxu0
    %1399 = vmatprep.subr.mxu0 %v725
    %1400 = vmatpush1.msra.mxu0 %v724
    %1401 = vmatprep.subr.mxu0 %v729
    %1402 = vmatpush1.msra.mxu0 %v728
    %1403 = vmatprep.subr.mxu0 %v733
    %1404 = vmatpush1.msra.mxu0 %v732
    %1405 = vmatprep.subr.mxu0 %v737
    %1406 = vmatpush1.msra.mxu0 %v736
    %1407 = vmatprep.subr.mxu0 %v741
    %1408 = vmatpush1.msra.mxu0 %v740
    %1409 = vmatprep.subr.mxu0 %v745
    %1410 = vmatpush1.msra.mxu0 %v744
    %1411 = vmatprep.subr.mxu0 %v749
    %1412 = vmatpush1.msra.mxu0 %v748
    %1413 = vmatprep.subr.mxu0 %v753
    %1414 = vmatpush1.msra.mxu0 %v752
    %1415 = vmatprep.subr.mxu0 %v757
    %1416 = vmatpush1.msra.mxu0 %v756
    %1417 = vmatprep.subr.mxu0 %v761
    %1418 = vmatpush1.msra.mxu0 %v760
    %1419 = vmatprep.subr.mxu0 %v765
    %1420 = vmatpush1.msra.mxu0 %v764
    %1421 = vmatprep.subr.mxu0 %v769
    %1422 = vmatpush1.msra.mxu0 %v768
    %1423 = vmatprep.subr.mxu0 %v773
    %1424 = vmatpush1.msra.mxu0 %v772
    %1425 = vmatprep.subr.mxu0 %v777
    %1426 = vmatpush1.msra.mxu0 %v776
    %1427 = vmatprep.subr.mxu0 %v781
    %1428 = vmatpush1.msra.mxu0 %v780
    %1429 = vmatprep.subr.mxu0 %v785
    %1430 = vmatpush1.msra.mxu0 %v784
    %1431 = vmatprep.subr.mxu0 0.0
    %1432 = vmatpush1.msra.mxu0 0.0
    %1433 = vmatprep.subr.mxu0 0.0
    %1434 = vmatpush1.msra.mxu0 0.0
    %1435 = vmatprep.subr.mxu0 0.0
    %1436 = vmatpush1.msra.mxu0 0.0
    %1437 = vmatprep.subr.mxu0 0.0
    %1438 = vmatpush1.msra.mxu0 0.0
    %1439 = vmatprep.subr.mxu0 0.0
    %1440 = vmatpush1.msra.mxu0 0.0
    %1441 = vmatprep.subr.mxu0 0.0
    %1442 = vmatpush1.msra.mxu0 0.0
    %1443 = vmatprep.subr.mxu0 0.0
    %1444 = vmatpush1.msra.mxu0 0.0
    %1445 = vmatprep.subr.mxu0 0.0
    %1446 = vmatpush1.msra.mxu0 0.0
    %1447 = vmatprep.subr.mxu0 0.0
    %1448 = vmatpush1.msra.mxu0 0.0
    %1449 = vmatprep.subr.mxu0 0.0
    %1450 = vmatpush1.msra.mxu0 0.0
    %1451 = vmatprep.subr.mxu0 0.0
    %1452 = vmatpush1.msra.mxu0 0.0
    %1453 = vmatprep.subr.mxu0 0.0
    %1454 = vmatpush1.msra.mxu0 0.0
    %1455 = vmatprep.subr.mxu0 0.0
    %1456 = vmatpush1.msra.mxu0 0.0
    %1457 = vmatprep.subr.mxu0 0.0
    %1458 = vmatpush1.msra.mxu0 0.0
    %1459 = vmatprep.subr.mxu0 0.0
    %1460 = vmatpush1.msra.mxu0 0.0
    %1461 = vmatprep.subr.mxu0 0.0
    %1462 = vmatpush1.msra.mxu0 0.0
    %1463 = vmatprep.mubr.f32.mxu0 0.0
    %1464 = vmatmul.mubr.f32.gmra.mrb[0].mxu0 %v1326
    %v1465 = vpop.f32.mrb[0].mxu0
    %v1466 = vadd.f32 0.0, %v1465
    %v1467 = vpop.f32.mrb[0].mxu0
    %v1468 = vadd.f32 0.0, %v1467
    %1469 = vdwg.mxu0
    %v1474 = vrot.slane %v1395, 4
    %v1475 = vrot.slane %v1397, 4
    %v1476 = vrot.slane %v1466, 4
    %v1477 = vrot.slane %v1468, 4
    %v1482 = vadd.f32 %v1322, %v1474
    %v1483 = vadd.f32 %v1323, %v1475
    %v1484 = vadd.f32 %v1324, %v1476
    %v1485 = vadd.f32 %v1325, %v1477
    %v1486 = vxor.u32 %v1318, 2147483648
    %v1487 = vmul.f32 %v1486, 1.442695
    %v1488 = vpow.pop %v1487
    %v1489 = vadd.f32 %v1488, 1.0
    %v1490 = vrcp.pop %v1489
    %v1491 = vmul.f32 1.0, %v1490
    %v1492 = vxor.u32 %v1319, 2147483648
    %v1493 = vmul.f32 %v1492, 1.442695
    %v1494 = vpow.pop %v1493
    %v1495 = vadd.f32 %v1494, 1.0
    %v1496 = vrcp.pop %v1495
    %v1497 = vmul.f32 1.0, %v1496
    %v1498 = vtanh.pop %v1320
    %v1499 = vxor.u32 %v1321, 2147483648
    %v1500 = vmul.f32 %v1499, 1.442695
    %v1501 = vpow.pop %v1500
    %v1502 = vadd.f32 %v1501, 1.0
    %v1503 = vrcp.pop %v1502
    %v1504 = vmul.f32 1.0, %v1503
    %v1506 = vrot.slane %v1119, 6
    %v1508 = vmul.f32 %v1497, %v1506
    %v1509 = vmul.f32 %v1491, %v1498
    %v1510 = vadd.f32 %v1508, %v1509
    %v1511 = vtanh.pop %v1510
    %v1512 = vmul.f32 %v1504, %v1511
    %v1513 = vxor.u32 %v1482, 2147483648
    %v1514 = vmul.f32 %v1513, 1.442695
    %v1515 = vpow.pop %v1514
    %v1516 = vadd.f32 %v1515, 1.0
    %v1517 = vrcp.pop %v1516
    %v1518 = vmul.f32 1.0, %v1517
    %v1519 = vxor.u32 %v1483, 2147483648
    %v1520 = vmul.f32 %v1519, 1.442695
    %v1521 = vpow.pop %v1520
    %v1522 = vadd.f32 %v1521, 1.0
    %v1523 = vrcp.pop %v1522
    %v1524 = vmul.f32 1.0, %v1523
    %v1525 = vtanh.pop %v1484
    %v1526 = vxor.u32 %v1485, 2147483648
    %v1527 = vmul.f32 %v1526, 1.442695
    %v1528 = vpow.pop %v1527
    %v1529 = vadd.f32 %v1528, 1.0
    %v1530 = vrcp.pop %v1529
    %v1531 = vmul.f32 1.0, %v1530
    %v1533 = vrot.slane %v1143, 2
    %v1535 = vmul.f32 %v1524, %v1533
    %v1536 = vmul.f32 %v1518, %v1525
    %v1537 = vadd.f32 %v1535, %v1536
    %v1538 = vtanh.pop %v1537
    %v1539 = vmul.f32 %v1531, %v1538
    %v1542 = vunpack.c.l.s4 1983009808
    %v1543 = vunpack.c.0.s8 %v1542
    %v1544 = vlaneseq
    %v1545 = vshrl.u32 %v1544, 7
    %v1546 = vsub.s32 %v1543, %v1545
    %v1547 = vrot.slane %v1512, %v1546
    %v1548 = vcombine.high %v1547, %v1547
    %s1550 = scalar_lea.vmem %s4, 4
    %1551 = vst [vmem:[%s1550] sm:$0x3] %v1548
    %v1553 = vcombine.high %v1539, %v1539
    %v1555 = vunpack.c.l.s4 1983009808
    %v1556 = vunpack.c.0.s8 %v1555
    %v1557 = vlaneseq
    %v1558 = vshrl.u32 %v1557, 7
    %v1559 = vsub.s32 %v1556, %v1558
    %v1560 = vrot.slane %v1553, %v1559
    %s1562 = scalar_lea.vmem %s4, 24
    %1563 = vst [vmem:[%s1562 + $0x2] sm:$0x3] %v1560
    %v1564 = vld [vmem:[#allocation2] sm:$0x30]
    %v1565 = vld [vmem:[#allocation2 + $0x8] sm:$0x30]
    %v1566 = vld [vmem:[#allocation2 + $0x10] sm:$0x30]
    %v1567 = vld [vmem:[#allocation2 + $0x18] sm:$0x30]
    %v1568 = vrot.slane %v1512, 2
    %1570 = vmatprep.subr.mxu0 %v658
    %1571 = vmatpush1.msra.mxu0 %v657
    %1572 = vmatprep.subr.mxu0 %v662
    %1573 = vmatpush1.msra.mxu0 %v661
    %1574 = vmatprep.subr.mxu0 %v666
    %1575 = vmatpush1.msra.mxu0 %v665
    %1576 = vmatprep.subr.mxu0 %v670
    %1577 = vmatpush1.msra.mxu0 %v669
    %1578 = vmatprep.subr.mxu0 %v674
    %1579 = vmatpush1.msra.mxu0 %v673
    %1580 = vmatprep.subr.mxu0 %v678
    %1581 = vmatpush1.msra.mxu0 %v677
    %1582 = vmatprep.subr.mxu0 %v682
    %1583 = vmatpush1.msra.mxu0 %v681
    %1584 = vmatprep.subr.mxu0 %v686
    %1585 = vmatpush1.msra.mxu0 %v685
    %1586 = vmatprep.subr.mxu0 %v690
    %1587 = vmatpush1.msra.mxu0 %v689
    %1588 = vmatprep.subr.mxu0 %v694
    %1589 = vmatpush1.msra.mxu0 %v693
    %1590 = vmatprep.subr.mxu0 %v698
    %1591 = vmatpush1.msra.mxu0 %v697
    %1592 = vmatprep.subr.mxu0 %v702
    %1593 = vmatpush1.msra.mxu0 %v701
    %1594 = vmatprep.subr.mxu0 %v706
    %1595 = vmatpush1.msra.mxu0 %v705
    %1596 = vmatprep.subr.mxu0 %v710
    %1597 = vmatpush1.msra.mxu0 %v709
    %1598 = vmatprep.subr.mxu0 %v714
    %1599 = vmatpush1.msra.mxu0 %v713
    %1600 = vmatprep.subr.mxu0 %v718
    %1601 = vmatpush1.msra.mxu0 %v717
    %1602 = vmatprep.subr.mxu0 0.0
    %1603 = vmatpush1.msra.mxu0 0.0
    %1604 = vmatprep.subr.mxu0 0.0
    %1605 = vmatpush1.msra.mxu0 0.0
    %1606 = vmatprep.subr.mxu0 0.0
    %1607 = vmatpush1.msra.mxu0 0.0
    %1608 = vmatprep.subr.mxu0 0.0
    %1609 = vmatpush1.msra.mxu0 0.0
    %1610 = vmatprep.subr.mxu0 0.0
    %1611 = vmatpush1.msra.mxu0 0.0
    %1612 = vmatprep.subr.mxu0 0.0
    %1613 = vmatpush1.msra.mxu0 0.0
    %1614 = vmatprep.subr.mxu0 0.0
    %1615 = vmatpush1.msra.mxu0 0.0
    %1616 = vmatprep.subr.mxu0 0.0
    %1617 = vmatpush1.msra.mxu0 0.0
    %1618 = vmatprep.subr.mxu0 0.0
    %1619 = vmatpush1.msra.mxu0 0.0
    %1620 = vmatprep.subr.mxu0 0.0
    %1621 = vmatpush1.msra.mxu0 0.0
    %1622 = vmatprep.subr.mxu0 0.0
    %1623 = vmatpush1.msra.mxu0 0.0
    %1624 = vmatprep.subr.mxu0 0.0
    %1625 = vmatpush1.msra.mxu0 0.0
    %1626 = vmatprep.subr.mxu0 0.0
    %1627 = vmatpush1.msra.mxu0 0.0
    %1628 = vmatprep.subr.mxu0 0.0
    %1629 = vmatpush1.msra.mxu0 0.0
    %1630 = vmatprep.subr.mxu0 0.0
    %1631 = vmatpush1.msra.mxu0 0.0
    %1632 = vmatprep.subr.mxu0 0.0
    %1633 = vmatpush1.msra.mxu0 0.0
    %1634 = vmatprep.mubr.f32.mxu0 0.0
    %1635 = vmatmul.mubr.f32.gmra.mrb[0].mxu0 %v1568
    %v1636 = vpop.f32.mrb[0].mxu0
    %v1637 = vadd.f32 0.0, %v1636
    %v1638 = vpop.f32.mrb[0].mxu0
    %v1639 = vadd.f32 0.0, %v1638
    %1640 = vdwg.mxu0
    %1641 = vmatprep.subr.mxu0 %v660
    %1642 = vmatpush1.msra.mxu0 %v659
    %1643 = vmatprep.subr.mxu0 %v664
    %1644 = vmatpush1.msra.mxu0 %v663
    %1645 = vmatprep.subr.mxu0 %v668
    %1646 = vmatpush1.msra.mxu0 %v667
    %1647 = vmatprep.subr.mxu0 %v672
    %1648 = vmatpush1.msra.mxu0 %v671
    %1649 = vmatprep.subr.mxu0 %v676
    %1650 = vmatpush1.msra.mxu0 %v675
    %1651 = vmatprep.subr.mxu0 %v680
    %1652 = vmatpush1.msra.mxu0 %v679
    %1653 = vmatprep.subr.mxu0 %v684
    %1654 = vmatpush1.msra.mxu0 %v683
    %1655 = vmatprep.subr.mxu0 %v688
    %1656 = vmatpush1.msra.mxu0 %v687
    %1657 = vmatprep.subr.mxu0 %v692
    %1658 = vmatpush1.msra.mxu0 %v691
    %1659 = vmatprep.subr.mxu0 %v696
    %1660 = vmatpush1.msra.mxu0 %v695
    %1661 = vmatprep.subr.mxu0 %v700
    %1662 = vmatpush1.msra.mxu0 %v699
    %1663 = vmatprep.subr.mxu0 %v704
    %1664 = vmatpush1.msra.mxu0 %v703
    %1665 = vmatprep.subr.mxu0 %v708
    %1666 = vmatpush1.msra.mxu0 %v707
    %1667 = vmatprep.subr.mxu0 %v712
    %1668 = vmatpush1.msra.mxu0 %v711
    %1669 = vmatprep.subr.mxu0 %v716
    %1670 = vmatpush1.msra.mxu0 %v715
    %1671 = vmatprep.subr.mxu0 %v720
    %1672 = vmatpush1.msra.mxu0 %v719
    %1673 = vmatprep.subr.mxu0 0.0
    %1674 = vmatpush1.msra.mxu0 0.0
    %1675 = vmatprep.subr.mxu0 0.0
    %1676 = vmatpush1.msra.mxu0 0.0
    %1677 = vmatprep.subr.mxu0 0.0
    %1678 = vmatpush1.msra.mxu0 0.0
    %1679 = vmatprep.subr.mxu0 0.0
    %1680 = vmatpush1.msra.mxu0 0.0
    %1681 = vmatprep.subr.mxu0 0.0
    %1682 = vmatpush1.msra.mxu0 0.0
    %1683 = vmatprep.subr.mxu0 0.0
    %1684 = vmatpush1.msra.mxu0 0.0
    %1685 = vmatprep.subr.mxu0 0.0
    %1686 = vmatpush1.msra.mxu0 0.0
    %1687 = vmatprep.subr.mxu0 0.0
    %1688 = vmatpush1.msra.mxu0 0.0
    %1689 = vmatprep.subr.mxu0 0.0
    %1690 = vmatpush1.msra.mxu0 0.0
    %1691 = vmatprep.subr.mxu0 0.0
    %1692 = vmatpush1.msra.mxu0 0.0
    %1693 = vmatprep.subr.mxu0 0.0
    %1694 = vmatpush1.msra.mxu0 0.0
    %1695 = vmatprep.subr.mxu0 0.0
    %1696 = vmatpush1.msra.mxu0 0.0
    %1697 = vmatprep.subr.mxu0 0.0
    %1698 = vmatpush1.msra.mxu0 0.0
    %1699 = vmatprep.subr.mxu0 0.0
    %1700 = vmatpush1.msra.mxu0 0.0
    %1701 = vmatprep.subr.mxu0 0.0
    %1702 = vmatpush1.msra.mxu0 0.0
    %1703 = vmatprep.subr.mxu0 0.0
    %1704 = vmatpush1.msra.mxu0 0.0
    %1705 = vmatprep.mubr.f32.mxu0 0.0
    %1706 = vmatmul.mubr.f32.gmra.mrb[0].mxu0 %v1568
    %v1707 = vpop.f32.mrb[0].mxu0
    %v1708 = vadd.f32 0.0, %v1707
    %v1709 = vpop.f32.mrb[0].mxu0
    %v1710 = vadd.f32 0.0, %v1709
    %1711 = vdwg.mxu0
    %v1716 = vrot.slane %v1637, 4
    %v1717 = vrot.slane %v1639, 4
    %v1718 = vrot.slane %v1708, 4
    %v1719 = vrot.slane %v1710, 4
    %v1724 = vadd.f32 %v1564, %v1716
    %v1725 = vadd.f32 %v1565, %v1717
    %v1726 = vadd.f32 %v1566, %v1718
    %v1727 = vadd.f32 %v1567, %v1719
    %v1728 = vld [vmem:[#allocation2 + $0x60] sm:$0xc]
    %v1729 = vld [vmem:[#allocation2 + $0x68] sm:$0xc]
    %v1730 = vld [vmem:[#allocation2 + $0x70] sm:$0xc]
    %v1731 = vld [vmem:[#allocation2 + $0x78] sm:$0xc]
    %v1732 = vrot.slane %v1539, 4
    %1734 = vmatprep.subr.mxu0 %v723
    %1735 = vmatpush1.msra.mxu0 %v722
    %1736 = vmatprep.subr.mxu0 %v727
    %1737 = vmatpush1.msra.mxu0 %v726
    %1738 = vmatprep.subr.mxu0 %v731
    %1739 = vmatpush1.msra.mxu0 %v730
    %1740 = vmatprep.subr.mxu0 %v735
    %1741 = vmatpush1.msra.mxu0 %v734
    %1742 = vmatprep.subr.mxu0 %v739
    %1743 = vmatpush1.msra.mxu0 %v738
    %1744 = vmatprep.subr.mxu0 %v743
    %1745 = vmatpush1.msra.mxu0 %v742
    %1746 = vmatprep.subr.mxu0 %v747
    %1747 = vmatpush1.msra.mxu0 %v746
    %1748 = vmatprep.subr.mxu0 %v751
    %1749 = vmatpush1.msra.mxu0 %v750
    %1750 = vmatprep.subr.mxu0 %v755
    %1751 = vmatpush1.msra.mxu0 %v754
    %1752 = vmatprep.subr.mxu0 %v759
    %1753 = vmatpush1.msra.mxu0 %v758
    %1754 = vmatprep.subr.mxu0 %v763
    %1755 = vmatpush1.msra.mxu0 %v762
    %1756 = vmatprep.subr.mxu0 %v767
    %1757 = vmatpush1.msra.mxu0 %v766
    %1758 = vmatprep.subr.mxu0 %v771
    %1759 = vmatpush1.msra.mxu0 %v770
    %1760 = vmatprep.subr.mxu0 %v775
    %1761 = vmatpush1.msra.mxu0 %v774
    %1762 = vmatprep.subr.mxu0 %v779
    %1763 = vmatpush1.msra.mxu0 %v778
    %1764 = vmatprep.subr.mxu0 %v783
    %1765 = vmatpush1.msra.mxu0 %v782
    %1766 = vmatprep.subr.mxu0 0.0
    %1767 = vmatpush1.msra.mxu0 0.0
    %1768 = vmatprep.subr.mxu0 0.0
    %1769 = vmatpush1.msra.mxu0 0.0
    %1770 = vmatprep.subr.mxu0 0.0
    %1771 = vmatpush1.msra.mxu0 0.0
    %1772 = vmatprep.subr.mxu0 0.0
    %1773 = vmatpush1.msra.mxu0 0.0
    %1774 = vmatprep.subr.mxu0 0.0
    %1775 = vmatpush1.msra.mxu0 0.0
    %1776 = vmatprep.subr.mxu0 0.0
    %1777 = vmatpush1.msra.mxu0 0.0
    %1778 = vmatprep.subr.mxu0 0.0
    %1779 = vmatpush1.msra.mxu0 0.0
    %1780 = vmatprep.subr.mxu0 0.0
    %1781 = vmatpush1.msra.mxu0 0.0
    %1782 = vmatprep.subr.mxu0 0.0
    %1783 = vmatpush1.msra.mxu0 0.0
    %1784 = vmatprep.subr.mxu0 0.0
    %1785 = vmatpush1.msra.mxu0 0.0
    %1786 = vmatprep.subr.mxu0 0.0
    %1787 = vmatpush1.msra.mxu0 0.0
    %1788 = vmatprep.subr.mxu0 0.0
    %1789 = vmatpush1.msra.mxu0 0.0
    %1790 = vmatprep.subr.mxu0 0.0
    %1791 = vmatpush1.msra.mxu0 0.0
    %1792 = vmatprep.subr.mxu0 0.0
    %1793 = vmatpush1.msra.mxu0 0.0
    %1794 = vmatprep.subr.mxu0 0.0
    %1795 = vmatpush1.msra.mxu0 0.0
    %1796 = vmatprep.subr.mxu0 0.0
    %1797 = vmatpush1.msra.mxu0 0.0
    %1798 = vmatprep.mubr.f32.mxu0 0.0
    %1799 = vmatmul.mubr.f32.gmra.mrb[0].mxu0 %v1732
    %v1800 = vpop.f32.mrb[0].mxu0
    %v1801 = vadd.f32 0.0, %v1800
    %v1802 = vpop.f32.mrb[0].mxu0
    %v1803 = vadd.f32 0.0, %v1802
    %1804 = vdwg.mxu0
    %1805 = vmatprep.subr.mxu0 %v725
    %1806 = vmatpush1.msra.mxu0 %v724
    %1807 = vmatprep.subr.mxu0 %v729
    %1808 = vmatpush1.msra.mxu0 %v728
    %1809 = vmatprep.subr.mxu0 %v733
    %1810 = vmatpush1.msra.mxu0 %v732
    %1811 = vmatprep.subr.mxu0 %v737
    %1812 = vmatpush1.msra.mxu0 %v736
    %1813 = vmatprep.subr.mxu0 %v741
    %1814 = vmatpush1.msra.mxu0 %v740
    %1815 = vmatprep.subr.mxu0 %v745
    %1816 = vmatpush1.msra.mxu0 %v744
    %1817 = vmatprep.subr.mxu0 %v749
    %1818 = vmatpush1.msra.mxu0 %v748
    %1819 = vmatprep.subr.mxu0 %v753
    %1820 = vmatpush1.msra.mxu0 %v752
    %1821 = vmatprep.subr.mxu0 %v757
    %1822 = vmatpush1.msra.mxu0 %v756
    %1823 = vmatprep.subr.mxu0 %v761
    %1824 = vmatpush1.msra.mxu0 %v760
    %1825 = vmatprep.subr.mxu0 %v765
    %1826 = vmatpush1.msra.mxu0 %v764
    %1827 = vmatprep.subr.mxu0 %v769
    %1828 = vmatpush1.msra.mxu0 %v768
    %1829 = vmatprep.subr.mxu0 %v773
    %1830 = vmatpush1.msra.mxu0 %v772
    %1831 = vmatprep.subr.mxu0 %v777
    %1832 = vmatpush1.msra.mxu0 %v776
    %1833 = vmatprep.subr.mxu0 %v781
    %1834 = vmatpush1.msra.mxu0 %v780
    %1835 = vmatprep.subr.mxu0 %v785
    %1836 = vmatpush1.msra.mxu0 %v784
    %1837 = vmatprep.subr.mxu0 0.0
    %1838 = vmatpush1.msra.mxu0 0.0
    %1839 = vmatprep.subr.mxu0 0.0
    %1840 = vmatpush1.msra.mxu0 0.0
    %1841 = vmatprep.subr.mxu0 0.0
    %1842 = vmatpush1.msra.mxu0 0.0
    %1843 = vmatprep.subr.mxu0 0.0
    %1844 = vmatpush1.msra.mxu0 0.0
    %1845 = vmatprep.subr.mxu0 0.0
    %1846 = vmatpush1.msra.mxu0 0.0
    %1847 = vmatprep.subr.mxu0 0.0
    %1848 = vmatpush1.msra.mxu0 0.0
    %1849 = vmatprep.subr.mxu0 0.0
    %1850 = vmatpush1.msra.mxu0 0.0
    %1851 = vmatprep.subr.mxu0 0.0
    %1852 = vmatpush1.msra.mxu0 0.0
    %1853 = vmatprep.subr.mxu0 0.0
    %1854 = vmatpush1.msra.mxu0 0.0
    %1855 = vmatprep.subr.mxu0 0.0
    %1856 = vmatpush1.msra.mxu0 0.0
    %1857 = vmatprep.subr.mxu0 0.0
    %1858 = vmatpush1.msra.mxu0 0.0
    %1859 = vmatprep.subr.mxu0 0.0
    %1860 = vmatpush1.msra.mxu0 0.0
    %1861 = vmatprep.subr.mxu0 0.0
    %1862 = vmatpush1.msra.mxu0 0.0
    %1863 = vmatprep.subr.mxu0 0.0
    %1864 = vmatpush1.msra.mxu0 0.0
    %1865 = vmatprep.subr.mxu0 0.0
    %1866 = vmatpush1.msra.mxu0 0.0
    %1867 = vmatprep.subr.mxu0 0.0
    %1868 = vmatpush1.msra.mxu0 0.0
    %1869 = vmatprep.mubr.f32.mxu0 0.0
    %1870 = vmatmul.mubr.f32.gmra.mrb[0].mxu0 %v1732
    %v1871 = vpop.f32.mrb[0].mxu0
    %v1872 = vadd.f32 0.0, %v1871
    %v1873 = vpop.f32.mrb[0].mxu0
    %v1874 = vadd.f32 0.0, %v1873
    %1875 = vdwg.mxu0
    %v1880 = vrot.slane %v1801, 6
    %v1881 = vrot.slane %v1803, 6
    %v1882 = vrot.slane %v1872, 6
    %v1883 = vrot.slane %v1874, 6
    %v1888 = vadd.f32 %v1728, %v1880
    %v1889 = vadd.f32 %v1729, %v1881
    %v1890 = vadd.f32 %v1730, %v1882
    %v1891 = vadd.f32 %v1731, %v1883
    %v1892 = vxor.u32 %v1724, 2147483648
    %v1893 = vmul.f32 %v1892, 1.442695
    %v1894 = vpow.pop %v1893
    %v1895 = vadd.f32 %v1894, 1.0
    %v1896 = vrcp.pop %v1895
    %v1897 = vmul.f32 1.0, %v1896
    %v1898 = vxor.u32 %v1725, 2147483648
    %v1899 = vmul.f32 %v1898, 1.442695
    %v1900 = vpow.pop %v1899
    %v1901 = vadd.f32 %v1900, 1.0
    %v1902 = vrcp.pop %v1901
    %v1903 = vmul.f32 1.0, %v1902
    %v1904 = vtanh.pop %v1726
    %v1905 = vxor.u32 %v1727, 2147483648
    %v1906 = vmul.f32 %v1905, 1.442695
    %v1907 = vpow.pop %v1906
    %v1908 = vadd.f32 %v1907, 1.0
    %v1909 = vrcp.pop %v1908
    %v1910 = vmul.f32 1.0, %v1909
    %v1912 = vrot.slane %v1510, 6
    %v1914 = vmul.f32 %v1903, %v1912
    %v1915 = vmul.f32 %v1897, %v1904
    %v1916 = vadd.f32 %v1914, %v1915
    %v1917 = vtanh.pop %v1916
    %v1918 = vmul.f32 %v1910, %v1917
    %v1919 = vxor.u32 %v1888, 2147483648
    %v1920 = vmul.f32 %v1919, 1.442695
    %v1921 = vpow.pop %v1920
    %v1922 = vadd.f32 %v1921, 1.0
    %v1923 = vrcp.pop %v1922
    %v1924 = vmul.f32 1.0, %v1923
    %v1925 = vxor.u32 %v1889, 2147483648
    %v1926 = vmul.f32 %v1925, 1.442695
    %v1927 = vpow.pop %v1926
    %v1928 = vadd.f32 %v1927, 1.0
    %v1929 = vrcp.pop %v1928
    %v1930 = vmul.f32 1.0, %v1929
    %v1931 = vtanh.pop %v1890
    %v1932 = vxor.u32 %v1891, 2147483648
    %v1933 = vmul.f32 %v1932, 1.442695
    %v1934 = vpow.pop %v1933
    %v1935 = vadd.f32 %v1934, 1.0
    %v1936 = vrcp.pop %v1935
    %v1937 = vmul.f32 1.0, %v1936
    %v1939 = vrot.slane %v1537, 2
    %v1941 = vmul.f32 %v1930, %v1939
    %v1942 = vmul.f32 %v1924, %v1931
    %v1943 = vadd.f32 %v1941, %v1942
    %v1944 = vtanh.pop %v1943
    %v1945 = vmul.f32 %v1937, %v1944
    %v1947 = vcombine.high %v1918, %v1918
    %v1949 = vunpack.c.l.s4 1983009808
    %v1950 = vunpack.c.0.s8 %v1949
    %v1951 = vlaneseq
    %v1952 = vshrl.u32 %v1951, 7
    %v1953 = vsub.s32 %v1950, %v1952
    %v1954 = vrot.slane %v1947, %v1953
    %s1956 = scalar_lea.vmem %s4, 8
    %1957 = vst [vmem:[%s1956] sm:$0x3] %v1954
    %v1960 = vunpack.c.l.s4 1983009808
    %v1961 = vunpack.c.0.s8 %v1960
    %v1962 = vlaneseq
    %v1963 = vshrl.u32 %v1962, 7
    %v1964 = vsub.s32 %v1961, %v1963
    %v1965 = vrot.slane %v1945, %v1964
    %v1966 = vcombine.high %v1965, %v1965
    %s1968 = scalar_lea.vmem %s4, 20
    %1969 = vst [vmem:[%s1968 + $0x2] sm:$0x3] %v1966
    %v1970 = vld [vmem:[#allocation2] sm:$0xc0]
    %v1971 = vld [vmem:[#allocation2 + $0x8] sm:$0xc0]
    %v1972 = vld [vmem:[#allocation2 + $0x10] sm:$0xc0]
    %v1973 = vld [vmem:[#allocation2 + $0x18] sm:$0xc0]
    %v1974 = vrot.slane %v1918, 4
    %1976 = vmatprep.subr.mxu0 %v658
    %1977 = vmatpush1.msra.mxu0 %v657
    %1978 = vmatprep.subr.mxu0 %v662
    %1979 = vmatpush1.msra.mxu0 %v661
    %1980 = vmatprep.subr.mxu0 %v666
    %1981 = vmatpush1.msra.mxu0 %v665
    %1982 = vmatprep.subr.mxu0 %v670
    %1983 = vmatpush1.msra.mxu0 %v669
    %1984 = vmatprep.subr.mxu0 %v674
    %1985 = vmatpush1.msra.mxu0 %v673
    %1986 = vmatprep.subr.mxu0 %v678
    %1987 = vmatpush1.msra.mxu0 %v677
    %1988 = vmatprep.subr.mxu0 %v682
    %1989 = vmatpush1.msra.mxu0 %v681
    %1990 = vmatprep.subr.mxu0 %v686
    %1991 = vmatpush1.msra.mxu0 %v685
    %1992 = vmatprep.subr.mxu0 %v690
    %1993 = vmatpush1.msra.mxu0 %v689
    %1994 = vmatprep.subr.mxu0 %v694
    %1995 = vmatpush1.msra.mxu0 %v693
    %1996 = vmatprep.subr.mxu0 %v698
    %1997 = vmatpush1.msra.mxu0 %v697
    %1998 = vmatprep.subr.mxu0 %v702
    %1999 = vmatpush1.msra.mxu0 %v701
    %2000 = vmatprep.subr.mxu0 %v706
    %2001 = vmatpush1.msra.mxu0 %v705
    %2002 = vmatprep.subr.mxu0 %v710
    %2003 = vmatpush1.msra.mxu0 %v709
    %2004 = vmatprep.subr.mxu0 %v714
    %2005 = vmatpush1.msra.mxu0 %v713
    %2006 = vmatprep.subr.mxu0 %v718
    %2007 = vmatpush1.msra.mxu0 %v717
    %2008 = vmatprep.subr.mxu0 0.0
    %2009 = vmatpush1.msra.mxu0 0.0
    %2010 = vmatprep.subr.mxu0 0.0
    %2011 = vmatpush1.msra.mxu0 0.0
    %2012 = vmatprep.subr.mxu0 0.0
    %2013 = vmatpush1.msra.mxu0 0.0
    %2014 = vmatprep.subr.mxu0 0.0
    %2015 = vmatpush1.msra.mxu0 0.0
    %2016 = vmatprep.subr.mxu0 0.0
    %2017 = vmatpush1.msra.mxu0 0.0
    %2018 = vmatprep.subr.mxu0 0.0
    %2019 = vmatpush1.msra.mxu0 0.0
    %2020 = vmatprep.subr.mxu0 0.0
    %2021 = vmatpush1.msra.mxu0 0.0
    %2022 = vmatprep.subr.mxu0 0.0
    %2023 = vmatpush1.msra.mxu0 0.0
    %2024 = vmatprep.subr.mxu0 0.0
    %2025 = vmatpush1.msra.mxu0 0.0
    %2026 = vmatprep.subr.mxu0 0.0
    %2027 = vmatpush1.msra.mxu0 0.0
    %2028 = vmatprep.subr.mxu0 0.0
    %2029 = vmatpush1.msra.mxu0 0.0
    %2030 = vmatprep.subr.mxu0 0.0
    %2031 = vmatpush1.msra.mxu0 0.0
    %2032 = vmatprep.subr.mxu0 0.0
    %2033 = vmatpush1.msra.mxu0 0.0
    %2034 = vmatprep.subr.mxu0 0.0
    %2035 = vmatpush1.msra.mxu0 0.0
    %2036 = vmatprep.subr.mxu0 0.0
    %2037 = vmatpush1.msra.mxu0 0.0
    %2038 = vmatprep.subr.mxu0 0.0
    %2039 = vmatpush1.msra.mxu0 0.0
    %2040 = vmatprep.mubr.f32.mxu0 0.0
    %2041 = vmatmul.mubr.f32.gmra.mrb[0].mxu0 %v1974
    %v2042 = vpop.f32.mrb[0].mxu0
    %v2043 = vadd.f32 0.0, %v2042
    %v2044 = vpop.f32.mrb[0].mxu0
    %v2045 = vadd.f32 0.0, %v2044
    %2046 = vdwg.mxu0
    %2047 = vmatprep.subr.mxu0 %v660
    %2048 = vmatpush1.msra.mxu0 %v659
    %2049 = vmatprep.subr.mxu0 %v664
    %2050 = vmatpush1.msra.mxu0 %v663
    %2051 = vmatprep.subr.mxu0 %v668
    %2052 = vmatpush1.msra.mxu0 %v667
    %2053 = vmatprep.subr.mxu0 %v672
    %2054 = vmatpush1.msra.mxu0 %v671
    %2055 = vmatprep.subr.mxu0 %v676
    %2056 = vmatpush1.msra.mxu0 %v675
    %2057 = vmatprep.subr.mxu0 %v680
    %2058 = vmatpush1.msra.mxu0 %v679
    %2059 = vmatprep.subr.mxu0 %v684
    %2060 = vmatpush1.msra.mxu0 %v683
    %2061 = vmatprep.subr.mxu0 %v688
    %2062 = vmatpush1.msra.mxu0 %v687
    %2063 = vmatprep.subr.mxu0 %v692
    %2064 = vmatpush1.msra.mxu0 %v691
    %2065 = vmatprep.subr.mxu0 %v696
    %2066 = vmatpush1.msra.mxu0 %v695
    %2067 = vmatprep.subr.mxu0 %v700
    %2068 = vmatpush1.msra.mxu0 %v699
    %2069 = vmatprep.subr.mxu0 %v704
    %2070 = vmatpush1.msra.mxu0 %v703
    %2071 = vmatprep.subr.mxu0 %v708
    %2072 = vmatpush1.msra.mxu0 %v707
    %2073 = vmatprep.subr.mxu0 %v712
    %2074 = vmatpush1.msra.mxu0 %v711
    %2075 = vmatprep.subr.mxu0 %v716
    %2076 = vmatpush1.msra.mxu0 %v715
    %2077 = vmatprep.subr.mxu0 %v720
    %2078 = vmatpush1.msra.mxu0 %v719
    %2079 = vmatprep.subr.mxu0 0.0
    %2080 = vmatpush1.msra.mxu0 0.0
    %2081 = vmatprep.subr.mxu0 0.0
    %2082 = vmatpush1.msra.mxu0 0.0
    %2083 = vmatprep.subr.mxu0 0.0
    %2084 = vmatpush1.msra.mxu0 0.0
    %2085 = vmatprep.subr.mxu0 0.0
    %2086 = vmatpush1.msra.mxu0 0.0
    %2087 = vmatprep.subr.mxu0 0.0
    %2088 = vmatpush1.msra.mxu0 0.0
    %2089 = vmatprep.subr.mxu0 0.0
    %2090 = vmatpush1.msra.mxu0 0.0
    %2091 = vmatprep.subr.mxu0 0.0
    %2092 = vmatpush1.msra.mxu0 0.0
    %2093 = vmatprep.subr.mxu0 0.0
    %2094 = vmatpush1.msra.mxu0 0.0
    %2095 = vmatprep.subr.mxu0 0.0
    %2096 = vmatpush1.msra.mxu0 0.0
    %2097 = vmatprep.subr.mxu0 0.0
    %2098 = vmatpush1.msra.mxu0 0.0
    %2099 = vmatprep.subr.mxu0 0.0
    %2100 = vmatpush1.msra.mxu0 0.0
    %2101 = vmatprep.subr.mxu0 0.0
    %2102 = vmatpush1.msra.mxu0 0.0
    %2103 = vmatprep.subr.mxu0 0.0
    %2104 = vmatpush1.msra.mxu0 0.0
    %2105 = vmatprep.subr.mxu0 0.0
    %2106 = vmatpush1.msra.mxu0 0.0
    %2107 = vmatprep.subr.mxu0 0.0
    %2108 = vmatpush1.msra.mxu0 0.0
    %2109 = vmatprep.subr.mxu0 0.0
    %2110 = vmatpush1.msra.mxu0 0.0
    %2111 = vmatprep.mubr.f32.mxu0 0.0
    %2112 = vmatmul.mubr.f32.gmra.mrb[0].mxu0 %v1974
    %v2113 = vpop.f32.mrb[0].mxu0
    %v2114 = vadd.f32 0.0, %v2113
    %v2115 = vpop.f32.mrb[0].mxu0
    %v2116 = vadd.f32 0.0, %v2115
    %2117 = vdwg.mxu0
    %v2122 = vrot.slane %v2043, 2
    %v2123 = vrot.slane %v2045, 2
    %v2124 = vrot.slane %v2114, 2
    %v2125 = vrot.slane %v2116, 2
    %v2130 = vadd.f32 %v1970, %v2122
    %v2131 = vadd.f32 %v1971, %v2123
    %v2132 = vadd.f32 %v1972, %v2124
    %v2133 = vadd.f32 %v1973, %v2125
    %v2134 = vld [vmem:[#allocation2 + $0x60] sm:$0x3]
    %v2135 = vld [vmem:[#allocation2 + $0x68] sm:$0x3]
    %v2136 = vld [vmem:[#allocation2 + $0x70] sm:$0x3]
    %v2137 = vld [vmem:[#allocation2 + $0x78] sm:$0x3]
    %v2138 = vrot.slane %v1945, 2
    %2140 = vmatprep.subr.mxu0 %v723
    %2141 = vmatpush1.msra.mxu0 %v722
    %2142 = vmatprep.subr.mxu0 %v727
    %2143 = vmatpush1.msra.mxu0 %v726
    %2144 = vmatprep.subr.mxu0 %v731
    %2145 = vmatpush1.msra.mxu0 %v730
    %2146 = vmatprep.subr.mxu0 %v735
    %2147 = vmatpush1.msra.mxu0 %v734
    %2148 = vmatprep.subr.mxu0 %v739
    %2149 = vmatpush1.msra.mxu0 %v738
    %2150 = vmatprep.subr.mxu0 %v743
    %2151 = vmatpush1.msra.mxu0 %v742
    %2152 = vmatprep.subr.mxu0 %v747
    %2153 = vmatpush1.msra.mxu0 %v746
    %2154 = vmatprep.subr.mxu0 %v751
    %2155 = vmatpush1.msra.mxu0 %v750
    %2156 = vmatprep.subr.mxu0 %v755
    %2157 = vmatpush1.msra.mxu0 %v754
    %2158 = vmatprep.subr.mxu0 %v759
    %2159 = vmatpush1.msra.mxu0 %v758
    %2160 = vmatprep.subr.mxu0 %v763
    %2161 = vmatpush1.msra.mxu0 %v762
    %2162 = vmatprep.subr.mxu0 %v767
    %2163 = vmatpush1.msra.mxu0 %v766
    %2164 = vmatprep.subr.mxu0 %v771
    %2165 = vmatpush1.msra.mxu0 %v770
    %2166 = vmatprep.subr.mxu0 %v775
    %2167 = vmatpush1.msra.mxu0 %v774
    %2168 = vmatprep.subr.mxu0 %v779
    %2169 = vmatpush1.msra.mxu0 %v778
    %2170 = vmatprep.subr.mxu0 %v783
    %2171 = vmatpush1.msra.mxu0 %v782
    %2172 = vmatprep.subr.mxu0 0.0
    %2173 = vmatpush1.msra.mxu0 0.0
    %2174 = vmatprep.subr.mxu0 0.0
    %2175 = vmatpush1.msra.mxu0 0.0
    %2176 = vmatprep.subr.mxu0 0.0
    %2177 = vmatpush1.msra.mxu0 0.0
    %2178 = vmatprep.subr.mxu0 0.0
    %2179 = vmatpush1.msra.mxu0 0.0
    %2180 = vmatprep.subr.mxu0 0.0
    %2181 = vmatpush1.msra.mxu0 0.0
    %2182 = vmatprep.subr.mxu0 0.0
    %2183 = vmatpush1.msra.mxu0 0.0
    %2184 = vmatprep.subr.mxu0 0.0
    %2185 = vmatpush1.msra.mxu0 0.0
    %2186 = vmatprep.subr.mxu0 0.0
    %2187 = vmatpush1.msra.mxu0 0.0
    %2188 = vmatprep.subr.mxu0 0.0
    %2189 = vmatpush1.msra.mxu0 0.0
    %2190 = vmatprep.subr.mxu0 0.0
    %2191 = vmatpush1.msra.mxu0 0.0
    %2192 = vmatprep.subr.mxu0 0.0
    %2193 = vmatpush1.msra.mxu0 0.0
    %2194 = vmatprep.subr.mxu0 0.0
    %2195 = vmatpush1.msra.mxu0 0.0
    %2196 = vmatprep.subr.mxu0 0.0
    %2197 = vmatpush1.msra.mxu0 0.0
    %2198 = vmatprep.subr.mxu0 0.0
    %2199 = vmatpush1.msra.mxu0 0.0
    %2200 = vmatprep.subr.mxu0 0.0
    %2201 = vmatpush1.msra.mxu0 0.0
    %2202 = vmatprep.subr.mxu0 0.0
    %2203 = vmatpush1.msra.mxu0 0.0
    %2204 = vmatprep.mubr.f32.mxu0 0.0
    %2205 = vmatmul.mubr.f32.gmra.mrb[0].mxu0 %v2138
    %v2206 = vpop.f32.mrb[0].mxu0
    %v2207 = vadd.f32 0.0, %v2206
    %v2208 = vpop.f32.mrb[0].mxu0
    %v2209 = vadd.f32 0.0, %v2208
    %2210 = vdwg.mxu0
    %2211 = vmatprep.subr.mxu0 %v725
    %2212 = vmatpush1.msra.mxu0 %v724
    %2213 = vmatprep.subr.mxu0 %v729
    %2214 = vmatpush1.msra.mxu0 %v728
    %2215 = vmatprep.subr.mxu0 %v733
    %2216 = vmatpush1.msra.mxu0 %v732
    %2217 = vmatprep.subr.mxu0 %v737
    %2218 = vmatpush1.msra.mxu0 %v736
    %2219 = vmatprep.subr.mxu0 %v741
    %2220 = vmatpush1.msra.mxu0 %v740
    %2221 = vmatprep.subr.mxu0 %v745
    %2222 = vmatpush1.msra.mxu0 %v744
    %2223 = vmatprep.subr.mxu0 %v749
    %2224 = vmatpush1.msra.mxu0 %v748
    %2225 = vmatprep.subr.mxu0 %v753
    %2226 = vmatpush1.msra.mxu0 %v752
    %2227 = vmatprep.subr.mxu0 %v757
    %2228 = vmatpush1.msra.mxu0 %v756
    %2229 = vmatprep.subr.mxu0 %v761
    %2230 = vmatpush1.msra.mxu0 %v760
    %2231 = vmatprep.subr.mxu0 %v765
    %2232 = vmatpush1.msra.mxu0 %v764
    %2233 = vmatprep.subr.mxu0 %v769
    %2234 = vmatpush1.msra.mxu0 %v768
    %2235 = vmatprep.subr.mxu0 %v773
    %2236 = vmatpush1.msra.mxu0 %v772
    %2237 = vmatprep.subr.mxu0 %v777
    %2238 = vmatpush1.msra.mxu0 %v776
    %2239 = vmatprep.subr.mxu0 %v781
    %2240 = vmatpush1.msra.mxu0 %v780
    %2241 = vmatprep.subr.mxu0 %v785
    %2242 = vmatpush1.msra.mxu0 %v784
    %2243 = vmatprep.subr.mxu0 0.0
    %2244 = vmatpush1.msra.mxu0 0.0
    %2245 = vmatprep.subr.mxu0 0.0
    %2246 = vmatpush1.msra.mxu0 0.0
    %2247 = vmatprep.subr.mxu0 0.0
    %2248 = vmatpush1.msra.mxu0 0.0
    %2249 = vmatprep.subr.mxu0 0.0
    %2250 = vmatpush1.msra.mxu0 0.0
    %2251 = vmatprep.subr.mxu0 0.0
    %2252 = vmatpush1.msra.mxu0 0.0
    %2253 = vmatprep.subr.mxu0 0.0
    %2254 = vmatpush1.msra.mxu0 0.0
    %2255 = vmatprep.subr.mxu0 0.0
    %2256 = vmatpush1.msra.mxu0 0.0
    %2257 = vmatprep.subr.mxu0 0.0
    %2258 = vmatpush1.msra.mxu0 0.0
    %2259 = vmatprep.subr.mxu0 0.0
    %2260 = vmatpush1.msra.mxu0 0.0
    %2261 = vmatprep.subr.mxu0 0.0
    %2262 = vmatpush1.msra.mxu0 0.0
    %2263 = vmatprep.subr.mxu0 0.0
    %2264 = vmatpush1.msra.mxu0 0.0
    %2265 = vmatprep.subr.mxu0 0.0
    %2266 = vmatpush1.msra.mxu0 0.0
    %2267 = vmatprep.subr.mxu0 0.0
    %2268 = vmatpush1.msra.mxu0 0.0
    %2269 = vmatprep.subr.mxu0 0.0
    %2270 = vmatpush1.msra.mxu0 0.0
    %2271 = vmatprep.subr.mxu0 0.0
    %2272 = vmatpush1.msra.mxu0 0.0
    %2273 = vmatprep.subr.mxu0 0.0
    %2274 = vmatpush1.msra.mxu0 0.0
    %2275 = vmatprep.mubr.f32.mxu0 0.0
    %2276 = vmatmul.mubr.f32.gmra.mrb[0].mxu0 %v2138
    %v2277 = vpop.f32.mrb[0].mxu0
    %v2278 = vadd.f32 0.0, %v2277
    %v2279 = vpop.f32.mrb[0].mxu0
    %v2280 = vadd.f32 0.0, %v2279
    %2281 = vdwg.mxu0
    %v2282 = vadd.f32 %v2134, %v2207
    %v2283 = vadd.f32 %v2135, %v2209
    %v2284 = vadd.f32 %v2136, %v2278
    %v2285 = vadd.f32 %v2137, %v2280
    %v2286 = vxor.u32 %v2130, 2147483648
    %v2287 = vmul.f32 %v2286, 1.442695
    %v2288 = vpow.pop %v2287
    %v2289 = vadd.f32 %v2288, 1.0
    %v2290 = vrcp.pop %v2289
    %v2291 = vmul.f32 1.0, %v2290
    %v2292 = vxor.u32 %v2131, 2147483648
    %v2293 = vmul.f32 %v2292, 1.442695
    %v2294 = vpow.pop %v2293
    %v2295 = vadd.f32 %v2294, 1.0
    %v2296 = vrcp.pop %v2295
    %v2297 = vmul.f32 1.0, %v2296
    %v2298 = vtanh.pop %v2132
    %v2299 = vxor.u32 %v2133, 2147483648
    %v2300 = vmul.f32 %v2299, 1.442695
    %v2301 = vpow.pop %v2300
    %v2302 = vadd.f32 %v2301, 1.0
    %v2303 = vrcp.pop %v2302
    %v2304 = vmul.f32 1.0, %v2303
    %v2306 = vrot.slane %v1916, 6
    %v2308 = vmul.f32 %v2297, %v2306
    %v2309 = vmul.f32 %v2291, %v2298
    %v2310 = vadd.f32 %v2308, %v2309
    %v2311 = vtanh.pop %v2310
    %v2312 = vmul.f32 %v2304, %v2311
    %v2313 = vxor.u32 %v2282, 2147483648
    %v2314 = vmul.f32 %v2313, 1.442695
    %v2315 = vpow.pop %v2314
    %v2316 = vadd.f32 %v2315, 1.0
    %v2317 = vrcp.pop %v2316
    %v2318 = vmul.f32 1.0, %v2317
    %v2319 = vxor.u32 %v2283, 2147483648
    %v2320 = vmul.f32 %v2319, 1.442695
    %v2321 = vpow.pop %v2320
    %v2322 = vadd.f32 %v2321, 1.0
    %v2323 = vrcp.pop %v2322
    %v2324 = vmul.f32 1.0, %v2323
    %v2325 = vtanh.pop %v2284
    %v2326 = vxor.u32 %v2285, 2147483648
    %v2327 = vmul.f32 %v2326, 1.442695
    %v2328 = vpow.pop %v2327
    %v2329 = vadd.f32 %v2328, 1.0
    %v2330 = vrcp.pop %v2329
    %v2331 = vmul.f32 1.0, %v2330
    %v2333 = vrot.slane %v1943, 2
    %v2335 = vmul.f32 %v2324, %v2333
    %v2336 = vmul.f32 %v2318, %v2325
    %v2337 = vadd.f32 %v2335, %v2336
    %v2338 = vtanh.pop %v2337
    %v2339 = vmul.f32 %v2331, %v2338
    %v2341 = vcombine.high %v2312, %v2312
    %v2343 = vunpack.c.l.s4 1983009808
    %v2344 = vunpack.c.0.s8 %v2343
    %v2345 = vlaneseq
    %v2346 = vshrl.u32 %v2345, 7
    %v2347 = vsub.s32 %v2344, %v2346
    %v2348 = vrot.slane %v2341, %v2347
    %v2349 = vcombine.high %v2348, %v2348
    %s2351 = scalar_lea.vmem %s4, 12
    %2352 = vst [vmem:[%s2351] sm:$0x3] %v2349
    %s2353 = scalar_lea.vmem %s4, 16
    %2354 = vst [vmem:[%s2353 + $0x2] sm:$0x3] %v2339
    %v2355 = vld [vmem:[#allocation2 + $0x40] sm:$0x3]
    %v2356 = vld [vmem:[#allocation2 + $0x48] sm:$0x3]
    %v2357 = vld [vmem:[#allocation2 + $0x50] sm:$0x3]
    %v2358 = vld [vmem:[#allocation2 + $0x58] sm:$0x3]
    %v2359 = vrot.slane %v2312, 6
    %2361 = vmatprep.subr.mxu0 %v658
    %2362 = vmatpush1.msra.mxu0 %v657
    %2363 = vmatprep.subr.mxu0 %v662
    %2364 = vmatpush1.msra.mxu0 %v661
    %2365 = vmatprep.subr.mxu0 %v666
    %2366 = vmatpush1.msra.mxu0 %v665
    %2367 = vmatprep.subr.mxu0 %v670
    %2368 = vmatpush1.msra.mxu0 %v669
    %2369 = vmatprep.subr.mxu0 %v674
    %2370 = vmatpush1.msra.mxu0 %v673
    %2371 = vmatprep.subr.mxu0 %v678
    %2372 = vmatpush1.msra.mxu0 %v677
    %2373 = vmatprep.subr.mxu0 %v682
    %2374 = vmatpush1.msra.mxu0 %v681
    %2375 = vmatprep.subr.mxu0 %v686
    %2376 = vmatpush1.msra.mxu0 %v685
    %2377 = vmatprep.subr.mxu0 %v690
    %2378 = vmatpush1.msra.mxu0 %v689
    %2379 = vmatprep.subr.mxu0 %v694
    %2380 = vmatpush1.msra.mxu0 %v693
    %2381 = vmatprep.subr.mxu0 %v698
    %2382 = vmatpush1.msra.mxu0 %v697
    %2383 = vmatprep.subr.mxu0 %v702
    %2384 = vmatpush1.msra.mxu0 %v701
    %2385 = vmatprep.subr.mxu0 %v706
    %2386 = vmatpush1.msra.mxu0 %v705
    %2387 = vmatprep.subr.mxu0 %v710
    %2388 = vmatpush1.msra.mxu0 %v709
    %2389 = vmatprep.subr.mxu0 %v714
    %2390 = vmatpush1.msra.mxu0 %v713
    %2391 = vmatprep.subr.mxu0 %v718
    %2392 = vmatpush1.msra.mxu0 %v717
    %2393 = vmatprep.subr.mxu0 0.0
    %2394 = vmatpush1.msra.mxu0 0.0
    %2395 = vmatprep.subr.mxu0 0.0
    %2396 = vmatpush1.msra.mxu0 0.0
    %2397 = vmatprep.subr.mxu0 0.0
    %2398 = vmatpush1.msra.mxu0 0.0
    %2399 = vmatprep.subr.mxu0 0.0
    %2400 = vmatpush1.msra.mxu0 0.0
    %2401 = vmatprep.subr.mxu0 0.0
    %2402 = vmatpush1.msra.mxu0 0.0
    %2403 = vmatprep.subr.mxu0 0.0
    %2404 = vmatpush1.msra.mxu0 0.0
    %2405 = vmatprep.subr.mxu0 0.0
    %2406 = vmatpush1.msra.mxu0 0.0
    %2407 = vmatprep.subr.mxu0 0.0
    %2408 = vmatpush1.msra.mxu0 0.0
    %2409 = vmatprep.subr.mxu0 0.0
    %2410 = vmatpush1.msra.mxu0 0.0
    %2411 = vmatprep.subr.mxu0 0.0
    %2412 = vmatpush1.msra.mxu0 0.0
    %2413 = vmatprep.subr.mxu0 0.0
    %2414 = vmatpush1.msra.mxu0 0.0
    %2415 = vmatprep.subr.mxu0 0.0
    %2416 = vmatpush1.msra.mxu0 0.0
    %2417 = vmatprep.subr.mxu0 0.0
    %2418 = vmatpush1.msra.mxu0 0.0
    %2419 = vmatprep.subr.mxu0 0.0
    %2420 = vmatpush1.msra.mxu0 0.0
    %2421 = vmatprep.subr.mxu0 0.0
    %2422 = vmatpush1.msra.mxu0 0.0
    %2423 = vmatprep.subr.mxu0 0.0
    %2424 = vmatpush1.msra.mxu0 0.0
    %2425 = vmatprep.mubr.f32.mxu0 0.0
    %2426 = vmatmul.mubr.f32.gmra.mrb[0].mxu0 %v2359
    %v2427 = vpop.f32.mrb[0].mxu0
    %v2428 = vadd.f32 0.0, %v2427
    %v2429 = vpop.f32.mrb[0].mxu0
    %v2430 = vadd.f32 0.0, %v2429
    %2431 = vdwg.mxu0
    %2432 = vmatprep.subr.mxu0 %v660
    %2433 = vmatpush1.msra.mxu0 %v659
    %2434 = vmatprep.subr.mxu0 %v664
    %2435 = vmatpush1.msra.mxu0 %v663
    %2436 = vmatprep.subr.mxu0 %v668
    %2437 = vmatpush1.msra.mxu0 %v667
    %2438 = vmatprep.subr.mxu0 %v672
    %2439 = vmatpush1.msra.mxu0 %v671
    %2440 = vmatprep.subr.mxu0 %v676
    %2441 = vmatpush1.msra.mxu0 %v675
    %2442 = vmatprep.subr.mxu0 %v680
    %2443 = vmatpush1.msra.mxu0 %v679
    %2444 = vmatprep.subr.mxu0 %v684
    %2445 = vmatpush1.msra.mxu0 %v683
    %2446 = vmatprep.subr.mxu0 %v688
    %2447 = vmatpush1.msra.mxu0 %v687
    %2448 = vmatprep.subr.mxu0 %v692
    %2449 = vmatpush1.msra.mxu0 %v691
    %2450 = vmatprep.subr.mxu0 %v696
    %2451 = vmatpush1.msra.mxu0 %v695
    %2452 = vmatprep.subr.mxu0 %v700
    %2453 = vmatpush1.msra.mxu0 %v699
    %2454 = vmatprep.subr.mxu0 %v704
    %2455 = vmatpush1.msra.mxu0 %v703
    %2456 = vmatprep.subr.mxu0 %v708
    %2457 = vmatpush1.msra.mxu0 %v707
    %2458 = vmatprep.subr.mxu0 %v712
    %2459 = vmatpush1.msra.mxu0 %v711
    %2460 = vmatprep.subr.mxu0 %v716
    %2461 = vmatpush1.msra.mxu0 %v715
    %2462 = vmatprep.subr.mxu0 %v720
    %2463 = vmatpush1.msra.mxu0 %v719
    %2464 = vmatprep.subr.mxu0 0.0
    %2465 = vmatpush1.msra.mxu0 0.0
    %2466 = vmatprep.subr.mxu0 0.0
    %2467 = vmatpush1.msra.mxu0 0.0
    %2468 = vmatprep.subr.mxu0 0.0
    %2469 = vmatpush1.msra.mxu0 0.0
    %2470 = vmatprep.subr.mxu0 0.0
    %2471 = vmatpush1.msra.mxu0 0.0
    %2472 = vmatprep.subr.mxu0 0.0
    %2473 = vmatpush1.msra.mxu0 0.0
    %2474 = vmatprep.subr.mxu0 0.0
    %2475 = vmatpush1.msra.mxu0 0.0
    %2476 = vmatprep.subr.mxu0 0.0
    %2477 = vmatpush1.msra.mxu0 0.0
    %2478 = vmatprep.subr.mxu0 0.0
    %2479 = vmatpush1.msra.mxu0 0.0
    %2480 = vmatprep.subr.mxu0 0.0
    %2481 = vmatpush1.msra.mxu0 0.0
    %2482 = vmatprep.subr.mxu0 0.0
    %2483 = vmatpush1.msra.mxu0 0.0
    %2484 = vmatprep.subr.mxu0 0.0
    %2485 = vmatpush1.msra.mxu0 0.0
    %2486 = vmatprep.subr.mxu0 0.0
    %2487 = vmatpush1.msra.mxu0 0.0
    %2488 = vmatprep.subr.mxu0 0.0
    %2489 = vmatpush1.msra.mxu0 0.0
    %2490 = vmatprep.subr.mxu0 0.0
    %2491 = vmatpush1.msra.mxu0 0.0
    %2492 = vmatprep.subr.mxu0 0.0
    %2493 = vmatpush1.msra.mxu0 0.0
    %2494 = vmatprep.subr.mxu0 0.0
    %2495 = vmatpush1.msra.mxu0 0.0
    %2496 = vmatprep.mubr.f32.mxu0 0.0
    %2497 = vmatmul.mubr.f32.gmra.mrb[0].mxu0 %v2359
    %v2498 = vpop.f32.mrb[0].mxu0
    %v2499 = vadd.f32 0.0, %v2498
    %v2500 = vpop.f32.mrb[0].mxu0
    %v2501 = vadd.f32 0.0, %v2500
    %2502 = vdwg.mxu0
    %v2503 = vadd.f32 %v2355, %v2428
    %v2504 = vadd.f32 %v2356, %v2430
    %v2505 = vadd.f32 %v2357, %v2499
    %v2506 = vadd.f32 %v2358, %v2501
    %v2507 = vld [vmem:[#allocation2 + $0x20] sm:$0xc0]
    %v2508 = vld [vmem:[#allocation2 + $0x28] sm:$0xc0]
    %v2509 = vld [vmem:[#allocation2 + $0x30] sm:$0xc0]
    %v2510 = vld [vmem:[#allocation2 + $0x38] sm:$0xc0]
    %2511 = vmatprep.subr.mxu0 %v723
    %2512 = vmatpush1.msra.mxu0 %v722
    %2513 = vmatprep.subr.mxu0 %v727
    %2514 = vmatpush1.msra.mxu0 %v726
    %2515 = vmatprep.subr.mxu0 %v731
    %2516 = vmatpush1.msra.mxu0 %v730
    %2517 = vmatprep.subr.mxu0 %v735
    %2518 = vmatpush1.msra.mxu0 %v734
    %2519 = vmatprep.subr.mxu0 %v739
    %2520 = vmatpush1.msra.mxu0 %v738
    %2521 = vmatprep.subr.mxu0 %v743
    %2522 = vmatpush1.msra.mxu0 %v742
    %2523 = vmatprep.subr.mxu0 %v747
    %2524 = vmatpush1.msra.mxu0 %v746
    %2525 = vmatprep.subr.mxu0 %v751
    %2526 = vmatpush1.msra.mxu0 %v750
    %2527 = vmatprep.subr.mxu0 %v755
    %2528 = vmatpush1.msra.mxu0 %v754
    %2529 = vmatprep.subr.mxu0 %v759
    %2530 = vmatpush1.msra.mxu0 %v758
    %2531 = vmatprep.subr.mxu0 %v763
    %2532 = vmatpush1.msra.mxu0 %v762
    %2533 = vmatprep.subr.mxu0 %v767
    %2534 = vmatpush1.msra.mxu0 %v766
    %2535 = vmatprep.subr.mxu0 %v771
    %2536 = vmatpush1.msra.mxu0 %v770
    %2537 = vmatprep.subr.mxu0 %v775
    %2538 = vmatpush1.msra.mxu0 %v774
    %2539 = vmatprep.subr.mxu0 %v779
    %2540 = vmatpush1.msra.mxu0 %v778
    %2541 = vmatprep.subr.mxu0 %v783
    %2542 = vmatpush1.msra.mxu0 %v782
    %2543 = vmatprep.subr.mxu0 0.0
    %2544 = vmatpush1.msra.mxu0 0.0
    %2545 = vmatprep.subr.mxu0 0.0
    %2546 = vmatpush1.msra.mxu0 0.0
    %2547 = vmatprep.subr.mxu0 0.0
    %2548 = vmatpush1.msra.mxu0 0.0
    %2549 = vmatprep.subr.mxu0 0.0
    %2550 = vmatpush1.msra.mxu0 0.0
    %2551 = vmatprep.subr.mxu0 0.0
    %2552 = vmatpush1.msra.mxu0 0.0
    %2553 = vmatprep.subr.mxu0 0.0
    %2554 = vmatpush1.msra.mxu0 0.0
    %2555 = vmatprep.subr.mxu0 0.0
    %2556 = vmatpush1.msra.mxu0 0.0
    %2557 = vmatprep.subr.mxu0 0.0
    %2558 = vmatpush1.msra.mxu0 0.0
    %2559 = vmatprep.subr.mxu0 0.0
    %2560 = vmatpush1.msra.mxu0 0.0
    %2561 = vmatprep.subr.mxu0 0.0
    %2562 = vmatpush1.msra.mxu0 0.0
    %2563 = vmatprep.subr.mxu0 0.0
    %2564 = vmatpush1.msra.mxu0 0.0
    %2565 = vmatprep.subr.mxu0 0.0
    %2566 = vmatpush1.msra.mxu0 0.0
    %2567 = vmatprep.subr.mxu0 0.0
    %2568 = vmatpush1.msra.mxu0 0.0
    %2569 = vmatprep.subr.mxu0 0.0
    %2570 = vmatpush1.msra.mxu0 0.0
    %2571 = vmatprep.subr.mxu0 0.0
    %2572 = vmatpush1.msra.mxu0 0.0
    %2573 = vmatprep.subr.mxu0 0.0
    %2574 = vmatpush1.msra.mxu0 0.0
    %2575 = vmatprep.mubr.f32.mxu0 0.0
    %2576 = vmatmul.mubr.f32.gmra.mrb[0].mxu0 %v2339
    %v2577 = vpop.f32.mrb[0].mxu0
    %v2578 = vadd.f32 0.0, %v2577
    %v2579 = vpop.f32.mrb[0].mxu0
    %v2580 = vadd.f32 0.0, %v2579
    %2581 = vdwg.mxu0
    %2582 = vmatprep.subr.mxu0 %v725
    %2583 = vmatpush1.msra.mxu0 %v724
    %2584 = vmatprep.subr.mxu0 %v729
    %2585 = vmatpush1.msra.mxu0 %v728
    %2586 = vmatprep.subr.mxu0 %v733
    %2587 = vmatpush1.msra.mxu0 %v732
    %2588 = vmatprep.subr.mxu0 %v737
    %2589 = vmatpush1.msra.mxu0 %v736
    %2590 = vmatprep.subr.mxu0 %v741
    %2591 = vmatpush1.msra.mxu0 %v740
    %2592 = vmatprep.subr.mxu0 %v745
    %2593 = vmatpush1.msra.mxu0 %v744
    %2594 = vmatprep.subr.mxu0 %v749
    %2595 = vmatpush1.msra.mxu0 %v748
    %2596 = vmatprep.subr.mxu0 %v753
    %2597 = vmatpush1.msra.mxu0 %v752
    %2598 = vmatprep.subr.mxu0 %v757
    %2599 = vmatpush1.msra.mxu0 %v756
    %2600 = vmatprep.subr.mxu0 %v761
    %2601 = vmatpush1.msra.mxu0 %v760
    %2602 = vmatprep.subr.mxu0 %v765
    %2603 = vmatpush1.msra.mxu0 %v764
    %2604 = vmatprep.subr.mxu0 %v769
    %2605 = vmatpush1.msra.mxu0 %v768
    %2606 = vmatprep.subr.mxu0 %v773
    %2607 = vmatpush1.msra.mxu0 %v772
    %2608 = vmatprep.subr.mxu0 %v777
    %2609 = vmatpush1.msra.mxu0 %v776
    %2610 = vmatprep.subr.mxu0 %v781
    %2611 = vmatpush1.msra.mxu0 %v780
    %2612 = vmatprep.subr.mxu0 %v785
    %2613 = vmatpush1.msra.mxu0 %v784
    %2614 = vmatprep.subr.mxu0 0.0
    %2615 = vmatpush1.msra.mxu0 0.0
    %2616 = vmatprep.subr.mxu0 0.0
    %2617 = vmatpush1.msra.mxu0 0.0
    %2618 = vmatprep.subr.mxu0 0.0
    %2619 = vmatpush1.msra.mxu0 0.0
    %2620 = vmatprep.subr.mxu0 0.0
    %2621 = vmatpush1.msra.mxu0 0.0
    %2622 = vmatprep.subr.mxu0 0.0
    %2623 = vmatpush1.msra.mxu0 0.0
    %2624 = vmatprep.subr.mxu0 0.0
    %2625 = vmatpush1.msra.mxu0 0.0
    %2626 = vmatprep.subr.mxu0 0.0
    %2627 = vmatpush1.msra.mxu0 0.0
    %2628 = vmatprep.subr.mxu0 0.0
    %2629 = vmatpush1.msra.mxu0 0.0
    %2630 = vmatprep.subr.mxu0 0.0
    %2631 = vmatpush1.msra.mxu0 0.0
    %2632 = vmatprep.subr.mxu0 0.0
    %2633 = vmatpush1.msra.mxu0 0.0
    %2634 = vmatprep.subr.mxu0 0.0
    %2635 = vmatpush1.msra.mxu0 0.0
    %2636 = vmatprep.subr.mxu0 0.0
    %2637 = vmatpush1.msra.mxu0 0.0
    %2638 = vmatprep.subr.mxu0 0.0
    %2639 = vmatpush1.msra.mxu0 0.0
    %2640 = vmatprep.subr.mxu0 0.0
    %2641 = vmatpush1.msra.mxu0 0.0
    %2642 = vmatprep.subr.mxu0 0.0
    %2643 = vmatpush1.msra.mxu0 0.0
    %2644 = vmatprep.subr.mxu0 0.0
    %2645 = vmatpush1.msra.mxu0 0.0
    %2646 = vmatprep.mubr.f32.mxu0 0.0
    %2647 = vmatmul.mubr.f32.gmra.mrb[0].mxu0 %v2339
    %v2648 = vpop.f32.mrb[0].mxu0
    %v2649 = vadd.f32 0.0, %v2648
    %v2650 = vpop.f32.mrb[0].mxu0
    %v2651 = vadd.f32 0.0, %v2650
    %2652 = vdwg.mxu0
    %v2657 = vrot.slane %v2578, 2
    %v2658 = vrot.slane %v2580, 2
    %v2659 = vrot.slane %v2649, 2
    %v2660 = vrot.slane %v2651, 2
    %v2665 = vadd.f32 %v2507, %v2657
    %v2666 = vadd.f32 %v2508, %v2658
    %v2667 = vadd.f32 %v2509, %v2659
    %v2668 = vadd.f32 %v2510, %v2660
    %v2669 = vxor.u32 %v2503, 2147483648
    %v2670 = vmul.f32 %v2669, 1.442695
    %v2671 = vpow.pop %v2670
    %v2672 = vadd.f32 %v2671, 1.0
    %v2673 = vrcp.pop %v2672
    %v2674 = vmul.f32 1.0, %v2673
    %v2675 = vxor.u32 %v2504, 2147483648
    %v2676 = vmul.f32 %v2675, 1.442695
    %v2677 = vpow.pop %v2676
    %v2678 = vadd.f32 %v2677, 1.0
    %v2679 = vrcp.pop %v2678
    %v2680 = vmul.f32 1.0, %v2679
    %v2681 = vtanh.pop %v2505
    %v2682 = vxor.u32 %v2506, 2147483648
    %v2683 = vmul.f32 %v2682, 1.442695
    %v2684 = vpow.pop %v2683
    %v2685 = vadd.f32 %v2684, 1.0
    %v2686 = vrcp.pop %v2685
    %v2687 = vmul.f32 1.0, %v2686
    %v2689 = vrot.slane %v2310, 6
    %v2691 = vmul.f32 %v2680, %v2689
    %v2692 = vmul.f32 %v2674, %v2681
    %v2693 = vadd.f32 %v2691, %v2692
    %v2694 = vtanh.pop %v2693
    %v2695 = vmul.f32 %v2687, %v2694
    %v2696 = vxor.u32 %v2665, 2147483648
    %v2697 = vmul.f32 %v2696, 1.442695
    %v2698 = vpow.pop %v2697
    %v2699 = vadd.f32 %v2698, 1.0
    %v2700 = vrcp.pop %v2699
    %v2701 = vmul.f32 1.0, %v2700
    %v2702 = vxor.u32 %v2666, 2147483648
    %v2703 = vmul.f32 %v2702, 1.442695
    %v2704 = vpow.pop %v2703
    %v2705 = vadd.f32 %v2704, 1.0
    %v2706 = vrcp.pop %v2705
    %v2707 = vmul.f32 1.0, %v2706
    %v2708 = vtanh.pop %v2667
    %v2709 = vxor.u32 %v2668, 2147483648
    %v2710 = vmul.f32 %v2709, 1.442695
    %v2711 = vpow.pop %v2710
    %v2712 = vadd.f32 %v2711, 1.0
    %v2713 = vrcp.pop %v2712
    %v2714 = vmul.f32 1.0, %v2713
    %v2716 = vrot.slane %v2337, 2
    %v2718 = vmul.f32 %v2707, %v2716
    %v2719 = vmul.f32 %v2701, %v2708
    %v2720 = vadd.f32 %v2718, %v2719
    %v2721 = vtanh.pop %v2720
    %v2722 = vmul.f32 %v2714, %v2721
    %2723 = vst [vmem:[%s2353] sm:$0x3] %v2695
    %v2725 = vcombine.high %v2722, %v2722
    %v2727 = vunpack.c.l.s4 1983009808
    %v2728 = vunpack.c.0.s8 %v2727
    %v2729 = vlaneseq
    %v2730 = vshrl.u32 %v2729, 7
    %v2731 = vsub.s32 %v2728, %v2730
    %v2732 = vrot.slane %v2725, %v2731
    %v2733 = vcombine.high %v2732, %v2732
    %2735 = vst [vmem:[%s2351 + $0x2] sm:$0x3] %v2733
    %v2736 = vld [vmem:[#allocation2 + $0x40] sm:$0xc]
    %v2737 = vld [vmem:[#allocation2 + $0x48] sm:$0xc]
    %v2738 = vld [vmem:[#allocation2 + $0x50] sm:$0xc]
    %v2739 = vld [vmem:[#allocation2 + $0x58] sm:$0xc]
    %2740 = vmatprep.subr.mxu0 %v658
    %2741 = vmatpush1.msra.mxu0 %v657
    %2742 = vmatprep.subr.mxu0 %v662
    %2743 = vmatpush1.msra.mxu0 %v661
    %2744 = vmatprep.subr.mxu0 %v666
    %2745 = vmatpush1.msra.mxu0 %v665
    %2746 = vmatprep.subr.mxu0 %v670
    %2747 = vmatpush1.msra.mxu0 %v669
    %2748 = vmatprep.subr.mxu0 %v674
    %2749 = vmatpush1.msra.mxu0 %v673
    %2750 = vmatprep.subr.mxu0 %v678
    %2751 = vmatpush1.msra.mxu0 %v677
    %2752 = vmatprep.subr.mxu0 %v682
    %2753 = vmatpush1.msra.mxu0 %v681
    %2754 = vmatprep.subr.mxu0 %v686
    %2755 = vmatpush1.msra.mxu0 %v685
    %2756 = vmatprep.subr.mxu0 %v690
    %2757 = vmatpush1.msra.mxu0 %v689
    %2758 = vmatprep.subr.mxu0 %v694
    %2759 = vmatpush1.msra.mxu0 %v693
    %2760 = vmatprep.subr.mxu0 %v698
    %2761 = vmatpush1.msra.mxu0 %v697
    %2762 = vmatprep.subr.mxu0 %v702
    %2763 = vmatpush1.msra.mxu0 %v701
    %2764 = vmatprep.subr.mxu0 %v706
    %2765 = vmatpush1.msra.mxu0 %v705
    %2766 = vmatprep.subr.mxu0 %v710
    %2767 = vmatpush1.msra.mxu0 %v709
    %2768 = vmatprep.subr.mxu0 %v714
    %2769 = vmatpush1.msra.mxu0 %v713
    %2770 = vmatprep.subr.mxu0 %v718
    %2771 = vmatpush1.msra.mxu0 %v717
    %2772 = vmatprep.subr.mxu0 0.0
    %2773 = vmatpush1.msra.mxu0 0.0
    %2774 = vmatprep.subr.mxu0 0.0
    %2775 = vmatpush1.msra.mxu0 0.0
    %2776 = vmatprep.subr.mxu0 0.0
    %2777 = vmatpush1.msra.mxu0 0.0
    %2778 = vmatprep.subr.mxu0 0.0
    %2779 = vmatpush1.msra.mxu0 0.0
    %2780 = vmatprep.subr.mxu0 0.0
    %2781 = vmatpush1.msra.mxu0 0.0
    %2782 = vmatprep.subr.mxu0 0.0
    %2783 = vmatpush1.msra.mxu0 0.0
    %2784 = vmatprep.subr.mxu0 0.0
    %2785 = vmatpush1.msra.mxu0 0.0
    %2786 = vmatprep.subr.mxu0 0.0
    %2787 = vmatpush1.msra.mxu0 0.0
    %2788 = vmatprep.subr.mxu0 0.0
    %2789 = vmatpush1.msra.mxu0 0.0
    %2790 = vmatprep.subr.mxu0 0.0
    %2791 = vmatpush1.msra.mxu0 0.0
    %2792 = vmatprep.subr.mxu0 0.0
    %2793 = vmatpush1.msra.mxu0 0.0
    %2794 = vmatprep.subr.mxu0 0.0
    %2795 = vmatpush1.msra.mxu0 0.0
    %2796 = vmatprep.subr.mxu0 0.0
    %2797 = vmatpush1.msra.mxu0 0.0
    %2798 = vmatprep.subr.mxu0 0.0
    %2799 = vmatpush1.msra.mxu0 0.0
    %2800 = vmatprep.subr.mxu0 0.0
    %2801 = vmatpush1.msra.mxu0 0.0
    %2802 = vmatprep.subr.mxu0 0.0
    %2803 = vmatpush1.msra.mxu0 0.0
    %2804 = vmatprep.mubr.f32.mxu0 0.0
    %2805 = vmatmul.mubr.f32.gmra.mrb[0].mxu0 %v2695
    %v2806 = vpop.f32.mrb[0].mxu0
    %v2807 = vadd.f32 0.0, %v2806
    %v2808 = vpop.f32.mrb[0].mxu0
    %v2809 = vadd.f32 0.0, %v2808
    %2810 = vdwg.mxu0
    %2811 = vmatprep.subr.mxu0 %v660
    %2812 = vmatpush1.msra.mxu0 %v659
    %2813 = vmatprep.subr.mxu0 %v664
    %2814 = vmatpush1.msra.mxu0 %v663
    %2815 = vmatprep.subr.mxu0 %v668
    %2816 = vmatpush1.msra.mxu0 %v667
    %2817 = vmatprep.subr.mxu0 %v672
    %2818 = vmatpush1.msra.mxu0 %v671
    %2819 = vmatprep.subr.mxu0 %v676
    %2820 = vmatpush1.msra.mxu0 %v675
    %2821 = vmatprep.subr.mxu0 %v680
    %2822 = vmatpush1.msra.mxu0 %v679
    %2823 = vmatprep.subr.mxu0 %v684
    %2824 = vmatpush1.msra.mxu0 %v683
    %2825 = vmatprep.subr.mxu0 %v688
    %2826 = vmatpush1.msra.mxu0 %v687
    %2827 = vmatprep.subr.mxu0 %v692
    %2828 = vmatpush1.msra.mxu0 %v691
    %2829 = vmatprep.subr.mxu0 %v696
    %2830 = vmatpush1.msra.mxu0 %v695
    %2831 = vmatprep.subr.mxu0 %v700
    %2832 = vmatpush1.msra.mxu0 %v699
    %2833 = vmatprep.subr.mxu0 %v704
    %2834 = vmatpush1.msra.mxu0 %v703
    %2835 = vmatprep.subr.mxu0 %v708
    %2836 = vmatpush1.msra.mxu0 %v707
    %2837 = vmatprep.subr.mxu0 %v712
    %2838 = vmatpush1.msra.mxu0 %v711
    %2839 = vmatprep.subr.mxu0 %v716
    %2840 = vmatpush1.msra.mxu0 %v715
    %2841 = vmatprep.subr.mxu0 %v720
    %2842 = vmatpush1.msra.mxu0 %v719
    %2843 = vmatprep.subr.mxu0 0.0
    %2844 = vmatpush1.msra.mxu0 0.0
    %2845 = vmatprep.subr.mxu0 0.0
    %2846 = vmatpush1.msra.mxu0 0.0
    %2847 = vmatprep.subr.mxu0 0.0
    %2848 = vmatpush1.msra.mxu0 0.0
    %2849 = vmatprep.subr.mxu0 0.0
    %2850 = vmatpush1.msra.mxu0 0.0
    %2851 = vmatprep.subr.mxu0 0.0
    %2852 = vmatpush1.msra.mxu0 0.0
    %2853 = vmatprep.subr.mxu0 0.0
    %2854 = vmatpush1.msra.mxu0 0.0
    %2855 = vmatprep.subr.mxu0 0.0
    %2856 = vmatpush1.msra.mxu0 0.0
    %2857 = vmatprep.subr.mxu0 0.0
    %2858 = vmatpush1.msra.mxu0 0.0
    %2859 = vmatprep.subr.mxu0 0.0
    %2860 = vmatpush1.msra.mxu0 0.0
    %2861 = vmatprep.subr.mxu0 0.0
    %2862 = vmatpush1.msra.mxu0 0.0
    %2863 = vmatprep.subr.mxu0 0.0
    %2864 = vmatpush1.msra.mxu0 0.0
    %2865 = vmatprep.subr.mxu0 0.0
    %2866 = vmatpush1.msra.mxu0 0.0
    %2867 = vmatprep.subr.mxu0 0.0
    %2868 = vmatpush1.msra.mxu0 0.0
    %2869 = vmatprep.subr.mxu0 0.0
    %2870 = vmatpush1.msra.mxu0 0.0
    %2871 = vmatprep.subr.mxu0 0.0
    %2872 = vmatpush1.msra.mxu0 0.0
    %2873 = vmatprep.subr.mxu0 0.0
    %2874 = vmatpush1.msra.mxu0 0.0
    %2875 = vmatprep.mubr.f32.mxu0 0.0
    %2876 = vmatmul.mubr.f32.gmra.mrb[0].mxu0 %v2695
    %v2877 = vpop.f32.mrb[0].mxu0
    %v2878 = vadd.f32 0.0, %v2877
    %v2879 = vpop.f32.mrb[0].mxu0
    %v2880 = vadd.f32 0.0, %v2879
    %2881 = vdwg.mxu0
    %v2886 = vrot.slane %v2807, 6
    %v2887 = vrot.slane %v2809, 6
    %v2888 = vrot.slane %v2878, 6
    %v2889 = vrot.slane %v2880, 6
    %v2894 = vadd.f32 %v2736, %v2886
    %v2895 = vadd.f32 %v2737, %v2887
    %v2896 = vadd.f32 %v2738, %v2888
    %v2897 = vadd.f32 %v2739, %v2889
    %v2898 = vld [vmem:[#allocation2 + $0x20] sm:$0x30]
    %v2899 = vld [vmem:[#allocation2 + $0x28] sm:$0x30]
    %v2900 = vld [vmem:[#allocation2 + $0x30] sm:$0x30]
    %v2901 = vld [vmem:[#allocation2 + $0x38] sm:$0x30]
    %v2902 = vrot.slane %v2722, 6
    %2904 = vmatprep.subr.mxu0 %v723
    %2905 = vmatpush1.msra.mxu0 %v722
    %2906 = vmatprep.subr.mxu0 %v727
    %2907 = vmatpush1.msra.mxu0 %v726
    %2908 = vmatprep.subr.mxu0 %v731
    %2909 = vmatpush1.msra.mxu0 %v730
    %2910 = vmatprep.subr.mxu0 %v735
    %2911 = vmatpush1.msra.mxu0 %v734
    %2912 = vmatprep.subr.mxu0 %v739
    %2913 = vmatpush1.msra.mxu0 %v738
    %2914 = vmatprep.subr.mxu0 %v743
    %2915 = vmatpush1.msra.mxu0 %v742
    %2916 = vmatprep.subr.mxu0 %v747
    %2917 = vmatpush1.msra.mxu0 %v746
    %2918 = vmatprep.subr.mxu0 %v751
    %2919 = vmatpush1.msra.mxu0 %v750
    %2920 = vmatprep.subr.mxu0 %v755
    %2921 = vmatpush1.msra.mxu0 %v754
    %2922 = vmatprep.subr.mxu0 %v759
    %2923 = vmatpush1.msra.mxu0 %v758
    %2924 = vmatprep.subr.mxu0 %v763
    %2925 = vmatpush1.msra.mxu0 %v762
    %2926 = vmatprep.subr.mxu0 %v767
    %2927 = vmatpush1.msra.mxu0 %v766
    %2928 = vmatprep.subr.mxu0 %v771
    %2929 = vmatpush1.msra.mxu0 %v770
    %2930 = vmatprep.subr.mxu0 %v775
    %2931 = vmatpush1.msra.mxu0 %v774
    %2932 = vmatprep.subr.mxu0 %v779
    %2933 = vmatpush1.msra.mxu0 %v778
    %2934 = vmatprep.subr.mxu0 %v783
    %2935 = vmatpush1.msra.mxu0 %v782
    %2936 = vmatprep.subr.mxu0 0.0
    %2937 = vmatpush1.msra.mxu0 0.0
    %2938 = vmatprep.subr.mxu0 0.0
    %2939 = vmatpush1.msra.mxu0 0.0
    %2940 = vmatprep.subr.mxu0 0.0
    %2941 = vmatpush1.msra.mxu0 0.0
    %2942 = vmatprep.subr.mxu0 0.0
    %2943 = vmatpush1.msra.mxu0 0.0
    %2944 = vmatprep.subr.mxu0 0.0
    %2945 = vmatpush1.msra.mxu0 0.0
    %2946 = vmatprep.subr.mxu0 0.0
    %2947 = vmatpush1.msra.mxu0 0.0
    %2948 = vmatprep.subr.mxu0 0.0
    %2949 = vmatpush1.msra.mxu0 0.0
    %2950 = vmatprep.subr.mxu0 0.0
    %2951 = vmatpush1.msra.mxu0 0.0
    %2952 = vmatprep.subr.mxu0 0.0
    %2953 = vmatpush1.msra.mxu0 0.0
    %2954 = vmatprep.subr.mxu0 0.0
    %2955 = vmatpush1.msra.mxu0 0.0
    %2956 = vmatprep.subr.mxu0 0.0
    %2957 = vmatpush1.msra.mxu0 0.0
    %2958 = vmatprep.subr.mxu0 0.0
    %2959 = vmatpush1.msra.mxu0 0.0
    %2960 = vmatprep.subr.mxu0 0.0
    %2961 = vmatpush1.msra.mxu0 0.0
    %2962 = vmatprep.subr.mxu0 0.0
    %2963 = vmatpush1.msra.mxu0 0.0
    %2964 = vmatprep.subr.mxu0 0.0
    %2965 = vmatpush1.msra.mxu0 0.0
    %2966 = vmatprep.subr.mxu0 0.0
    %2967 = vmatpush1.msra.mxu0 0.0
    %2968 = vmatprep.mubr.f32.mxu0 0.0
    %2969 = vmatmul.mubr.f32.gmra.mrb[0].mxu0 %v2902
    %v2970 = vpop.f32.mrb[0].mxu0
    %v2971 = vadd.f32 0.0, %v2970
    %v2972 = vpop.f32.mrb[0].mxu0
    %v2973 = vadd.f32 0.0, %v2972
    %2974 = vdwg.mxu0
    %2975 = vmatprep.subr.mxu0 %v725
    %2976 = vmatpush1.msra.mxu0 %v724
    %2977 = vmatprep.subr.mxu0 %v729
    %2978 = vmatpush1.msra.mxu0 %v728
    %2979 = vmatprep.subr.mxu0 %v733
    %2980 = vmatpush1.msra.mxu0 %v732
    %2981 = vmatprep.subr.mxu0 %v737
    %2982 = vmatpush1.msra.mxu0 %v736
    %2983 = vmatprep.subr.mxu0 %v741
    %2984 = vmatpush1.msra.mxu0 %v740
    %2985 = vmatprep.subr.mxu0 %v745
    %2986 = vmatpush1.msra.mxu0 %v744
    %2987 = vmatprep.subr.mxu0 %v749
    %2988 = vmatpush1.msra.mxu0 %v748
    %2989 = vmatprep.subr.mxu0 %v753
    %2990 = vmatpush1.msra.mxu0 %v752
    %2991 = vmatprep.subr.mxu0 %v757
    %2992 = vmatpush1.msra.mxu0 %v756
    %2993 = vmatprep.subr.mxu0 %v761
    %2994 = vmatpush1.msra.mxu0 %v760
    %2995 = vmatprep.subr.mxu0 %v765
    %2996 = vmatpush1.msra.mxu0 %v764
    %2997 = vmatprep.subr.mxu0 %v769
    %2998 = vmatpush1.msra.mxu0 %v768
    %2999 = vmatprep.subr.mxu0 %v773
    %3000 = vmatpush1.msra.mxu0 %v772
    %3001 = vmatprep.subr.mxu0 %v777
    %3002 = vmatpush1.msra.mxu0 %v776
    %3003 = vmatprep.subr.mxu0 %v781
    %3004 = vmatpush1.msra.mxu0 %v780
    %3005 = vmatprep.subr.mxu0 %v785
    %3006 = vmatpush1.msra.mxu0 %v784
    %3007 = vmatprep.subr.mxu0 0.0
    %3008 = vmatpush1.msra.mxu0 0.0
    %3009 = vmatprep.subr.mxu0 0.0
    %3010 = vmatpush1.msra.mxu0 0.0
    %3011 = vmatprep.subr.mxu0 0.0
    %3012 = vmatpush1.msra.mxu0 0.0
    %3013 = vmatprep.subr.mxu0 0.0
    %3014 = vmatpush1.msra.mxu0 0.0
    %3015 = vmatprep.subr.mxu0 0.0
    %3016 = vmatpush1.msra.mxu0 0.0
    %3017 = vmatprep.subr.mxu0 0.0
    %3018 = vmatpush1.msra.mxu0 0.0
    %3019 = vmatprep.subr.mxu0 0.0
    %3020 = vmatpush1.msra.mxu0 0.0
    %3021 = vmatprep.subr.mxu0 0.0
    %3022 = vmatpush1.msra.mxu0 0.0
    %3023 = vmatprep.subr.mxu0 0.0
    %3024 = vmatpush1.msra.mxu0 0.0
    %3025 = vmatprep.subr.mxu0 0.0
    %3026 = vmatpush1.msra.mxu0 0.0
    %3027 = vmatprep.subr.mxu0 0.0
    %3028 = vmatpush1.msra.mxu0 0.0
    %3029 = vmatprep.subr.mxu0 0.0
    %3030 = vmatpush1.msra.mxu0 0.0
    %3031 = vmatprep.subr.mxu0 0.0
    %3032 = vmatpush1.msra.mxu0 0.0
    %3033 = vmatprep.subr.mxu0 0.0
    %3034 = vmatpush1.msra.mxu0 0.0
    %3035 = vmatprep.subr.mxu0 0.0
    %3036 = vmatpush1.msra.mxu0 0.0
    %3037 = vmatprep.subr.mxu0 0.0
    %3038 = vmatpush1.msra.mxu0 0.0
    %3039 = vmatprep.mubr.f32.mxu0 0.0
    %3040 = vmatmul.mubr.f32.gmra.mrb[0].mxu0 %v2902
    %v3041 = vpop.f32.mrb[0].mxu0
    %v3042 = vadd.f32 0.0, %v3041
    %v3043 = vpop.f32.mrb[0].mxu0
    %v3044 = vadd.f32 0.0, %v3043
    %3045 = vdwg.mxu0
    %v3050 = vrot.slane %v2971, 4
    %v3051 = vrot.slane %v2973, 4
    %v3052 = vrot.slane %v3042, 4
    %v3053 = vrot.slane %v3044, 4
    %v3058 = vadd.f32 %v2898, %v3050
    %v3059 = vadd.f32 %v2899, %v3051
    %v3060 = vadd.f32 %v2900, %v3052
    %v3061 = vadd.f32 %v2901, %v3053
    %v3062 = vxor.u32 %v2894, 2147483648
    %v3063 = vmul.f32 %v3062, 1.442695
    %v3064 = vpow.pop %v3063
    %v3065 = vadd.f32 %v3064, 1.0
    %v3066 = vrcp.pop %v3065
    %v3067 = vmul.f32 1.0, %v3066
    %v3068 = vxor.u32 %v2895, 2147483648
    %v3069 = vmul.f32 %v3068, 1.442695
    %v3070 = vpow.pop %v3069
    %v3071 = vadd.f32 %v3070, 1.0
    %v3072 = vrcp.pop %v3071
    %v3073 = vmul.f32 1.0, %v3072
    %v3074 = vtanh.pop %v2896
    %v3075 = vxor.u32 %v2897, 2147483648
    %v3076 = vmul.f32 %v3075, 1.442695
    %v3077 = vpow.pop %v3076
    %v3078 = vadd.f32 %v3077, 1.0
    %v3079 = vrcp.pop %v3078
    %v3080 = vmul.f32 1.0, %v3079
    %v3082 = vrot.slane %v2693, 6
    %v3084 = vmul.f32 %v3073, %v3082
    %v3085 = vmul.f32 %v3067, %v3074
    %v3086 = vadd.f32 %v3084, %v3085
    %v3087 = vtanh.pop %v3086
    %v3088 = vmul.f32 %v3080, %v3087
    %v3089 = vxor.u32 %v3058, 2147483648
    %v3090 = vmul.f32 %v3089, 1.442695
    %v3091 = vpow.pop %v3090
    %v3092 = vadd.f32 %v3091, 1.0
    %v3093 = vrcp.pop %v3092
    %v3094 = vmul.f32 1.0, %v3093
    %v3095 = vxor.u32 %v3059, 2147483648
    %v3096 = vmul.f32 %v3095, 1.442695
    %v3097 = vpow.pop %v3096
    %v3098 = vadd.f32 %v3097, 1.0
    %v3099 = vrcp.pop %v3098
    %v3100 = vmul.f32 1.0, %v3099
    %v3101 = vtanh.pop %v3060
    %v3102 = vxor.u32 %v3061, 2147483648
    %v3103 = vmul.f32 %v3102, 1.442695
    %v3104 = vpow.pop %v3103
    %v3105 = vadd.f32 %v3104, 1.0
    %v3106 = vrcp.pop %v3105
    %v3107 = vmul.f32 1.0, %v3106
    %v3109 = vrot.slane %v2720, 2
    %v3111 = vmul.f32 %v3100, %v3109
    %v3112 = vmul.f32 %v3094, %v3101
    %v3113 = vadd.f32 %v3111, %v3112
    %v3114 = vtanh.pop %v3113
    %v3115 = vmul.f32 %v3107, %v3114
    %v3118 = vunpack.c.l.s4 1983009808
    %v3119 = vunpack.c.0.s8 %v3118
    %v3120 = vlaneseq
    %v3121 = vshrl.u32 %v3120, 7
    %v3122 = vsub.s32 %v3119, %v3121
    %v3123 = vrot.slane %v3088, %v3122
    %v3124 = vcombine.high %v3123, %v3123
    %3126 = vst [vmem:[%s1968] sm:$0x3] %v3124
    %v3128 = vcombine.high %v3115, %v3115
    %v3130 = vunpack.c.l.s4 1983009808
    %v3131 = vunpack.c.0.s8 %v3130
    %v3132 = vlaneseq
    %v3133 = vshrl.u32 %v3132, 7
    %v3134 = vsub.s32 %v3131, %v3133
    %v3135 = vrot.slane %v3128, %v3134
    %3137 = vst [vmem:[%s1956 + $0x2] sm:$0x3] %v3135
    %v3138 = vld [vmem:[#allocation2 + $0x40] sm:$0x30]
    %v3139 = vld [vmem:[#allocation2 + $0x48] sm:$0x30]
    %v3140 = vld [vmem:[#allocation2 + $0x50] sm:$0x30]
    %v3141 = vld [vmem:[#allocation2 + $0x58] sm:$0x30]
    %v3142 = vrot.slane %v3088, 2
    %3144 = vmatprep.subr.mxu0 %v658
    %3145 = vmatpush1.msra.mxu0 %v657
    %3146 = vmatprep.subr.mxu0 %v662
    %3147 = vmatpush1.msra.mxu0 %v661
    %3148 = vmatprep.subr.mxu0 %v666
    %3149 = vmatpush1.msra.mxu0 %v665
    %3150 = vmatprep.subr.mxu0 %v670
    %3151 = vmatpush1.msra.mxu0 %v669
    %3152 = vmatprep.subr.mxu0 %v674
    %3153 = vmatpush1.msra.mxu0 %v673
    %3154 = vmatprep.subr.mxu0 %v678
    %3155 = vmatpush1.msra.mxu0 %v677
    %3156 = vmatprep.subr.mxu0 %v682
    %3157 = vmatpush1.msra.mxu0 %v681
    %3158 = vmatprep.subr.mxu0 %v686
    %3159 = vmatpush1.msra.mxu0 %v685
    %3160 = vmatprep.subr.mxu0 %v690
    %3161 = vmatpush1.msra.mxu0 %v689
    %3162 = vmatprep.subr.mxu0 %v694
    %3163 = vmatpush1.msra.mxu0 %v693
    %3164 = vmatprep.subr.mxu0 %v698
    %3165 = vmatpush1.msra.mxu0 %v697
    %3166 = vmatprep.subr.mxu0 %v702
    %3167 = vmatpush1.msra.mxu0 %v701
    %3168 = vmatprep.subr.mxu0 %v706
    %3169 = vmatpush1.msra.mxu0 %v705
    %3170 = vmatprep.subr.mxu0 %v710
    %3171 = vmatpush1.msra.mxu0 %v709
    %3172 = vmatprep.subr.mxu0 %v714
    %3173 = vmatpush1.msra.mxu0 %v713
    %3174 = vmatprep.subr.mxu0 %v718
    %3175 = vmatpush1.msra.mxu0 %v717
    %3176 = vmatprep.subr.mxu0 0.0
    %3177 = vmatpush1.msra.mxu0 0.0
    %3178 = vmatprep.subr.mxu0 0.0
    %3179 = vmatpush1.msra.mxu0 0.0
    %3180 = vmatprep.subr.mxu0 0.0
    %3181 = vmatpush1.msra.mxu0 0.0
    %3182 = vmatprep.subr.mxu0 0.0
    %3183 = vmatpush1.msra.mxu0 0.0
    %3184 = vmatprep.subr.mxu0 0.0
    %3185 = vmatpush1.msra.mxu0 0.0
    %3186 = vmatprep.subr.mxu0 0.0
    %3187 = vmatpush1.msra.mxu0 0.0
    %3188 = vmatprep.subr.mxu0 0.0
    %3189 = vmatpush1.msra.mxu0 0.0
    %3190 = vmatprep.subr.mxu0 0.0
    %3191 = vmatpush1.msra.mxu0 0.0
    %3192 = vmatprep.subr.mxu0 0.0
    %3193 = vmatpush1.msra.mxu0 0.0
    %3194 = vmatprep.subr.mxu0 0.0
    %3195 = vmatpush1.msra.mxu0 0.0
    %3196 = vmatprep.subr.mxu0 0.0
    %3197 = vmatpush1.msra.mxu0 0.0
    %3198 = vmatprep.subr.mxu0 0.0
    %3199 = vmatpush1.msra.mxu0 0.0
    %3200 = vmatprep.subr.mxu0 0.0
    %3201 = vmatpush1.msra.mxu0 0.0
    %3202 = vmatprep.subr.mxu0 0.0
    %3203 = vmatpush1.msra.mxu0 0.0
    %3204 = vmatprep.subr.mxu0 0.0
    %3205 = vmatpush1.msra.mxu0 0.0
    %3206 = vmatprep.subr.mxu0 0.0
    %3207 = vmatpush1.msra.mxu0 0.0
    %3208 = vmatprep.mubr.f32.mxu0 0.0
    %3209 = vmatmul.mubr.f32.gmra.mrb[0].mxu0 %v3142
    %v3210 = vpop.f32.mrb[0].mxu0
    %v3211 = vadd.f32 0.0, %v3210
    %v3212 = vpop.f32.mrb[0].mxu0
    %v3213 = vadd.f32 0.0, %v3212
    %3214 = vdwg.mxu0
    %3215 = vmatprep.subr.mxu0 %v660
    %3216 = vmatpush1.msra.mxu0 %v659
    %3217 = vmatprep.subr.mxu0 %v664
    %3218 = vmatpush1.msra.mxu0 %v663
    %3219 = vmatprep.subr.mxu0 %v668
    %3220 = vmatpush1.msra.mxu0 %v667
    %3221 = vmatprep.subr.mxu0 %v672
    %3222 = vmatpush1.msra.mxu0 %v671
    %3223 = vmatprep.subr.mxu0 %v676
    %3224 = vmatpush1.msra.mxu0 %v675
    %3225 = vmatprep.subr.mxu0 %v680
    %3226 = vmatpush1.msra.mxu0 %v679
    %3227 = vmatprep.subr.mxu0 %v684
    %3228 = vmatpush1.msra.mxu0 %v683
    %3229 = vmatprep.subr.mxu0 %v688
    %3230 = vmatpush1.msra.mxu0 %v687
    %3231 = vmatprep.subr.mxu0 %v692
    %3232 = vmatpush1.msra.mxu0 %v691
    %3233 = vmatprep.subr.mxu0 %v696
    %3234 = vmatpush1.msra.mxu0 %v695
    %3235 = vmatprep.subr.mxu0 %v700
    %3236 = vmatpush1.msra.mxu0 %v699
    %3237 = vmatprep.subr.mxu0 %v704
    %3238 = vmatpush1.msra.mxu0 %v703
    %3239 = vmatprep.subr.mxu0 %v708
    %3240 = vmatpush1.msra.mxu0 %v707
    %3241 = vmatprep.subr.mxu0 %v712
    %3242 = vmatpush1.msra.mxu0 %v711
    %3243 = vmatprep.subr.mxu0 %v716
    %3244 = vmatpush1.msra.mxu0 %v715
    %3245 = vmatprep.subr.mxu0 %v720
    %3246 = vmatpush1.msra.mxu0 %v719
    %3247 = vmatprep.subr.mxu0 0.0
    %3248 = vmatpush1.msra.mxu0 0.0
    %3249 = vmatprep.subr.mxu0 0.0
    %3250 = vmatpush1.msra.mxu0 0.0
    %3251 = vmatprep.subr.mxu0 0.0
    %3252 = vmatpush1.msra.mxu0 0.0
    %3253 = vmatprep.subr.mxu0 0.0
    %3254 = vmatpush1.msra.mxu0 0.0
    %3255 = vmatprep.subr.mxu0 0.0
    %3256 = vmatpush1.msra.mxu0 0.0
    %3257 = vmatprep.subr.mxu0 0.0
    %3258 = vmatpush1.msra.mxu0 0.0
    %3259 = vmatprep.subr.mxu0 0.0
    %3260 = vmatpush1.msra.mxu0 0.0
    %3261 = vmatprep.subr.mxu0 0.0
    %3262 = vmatpush1.msra.mxu0 0.0
    %3263 = vmatprep.subr.mxu0 0.0
    %3264 = vmatpush1.msra.mxu0 0.0
    %3265 = vmatprep.subr.mxu0 0.0
    %3266 = vmatpush1.msra.mxu0 0.0
    %3267 = vmatprep.subr.mxu0 0.0
    %3268 = vmatpush1.msra.mxu0 0.0
    %3269 = vmatprep.subr.mxu0 0.0
    %3270 = vmatpush1.msra.mxu0 0.0
    %3271 = vmatprep.subr.mxu0 0.0
    %3272 = vmatpush1.msra.mxu0 0.0
    %3273 = vmatprep.subr.mxu0 0.0
    %3274 = vmatpush1.msra.mxu0 0.0
    %3275 = vmatprep.subr.mxu0 0.0
    %3276 = vmatpush1.msra.mxu0 0.0
    %3277 = vmatprep.subr.mxu0 0.0
    %3278 = vmatpush1.msra.mxu0 0.0
    %3279 = vmatprep.mubr.f32.mxu0 0.0
    %3280 = vmatmul.mubr.f32.gmra.mrb[0].mxu0 %v3142
    %v3281 = vpop.f32.mrb[0].mxu0
    %v3282 = vadd.f32 0.0, %v3281
    %v3283 = vpop.f32.mrb[0].mxu0
    %v3284 = vadd.f32 0.0, %v3283
    %3285 = vdwg.mxu0
    %v3290 = vrot.slane %v3211, 4
    %v3291 = vrot.slane %v3213, 4
    %v3292 = vrot.slane %v3282, 4
    %v3293 = vrot.slane %v3284, 4
    %v3298 = vadd.f32 %v3138, %v3290
    %v3299 = vadd.f32 %v3139, %v3291
    %v3300 = vadd.f32 %v3140, %v3292
    %v3301 = vadd.f32 %v3141, %v3293
    %v3302 = vld [vmem:[#allocation2 + $0x20] sm:$0xc]
    %v3303 = vld [vmem:[#allocation2 + $0x28] sm:$0xc]
    %v3304 = vld [vmem:[#allocation2 + $0x30] sm:$0xc]
    %v3305 = vld [vmem:[#allocation2 + $0x38] sm:$0xc]
    %v3306 = vrot.slane %v3115, 4
    %3308 = vmatprep.subr.mxu0 %v723
    %3309 = vmatpush1.msra.mxu0 %v722
    %3310 = vmatprep.subr.mxu0 %v727
    %3311 = vmatpush1.msra.mxu0 %v726
    %3312 = vmatprep.subr.mxu0 %v731
    %3313 = vmatpush1.msra.mxu0 %v730
    %3314 = vmatprep.subr.mxu0 %v735
    %3315 = vmatpush1.msra.mxu0 %v734
    %3316 = vmatprep.subr.mxu0 %v739
    %3317 = vmatpush1.msra.mxu0 %v738
    %3318 = vmatprep.subr.mxu0 %v743
    %3319 = vmatpush1.msra.mxu0 %v742
    %3320 = vmatprep.subr.mxu0 %v747
    %3321 = vmatpush1.msra.mxu0 %v746
    %3322 = vmatprep.subr.mxu0 %v751
    %3323 = vmatpush1.msra.mxu0 %v750
    %3324 = vmatprep.subr.mxu0 %v755
    %3325 = vmatpush1.msra.mxu0 %v754
    %3326 = vmatprep.subr.mxu0 %v759
    %3327 = vmatpush1.msra.mxu0 %v758
    %3328 = vmatprep.subr.mxu0 %v763
    %3329 = vmatpush1.msra.mxu0 %v762
    %3330 = vmatprep.subr.mxu0 %v767
    %3331 = vmatpush1.msra.mxu0 %v766
    %3332 = vmatprep.subr.mxu0 %v771
    %3333 = vmatpush1.msra.mxu0 %v770
    %3334 = vmatprep.subr.mxu0 %v775
    %3335 = vmatpush1.msra.mxu0 %v774
    %3336 = vmatprep.subr.mxu0 %v779
    %3337 = vmatpush1.msra.mxu0 %v778
    %3338 = vmatprep.subr.mxu0 %v783
    %3339 = vmatpush1.msra.mxu0 %v782
    %3340 = vmatprep.subr.mxu0 0.0
    %3341 = vmatpush1.msra.mxu0 0.0
    %3342 = vmatprep.subr.mxu0 0.0
    %3343 = vmatpush1.msra.mxu0 0.0
    %3344 = vmatprep.subr.mxu0 0.0
    %3345 = vmatpush1.msra.mxu0 0.0
    %3346 = vmatprep.subr.mxu0 0.0
    %3347 = vmatpush1.msra.mxu0 0.0
    %3348 = vmatprep.subr.mxu0 0.0
    %3349 = vmatpush1.msra.mxu0 0.0
    %3350 = vmatprep.subr.mxu0 0.0
    %3351 = vmatpush1.msra.mxu0 0.0
    %3352 = vmatprep.subr.mxu0 0.0
    %3353 = vmatpush1.msra.mxu0 0.0
    %3354 = vmatprep.subr.mxu0 0.0
    %3355 = vmatpush1.msra.mxu0 0.0
    %3356 = vmatprep.subr.mxu0 0.0
    %3357 = vmatpush1.msra.mxu0 0.0
    %3358 = vmatprep.subr.mxu0 0.0
    %3359 = vmatpush1.msra.mxu0 0.0
    %3360 = vmatprep.subr.mxu0 0.0
    %3361 = vmatpush1.msra.mxu0 0.0
    %3362 = vmatprep.subr.mxu0 0.0
    %3363 = vmatpush1.msra.mxu0 0.0
    %3364 = vmatprep.subr.mxu0 0.0
    %3365 = vmatpush1.msra.mxu0 0.0
    %3366 = vmatprep.subr.mxu0 0.0
    %3367 = vmatpush1.msra.mxu0 0.0
    %3368 = vmatprep.subr.mxu0 0.0
    %3369 = vmatpush1.msra.mxu0 0.0
    %3370 = vmatprep.subr.mxu0 0.0
    %3371 = vmatpush1.msra.mxu0 0.0
    %3372 = vmatprep.mubr.f32.mxu0 0.0
    %3373 = vmatmul.mubr.f32.gmra.mrb[0].mxu0 %v3306
    %v3374 = vpop.f32.mrb[0].mxu0
    %v3375 = vadd.f32 0.0, %v3374
    %v3376 = vpop.f32.mrb[0].mxu0
    %v3377 = vadd.f32 0.0, %v3376
    %3378 = vdwg.mxu0
    %3379 = vmatprep.subr.mxu0 %v725
    %3380 = vmatpush1.msra.mxu0 %v724
    %3381 = vmatprep.subr.mxu0 %v729
    %3382 = vmatpush1.msra.mxu0 %v728
    %3383 = vmatprep.subr.mxu0 %v733
    %3384 = vmatpush1.msra.mxu0 %v732
    %3385 = vmatprep.subr.mxu0 %v737
    %3386 = vmatpush1.msra.mxu0 %v736
    %3387 = vmatprep.subr.mxu0 %v741
    %3388 = vmatpush1.msra.mxu0 %v740
    %3389 = vmatprep.subr.mxu0 %v745
    %3390 = vmatpush1.msra.mxu0 %v744
    %3391 = vmatprep.subr.mxu0 %v749
    %3392 = vmatpush1.msra.mxu0 %v748
    %3393 = vmatprep.subr.mxu0 %v753
    %3394 = vmatpush1.msra.mxu0 %v752
    %3395 = vmatprep.subr.mxu0 %v757
    %3396 = vmatpush1.msra.mxu0 %v756
    %3397 = vmatprep.subr.mxu0 %v761
    %3398 = vmatpush1.msra.mxu0 %v760
    %3399 = vmatprep.subr.mxu0 %v765
    %3400 = vmatpush1.msra.mxu0 %v764
    %3401 = vmatprep.subr.mxu0 %v769
    %3402 = vmatpush1.msra.mxu0 %v768
    %3403 = vmatprep.subr.mxu0 %v773
    %3404 = vmatpush1.msra.mxu0 %v772
    %3405 = vmatprep.subr.mxu0 %v777
    %3406 = vmatpush1.msra.mxu0 %v776
    %3407 = vmatprep.subr.mxu0 %v781
    %3408 = vmatpush1.msra.mxu0 %v780
    %3409 = vmatprep.subr.mxu0 %v785
    %3410 = vmatpush1.msra.mxu0 %v784
    %3411 = vmatprep.subr.mxu0 0.0
    %3412 = vmatpush1.msra.mxu0 0.0
    %3413 = vmatprep.subr.mxu0 0.0
    %3414 = vmatpush1.msra.mxu0 0.0
    %3415 = vmatprep.subr.mxu0 0.0
    %3416 = vmatpush1.msra.mxu0 0.0
    %3417 = vmatprep.subr.mxu0 0.0
    %3418 = vmatpush1.msra.mxu0 0.0
    %3419 = vmatprep.subr.mxu0 0.0
    %3420 = vmatpush1.msra.mxu0 0.0
    %3421 = vmatprep.subr.mxu0 0.0
    %3422 = vmatpush1.msra.mxu0 0.0
    %3423 = vmatprep.subr.mxu0 0.0
    %3424 = vmatpush1.msra.mxu0 0.0
    %3425 = vmatprep.subr.mxu0 0.0
    %3426 = vmatpush1.msra.mxu0 0.0
    %3427 = vmatprep.subr.mxu0 0.0
    %3428 = vmatpush1.msra.mxu0 0.0
    %3429 = vmatprep.subr.mxu0 0.0
    %3430 = vmatpush1.msra.mxu0 0.0
    %3431 = vmatprep.subr.mxu0 0.0
    %3432 = vmatpush1.msra.mxu0 0.0
    %3433 = vmatprep.subr.mxu0 0.0
    %3434 = vmatpush1.msra.mxu0 0.0
    %3435 = vmatprep.subr.mxu0 0.0
    %3436 = vmatpush1.msra.mxu0 0.0
    %3437 = vmatprep.subr.mxu0 0.0
    %3438 = vmatpush1.msra.mxu0 0.0
    %3439 = vmatprep.subr.mxu0 0.0
    %3440 = vmatpush1.msra.mxu0 0.0
    %3441 = vmatprep.subr.mxu0 0.0
    %3442 = vmatpush1.msra.mxu0 0.0
    %3443 = vmatprep.mubr.f32.mxu0 0.0
    %3444 = vmatmul.mubr.f32.gmra.mrb[0].mxu0 %v3306
    %v3445 = vpop.f32.mrb[0].mxu0
    %v3446 = vadd.f32 0.0, %v3445
    %v3447 = vpop.f32.mrb[0].mxu0
    %v3448 = vadd.f32 0.0, %v3447
    %3449 = vdwg.mxu0
    %v3454 = vrot.slane %v3375, 6
    %v3455 = vrot.slane %v3377, 6
    %v3456 = vrot.slane %v3446, 6
    %v3457 = vrot.slane %v3448, 6
    %v3462 = vadd.f32 %v3302, %v3454
    %v3463 = vadd.f32 %v3303, %v3455
    %v3464 = vadd.f32 %v3304, %v3456
    %v3465 = vadd.f32 %v3305, %v3457
    %v3466 = vxor.u32 %v3298, 2147483648
    %v3467 = vmul.f32 %v3466, 1.442695
    %v3468 = vpow.pop %v3467
    %v3469 = vadd.f32 %v3468, 1.0
    %v3470 = vrcp.pop %v3469
    %v3471 = vmul.f32 1.0, %v3470
    %v3472 = vxor.u32 %v3299, 2147483648
    %v3473 = vmul.f32 %v3472, 1.442695
    %v3474 = vpow.pop %v3473
    %v3475 = vadd.f32 %v3474, 1.0
    %v3476 = vrcp.pop %v3475
    %v3477 = vmul.f32 1.0, %v3476
    %v3478 = vtanh.pop %v3300
    %v3479 = vxor.u32 %v3301, 2147483648
    %v3480 = vmul.f32 %v3479, 1.442695
    %v3481 = vpow.pop %v3480
    %v3482 = vadd.f32 %v3481, 1.0
    %v3483 = vrcp.pop %v3482
    %v3484 = vmul.f32 1.0, %v3483
    %v3486 = vrot.slane %v3086, 6
    %v3488 = vmul.f32 %v3477, %v3486
    %v3489 = vmul.f32 %v3471, %v3478
    %v3490 = vadd.f32 %v3488, %v3489
    %v3491 = vtanh.pop %v3490
    %v3492 = vmul.f32 %v3484, %v3491
    %v3493 = vxor.u32 %v3462, 2147483648
    %v3494 = vmul.f32 %v3493, 1.442695
    %v3495 = vpow.pop %v3494
    %v3496 = vadd.f32 %v3495, 1.0
    %v3497 = vrcp.pop %v3496
    %v3498 = vmul.f32 1.0, %v3497
    %v3499 = vxor.u32 %v3463, 2147483648
    %v3500 = vmul.f32 %v3499, 1.442695
    %v3501 = vpow.pop %v3500
    %v3502 = vadd.f32 %v3501, 1.0
    %v3503 = vrcp.pop %v3502
    %v3504 = vmul.f32 1.0, %v3503
    %v3505 = vtanh.pop %v3464
    %v3506 = vxor.u32 %v3465, 2147483648
    %v3507 = vmul.f32 %v3506, 1.442695
    %v3508 = vpow.pop %v3507
    %v3509 = vadd.f32 %v3508, 1.0
    %v3510 = vrcp.pop %v3509
    %v3511 = vmul.f32 1.0, %v3510
    %v3513 = vrot.slane %v3113, 2
    %v3515 = vmul.f32 %v3504, %v3513
    %v3516 = vmul.f32 %v3498, %v3505
    %v3517 = vadd.f32 %v3515, %v3516
    %v3518 = vtanh.pop %v3517
    %v3519 = vmul.f32 %v3511, %v3518
    %v3521 = vcombine.high %v3492, %v3492
    %v3523 = vunpack.c.l.s4 1983009808
    %v3524 = vunpack.c.0.s8 %v3523
    %v3525 = vlaneseq
    %v3526 = vshrl.u32 %v3525, 7
    %v3527 = vsub.s32 %v3524, %v3526
    %v3528 = vrot.slane %v3521, %v3527
    %3530 = vst [vmem:[%s1562] sm:$0x3] %v3528
    %v3533 = vunpack.c.l.s4 1983009808
    %v3534 = vunpack.c.0.s8 %v3533
    %v3535 = vlaneseq
    %v3536 = vshrl.u32 %v3535, 7
    %v3537 = vsub.s32 %v3534, %v3536
    %v3538 = vrot.slane %v3519, %v3537
    %v3539 = vcombine.high %v3538, %v3538
    %3541 = vst [vmem:[%s1550 + $0x2] sm:$0x3] %v3539
    %v3542 = vld [vmem:[#allocation2 + $0x40] sm:$0xc0]
    %v3543 = vld [vmem:[#allocation2 + $0x48] sm:$0xc0]
    %v3544 = vld [vmem:[#allocation2 + $0x50] sm:$0xc0]
    %v3545 = vld [vmem:[#allocation2 + $0x58] sm:$0xc0]
    %v3546 = vrot.slane %v3492, 4
    %3548 = vmatprep.subr.mxu0 %v658
    %3549 = vmatpush1.msra.mxu0 %v657
    %3550 = vmatprep.subr.mxu0 %v662
    %3551 = vmatpush1.msra.mxu0 %v661
    %3552 = vmatprep.subr.mxu0 %v666
    %3553 = vmatpush1.msra.mxu0 %v665
    %3554 = vmatprep.subr.mxu0 %v670
    %3555 = vmatpush1.msra.mxu0 %v669
    %3556 = vmatprep.subr.mxu0 %v674
    %3557 = vmatpush1.msra.mxu0 %v673
    %3558 = vmatprep.subr.mxu0 %v678
    %3559 = vmatpush1.msra.mxu0 %v677
    %3560 = vmatprep.subr.mxu0 %v682
    %3561 = vmatpush1.msra.mxu0 %v681
    %3562 = vmatprep.subr.mxu0 %v686
    %3563 = vmatpush1.msra.mxu0 %v685
    %3564 = vmatprep.subr.mxu0 %v690
    %3565 = vmatpush1.msra.mxu0 %v689
    %3566 = vmatprep.subr.mxu0 %v694
    %3567 = vmatpush1.msra.mxu0 %v693
    %3568 = vmatprep.subr.mxu0 %v698
    %3569 = vmatpush1.msra.mxu0 %v697
    %3570 = vmatprep.subr.mxu0 %v702
    %3571 = vmatpush1.msra.mxu0 %v701
    %3572 = vmatprep.subr.mxu0 %v706
    %3573 = vmatpush1.msra.mxu0 %v705
    %3574 = vmatprep.subr.mxu0 %v710
    %3575 = vmatpush1.msra.mxu0 %v709
    %3576 = vmatprep.subr.mxu0 %v714
    %3577 = vmatpush1.msra.mxu0 %v713
    %3578 = vmatprep.subr.mxu0 %v718
    %3579 = vmatpush1.msra.mxu0 %v717
    %3580 = vmatprep.subr.mxu0 0.0
    %3581 = vmatpush1.msra.mxu0 0.0
    %3582 = vmatprep.subr.mxu0 0.0
    %3583 = vmatpush1.msra.mxu0 0.0
    %3584 = vmatprep.subr.mxu0 0.0
    %3585 = vmatpush1.msra.mxu0 0.0
    %3586 = vmatprep.subr.mxu0 0.0
    %3587 = vmatpush1.msra.mxu0 0.0
    %3588 = vmatprep.subr.mxu0 0.0
    %3589 = vmatpush1.msra.mxu0 0.0
    %3590 = vmatprep.subr.mxu0 0.0
    %3591 = vmatpush1.msra.mxu0 0.0
    %3592 = vmatprep.subr.mxu0 0.0
    %3593 = vmatpush1.msra.mxu0 0.0
    %3594 = vmatprep.subr.mxu0 0.0
    %3595 = vmatpush1.msra.mxu0 0.0
    %3596 = vmatprep.subr.mxu0 0.0
    %3597 = vmatpush1.msra.mxu0 0.0
    %3598 = vmatprep.subr.mxu0 0.0
    %3599 = vmatpush1.msra.mxu0 0.0
    %3600 = vmatprep.subr.mxu0 0.0
    %3601 = vmatpush1.msra.mxu0 0.0
    %3602 = vmatprep.subr.mxu0 0.0
    %3603 = vmatpush1.msra.mxu0 0.0
    %3604 = vmatprep.subr.mxu0 0.0
    %3605 = vmatpush1.msra.mxu0 0.0
    %3606 = vmatprep.subr.mxu0 0.0
    %3607 = vmatpush1.msra.mxu0 0.0
    %3608 = vmatprep.subr.mxu0 0.0
    %3609 = vmatpush1.msra.mxu0 0.0
    %3610 = vmatprep.subr.mxu0 0.0
    %3611 = vmatpush1.msra.mxu0 0.0
    %3612 = vmatprep.mubr.f32.mxu0 0.0
    %3613 = vmatmul.mubr.f32.gmra.mrb[0].mxu0 %v3546
    %v3614 = vpop.f32.mrb[0].mxu0
    %v3615 = vadd.f32 0.0, %v3614
    %v3616 = vpop.f32.mrb[0].mxu0
    %v3617 = vadd.f32 0.0, %v3616
    %3618 = vdwg.mxu0
    %3619 = vmatprep.subr.mxu0 %v660
    %3620 = vmatpush1.msra.mxu0 %v659
    %3621 = vmatprep.subr.mxu0 %v664
    %3622 = vmatpush1.msra.mxu0 %v663
    %3623 = vmatprep.subr.mxu0 %v668
    %3624 = vmatpush1.msra.mxu0 %v667
    %3625 = vmatprep.subr.mxu0 %v672
    %3626 = vmatpush1.msra.mxu0 %v671
    %3627 = vmatprep.subr.mxu0 %v676
    %3628 = vmatpush1.msra.mxu0 %v675
    %3629 = vmatprep.subr.mxu0 %v680
    %3630 = vmatpush1.msra.mxu0 %v679
    %3631 = vmatprep.subr.mxu0 %v684
    %3632 = vmatpush1.msra.mxu0 %v683
    %3633 = vmatprep.subr.mxu0 %v688
    %3634 = vmatpush1.msra.mxu0 %v687
    %3635 = vmatprep.subr.mxu0 %v692
    %3636 = vmatpush1.msra.mxu0 %v691
    %3637 = vmatprep.subr.mxu0 %v696
    %3638 = vmatpush1.msra.mxu0 %v695
    %3639 = vmatprep.subr.mxu0 %v700
    %3640 = vmatpush1.msra.mxu0 %v699
    %3641 = vmatprep.subr.mxu0 %v704
    %3642 = vmatpush1.msra.mxu0 %v703
    %3643 = vmatprep.subr.mxu0 %v708
    %3644 = vmatpush1.msra.mxu0 %v707
    %3645 = vmatprep.subr.mxu0 %v712
    %3646 = vmatpush1.msra.mxu0 %v711
    %3647 = vmatprep.subr.mxu0 %v716
    %3648 = vmatpush1.msra.mxu0 %v715
    %3649 = vmatprep.subr.mxu0 %v720
    %3650 = vmatpush1.msra.mxu0 %v719
    %3651 = vmatprep.subr.mxu0 0.0
    %3652 = vmatpush1.msra.mxu0 0.0
    %3653 = vmatprep.subr.mxu0 0.0
    %3654 = vmatpush1.msra.mxu0 0.0
    %3655 = vmatprep.subr.mxu0 0.0
    %3656 = vmatpush1.msra.mxu0 0.0
    %3657 = vmatprep.subr.mxu0 0.0
    %3658 = vmatpush1.msra.mxu0 0.0
    %3659 = vmatprep.subr.mxu0 0.0
    %3660 = vmatpush1.msra.mxu0 0.0
    %3661 = vmatprep.subr.mxu0 0.0
    %3662 = vmatpush1.msra.mxu0 0.0
    %3663 = vmatprep.subr.mxu0 0.0
    %3664 = vmatpush1.msra.mxu0 0.0
    %3665 = vmatprep.subr.mxu0 0.0
    %3666 = vmatpush1.msra.mxu0 0.0
    %3667 = vmatprep.subr.mxu0 0.0
    %3668 = vmatpush1.msra.mxu0 0.0
    %3669 = vmatprep.subr.mxu0 0.0
    %3670 = vmatpush1.msra.mxu0 0.0
    %3671 = vmatprep.subr.mxu0 0.0
    %3672 = vmatpush1.msra.mxu0 0.0
    %3673 = vmatprep.subr.mxu0 0.0
    %3674 = vmatpush1.msra.mxu0 0.0
    %3675 = vmatprep.subr.mxu0 0.0
    %3676 = vmatpush1.msra.mxu0 0.0
    %3677 = vmatprep.subr.mxu0 0.0
    %3678 = vmatpush1.msra.mxu0 0.0
    %3679 = vmatprep.subr.mxu0 0.0
    %3680 = vmatpush1.msra.mxu0 0.0
    %3681 = vmatprep.subr.mxu0 0.0
    %3682 = vmatpush1.msra.mxu0 0.0
    %3683 = vmatprep.mubr.f32.mxu0 0.0
    %3684 = vmatmul.mubr.f32.gmra.mrb[0].mxu0 %v3546
    %v3685 = vpop.f32.mrb[0].mxu0
    %v3686 = vadd.f32 0.0, %v3685
    %v3687 = vpop.f32.mrb[0].mxu0
    %v3688 = vadd.f32 0.0, %v3687
    %3689 = vdwg.mxu0
    %v3694 = vrot.slane %v3615, 2
    %v3695 = vrot.slane %v3617, 2
    %v3696 = vrot.slane %v3686, 2
    %v3697 = vrot.slane %v3688, 2
    %v3702 = vadd.f32 %v3542, %v3694
    %v3703 = vadd.f32 %v3543, %v3695
    %v3704 = vadd.f32 %v3544, %v3696
    %v3705 = vadd.f32 %v3545, %v3697
    %v3706 = vld [vmem:[#allocation2 + $0x20] sm:$0x3]
    %v3707 = vld [vmem:[#allocation2 + $0x28] sm:$0x3]
    %v3708 = vld [vmem:[#allocation2 + $0x30] sm:$0x3]
    %v3709 = vld [vmem:[#allocation2 + $0x38] sm:$0x3]
    %v3710 = vrot.slane %v3519, 2
    %3712 = vmatprep.subr.mxu0 %v723
    %3713 = vmatpush1.msra.mxu0 %v722
    %3714 = vmatprep.subr.mxu0 %v727
    %3715 = vmatpush1.msra.mxu0 %v726
    %3716 = vmatprep.subr.mxu0 %v731
    %3717 = vmatpush1.msra.mxu0 %v730
    %3718 = vmatprep.subr.mxu0 %v735
    %3719 = vmatpush1.msra.mxu0 %v734
    %3720 = vmatprep.subr.mxu0 %v739
    %3721 = vmatpush1.msra.mxu0 %v738
    %3722 = vmatprep.subr.mxu0 %v743
    %3723 = vmatpush1.msra.mxu0 %v742
    %3724 = vmatprep.subr.mxu0 %v747
    %3725 = vmatpush1.msra.mxu0 %v746
    %3726 = vmatprep.subr.mxu0 %v751
    %3727 = vmatpush1.msra.mxu0 %v750
    %3728 = vmatprep.subr.mxu0 %v755
    %3729 = vmatpush1.msra.mxu0 %v754
    %3730 = vmatprep.subr.mxu0 %v759
    %3731 = vmatpush1.msra.mxu0 %v758
    %3732 = vmatprep.subr.mxu0 %v763
    %3733 = vmatpush1.msra.mxu0 %v762
    %3734 = vmatprep.subr.mxu0 %v767
    %3735 = vmatpush1.msra.mxu0 %v766
    %3736 = vmatprep.subr.mxu0 %v771
    %3737 = vmatpush1.msra.mxu0 %v770
    %3738 = vmatprep.subr.mxu0 %v775
    %3739 = vmatpush1.msra.mxu0 %v774
    %3740 = vmatprep.subr.mxu0 %v779
    %3741 = vmatpush1.msra.mxu0 %v778
    %3742 = vmatprep.subr.mxu0 %v783
    %3743 = vmatpush1.msra.mxu0 %v782
    %3744 = vmatprep.subr.mxu0 0.0
    %3745 = vmatpush1.msra.mxu0 0.0
    %3746 = vmatprep.subr.mxu0 0.0
    %3747 = vmatpush1.msra.mxu0 0.0
    %3748 = vmatprep.subr.mxu0 0.0
    %3749 = vmatpush1.msra.mxu0 0.0
    %3750 = vmatprep.subr.mxu0 0.0
    %3751 = vmatpush1.msra.mxu0 0.0
    %3752 = vmatprep.subr.mxu0 0.0
    %3753 = vmatpush1.msra.mxu0 0.0
    %3754 = vmatprep.subr.mxu0 0.0
    %3755 = vmatpush1.msra.mxu0 0.0
    %3756 = vmatprep.subr.mxu0 0.0
    %3757 = vmatpush1.msra.mxu0 0.0
    %3758 = vmatprep.subr.mxu0 0.0
    %3759 = vmatpush1.msra.mxu0 0.0
    %3760 = vmatprep.subr.mxu0 0.0
    %3761 = vmatpush1.msra.mxu0 0.0
    %3762 = vmatprep.subr.mxu0 0.0
    %3763 = vmatpush1.msra.mxu0 0.0
    %3764 = vmatprep.subr.mxu0 0.0
    %3765 = vmatpush1.msra.mxu0 0.0
    %3766 = vmatprep.subr.mxu0 0.0
    %3767 = vmatpush1.msra.mxu0 0.0
    %3768 = vmatprep.subr.mxu0 0.0
    %3769 = vmatpush1.msra.mxu0 0.0
    %3770 = vmatprep.subr.mxu0 0.0
    %3771 = vmatpush1.msra.mxu0 0.0
    %3772 = vmatprep.subr.mxu0 0.0
    %3773 = vmatpush1.msra.mxu0 0.0
    %3774 = vmatprep.subr.mxu0 0.0
    %3775 = vmatpush1.msra.mxu0 0.0
    %3776 = vmatprep.mubr.f32.mxu0 0.0
    %3777 = vmatmul.mubr.f32.gmra.mrb[0].mxu0 %v3710
    %v3778 = vpop.f32.mrb[0].mxu0
    %v3779 = vadd.f32 0.0, %v3778
    %v3780 = vpop.f32.mrb[0].mxu0
    %v3781 = vadd.f32 0.0, %v3780
    %3782 = vdwg.mxu0
    %3783 = vmatprep.subr.mxu0 %v725
    %3784 = vmatpush1.msra.mxu0 %v724
    %3785 = vmatprep.subr.mxu0 %v729
    %3786 = vmatpush1.msra.mxu0 %v728
    %3787 = vmatprep.subr.mxu0 %v733
    %3788 = vmatpush1.msra.mxu0 %v732
    %3789 = vmatprep.subr.mxu0 %v737
    %3790 = vmatpush1.msra.mxu0 %v736
    %3791 = vmatprep.subr.mxu0 %v741
    %3792 = vmatpush1.msra.mxu0 %v740
    %3793 = vmatprep.subr.mxu0 %v745
    %3794 = vmatpush1.msra.mxu0 %v744
    %3795 = vmatprep.subr.mxu0 %v749
    %3796 = vmatpush1.msra.mxu0 %v748
    %3797 = vmatprep.subr.mxu0 %v753
    %3798 = vmatpush1.msra.mxu0 %v752
    %3799 = vmatprep.subr.mxu0 %v757
    %3800 = vmatpush1.msra.mxu0 %v756
    %3801 = vmatprep.subr.mxu0 %v761
    %3802 = vmatpush1.msra.mxu0 %v760
    %3803 = vmatprep.subr.mxu0 %v765
    %3804 = vmatpush1.msra.mxu0 %v764
    %3805 = vmatprep.subr.mxu0 %v769
    %3806 = vmatpush1.msra.mxu0 %v768
    %3807 = vmatprep.subr.mxu0 %v773
    %3808 = vmatpush1.msra.mxu0 %v772
    %3809 = vmatprep.subr.mxu0 %v777
    %3810 = vmatpush1.msra.mxu0 %v776
    %3811 = vmatprep.subr.mxu0 %v781
    %3812 = vmatpush1.msra.mxu0 %v780
    %3813 = vmatprep.subr.mxu0 %v785
    %3814 = vmatpush1.msra.mxu0 %v784
    %3815 = vmatprep.subr.mxu0 0.0
    %3816 = vmatpush1.msra.mxu0 0.0
    %3817 = vmatprep.subr.mxu0 0.0
    %3818 = vmatpush1.msra.mxu0 0.0
    %3819 = vmatprep.subr.mxu0 0.0
    %3820 = vmatpush1.msra.mxu0 0.0
    %3821 = vmatprep.subr.mxu0 0.0
    %3822 = vmatpush1.msra.mxu0 0.0
    %3823 = vmatprep.subr.mxu0 0.0
    %3824 = vmatpush1.msra.mxu0 0.0
    %3825 = vmatprep.subr.mxu0 0.0
    %3826 = vmatpush1.msra.mxu0 0.0
    %3827 = vmatprep.subr.mxu0 0.0
    %3828 = vmatpush1.msra.mxu0 0.0
    %3829 = vmatprep.subr.mxu0 0.0
    %3830 = vmatpush1.msra.mxu0 0.0
    %3831 = vmatprep.subr.mxu0 0.0
    %3832 = vmatpush1.msra.mxu0 0.0
    %3833 = vmatprep.subr.mxu0 0.0
    %3834 = vmatpush1.msra.mxu0 0.0
    %3835 = vmatprep.subr.mxu0 0.0
    %3836 = vmatpush1.msra.mxu0 0.0
    %3837 = vmatprep.subr.mxu0 0.0
    %3838 = vmatpush1.msra.mxu0 0.0
    %3839 = vmatprep.subr.mxu0 0.0
    %3840 = vmatpush1.msra.mxu0 0.0
    %3841 = vmatprep.subr.mxu0 0.0
    %3842 = vmatpush1.msra.mxu0 0.0
    %3843 = vmatprep.subr.mxu0 0.0
    %3844 = vmatpush1.msra.mxu0 0.0
    %3845 = vmatprep.subr.mxu0 0.0
    %3846 = vmatpush1.msra.mxu0 0.0
    %3847 = vmatprep.mubr.f32.mxu0 0.0
    %3848 = vmatmul.mubr.f32.gmra.mrb[0].mxu0 %v3710
    %v3849 = vpop.f32.mrb[0].mxu0
    %v3850 = vadd.f32 0.0, %v3849
    %v3851 = vpop.f32.mrb[0].mxu0
    %v3852 = vadd.f32 0.0, %v3851
    %3853 = vdwg.mxu0
    %v3854 = vadd.f32 %v3706, %v3779
    %v3855 = vadd.f32 %v3707, %v3781
    %v3856 = vadd.f32 %v3708, %v3850
    %v3857 = vadd.f32 %v3709, %v3852
    %v3858 = vxor.u32 %v3702, 2147483648
    %v3859 = vmul.f32 %v3858, 1.442695
    %v3860 = vpow.pop %v3859
    %v3861 = vadd.f32 %v3860, 1.0
    %v3862 = vrcp.pop %v3861
    %v3863 = vmul.f32 1.0, %v3862
    %v3864 = vxor.u32 %v3703, 2147483648
    %v3865 = vmul.f32 %v3864, 1.442695
    %v3866 = vpow.pop %v3865
    %v3867 = vadd.f32 %v3866, 1.0
    %v3868 = vrcp.pop %v3867
    %v3869 = vmul.f32 1.0, %v3868
    %v3870 = vtanh.pop %v3704
    %v3871 = vxor.u32 %v3705, 2147483648
    %v3872 = vmul.f32 %v3871, 1.442695
    %v3873 = vpow.pop %v3872
    %v3874 = vadd.f32 %v3873, 1.0
    %v3875 = vrcp.pop %v3874
    %v3876 = vmul.f32 1.0, %v3875
    %v3878 = vrot.slane %v3490, 6
    %v3880 = vmul.f32 %v3869, %v3878
    %v3881 = vmul.f32 %v3863, %v3870
    %v3882 = vadd.f32 %v3880, %v3881
    %v3883 = vtanh.pop %v3882
    %v3884 = vmul.f32 %v3876, %v3883
    %v3885 = vxor.u32 %v3854, 2147483648
    %v3886 = vmul.f32 %v3885, 1.442695
    %v3887 = vpow.pop %v3886
    %v3888 = vadd.f32 %v3887, 1.0
    %v3889 = vrcp.pop %v3888
    %v3890 = vmul.f32 1.0, %v3889
    %v3891 = vxor.u32 %v3855, 2147483648
    %v3892 = vmul.f32 %v3891, 1.442695
    %v3893 = vpow.pop %v3892
    %v3894 = vadd.f32 %v3893, 1.0
    %v3895 = vrcp.pop %v3894
    %v3896 = vmul.f32 1.0, %v3895
    %v3897 = vtanh.pop %v3856
    %v3898 = vxor.u32 %v3857, 2147483648
    %v3899 = vmul.f32 %v3898, 1.442695
    %v3900 = vpow.pop %v3899
    %v3901 = vadd.f32 %v3900, 1.0
    %v3902 = vrcp.pop %v3901
    %v3903 = vmul.f32 1.0, %v3902
    %v3905 = vrot.slane %v3517, 2
    %v3907 = vmul.f32 %v3896, %v3905
    %v3908 = vmul.f32 %v3890, %v3897
    %v3909 = vadd.f32 %v3907, %v3908
    %v3910 = vtanh.pop %v3909
    %v3911 = vmul.f32 %v3903, %v3910
    %v3913 = vcombine.high %v3884, %v3884
    %v3915 = vunpack.c.l.s4 1983009808
    %v3916 = vunpack.c.0.s8 %v3915
    %v3917 = vlaneseq
    %v3918 = vshrl.u32 %v3917, 7
    %v3919 = vsub.s32 %v3916, %v3918
    %v3920 = vrot.slane %v3913, %v3919
    %v3921 = vcombine.high %v3920, %v3920
    %3923 = vst [vmem:[%s1158] sm:$0x3] %v3921
    %3924 = vst [vmem:[%s4 + $0x2] sm:$0x3] %v3911
    // Predicated region
    $region22: #{_lambda_.4} parent=1 // pred_check
      _
    $region23: #{_lambda_.4} parent=1 // pred_check_branch
      %3926 = sbr.rel (0) target = $region25
    $region24: #{_lambda_.4} parent=1 // pred_region
      _
    $region25: #{_lambda_.4} parent=1 // pred_fallthru
      _
    // Predicated region
    $region26: #{_lambda_.4} parent=1 // pred_check
      _
    $region27: #{_lambda_.4} parent=1 // pred_check_branch
      %3928 = sbr.rel (0) target = $region29
    $region28: #{_lambda_.4} parent=1 // pred_region
      _
    $region29: #{_lambda_.4} parent=1 // pred_fallthru
      _
    %3929 = vsyncpa [#allocation4], 1

</llo_original>
